<compile_context>
chip_gen: v7x
topology: tpu7x:2x2x1
jax: 0.10.0
libtpu: 0.0.40
codegen_flags: <defaults>
</compile_context>

<pallas_src>
import functools

import jax
import jax.numpy as jnp
from jax.experimental import pallas as pl
from jax.experimental.pallas import tpu as pltpu


# ----------------------------------------------------------------------------
# Fused kernel: 2-layer LSTM (wavefront) + DNN block + output projection
# ----------------------------------------------------------------------------
def _rnnlm_fused_kernel(
    x_ref,                                   # (N, E)   bf16, time-major flat, N = T*B
    wih1_ref, whh1_ref, b1_ref,              # (E, 4H) bf16, (H, 4H) bf16, (1, 4H) f32
    w2_ref, b2_ref,                          # (2H, 4H) bf16 = [W_ih2; W_hh2], (1, 4H) f32
    wd_ref, bd_ref, g_ref, be_ref,           # (H, Dd) bf16, (1, Dd) f32 x3
    wo_ref, bo_ref,                          # (Dd, V) bf16, (1, V) f32
    o_ref,                                   # (N, V)   f32
    z_sc, y_sc,                              # (N, 4H) f32, (N, H) f32 VMEM scratch
    *, batch,
):
    N = x_ref.shape[0]
    H = y_sc.shape[1]
    B = batch
    T = N // B
    f32 = jnp.float32
    bf16 = jnp.bfloat16

    def lstm_gates(z, c_prev):
        # PyTorch gate order: i, f, g, o.  H = 128 -> lane-aligned slices.
        # Gate math / cell state kept in f32 (v5e VPU/EUP are f32-only).
        i_g = jax.nn.sigmoid(z[:, 0 * H:1 * H])
        f_g = jax.nn.sigmoid(z[:, 1 * H:2 * H])
        g_g = jnp.tanh(z[:, 2 * H:3 * H])
        o_g = jax.nn.sigmoid(z[:, 3 * H:4 * H])
        c_new = f_g * c_prev + i_g * g_g
        h_new = o_g * jnp.tanh(c_new)
        return h_new, c_new

    # (1) Hoisted layer-1 input projection: one (N, E) x (E, 4H) MXU GEMM.
    z_sc[...] = (
        jnp.dot(x_ref[...], wih1_ref[...], preferred_element_type=f32)
        + b1_ref[...]
    )

    def layer2_step(h1_prev_bf, h2_bf, c2):
        # Input + recurrent projection fused into one K=256 GEMM.
        lhs = jnp.concatenate([h1_prev_bf, h2_bf], axis=-1)        # (B, 2H) bf16
        z2 = (jnp.dot(lhs, w2_ref[...], preferred_element_type=f32)
              + b2_ref[...])
        return lstm_gates(z2, c2)

    # Prologue: layer-1 step 0 (hx=None -> zero state, so h @ W_hh term is 0).
    zeros_f = jnp.zeros((B, H), f32)
    h1_0, c1_0 = lstm_gates(z_sc[pl.ds(0, B), :], zeros_f)
    carry0 = (h1_0.astype(bf16), c1_0, jnp.zeros((B, H), bf16), zeros_f)

    # (2) Wavefront recurrence: iteration t runs L1 step t and L2 step t-1.
    #     h/c live in vregs via the loop carry; only y (L2 output) hits VMEM.
    def step(t, carry):
        h1_bf, c1, h2_bf, c2 = carry
        r1 = pl.multiple_of(t * B, B)                 # sublane-aligned row start
        # Layer-1 step t.
        z1 = z_sc[pl.ds(r1, B), :] + jnp.dot(
            h1_bf, whh1_ref[...], preferred_element_type=f32)
        h1_new, c1_new = lstm_gates(z1, c1)
        # Layer-2 step t-1 (independent of L1 step t -> overlaps MXU/EUP/VPU).
        h2_new, c2_new = layer2_step(h1_bf, h2_bf, c2)
        r2 = pl.multiple_of((t - 1) * B, B)
        y_sc[pl.ds(r2, B), :] = h2_new                # f32 store (one aligned tile)
        return (h1_new.astype(bf16), c1_new, h2_new.astype(bf16), c2_new)

    # Full unroll at T=8; for speech-length T cap this at 4-8.
    h1_bf, _, h2_bf, c2 = jax.lax.fori_loop(1, T, step, carry0, unroll=True)

    # Epilogue: layer-2 step T-1.
    h2_last, _ = layer2_step(h1_bf, h2_bf, c2)
    y_sc[pl.ds((T - 1) * B, B), :] = h2_last

    # (3) DNN block: Linear -> LayerNorm(eps=1e-5) -> LeakyReLU(0.01); dropout=id.
    hdn = (jnp.dot(y_sc[...].astype(wd_ref.dtype), wd_ref[...],
                   preferred_element_type=f32) + bd_ref[...])
    mean = jnp.mean(hdn, axis=-1, keepdims=True)
    var = jnp.mean(hdn * hdn, axis=-1, keepdims=True) - mean * mean   # single pass
    hn = (hdn - mean) * jax.lax.rsqrt(var + 1e-5) * g_ref[...] + be_ref[...]
    act = jnp.where(hn >= 0.0, hn, 0.01 * hn)

    # (4) Output projection (lane-dense V=128 -> unmasked full-vreg stores).
    logits = (jnp.dot(act.astype(wo_ref.dtype), wo_ref[...],
                      preferred_element_type=f32) + bo_ref[...])
    o_ref[...] = logits.astype(o_ref.dtype)


# ----------------------------------------------------------------------------
# Wrapper
# ----------------------------------------------------------------------------
def rnnlm_forward(params, tokens):
    """tokens: (B, T) int32 -> logits (B, T, V).  Eval mode (dropout = id)."""
    B, T = tokens.shape
    V, E = params["emb"].shape
    H = params["whh1"].shape[0]
    N = T * B

    # TODO(synk): the data-dependent embedding gather stays in plain JAX (not a
    # Pallas hot path); only the post-embedding network is fused in the kernel.
    flat_ids = tokens.T.reshape(-1)                    # (T*B,), row = t*B + b
    x = jnp.take(params["emb"], flat_ids, axis=0).astype(jnp.bfloat16)  # (N, E)

    inputs = (x,
              params["wih1"], params["whh1"], params["b1"],
              params["w2"], params["b2"],
              params["wd"], params["bd"], params["ln_g"], params["ln_b"],
              params["wo"], params["bo"])

    grid_spec = pltpu.PrefetchScalarGridSpec(
        num_scalar_prefetch=0,
        grid=(1,),
        in_specs=[pl.BlockSpec(a.shape, lambda i: (0, 0)) for a in inputs],
        out_specs=pl.BlockSpec((N, V), lambda i: (0, 0)),
        scratch_shapes=[
            pltpu.VMEM((N, 4 * H), jnp.float32),   # z: hoisted L1 input projection
            pltpu.VMEM((N, H), jnp.float32),       # y: L2 output slab
        ],
    )
    logits_flat = pl.pallas_call(
        functools.partial(_rnnlm_fused_kernel, batch=B),
        out_shape=jax.ShapeDtypeStruct((N, V), jnp.float32),
        grid_spec=grid_spec,
        compiler_params=pltpu.CompilerParams(
            dimension_semantics=("arbitrary",),
            vmem_limit_bytes=32 * 1024 * 1024),
    )(*inputs)

    # Time-major (T*B, V) -> (B, T, V).  Negligible at V=128; at production
    # vocab sizes tile over T and emit batch-major via the output index_map.
    return logits_flat.reshape(T, B, V).transpose(1, 0, 2)


# ----------------------------------------------------------------------------
# Parameter construction (deterministic, synthetic; rnn_layers=2, dnn_blocks=1,
# matching the module defaults).  A real SpeechBrain checkpoint loader must
# pre-transpose weights for x @ W, fold b = b_ih + b_hh, and build
# w2 = concat([W_ih2^T, W_hh2^T], axis=0).
# ----------------------------------------------------------------------------
def init_params(key, *, output_neurons, embedding_dim, rnn_neurons, dnn_neurons):
    V, E, H, Dd = output_neurons, embedding_dim, rnn_neurons, dnn_neurons
    keys = jax.random.split(key, 10)

    def nrm(k, shape, dtype=jnp.float32):
        return (0.1 * jax.random.normal(k, shape, jnp.float32)).astype(dtype)

    p = {}
    p["emb"] = nrm(keys[0], (V, E))
    # MXU operands in bf16 (f32 accumulate inside the kernel).
    p["wih1"] = nrm(keys[1], (E, 4 * H), jnp.bfloat16)
    p["whh1"] = nrm(keys[2], (H, 4 * H), jnp.bfloat16)
    p["b1"] = nrm(keys[3], (1, 4 * H))
    p["w2"] = nrm(keys[4], (2 * H, 4 * H), jnp.bfloat16)   # [W_ih2; W_hh2]
    p["b2"] = nrm(keys[5], (1, 4 * H))
    p["wd"] = nrm(keys[6], (H, Dd), jnp.bfloat16)
    p["bd"] = jnp.zeros((1, Dd), jnp.float32)
    p["ln_g"] = jnp.ones((1, Dd), jnp.float32)
    p["ln_b"] = jnp.zeros((1, Dd), jnp.float32)
    p["wo"] = nrm(keys[7], (Dd, V), jnp.bfloat16)
    p["bo"] = jnp.zeros((1, V), jnp.float32)
    return p


if __name__ == "__main__":
    # Small, module-consistent, TPU-layout-friendly sizes.
    OUTPUT_NEURONS = 128    # vocab == output layer width (lane-dense: 128)
    EMBEDDING_DIM = 64
    RNN_NEURONS = 128       # H = 128 -> gate slabs lane-aligned
    DNN_NEURONS = 128
    B, T = 8, 8             # B multiple of 8 -> sublane-aligned per-step slices

    key = jax.random.PRNGKey(0)
    pkey, tkey = jax.random.split(key)
    params = init_params(pkey,
                         output_neurons=OUTPUT_NEURONS,
                         embedding_dim=EMBEDDING_DIM,
                         rnn_neurons=RNN_NEURONS,
                         dnn_neurons=DNN_NEURONS)
    tokens = jax.random.randint(tkey, (B, T), 0, OUTPUT_NEURONS, jnp.int32)

    forward = jax.jit(rnnlm_forward)
    out = jax.block_until_ready(forward(params, tokens))

    assert out.shape == (B, T, OUTPUT_NEURONS), out.shape
    assert out.dtype == jnp.float32
    assert bool(jnp.all(jnp.isfinite(out)))
    print("KERNEL_OK")
</pallas_src>

<mosaic_0001>
module attributes {stable_mosaic.version = 11 : i64} {
  func.func @_rnnlm_fused_kernel(%arg0: i32, %arg1: memref<64x64xbf16, #tpu.memory_space<vmem>>, %arg2: memref<64x512xbf16, #tpu.memory_space<vmem>>, %arg3: memref<128x512xbf16, #tpu.memory_space<vmem>>, %arg4: memref<1x512xf32, #tpu.memory_space<vmem>>, %arg5: memref<256x512xbf16, #tpu.memory_space<vmem>>, %arg6: memref<1x512xf32, #tpu.memory_space<vmem>>, %arg7: memref<128x128xbf16, #tpu.memory_space<vmem>>, %arg8: memref<1x128xf32, #tpu.memory_space<vmem>>, %arg9: memref<1x128xf32, #tpu.memory_space<vmem>>, %arg10: memref<1x128xf32, #tpu.memory_space<vmem>>, %arg11: memref<128x128xbf16, #tpu.memory_space<vmem>>, %arg12: memref<1x128xf32, #tpu.memory_space<vmem>>, %arg13: memref<64x128xf32, #tpu.memory_space<vmem>>, %arg14: memref<64x512xf32, #tpu.memory_space<vmem>>, %arg15: memref<64x128xf32, #tpu.memory_space<vmem>>) attributes {dimension_semantics = [#tpu.dimension_semantics<arbitrary>], iteration_bounds = array<i64: 1>, scalar_prefetch = 0 : i64, scratch_operands = 2 : i64, tpu.core_type = #tpu.core_type<tc>, window_params = [{pipeline_mode = #tpu.pipeline_mode<synchronous>, transform_indices = @transform_0, window_bounds = array<i64: 64, 64>}, {pipeline_mode = #tpu.pipeline_mode<synchronous>, transform_indices = @transform_1, window_bounds = array<i64: 64, 512>}, {pipeline_mode = #tpu.pipeline_mode<synchronous>, transform_indices = @transform_2, window_bounds = array<i64: 128, 512>}, {pipeline_mode = #tpu.pipeline_mode<synchronous>, transform_indices = @transform_3, window_bounds = array<i64: 1, 512>}, {pipeline_mode = #tpu.pipeline_mode<synchronous>, transform_indices = @transform_4, window_bounds = array<i64: 256, 512>}, {pipeline_mode = #tpu.pipeline_mode<synchronous>, transform_indices = @transform_5, window_bounds = array<i64: 1, 512>}, {pipeline_mode = #tpu.pipeline_mode<synchronous>, transform_indices = @transform_6, window_bounds = array<i64: 128, 128>}, {pipeline_mode = #tpu.pipeline_mode<synchronous>, transform_indices = @transform_7, window_bounds = array<i64: 1, 128>}, {pipeline_mode = #tpu.pipeline_mode<synchronous>, transform_indices = @transform_8, window_bounds = array<i64: 1, 128>}, {pipeline_mode = #tpu.pipeline_mode<synchronous>, transform_indices = @transform_9, window_bounds = array<i64: 1, 128>}, {pipeline_mode = #tpu.pipeline_mode<synchronous>, transform_indices = @transform_10, window_bounds = array<i64: 128, 128>}, {pipeline_mode = #tpu.pipeline_mode<synchronous>, transform_indices = @transform_11, window_bounds = array<i64: 1, 128>}, {pipeline_mode = #tpu.pipeline_mode<synchronous>, transform_indices = @transform_12, window_bounds = array<i64: 64, 128>}]} {
    %c0 = arith.constant 0 : index
    %c0_0 = arith.constant 0 : index
    %0 = vector.load %arg1[%c0, %c0_0] : memref<64x64xbf16, #tpu.memory_space<vmem>>, vector<64x64xbf16>
    %c0_1 = arith.constant 0 : index
    %c0_2 = arith.constant 0 : index
    %1 = vector.load %arg2[%c0_1, %c0_2] : memref<64x512xbf16, #tpu.memory_space<vmem>>, vector<64x512xbf16>
    %cst = arith.constant dense<0.000000e+00> : vector<64x512xf32>
    %2 = tpu.matmul %0, %1, %cst {dimension_numbers = #tpu.dot_dimension_numbers<[1], [0], [0], [1], [0, 0, 1, 1], [], []>} : vector<64x64xbf16>, vector<64x512xbf16>, vector<64x512xf32> -> vector<64x512xf32>
    %c0_3 = arith.constant 0 : index
    %c0_4 = arith.constant 0 : index
    %3 = vector.load %arg4[%c0_3, %c0_4] : memref<1x512xf32, #tpu.memory_space<vmem>>, vector<1x512xf32>
    %4 = vector.broadcast %3 : vector<1x512xf32> to vector<64x512xf32>
    %5 = arith.addf %2, %4 : vector<64x512xf32>
    %c0_5 = arith.constant 0 : index
    %c0_6 = arith.constant 0 : index
    %6 = vector.load %arg14[%c0_5, %c0_6] : memref<64x512xf32, #tpu.memory_space<vmem>>, vector<64x512xf32>
    tpu.vector_store %arg14[%c0_5, %c0_6], %5 {strides = array<i32>} : memref<64x512xf32, #tpu.memory_space<vmem>>, vector<64x512xf32>,
    %cst_7 = arith.constant 0.000000e+00 : f32
    %7 = vector.broadcast %cst_7 : f32 to vector<8x128xf32>
    %c0_8 = arith.constant 0 : index
    %c0_9 = arith.constant 0 : index
    %8 = vector.load %arg14[%c0_8, %c0_9] : memref<64x512xf32, #tpu.memory_space<vmem>>, vector<8x512xf32>
    %9 = vector.extract_strided_slice %8 {offsets = [0, 0], sizes = [8, 128], strides = [1, 1]} : vector<8x512xf32> to vector<8x128xf32>
    %10 = arith.negf %9 : vector<8x128xf32>
    %11 = math.exp %10 : vector<8x128xf32>
    %cst_10 = arith.constant 1.000000e+00 : f32
    %12 = vector.broadcast %cst_10 : f32 to vector<8x128xf32>
    %13 = arith.addf %12, %11 : vector<8x128xf32>
    %14 = arith.divf %12, %13 : vector<8x128xf32>
    %15 = vector.extract_strided_slice %8 {offsets = [0, 128], sizes = [8, 128], strides = [1, 1]} : vector<8x512xf32> to vector<8x128xf32>
    %16 = arith.negf %15 : vector<8x128xf32>
    %17 = math.exp %16 : vector<8x128xf32>
    %cst_11 = arith.constant 1.000000e+00 : f32
    %18 = vector.broadcast %cst_11 : f32 to vector<8x128xf32>
    %19 = arith.addf %18, %17 : vector<8x128xf32>
    %20 = arith.divf %18, %19 : vector<8x128xf32>
    %21 = vector.extract_strided_slice %8 {offsets = [0, 256], sizes = [8, 128], strides = [1, 1]} : vector<8x512xf32> to vector<8x128xf32>
    %22 = math.tanh %21 : vector<8x128xf32>
    %23 = vector.extract_strided_slice %8 {offsets = [0, 384], sizes = [8, 128], strides = [1, 1]} : vector<8x512xf32> to vector<8x128xf32>
    %24 = arith.negf %23 : vector<8x128xf32>
    %25 = math.exp %24 : vector<8x128xf32>
    %cst_12 = arith.constant 1.000000e+00 : f32
    %26 = vector.broadcast %cst_12 : f32 to vector<8x128xf32>
    %27 = arith.addf %26, %25 : vector<8x128xf32>
    %28 = arith.divf %26, %27 : vector<8x128xf32>
    %29 = arith.mulf %20, %7 : vector<8x128xf32>
    %30 = arith.mulf %14, %22 : vector<8x128xf32>
    %31 = arith.addf %29, %30 : vector<8x128xf32>
    %32 = math.tanh %31 : vector<8x128xf32>
    %33 = arith.mulf %28, %32 : vector<8x128xf32>
    %34 = arith.truncf %33 : vector<8x128xf32> to vector<8x128xbf16>
    %cst_13 = arith.constant 0.000000e+00 : bf16
    %35 = vector.broadcast %cst_13 : bf16 to vector<8x128xbf16>
    %c1_i32 = arith.constant 1 : i32
    %c8_i32 = arith.constant 8 : i32
    %36 = arith.muli %c1_i32, %c8_i32 : i32
    %37 = tpu.assume_multiple %36, 8 : i32
    %38 = arith.index_cast %37 : i32 to index
    %c0_14 = arith.constant 0 : index
    %39 = vector.load %arg14[%38, %c0_14] : memref<64x512xf32, #tpu.memory_space<vmem>>, vector<8x512xf32>
    %c0_15 = arith.constant 0 : index
    %c0_16 = arith.constant 0 : index
    %40 = vector.load %arg3[%c0_15, %c0_16] : memref<128x512xbf16, #tpu.memory_space<vmem>>, vector<128x512xbf16>
    %cst_17 = arith.constant dense<0.000000e+00> : vector<8x512xf32>
    %41 = tpu.matmul %34, %40, %cst_17 {dimension_numbers = #tpu.dot_dimension_numbers<[1], [0], [0], [1], [0, 0, 1, 1], [], []>} : vector<8x128xbf16>, vector<128x512xbf16>, vector<8x512xf32> -> vector<8x512xf32>
    %42 = arith.addf %39, %41 : vector<8x512xf32>
    %43 = vector.extract_strided_slice %42 {offsets = [0, 0], sizes = [8, 128], strides = [1, 1]} : vector<8x512xf32> to vector<8x128xf32>
    %44 = arith.negf %43 : vector<8x128xf32>
    %45 = math.exp %44 : vector<8x128xf32>
    %cst_18 = arith.constant 1.000000e+00 : f32
    %46 = vector.broadcast %cst_18 : f32 to vector<8x128xf32>
    %47 = arith.addf %46, %45 : vector<8x128xf32>
    %48 = arith.divf %46, %47 : vector<8x128xf32>
    %49 = vector.extract_strided_slice %42 {offsets = [0, 128], sizes = [8, 128], strides = [1, 1]} : vector<8x512xf32> to vector<8x128xf32>
    %50 = arith.negf %49 : vector<8x128xf32>
    %51 = math.exp %50 : vector<8x128xf32>
    %cst_19 = arith.constant 1.000000e+00 : f32
    %52 = vector.broadcast %cst_19 : f32 to vector<8x128xf32>
    %53 = arith.addf %52, %51 : vector<8x128xf32>
    %54 = arith.divf %52, %53 : vector<8x128xf32>
    %55 = vector.extract_strided_slice %42 {offsets = [0, 256], sizes = [8, 128], strides = [1, 1]} : vector<8x512xf32> to vector<8x128xf32>
    %56 = math.tanh %55 : vector<8x128xf32>
    %57 = vector.extract_strided_slice %42 {offsets = [0, 384], sizes = [8, 128], strides = [1, 1]} : vector<8x512xf32> to vector<8x128xf32>
    %58 = arith.negf %57 : vector<8x128xf32>
    %59 = math.exp %58 : vector<8x128xf32>
    %cst_20 = arith.constant 1.000000e+00 : f32
    %60 = vector.broadcast %cst_20 : f32 to vector<8x128xf32>
    %61 = arith.addf %60, %59 : vector<8x128xf32>
    %62 = arith.divf %60, %61 : vector<8x128xf32>
    %63 = arith.mulf %54, %31 : vector<8x128xf32>
    %64 = arith.mulf %48, %56 : vector<8x128xf32>
    %65 = arith.addf %63, %64 : vector<8x128xf32>
    %66 = math.tanh %65 : vector<8x128xf32>
    %67 = arith.mulf %62, %66 : vector<8x128xf32>
    %68 = tpu.concatenate %34, %35 in 1 : vector<8x128xbf16>, vector<8x128xbf16> -> vector<8x256xbf16>
    %c0_21 = arith.constant 0 : index
    %c0_22 = arith.constant 0 : index
    %69 = vector.load %arg5[%c0_21, %c0_22] : memref<256x512xbf16, #tpu.memory_space<vmem>>, vector<256x512xbf16>
    %cst_23 = arith.constant dense<0.000000e+00> : vector<8x512xf32>
    %70 = tpu.matmul %68, %69, %cst_23 {dimension_numbers = #tpu.dot_dimension_numbers<[1], [0], [0], [1], [0, 0, 1, 1], [], []>} : vector<8x256xbf16>, vector<256x512xbf16>, vector<8x512xf32> -> vector<8x512xf32>
    %c0_24 = arith.constant 0 : index
    %c0_25 = arith.constant 0 : index
    %71 = vector.load %arg6[%c0_24, %c0_25] : memref<1x512xf32, #tpu.memory_space<vmem>>, vector<1x512xf32>
    %72 = vector.broadcast %71 : vector<1x512xf32> to vector<8x512xf32>
    %73 = arith.addf %70, %72 : vector<8x512xf32>
    %74 = vector.extract_strided_slice %73 {offsets = [0, 0], sizes = [8, 128], strides = [1, 1]} : vector<8x512xf32> to vector<8x128xf32>
    %75 = arith.negf %74 : vector<8x128xf32>
    %76 = math.exp %75 : vector<8x128xf32>
    %cst_26 = arith.constant 1.000000e+00 : f32
    %77 = vector.broadcast %cst_26 : f32 to vector<8x128xf32>
    %78 = arith.addf %77, %76 : vector<8x128xf32>
    %79 = arith.divf %77, %78 : vector<8x128xf32>
    %80 = vector.extract_strided_slice %73 {offsets = [0, 128], sizes = [8, 128], strides = [1, 1]} : vector<8x512xf32> to vector<8x128xf32>
    %81 = arith.negf %80 : vector<8x128xf32>
    %82 = math.exp %81 : vector<8x128xf32>
    %cst_27 = arith.constant 1.000000e+00 : f32
    %83 = vector.broadcast %cst_27 : f32 to vector<8x128xf32>
    %84 = arith.addf %83, %82 : vector<8x128xf32>
    %85 = arith.divf %83, %84 : vector<8x128xf32>
    %86 = vector.extract_strided_slice %73 {offsets = [0, 256], sizes = [8, 128], strides = [1, 1]} : vector<8x512xf32> to vector<8x128xf32>
    %87 = math.tanh %86 : vector<8x128xf32>
    %88 = vector.extract_strided_slice %73 {offsets = [0, 384], sizes = [8, 128], strides = [1, 1]} : vector<8x512xf32> to vector<8x128xf32>
    %89 = arith.negf %88 : vector<8x128xf32>
    %90 = math.exp %89 : vector<8x128xf32>
    %cst_28 = arith.constant 1.000000e+00 : f32
    %91 = vector.broadcast %cst_28 : f32 to vector<8x128xf32>
    %92 = arith.addf %91, %90 : vector<8x128xf32>
    %93 = arith.divf %91, %92 : vector<8x128xf32>
    %94 = arith.mulf %85, %7 : vector<8x128xf32>
    %95 = arith.mulf %79, %87 : vector<8x128xf32>
    %96 = arith.addf %94, %95 : vector<8x128xf32>
    %97 = math.tanh %96 : vector<8x128xf32>
    %98 = arith.mulf %93, %97 : vector<8x128xf32>
    %c1_i32_29 = arith.constant 1 : i32
    %99 = arith.subi %c1_i32, %c1_i32_29 : i32
    %c8_i32_30 = arith.constant 8 : i32
    %100 = arith.muli %99, %c8_i32_30 : i32
    %101 = tpu.assume_multiple %100, 8 : i32
    %102 = arith.index_cast %101 : i32 to index
    %c0_31 = arith.constant 0 : index
    %103 = vector.load %arg15[%102, %c0_31] : memref<64x128xf32, #tpu.memory_space<vmem>>, vector<8x128xf32>
    tpu.vector_store %arg15[%102, %c0_31], %98 {strides = array<i32>} : memref<64x128xf32, #tpu.memory_space<vmem>>, vector<8x128xf32>,
    %104 = arith.truncf %67 : vector<8x128xf32> to vector<8x128xbf16>
    %105 = arith.truncf %98 : vector<8x128xf32> to vector<8x128xbf16>
    %c2_i32 = arith.constant 2 : i32
    %c8_i32_32 = arith.constant 8 : i32
    %106 = arith.muli %c2_i32, %c8_i32_32 : i32
    %107 = tpu.assume_multiple %106, 8 : i32
    %108 = arith.index_cast %107 : i32 to index
    %c0_33 = arith.constant 0 : index
    %109 = vector.load %arg14[%108, %c0_33] : memref<64x512xf32, #tpu.memory_space<vmem>>, vector<8x512xf32>
    %c0_34 = arith.constant 0 : index
    %c0_35 = arith.constant 0 : index
    %110 = vector.load %arg3[%c0_34, %c0_35] : memref<128x512xbf16, #tpu.memory_space<vmem>>, vector<128x512xbf16>
    %cst_36 = arith.constant dense<0.000000e+00> : vector<8x512xf32>
    %111 = tpu.matmul %104, %110, %cst_36 {dimension_numbers = #tpu.dot_dimension_numbers<[1], [0], [0], [1], [0, 0, 1, 1], [], []>} : vector<8x128xbf16>, vector<128x512xbf16>, vector<8x512xf32> -> vector<8x512xf32>
    %112 = arith.addf %109, %111 : vector<8x512xf32>
    %113 = vector.extract_strided_slice %112 {offsets = [0, 0], sizes = [8, 128], strides = [1, 1]} : vector<8x512xf32> to vector<8x128xf32>
    %114 = arith.negf %113 : vector<8x128xf32>
    %115 = math.exp %114 : vector<8x128xf32>
    %cst_37 = arith.constant 1.000000e+00 : f32
    %116 = vector.broadcast %cst_37 : f32 to vector<8x128xf32>
    %117 = arith.addf %116, %115 : vector<8x128xf32>
    %118 = arith.divf %116, %117 : vector<8x128xf32>
    %119 = vector.extract_strided_slice %112 {offsets = [0, 128], sizes = [8, 128], strides = [1, 1]} : vector<8x512xf32> to vector<8x128xf32>
    %120 = arith.negf %119 : vector<8x128xf32>
    %121 = math.exp %120 : vector<8x128xf32>
    %cst_38 = arith.constant 1.000000e+00 : f32
    %122 = vector.broadcast %cst_38 : f32 to vector<8x128xf32>
    %123 = arith.addf %122, %121 : vector<8x128xf32>
    %124 = arith.divf %122, %123 : vector<8x128xf32>
    %125 = vector.extract_strided_slice %112 {offsets = [0, 256], sizes = [8, 128], strides = [1, 1]} : vector<8x512xf32> to vector<8x128xf32>
    %126 = math.tanh %125 : vector<8x128xf32>
    %127 = vector.extract_strided_slice %112 {offsets = [0, 384], sizes = [8, 128], strides = [1, 1]} : vector<8x512xf32> to vector<8x128xf32>
    %128 = arith.negf %127 : vector<8x128xf32>
    %129 = math.exp %128 : vector<8x128xf32>
    %cst_39 = arith.constant 1.000000e+00 : f32
    %130 = vector.broadcast %cst_39 : f32 to vector<8x128xf32>
    %131 = arith.addf %130, %129 : vector<8x128xf32>
    %132 = arith.divf %130, %131 : vector<8x128xf32>
    %133 = arith.mulf %124, %65 : vector<8x128xf32>
    %134 = arith.mulf %118, %126 : vector<8x128xf32>
    %135 = arith.addf %133, %134 : vector<8x128xf32>
    %136 = math.tanh %135 : vector<8x128xf32>
    %137 = arith.mulf %132, %136 : vector<8x128xf32>
    %138 = tpu.concatenate %104, %105 in 1 : vector<8x128xbf16>, vector<8x128xbf16> -> vector<8x256xbf16>
    %c0_40 = arith.constant 0 : index
    %c0_41 = arith.constant 0 : index
    %139 = vector.load %arg5[%c0_40, %c0_41] : memref<256x512xbf16, #tpu.memory_space<vmem>>, vector<256x512xbf16>
    %cst_42 = arith.constant dense<0.000000e+00> : vector<8x512xf32>
    %140 = tpu.matmul %138, %139, %cst_42 {dimension_numbers = #tpu.dot_dimension_numbers<[1], [0], [0], [1], [0, 0, 1, 1], [], []>} : vector<8x256xbf16>, vector<256x512xbf16>, vector<8x512xf32> -> vector<8x512xf32>
    %c0_43 = arith.constant 0 : index
    %c0_44 = arith.constant 0 : index
    %141 = vector.load %arg6[%c0_43, %c0_44] : memref<1x512xf32, #tpu.memory_space<vmem>>, vector<1x512xf32>
    %142 = vector.broadcast %141 : vector<1x512xf32> to vector<8x512xf32>
    %143 = arith.addf %140, %142 : vector<8x512xf32>
    %144 = vector.extract_strided_slice %143 {offsets = [0, 0], sizes = [8, 128], strides = [1, 1]} : vector<8x512xf32> to vector<8x128xf32>
    %145 = arith.negf %144 : vector<8x128xf32>
    %146 = math.exp %145 : vector<8x128xf32>
    %cst_45 = arith.constant 1.000000e+00 : f32
    %147 = vector.broadcast %cst_45 : f32 to vector<8x128xf32>
    %148 = arith.addf %147, %146 : vector<8x128xf32>
    %149 = arith.divf %147, %148 : vector<8x128xf32>
    %150 = vector.extract_strided_slice %143 {offsets = [0, 128], sizes = [8, 128], strides = [1, 1]} : vector<8x512xf32> to vector<8x128xf32>
    %151 = arith.negf %150 : vector<8x128xf32>
    %152 = math.exp %151 : vector<8x128xf32>
    %cst_46 = arith.constant 1.000000e+00 : f32
    %153 = vector.broadcast %cst_46 : f32 to vector<8x128xf32>
    %154 = arith.addf %153, %152 : vector<8x128xf32>
    %155 = arith.divf %153, %154 : vector<8x128xf32>
    %156 = vector.extract_strided_slice %143 {offsets = [0, 256], sizes = [8, 128], strides = [1, 1]} : vector<8x512xf32> to vector<8x128xf32>
    %157 = math.tanh %156 : vector<8x128xf32>
    %158 = vector.extract_strided_slice %143 {offsets = [0, 384], sizes = [8, 128], strides = [1, 1]} : vector<8x512xf32> to vector<8x128xf32>
    %159 = arith.negf %158 : vector<8x128xf32>
    %160 = math.exp %159 : vector<8x128xf32>
    %cst_47 = arith.constant 1.000000e+00 : f32
    %161 = vector.broadcast %cst_47 : f32 to vector<8x128xf32>
    %162 = arith.addf %161, %160 : vector<8x128xf32>
    %163 = arith.divf %161, %162 : vector<8x128xf32>
    %164 = arith.mulf %155, %96 : vector<8x128xf32>
    %165 = arith.mulf %149, %157 : vector<8x128xf32>
    %166 = arith.addf %164, %165 : vector<8x128xf32>
    %167 = math.tanh %166 : vector<8x128xf32>
    %168 = arith.mulf %163, %167 : vector<8x128xf32>
    %c1_i32_48 = arith.constant 1 : i32
    %169 = arith.subi %c2_i32, %c1_i32_48 : i32
    %c8_i32_49 = arith.constant 8 : i32
    %170 = arith.muli %169, %c8_i32_49 : i32
    %171 = tpu.assume_multiple %170, 8 : i32
    %172 = arith.index_cast %171 : i32 to index
    %c0_50 = arith.constant 0 : index
    %173 = vector.load %arg15[%172, %c0_50] : memref<64x128xf32, #tpu.memory_space<vmem>>, vector<8x128xf32>
    tpu.vector_store %arg15[%172, %c0_50], %168 {strides = array<i32>} : memref<64x128xf32, #tpu.memory_space<vmem>>, vector<8x128xf32>,
    %174 = arith.truncf %137 : vector<8x128xf32> to vector<8x128xbf16>
    %175 = arith.truncf %168 : vector<8x128xf32> to vector<8x128xbf16>
    %c3_i32 = arith.constant 3 : i32
    %c8_i32_51 = arith.constant 8 : i32
    %176 = arith.muli %c3_i32, %c8_i32_51 : i32
    %177 = tpu.assume_multiple %176, 8 : i32
    %178 = arith.index_cast %177 : i32 to index
    %c0_52 = arith.constant 0 : index
    %179 = vector.load %arg14[%178, %c0_52] : memref<64x512xf32, #tpu.memory_space<vmem>>, vector<8x512xf32>
    %c0_53 = arith.constant 0 : index
    %c0_54 = arith.constant 0 : index
    %180 = vector.load %arg3[%c0_53, %c0_54] : memref<128x512xbf16, #tpu.memory_space<vmem>>, vector<128x512xbf16>
    %cst_55 = arith.constant dense<0.000000e+00> : vector<8x512xf32>
    %181 = tpu.matmul %174, %180, %cst_55 {dimension_numbers = #tpu.dot_dimension_numbers<[1], [0], [0], [1], [0, 0, 1, 1], [], []>} : vector<8x128xbf16>, vector<128x512xbf16>, vector<8x512xf32> -> vector<8x512xf32>
    %182 = arith.addf %179, %181 : vector<8x512xf32>
    %183 = vector.extract_strided_slice %182 {offsets = [0, 0], sizes = [8, 128], strides = [1, 1]} : vector<8x512xf32> to vector<8x128xf32>
    %184 = arith.negf %183 : vector<8x128xf32>
    %185 = math.exp %184 : vector<8x128xf32>
    %cst_56 = arith.constant 1.000000e+00 : f32
    %186 = vector.broadcast %cst_56 : f32 to vector<8x128xf32>
    %187 = arith.addf %186, %185 : vector<8x128xf32>
    %188 = arith.divf %186, %187 : vector<8x128xf32>
    %189 = vector.extract_strided_slice %182 {offsets = [0, 128], sizes = [8, 128], strides = [1, 1]} : vector<8x512xf32> to vector<8x128xf32>
    %190 = arith.negf %189 : vector<8x128xf32>
    %191 = math.exp %190 : vector<8x128xf32>
    %cst_57 = arith.constant 1.000000e+00 : f32
    %192 = vector.broadcast %cst_57 : f32 to vector<8x128xf32>
    %193 = arith.addf %192, %191 : vector<8x128xf32>
    %194 = arith.divf %192, %193 : vector<8x128xf32>
    %195 = vector.extract_strided_slice %182 {offsets = [0, 256], sizes = [8, 128], strides = [1, 1]} : vector<8x512xf32> to vector<8x128xf32>
    %196 = math.tanh %195 : vector<8x128xf32>
    %197 = vector.extract_strided_slice %182 {offsets = [0, 384], sizes = [8, 128], strides = [1, 1]} : vector<8x512xf32> to vector<8x128xf32>
    %198 = arith.negf %197 : vector<8x128xf32>
    %199 = math.exp %198 : vector<8x128xf32>
    %cst_58 = arith.constant 1.000000e+00 : f32
    %200 = vector.broadcast %cst_58 : f32 to vector<8x128xf32>
    %201 = arith.addf %200, %199 : vector<8x128xf32>
    %202 = arith.divf %200, %201 : vector<8x128xf32>
    %203 = arith.mulf %194, %135 : vector<8x128xf32>
    %204 = arith.mulf %188, %196 : vector<8x128xf32>
    %205 = arith.addf %203, %204 : vector<8x128xf32>
    %206 = math.tanh %205 : vector<8x128xf32>
    %207 = arith.mulf %202, %206 : vector<8x128xf32>
    %208 = tpu.concatenate %174, %175 in 1 : vector<8x128xbf16>, vector<8x128xbf16> -> vector<8x256xbf16>
    %c0_59 = arith.constant 0 : index
    %c0_60 = arith.constant 0 : index
    %209 = vector.load %arg5[%c0_59, %c0_60] : memref<256x512xbf16, #tpu.memory_space<vmem>>, vector<256x512xbf16>
    %cst_61 = arith.constant dense<0.000000e+00> : vector<8x512xf32>
    %210 = tpu.matmul %208, %209, %cst_61 {dimension_numbers = #tpu.dot_dimension_numbers<[1], [0], [0], [1], [0, 0, 1, 1], [], []>} : vector<8x256xbf16>, vector<256x512xbf16>, vector<8x512xf32> -> vector<8x512xf32>
    %c0_62 = arith.constant 0 : index
    %c0_63 = arith.constant 0 : index
    %211 = vector.load %arg6[%c0_62, %c0_63] : memref<1x512xf32, #tpu.memory_space<vmem>>, vector<1x512xf32>
    %212 = vector.broadcast %211 : vector<1x512xf32> to vector<8x512xf32>
    %213 = arith.addf %210, %212 : vector<8x512xf32>
    %214 = vector.extract_strided_slice %213 {offsets = [0, 0], sizes = [8, 128], strides = [1, 1]} : vector<8x512xf32> to vector<8x128xf32>
    %215 = arith.negf %214 : vector<8x128xf32>
    %216 = math.exp %215 : vector<8x128xf32>
    %cst_64 = arith.constant 1.000000e+00 : f32
    %217 = vector.broadcast %cst_64 : f32 to vector<8x128xf32>
    %218 = arith.addf %217, %216 : vector<8x128xf32>
    %219 = arith.divf %217, %218 : vector<8x128xf32>
    %220 = vector.extract_strided_slice %213 {offsets = [0, 128], sizes = [8, 128], strides = [1, 1]} : vector<8x512xf32> to vector<8x128xf32>
    %221 = arith.negf %220 : vector<8x128xf32>
    %222 = math.exp %221 : vector<8x128xf32>
    %cst_65 = arith.constant 1.000000e+00 : f32
    %223 = vector.broadcast %cst_65 : f32 to vector<8x128xf32>
    %224 = arith.addf %223, %222 : vector<8x128xf32>
    %225 = arith.divf %223, %224 : vector<8x128xf32>
    %226 = vector.extract_strided_slice %213 {offsets = [0, 256], sizes = [8, 128], strides = [1, 1]} : vector<8x512xf32> to vector<8x128xf32>
    %227 = math.tanh %226 : vector<8x128xf32>
    %228 = vector.extract_strided_slice %213 {offsets = [0, 384], sizes = [8, 128], strides = [1, 1]} : vector<8x512xf32> to vector<8x128xf32>
    %229 = arith.negf %228 : vector<8x128xf32>
    %230 = math.exp %229 : vector<8x128xf32>
    %cst_66 = arith.constant 1.000000e+00 : f32
    %231 = vector.broadcast %cst_66 : f32 to vector<8x128xf32>
    %232 = arith.addf %231, %230 : vector<8x128xf32>
    %233 = arith.divf %231, %232 : vector<8x128xf32>
    %234 = arith.mulf %225, %166 : vector<8x128xf32>
    %235 = arith.mulf %219, %227 : vector<8x128xf32>
    %236 = arith.addf %234, %235 : vector<8x128xf32>
    %237 = math.tanh %236 : vector<8x128xf32>
    %238 = arith.mulf %233, %237 : vector<8x128xf32>
    %c1_i32_67 = arith.constant 1 : i32
    %239 = arith.subi %c3_i32, %c1_i32_67 : i32
    %c8_i32_68 = arith.constant 8 : i32
    %240 = arith.muli %239, %c8_i32_68 : i32
    %241 = tpu.assume_multiple %240, 8 : i32
    %242 = arith.index_cast %241 : i32 to index
    %c0_69 = arith.constant 0 : index
    %243 = vector.load %arg15[%242, %c0_69] : memref<64x128xf32, #tpu.memory_space<vmem>>, vector<8x128xf32>
    tpu.vector_store %arg15[%242, %c0_69], %238 {strides = array<i32>} : memref<64x128xf32, #tpu.memory_space<vmem>>, vector<8x128xf32>,
    %244 = arith.truncf %207 : vector<8x128xf32> to vector<8x128xbf16>
    %245 = arith.truncf %238 : vector<8x128xf32> to vector<8x128xbf16>
    %c4_i32 = arith.constant 4 : i32
    %c8_i32_70 = arith.constant 8 : i32
    %246 = arith.muli %c4_i32, %c8_i32_70 : i32
    %247 = tpu.assume_multiple %246, 8 : i32
    %248 = arith.index_cast %247 : i32 to index
    %c0_71 = arith.constant 0 : index
    %249 = vector.load %arg14[%248, %c0_71] : memref<64x512xf32, #tpu.memory_space<vmem>>, vector<8x512xf32>
    %c0_72 = arith.constant 0 : index
    %c0_73 = arith.constant 0 : index
    %250 = vector.load %arg3[%c0_72, %c0_73] : memref<128x512xbf16, #tpu.memory_space<vmem>>, vector<128x512xbf16>
    %cst_74 = arith.constant dense<0.000000e+00> : vector<8x512xf32>
    %251 = tpu.matmul %244, %250, %cst_74 {dimension_numbers = #tpu.dot_dimension_numbers<[1], [0], [0], [1], [0, 0, 1, 1], [], []>} : vector<8x128xbf16>, vector<128x512xbf16>, vector<8x512xf32> -> vector<8x512xf32>
    %252 = arith.addf %249, %251 : vector<8x512xf32>
    %253 = vector.extract_strided_slice %252 {offsets = [0, 0], sizes = [8, 128], strides = [1, 1]} : vector<8x512xf32> to vector<8x128xf32>
    %254 = arith.negf %253 : vector<8x128xf32>
    %255 = math.exp %254 : vector<8x128xf32>
    %cst_75 = arith.constant 1.000000e+00 : f32
    %256 = vector.broadcast %cst_75 : f32 to vector<8x128xf32>
    %257 = arith.addf %256, %255 : vector<8x128xf32>
    %258 = arith.divf %256, %257 : vector<8x128xf32>
    %259 = vector.extract_strided_slice %252 {offsets = [0, 128], sizes = [8, 128], strides = [1, 1]} : vector<8x512xf32> to vector<8x128xf32>
    %260 = arith.negf %259 : vector<8x128xf32>
    %261 = math.exp %260 : vector<8x128xf32>
    %cst_76 = arith.constant 1.000000e+00 : f32
    %262 = vector.broadcast %cst_76 : f32 to vector<8x128xf32>
    %263 = arith.addf %262, %261 : vector<8x128xf32>
    %264 = arith.divf %262, %263 : vector<8x128xf32>
    %265 = vector.extract_strided_slice %252 {offsets = [0, 256], sizes = [8, 128], strides = [1, 1]} : vector<8x512xf32> to vector<8x128xf32>
    %266 = math.tanh %265 : vector<8x128xf32>
    %267 = vector.extract_strided_slice %252 {offsets = [0, 384], sizes = [8, 128], strides = [1, 1]} : vector<8x512xf32> to vector<8x128xf32>
    %268 = arith.negf %267 : vector<8x128xf32>
    %269 = math.exp %268 : vector<8x128xf32>
    %cst_77 = arith.constant 1.000000e+00 : f32
    %270 = vector.broadcast %cst_77 : f32 to vector<8x128xf32>
    %271 = arith.addf %270, %269 : vector<8x128xf32>
    %272 = arith.divf %270, %271 : vector<8x128xf32>
    %273 = arith.mulf %264, %205 : vector<8x128xf32>
    %274 = arith.mulf %258, %266 : vector<8x128xf32>
    %275 = arith.addf %273, %274 : vector<8x128xf32>
    %276 = math.tanh %275 : vector<8x128xf32>
    %277 = arith.mulf %272, %276 : vector<8x128xf32>
    %278 = tpu.concatenate %244, %245 in 1 : vector<8x128xbf16>, vector<8x128xbf16> -> vector<8x256xbf16>
    %c0_78 = arith.constant 0 : index
    %c0_79 = arith.constant 0 : index
    %279 = vector.load %arg5[%c0_78, %c0_79] : memref<256x512xbf16, #tpu.memory_space<vmem>>, vector<256x512xbf16>
    %cst_80 = arith.constant dense<0.000000e+00> : vector<8x512xf32>
    %280 = tpu.matmul %278, %279, %cst_80 {dimension_numbers = #tpu.dot_dimension_numbers<[1], [0], [0], [1], [0, 0, 1, 1], [], []>} : vector<8x256xbf16>, vector<256x512xbf16>, vector<8x512xf32> -> vector<8x512xf32>
    %c0_81 = arith.constant 0 : index
    %c0_82 = arith.constant 0 : index
    %281 = vector.load %arg6[%c0_81, %c0_82] : memref<1x512xf32, #tpu.memory_space<vmem>>, vector<1x512xf32>
    %282 = vector.broadcast %281 : vector<1x512xf32> to vector<8x512xf32>
    %283 = arith.addf %280, %282 : vector<8x512xf32>
    %284 = vector.extract_strided_slice %283 {offsets = [0, 0], sizes = [8, 128], strides = [1, 1]} : vector<8x512xf32> to vector<8x128xf32>
    %285 = arith.negf %284 : vector<8x128xf32>
    %286 = math.exp %285 : vector<8x128xf32>
    %cst_83 = arith.constant 1.000000e+00 : f32
    %287 = vector.broadcast %cst_83 : f32 to vector<8x128xf32>
    %288 = arith.addf %287, %286 : vector<8x128xf32>
    %289 = arith.divf %287, %288 : vector<8x128xf32>
    %290 = vector.extract_strided_slice %283 {offsets = [0, 128], sizes = [8, 128], strides = [1, 1]} : vector<8x512xf32> to vector<8x128xf32>
    %291 = arith.negf %290 : vector<8x128xf32>
    %292 = math.exp %291 : vector<8x128xf32>
    %cst_84 = arith.constant 1.000000e+00 : f32
    %293 = vector.broadcast %cst_84 : f32 to vector<8x128xf32>
    %294 = arith.addf %293, %292 : vector<8x128xf32>
    %295 = arith.divf %293, %294 : vector<8x128xf32>
    %296 = vector.extract_strided_slice %283 {offsets = [0, 256], sizes = [8, 128], strides = [1, 1]} : vector<8x512xf32> to vector<8x128xf32>
    %297 = math.tanh %296 : vector<8x128xf32>
    %298 = vector.extract_strided_slice %283 {offsets = [0, 384], sizes = [8, 128], strides = [1, 1]} : vector<8x512xf32> to vector<8x128xf32>
    %299 = arith.negf %298 : vector<8x128xf32>
    %300 = math.exp %299 : vector<8x128xf32>
    %cst_85 = arith.constant 1.000000e+00 : f32
    %301 = vector.broadcast %cst_85 : f32 to vector<8x128xf32>
    %302 = arith.addf %301, %300 : vector<8x128xf32>
    %303 = arith.divf %301, %302 : vector<8x128xf32>
    %304 = arith.mulf %295, %236 : vector<8x128xf32>
    %305 = arith.mulf %289, %297 : vector<8x128xf32>
    %306 = arith.addf %304, %305 : vector<8x128xf32>
    %307 = math.tanh %306 : vector<8x128xf32>
    %308 = arith.mulf %303, %307 : vector<8x128xf32>
    %c1_i32_86 = arith.constant 1 : i32
    %309 = arith.subi %c4_i32, %c1_i32_86 : i32
    %c8_i32_87 = arith.constant 8 : i32
    %310 = arith.muli %309, %c8_i32_87 : i32
    %311 = tpu.assume_multiple %310, 8 : i32
    %312 = arith.index_cast %311 : i32 to index
    %c0_88 = arith.constant 0 : index
    %313 = vector.load %arg15[%312, %c0_88] : memref<64x128xf32, #tpu.memory_space<vmem>>, vector<8x128xf32>
    tpu.vector_store %arg15[%312, %c0_88], %308 {strides = array<i32>} : memref<64x128xf32, #tpu.memory_space<vmem>>, vector<8x128xf32>,
    %314 = arith.truncf %277 : vector<8x128xf32> to vector<8x128xbf16>
    %315 = arith.truncf %308 : vector<8x128xf32> to vector<8x128xbf16>
    %c5_i32 = arith.constant 5 : i32
    %c8_i32_89 = arith.constant 8 : i32
    %316 = arith.muli %c5_i32, %c8_i32_89 : i32
    %317 = tpu.assume_multiple %316, 8 : i32
    %318 = arith.index_cast %317 : i32 to index
    %c0_90 = arith.constant 0 : index
    %319 = vector.load %arg14[%318, %c0_90] : memref<64x512xf32, #tpu.memory_space<vmem>>, vector<8x512xf32>
    %c0_91 = arith.constant 0 : index
    %c0_92 = arith.constant 0 : index
    %320 = vector.load %arg3[%c0_91, %c0_92] : memref<128x512xbf16, #tpu.memory_space<vmem>>, vector<128x512xbf16>
    %cst_93 = arith.constant dense<0.000000e+00> : vector<8x512xf32>
    %321 = tpu.matmul %314, %320, %cst_93 {dimension_numbers = #tpu.dot_dimension_numbers<[1], [0], [0], [1], [0, 0, 1, 1], [], []>} : vector<8x128xbf16>, vector<128x512xbf16>, vector<8x512xf32> -> vector<8x512xf32>
    %322 = arith.addf %319, %321 : vector<8x512xf32>
    %323 = vector.extract_strided_slice %322 {offsets = [0, 0], sizes = [8, 128], strides = [1, 1]} : vector<8x512xf32> to vector<8x128xf32>
    %324 = arith.negf %323 : vector<8x128xf32>
    %325 = math.exp %324 : vector<8x128xf32>
    %cst_94 = arith.constant 1.000000e+00 : f32
    %326 = vector.broadcast %cst_94 : f32 to vector<8x128xf32>
    %327 = arith.addf %326, %325 : vector<8x128xf32>
    %328 = arith.divf %326, %327 : vector<8x128xf32>
    %329 = vector.extract_strided_slice %322 {offsets = [0, 128], sizes = [8, 128], strides = [1, 1]} : vector<8x512xf32> to vector<8x128xf32>
    %330 = arith.negf %329 : vector<8x128xf32>
    %331 = math.exp %330 : vector<8x128xf32>
    %cst_95 = arith.constant 1.000000e+00 : f32
    %332 = vector.broadcast %cst_95 : f32 to vector<8x128xf32>
    %333 = arith.addf %332, %331 : vector<8x128xf32>
    %334 = arith.divf %332, %333 : vector<8x128xf32>
    %335 = vector.extract_strided_slice %322 {offsets = [0, 256], sizes = [8, 128], strides = [1, 1]} : vector<8x512xf32> to vector<8x128xf32>
    %336 = math.tanh %335 : vector<8x128xf32>
    %337 = vector.extract_strided_slice %322 {offsets = [0, 384], sizes = [8, 128], strides = [1, 1]} : vector<8x512xf32> to vector<8x128xf32>
    %338 = arith.negf %337 : vector<8x128xf32>
    %339 = math.exp %338 : vector<8x128xf32>
    %cst_96 = arith.constant 1.000000e+00 : f32
    %340 = vector.broadcast %cst_96 : f32 to vector<8x128xf32>
    %341 = arith.addf %340, %339 : vector<8x128xf32>
    %342 = arith.divf %340, %341 : vector<8x128xf32>
    %343 = arith.mulf %334, %275 : vector<8x128xf32>
    %344 = arith.mulf %328, %336 : vector<8x128xf32>
    %345 = arith.addf %343, %344 : vector<8x128xf32>
    %346 = math.tanh %345 : vector<8x128xf32>
    %347 = arith.mulf %342, %346 : vector<8x128xf32>
    %348 = tpu.concatenate %314, %315 in 1 : vector<8x128xbf16>, vector<8x128xbf16> -> vector<8x256xbf16>
    %c0_97 = arith.constant 0 : index
    %c0_98 = arith.constant 0 : index
    %349 = vector.load %arg5[%c0_97, %c0_98] : memref<256x512xbf16, #tpu.memory_space<vmem>>, vector<256x512xbf16>
    %cst_99 = arith.constant dense<0.000000e+00> : vector<8x512xf32>
    %350 = tpu.matmul %348, %349, %cst_99 {dimension_numbers = #tpu.dot_dimension_numbers<[1], [0], [0], [1], [0, 0, 1, 1], [], []>} : vector<8x256xbf16>, vector<256x512xbf16>, vector<8x512xf32> -> vector<8x512xf32>
    %c0_100 = arith.constant 0 : index
    %c0_101 = arith.constant 0 : index
    %351 = vector.load %arg6[%c0_100, %c0_101] : memref<1x512xf32, #tpu.memory_space<vmem>>, vector<1x512xf32>
    %352 = vector.broadcast %351 : vector<1x512xf32> to vector<8x512xf32>
    %353 = arith.addf %350, %352 : vector<8x512xf32>
    %354 = vector.extract_strided_slice %353 {offsets = [0, 0], sizes = [8, 128], strides = [1, 1]} : vector<8x512xf32> to vector<8x128xf32>
    %355 = arith.negf %354 : vector<8x128xf32>
    %356 = math.exp %355 : vector<8x128xf32>
    %cst_102 = arith.constant 1.000000e+00 : f32
    %357 = vector.broadcast %cst_102 : f32 to vector<8x128xf32>
    %358 = arith.addf %357, %356 : vector<8x128xf32>
    %359 = arith.divf %357, %358 : vector<8x128xf32>
    %360 = vector.extract_strided_slice %353 {offsets = [0, 128], sizes = [8, 128], strides = [1, 1]} : vector<8x512xf32> to vector<8x128xf32>
    %361 = arith.negf %360 : vector<8x128xf32>
    %362 = math.exp %361 : vector<8x128xf32>
    %cst_103 = arith.constant 1.000000e+00 : f32
    %363 = vector.broadcast %cst_103 : f32 to vector<8x128xf32>
    %364 = arith.addf %363, %362 : vector<8x128xf32>
    %365 = arith.divf %363, %364 : vector<8x128xf32>
    %366 = vector.extract_strided_slice %353 {offsets = [0, 256], sizes = [8, 128], strides = [1, 1]} : vector<8x512xf32> to vector<8x128xf32>
    %367 = math.tanh %366 : vector<8x128xf32>
    %368 = vector.extract_strided_slice %353 {offsets = [0, 384], sizes = [8, 128], strides = [1, 1]} : vector<8x512xf32> to vector<8x128xf32>
    %369 = arith.negf %368 : vector<8x128xf32>
    %370 = math.exp %369 : vector<8x128xf32>
    %cst_104 = arith.constant 1.000000e+00 : f32
    %371 = vector.broadcast %cst_104 : f32 to vector<8x128xf32>
    %372 = arith.addf %371, %370 : vector<8x128xf32>
    %373 = arith.divf %371, %372 : vector<8x128xf32>
    %374 = arith.mulf %365, %306 : vector<8x128xf32>
    %375 = arith.mulf %359, %367 : vector<8x128xf32>
    %376 = arith.addf %374, %375 : vector<8x128xf32>
    %377 = math.tanh %376 : vector<8x128xf32>
    %378 = arith.mulf %373, %377 : vector<8x128xf32>
    %c1_i32_105 = arith.constant 1 : i32
    %379 = arith.subi %c5_i32, %c1_i32_105 : i32
    %c8_i32_106 = arith.constant 8 : i32
    %380 = arith.muli %379, %c8_i32_106 : i32
    %381 = tpu.assume_multiple %380, 8 : i32
    %382 = arith.index_cast %381 : i32 to index
    %c0_107 = arith.constant 0 : index
    %383 = vector.load %arg15[%382, %c0_107] : memref<64x128xf32, #tpu.memory_space<vmem>>, vector<8x128xf32>
    tpu.vector_store %arg15[%382, %c0_107], %378 {strides = array<i32>} : memref<64x128xf32, #tpu.memory_space<vmem>>, vector<8x128xf32>,
    %384 = arith.truncf %347 : vector<8x128xf32> to vector<8x128xbf16>
    %385 = arith.truncf %378 : vector<8x128xf32> to vector<8x128xbf16>
    %c6_i32 = arith.constant 6 : i32
    %c8_i32_108 = arith.constant 8 : i32
    %386 = arith.muli %c6_i32, %c8_i32_108 : i32
    %387 = tpu.assume_multiple %386, 8 : i32
    %388 = arith.index_cast %387 : i32 to index
    %c0_109 = arith.constant 0 : index
    %389 = vector.load %arg14[%388, %c0_109] : memref<64x512xf32, #tpu.memory_space<vmem>>, vector<8x512xf32>
    %c0_110 = arith.constant 0 : index
    %c0_111 = arith.constant 0 : index
    %390 = vector.load %arg3[%c0_110, %c0_111] : memref<128x512xbf16, #tpu.memory_space<vmem>>, vector<128x512xbf16>
    %cst_112 = arith.constant dense<0.000000e+00> : vector<8x512xf32>
    %391 = tpu.matmul %384, %390, %cst_112 {dimension_numbers = #tpu.dot_dimension_numbers<[1], [0], [0], [1], [0, 0, 1, 1], [], []>} : vector<8x128xbf16>, vector<128x512xbf16>, vector<8x512xf32> -> vector<8x512xf32>
    %392 = arith.addf %389, %391 : vector<8x512xf32>
    %393 = vector.extract_strided_slice %392 {offsets = [0, 0], sizes = [8, 128], strides = [1, 1]} : vector<8x512xf32> to vector<8x128xf32>
    %394 = arith.negf %393 : vector<8x128xf32>
    %395 = math.exp %394 : vector<8x128xf32>
    %cst_113 = arith.constant 1.000000e+00 : f32
    %396 = vector.broadcast %cst_113 : f32 to vector<8x128xf32>
    %397 = arith.addf %396, %395 : vector<8x128xf32>
    %398 = arith.divf %396, %397 : vector<8x128xf32>
    %399 = vector.extract_strided_slice %392 {offsets = [0, 128], sizes = [8, 128], strides = [1, 1]} : vector<8x512xf32> to vector<8x128xf32>
    %400 = arith.negf %399 : vector<8x128xf32>
    %401 = math.exp %400 : vector<8x128xf32>
    %cst_114 = arith.constant 1.000000e+00 : f32
    %402 = vector.broadcast %cst_114 : f32 to vector<8x128xf32>
    %403 = arith.addf %402, %401 : vector<8x128xf32>
    %404 = arith.divf %402, %403 : vector<8x128xf32>
    %405 = vector.extract_strided_slice %392 {offsets = [0, 256], sizes = [8, 128], strides = [1, 1]} : vector<8x512xf32> to vector<8x128xf32>
    %406 = math.tanh %405 : vector<8x128xf32>
    %407 = vector.extract_strided_slice %392 {offsets = [0, 384], sizes = [8, 128], strides = [1, 1]} : vector<8x512xf32> to vector<8x128xf32>
    %408 = arith.negf %407 : vector<8x128xf32>
    %409 = math.exp %408 : vector<8x128xf32>
    %cst_115 = arith.constant 1.000000e+00 : f32
    %410 = vector.broadcast %cst_115 : f32 to vector<8x128xf32>
    %411 = arith.addf %410, %409 : vector<8x128xf32>
    %412 = arith.divf %410, %411 : vector<8x128xf32>
    %413 = arith.mulf %404, %345 : vector<8x128xf32>
    %414 = arith.mulf %398, %406 : vector<8x128xf32>
    %415 = arith.addf %413, %414 : vector<8x128xf32>
    %416 = math.tanh %415 : vector<8x128xf32>
    %417 = arith.mulf %412, %416 : vector<8x128xf32>
    %418 = tpu.concatenate %384, %385 in 1 : vector<8x128xbf16>, vector<8x128xbf16> -> vector<8x256xbf16>
    %c0_116 = arith.constant 0 : index
    %c0_117 = arith.constant 0 : index
    %419 = vector.load %arg5[%c0_116, %c0_117] : memref<256x512xbf16, #tpu.memory_space<vmem>>, vector<256x512xbf16>
    %cst_118 = arith.constant dense<0.000000e+00> : vector<8x512xf32>
    %420 = tpu.matmul %418, %419, %cst_118 {dimension_numbers = #tpu.dot_dimension_numbers<[1], [0], [0], [1], [0, 0, 1, 1], [], []>} : vector<8x256xbf16>, vector<256x512xbf16>, vector<8x512xf32> -> vector<8x512xf32>
    %c0_119 = arith.constant 0 : index
    %c0_120 = arith.constant 0 : index
    %421 = vector.load %arg6[%c0_119, %c0_120] : memref<1x512xf32, #tpu.memory_space<vmem>>, vector<1x512xf32>
    %422 = vector.broadcast %421 : vector<1x512xf32> to vector<8x512xf32>
    %423 = arith.addf %420, %422 : vector<8x512xf32>
    %424 = vector.extract_strided_slice %423 {offsets = [0, 0], sizes = [8, 128], strides = [1, 1]} : vector<8x512xf32> to vector<8x128xf32>
    %425 = arith.negf %424 : vector<8x128xf32>
    %426 = math.exp %425 : vector<8x128xf32>
    %cst_121 = arith.constant 1.000000e+00 : f32
    %427 = vector.broadcast %cst_121 : f32 to vector<8x128xf32>
    %428 = arith.addf %427, %426 : vector<8x128xf32>
    %429 = arith.divf %427, %428 : vector<8x128xf32>
    %430 = vector.extract_strided_slice %423 {offsets = [0, 128], sizes = [8, 128], strides = [1, 1]} : vector<8x512xf32> to vector<8x128xf32>
    %431 = arith.negf %430 : vector<8x128xf32>
    %432 = math.exp %431 : vector<8x128xf32>
    %cst_122 = arith.constant 1.000000e+00 : f32
    %433 = vector.broadcast %cst_122 : f32 to vector<8x128xf32>
    %434 = arith.addf %433, %432 : vector<8x128xf32>
    %435 = arith.divf %433, %434 : vector<8x128xf32>
    %436 = vector.extract_strided_slice %423 {offsets = [0, 256], sizes = [8, 128], strides = [1, 1]} : vector<8x512xf32> to vector<8x128xf32>
    %437 = math.tanh %436 : vector<8x128xf32>
    %438 = vector.extract_strided_slice %423 {offsets = [0, 384], sizes = [8, 128], strides = [1, 1]} : vector<8x512xf32> to vector<8x128xf32>
    %439 = arith.negf %438 : vector<8x128xf32>
    %440 = math.exp %439 : vector<8x128xf32>
    %cst_123 = arith.constant 1.000000e+00 : f32
    %441 = vector.broadcast %cst_123 : f32 to vector<8x128xf32>
    %442 = arith.addf %441, %440 : vector<8x128xf32>
    %443 = arith.divf %441, %442 : vector<8x128xf32>
    %444 = arith.mulf %435, %376 : vector<8x128xf32>
    %445 = arith.mulf %429, %437 : vector<8x128xf32>
    %446 = arith.addf %444, %445 : vector<8x128xf32>
    %447 = math.tanh %446 : vector<8x128xf32>
    %448 = arith.mulf %443, %447 : vector<8x128xf32>
    %c1_i32_124 = arith.constant 1 : i32
    %449 = arith.subi %c6_i32, %c1_i32_124 : i32
    %c8_i32_125 = arith.constant 8 : i32
    %450 = arith.muli %449, %c8_i32_125 : i32
    %451 = tpu.assume_multiple %450, 8 : i32
    %452 = arith.index_cast %451 : i32 to index
    %c0_126 = arith.constant 0 : index
    %453 = vector.load %arg15[%452, %c0_126] : memref<64x128xf32, #tpu.memory_space<vmem>>, vector<8x128xf32>
    tpu.vector_store %arg15[%452, %c0_126], %448 {strides = array<i32>} : memref<64x128xf32, #tpu.memory_space<vmem>>, vector<8x128xf32>,
    %454 = arith.truncf %417 : vector<8x128xf32> to vector<8x128xbf16>
    %455 = arith.truncf %448 : vector<8x128xf32> to vector<8x128xbf16>
    %c7_i32 = arith.constant 7 : i32
    %c8_i32_127 = arith.constant 8 : i32
    %456 = arith.muli %c7_i32, %c8_i32_127 : i32
    %457 = tpu.assume_multiple %456, 8 : i32
    %458 = arith.index_cast %457 : i32 to index
    %c0_128 = arith.constant 0 : index
    %459 = vector.load %arg14[%458, %c0_128] : memref<64x512xf32, #tpu.memory_space<vmem>>, vector<8x512xf32>
    %c0_129 = arith.constant 0 : index
    %c0_130 = arith.constant 0 : index
    %460 = vector.load %arg3[%c0_129, %c0_130] : memref<128x512xbf16, #tpu.memory_space<vmem>>, vector<128x512xbf16>
    %cst_131 = arith.constant dense<0.000000e+00> : vector<8x512xf32>
    %461 = tpu.matmul %454, %460, %cst_131 {dimension_numbers = #tpu.dot_dimension_numbers<[1], [0], [0], [1], [0, 0, 1, 1], [], []>} : vector<8x128xbf16>, vector<128x512xbf16>, vector<8x512xf32> -> vector<8x512xf32>
    %462 = arith.addf %459, %461 : vector<8x512xf32>
    %463 = vector.extract_strided_slice %462 {offsets = [0, 0], sizes = [8, 128], strides = [1, 1]} : vector<8x512xf32> to vector<8x128xf32>
    %464 = arith.negf %463 : vector<8x128xf32>
    %465 = math.exp %464 : vector<8x128xf32>
    %cst_132 = arith.constant 1.000000e+00 : f32
    %466 = vector.broadcast %cst_132 : f32 to vector<8x128xf32>
    %467 = arith.addf %466, %465 : vector<8x128xf32>
    %468 = arith.divf %466, %467 : vector<8x128xf32>
    %469 = vector.extract_strided_slice %462 {offsets = [0, 128], sizes = [8, 128], strides = [1, 1]} : vector<8x512xf32> to vector<8x128xf32>
    %470 = arith.negf %469 : vector<8x128xf32>
    %471 = math.exp %470 : vector<8x128xf32>
    %cst_133 = arith.constant 1.000000e+00 : f32
    %472 = vector.broadcast %cst_133 : f32 to vector<8x128xf32>
    %473 = arith.addf %472, %471 : vector<8x128xf32>
    %474 = arith.divf %472, %473 : vector<8x128xf32>
    %475 = vector.extract_strided_slice %462 {offsets = [0, 256], sizes = [8, 128], strides = [1, 1]} : vector<8x512xf32> to vector<8x128xf32>
    %476 = math.tanh %475 : vector<8x128xf32>
    %477 = vector.extract_strided_slice %462 {offsets = [0, 384], sizes = [8, 128], strides = [1, 1]} : vector<8x512xf32> to vector<8x128xf32>
    %478 = arith.negf %477 : vector<8x128xf32>
    %479 = math.exp %478 : vector<8x128xf32>
    %cst_134 = arith.constant 1.000000e+00 : f32
    %480 = vector.broadcast %cst_134 : f32 to vector<8x128xf32>
    %481 = arith.addf %480, %479 : vector<8x128xf32>
    %482 = arith.divf %480, %481 : vector<8x128xf32>
    %483 = arith.mulf %474, %415 : vector<8x128xf32>
    %484 = arith.mulf %468, %476 : vector<8x128xf32>
    %485 = arith.addf %483, %484 : vector<8x128xf32>
    %486 = math.tanh %485 : vector<8x128xf32>
    %487 = arith.mulf %482, %486 : vector<8x128xf32>
    %488 = tpu.concatenate %454, %455 in 1 : vector<8x128xbf16>, vector<8x128xbf16> -> vector<8x256xbf16>
    %c0_135 = arith.constant 0 : index
    %c0_136 = arith.constant 0 : index
    %489 = vector.load %arg5[%c0_135, %c0_136] : memref<256x512xbf16, #tpu.memory_space<vmem>>, vector<256x512xbf16>
    %cst_137 = arith.constant dense<0.000000e+00> : vector<8x512xf32>
    %490 = tpu.matmul %488, %489, %cst_137 {dimension_numbers = #tpu.dot_dimension_numbers<[1], [0], [0], [1], [0, 0, 1, 1], [], []>} : vector<8x256xbf16>, vector<256x512xbf16>, vector<8x512xf32> -> vector<8x512xf32>
    %c0_138 = arith.constant 0 : index
    %c0_139 = arith.constant 0 : index
    %491 = vector.load %arg6[%c0_138, %c0_139] : memref<1x512xf32, #tpu.memory_space<vmem>>, vector<1x512xf32>
    %492 = vector.broadcast %491 : vector<1x512xf32> to vector<8x512xf32>
    %493 = arith.addf %490, %492 : vector<8x512xf32>
    %494 = vector.extract_strided_slice %493 {offsets = [0, 0], sizes = [8, 128], strides = [1, 1]} : vector<8x512xf32> to vector<8x128xf32>
    %495 = arith.negf %494 : vector<8x128xf32>
    %496 = math.exp %495 : vector<8x128xf32>
    %cst_140 = arith.constant 1.000000e+00 : f32
    %497 = vector.broadcast %cst_140 : f32 to vector<8x128xf32>
    %498 = arith.addf %497, %496 : vector<8x128xf32>
    %499 = arith.divf %497, %498 : vector<8x128xf32>
    %500 = vector.extract_strided_slice %493 {offsets = [0, 128], sizes = [8, 128], strides = [1, 1]} : vector<8x512xf32> to vector<8x128xf32>
    %501 = arith.negf %500 : vector<8x128xf32>
    %502 = math.exp %501 : vector<8x128xf32>
    %cst_141 = arith.constant 1.000000e+00 : f32
    %503 = vector.broadcast %cst_141 : f32 to vector<8x128xf32>
    %504 = arith.addf %503, %502 : vector<8x128xf32>
    %505 = arith.divf %503, %504 : vector<8x128xf32>
    %506 = vector.extract_strided_slice %493 {offsets = [0, 256], sizes = [8, 128], strides = [1, 1]} : vector<8x512xf32> to vector<8x128xf32>
    %507 = math.tanh %506 : vector<8x128xf32>
    %508 = vector.extract_strided_slice %493 {offsets = [0, 384], sizes = [8, 128], strides = [1, 1]} : vector<8x512xf32> to vector<8x128xf32>
    %509 = arith.negf %508 : vector<8x128xf32>
    %510 = math.exp %509 : vector<8x128xf32>
    %cst_142 = arith.constant 1.000000e+00 : f32
    %511 = vector.broadcast %cst_142 : f32 to vector<8x128xf32>
    %512 = arith.addf %511, %510 : vector<8x128xf32>
    %513 = arith.divf %511, %512 : vector<8x128xf32>
    %514 = arith.mulf %505, %446 : vector<8x128xf32>
    %515 = arith.mulf %499, %507 : vector<8x128xf32>
    %516 = arith.addf %514, %515 : vector<8x128xf32>
    %517 = math.tanh %516 : vector<8x128xf32>
    %518 = arith.mulf %513, %517 : vector<8x128xf32>
    %c1_i32_143 = arith.constant 1 : i32
    %519 = arith.subi %c7_i32, %c1_i32_143 : i32
    %c8_i32_144 = arith.constant 8 : i32
    %520 = arith.muli %519, %c8_i32_144 : i32
    %521 = tpu.assume_multiple %520, 8 : i32
    %522 = arith.index_cast %521 : i32 to index
    %c0_145 = arith.constant 0 : index
    %523 = vector.load %arg15[%522, %c0_145] : memref<64x128xf32, #tpu.memory_space<vmem>>, vector<8x128xf32>
    tpu.vector_store %arg15[%522, %c0_145], %518 {strides = array<i32>} : memref<64x128xf32, #tpu.memory_space<vmem>>, vector<8x128xf32>,
    %524 = arith.truncf %487 : vector<8x128xf32> to vector<8x128xbf16>
    %525 = arith.truncf %518 : vector<8x128xf32> to vector<8x128xbf16>
    %c7_i32_146 = arith.constant 7 : i32
    %526 = tpu.concatenate %524, %525 in 1 : vector<8x128xbf16>, vector<8x128xbf16> -> vector<8x256xbf16>
    %c0_147 = arith.constant 0 : index
    %c0_148 = arith.constant 0 : index
    %527 = vector.load %arg5[%c0_147, %c0_148] : memref<256x512xbf16, #tpu.memory_space<vmem>>, vector<256x512xbf16>
    %cst_149 = arith.constant dense<0.000000e+00> : vector<8x512xf32>
    %528 = tpu.matmul %526, %527, %cst_149 {dimension_numbers = #tpu.dot_dimension_numbers<[1], [0], [0], [1], [0, 0, 1, 1], [], []>} : vector<8x256xbf16>, vector<256x512xbf16>, vector<8x512xf32> -> vector<8x512xf32>
    %c0_150 = arith.constant 0 : index
    %c0_151 = arith.constant 0 : index
    %529 = vector.load %arg6[%c0_150, %c0_151] : memref<1x512xf32, #tpu.memory_space<vmem>>, vector<1x512xf32>
    %530 = vector.broadcast %529 : vector<1x512xf32> to vector<8x512xf32>
    %531 = arith.addf %528, %530 : vector<8x512xf32>
    %532 = vector.extract_strided_slice %531 {offsets = [0, 0], sizes = [8, 128], strides = [1, 1]} : vector<8x512xf32> to vector<8x128xf32>
    %533 = arith.negf %532 : vector<8x128xf32>
    %534 = math.exp %533 : vector<8x128xf32>
    %cst_152 = arith.constant 1.000000e+00 : f32
    %535 = vector.broadcast %cst_152 : f32 to vector<8x128xf32>
    %536 = arith.addf %535, %534 : vector<8x128xf32>
    %537 = arith.divf %535, %536 : vector<8x128xf32>
    %538 = vector.extract_strided_slice %531 {offsets = [0, 128], sizes = [8, 128], strides = [1, 1]} : vector<8x512xf32> to vector<8x128xf32>
    %539 = arith.negf %538 : vector<8x128xf32>
    %540 = math.exp %539 : vector<8x128xf32>
    %cst_153 = arith.constant 1.000000e+00 : f32
    %541 = vector.broadcast %cst_153 : f32 to vector<8x128xf32>
    %542 = arith.addf %541, %540 : vector<8x128xf32>
    %543 = arith.divf %541, %542 : vector<8x128xf32>
    %544 = vector.extract_strided_slice %531 {offsets = [0, 256], sizes = [8, 128], strides = [1, 1]} : vector<8x512xf32> to vector<8x128xf32>
    %545 = math.tanh %544 : vector<8x128xf32>
    %546 = vector.extract_strided_slice %531 {offsets = [0, 384], sizes = [8, 128], strides = [1, 1]} : vector<8x512xf32> to vector<8x128xf32>
    %547 = arith.negf %546 : vector<8x128xf32>
    %548 = math.exp %547 : vector<8x128xf32>
    %cst_154 = arith.constant 1.000000e+00 : f32
    %549 = vector.broadcast %cst_154 : f32 to vector<8x128xf32>
    %550 = arith.addf %549, %548 : vector<8x128xf32>
    %551 = arith.divf %549, %550 : vector<8x128xf32>
    %552 = arith.mulf %543, %516 : vector<8x128xf32>
    %553 = arith.mulf %537, %545 : vector<8x128xf32>
    %554 = arith.addf %552, %553 : vector<8x128xf32>
    %555 = math.tanh %554 : vector<8x128xf32>
    %556 = arith.mulf %551, %555 : vector<8x128xf32>
    %c56 = arith.constant 56 : index
    %c0_155 = arith.constant 0 : index
    %557 = vector.load %arg15[%c56, %c0_155] : memref<64x128xf32, #tpu.memory_space<vmem>>, vector<8x128xf32>
    tpu.vector_store %arg15[%c56, %c0_155], %556 {strides = array<i32>} : memref<64x128xf32, #tpu.memory_space<vmem>>, vector<8x128xf32>,
    %c0_156 = arith.constant 0 : index
    %c0_157 = arith.constant 0 : index
    %558 = vector.load %arg15[%c0_156, %c0_157] : memref<64x128xf32, #tpu.memory_space<vmem>>, vector<64x128xf32>
    %559 = arith.truncf %558 : vector<64x128xf32> to vector<64x128xbf16>
    %c0_158 = arith.constant 0 : index
    %c0_159 = arith.constant 0 : index
    %560 = vector.load %arg7[%c0_158, %c0_159] : memref<128x128xbf16, #tpu.memory_space<vmem>>, vector<128x128xbf16>
    %cst_160 = arith.constant dense<0.000000e+00> : vector<64x128xf32>
    %561 = tpu.matmul %559, %560, %cst_160 {dimension_numbers = #tpu.dot_dimension_numbers<[1], [0], [0], [1], [0, 0, 1, 1], [], []>} : vector<64x128xbf16>, vector<128x128xbf16>, vector<64x128xf32> -> vector<64x128xf32>
    %c0_161 = arith.constant 0 : index
    %c0_162 = arith.constant 0 : index
    %562 = vector.load %arg8[%c0_161, %c0_162] : memref<1x128xf32, #tpu.memory_space<vmem>>, vector<1x128xf32>
    %563 = vector.broadcast %562 : vector<1x128xf32> to vector<64x128xf32>
    %564 = arith.addf %561, %563 : vector<64x128xf32>
    %cst_163 = arith.constant dense<0.000000e+00> : vector<64xf32>
    %565 = vector.multi_reduction <add>, %564, %cst_163 [1] : vector<64x128xf32> to vector<64xf32>
    %566 = vector.shape_cast %565 : vector<64xf32> to vector<64x1xf32>
    %cst_164 = arith.constant 1.280000e+02 : f32
    %567 = vector.broadcast %cst_164 : f32 to vector<64x1xf32>
    %568 = arith.divf %566, %567 : vector<64x1xf32>
    %569 = arith.mulf %564, %564 : vector<64x128xf32>
    %cst_165 = arith.constant dense<0.000000e+00> : vector<64xf32>
    %570 = vector.multi_reduction <add>, %569, %cst_165 [1] : vector<64x128xf32> to vector<64xf32>
    %571 = vector.shape_cast %570 : vector<64xf32> to vector<64x1xf32>
    %cst_166 = arith.constant 1.280000e+02 : f32
    %572 = vector.broadcast %cst_166 : f32 to vector<64x1xf32>
    %573 = arith.divf %571, %572 : vector<64x1xf32>
    %574 = arith.mulf %568, %568 : vector<64x1xf32>
    %575 = arith.subf %573, %574 : vector<64x1xf32>
    %576 = vector.broadcast %568 : vector<64x1xf32> to vector<64x128xf32>
    %577 = arith.subf %564, %576 : vector<64x128xf32>
    %cst_167 = arith.constant 9.99999974E-6 : f32
    %578 = vector.broadcast %cst_167 : f32 to vector<64x1xf32>
    %579 = arith.addf %575, %578 : vector<64x1xf32>
    %580 = math.rsqrt %579 : vector<64x1xf32>
    %581 = vector.broadcast %580 : vector<64x1xf32> to vector<64x128xf32>
    %582 = arith.mulf %577, %581 : vector<64x128xf32>
    %c0_168 = arith.constant 0 : index
    %c0_169 = arith.constant 0 : index
    %583 = vector.load %arg9[%c0_168, %c0_169] : memref<1x128xf32, #tpu.memory_space<vmem>>, vector<1x128xf32>
    %584 = vector.broadcast %583 : vector<1x128xf32> to vector<64x128xf32>
    %585 = arith.mulf %582, %584 : vector<64x128xf32>
    %c0_170 = arith.constant 0 : index
    %c0_171 = arith.constant 0 : index
    %586 = vector.load %arg10[%c0_170, %c0_171] : memref<1x128xf32, #tpu.memory_space<vmem>>, vector<1x128xf32>
    %587 = vector.broadcast %586 : vector<1x128xf32> to vector<64x128xf32>
    %588 = arith.addf %585, %587 : vector<64x128xf32>
    %cst_172 = arith.constant 0.000000e+00 : f32
    %589 = vector.broadcast %cst_172 : f32 to vector<64x128xf32>
    %590 = arith.cmpf oge, %588, %589 : vector<64x128xf32>
    %cst_173 = arith.constant 0.00999999977 : f32
    %591 = vector.broadcast %cst_173 : f32 to vector<64x128xf32>
    %592 = arith.mulf %591, %588 : vector<64x128xf32>
    %593 = arith.select %590, %588, %592 : vector<64x128xi1>, vector<64x128xf32>
    %594 = arith.truncf %593 : vector<64x128xf32> to vector<64x128xbf16>
    %c0_174 = arith.constant 0 : index
    %c0_175 = arith.constant 0 : index
    %595 = vector.load %arg11[%c0_174, %c0_175] : memref<128x128xbf16, #tpu.memory_space<vmem>>, vector<128x128xbf16>
    %cst_176 = arith.constant dense<0.000000e+00> : vector<64x128xf32>
    %596 = tpu.matmul %594, %595, %cst_176 {dimension_numbers = #tpu.dot_dimension_numbers<[1], [0], [0], [1], [0, 0, 1, 1], [], []>} : vector<64x128xbf16>, vector<128x128xbf16>, vector<64x128xf32> -> vector<64x128xf32>
    %c0_177 = arith.constant 0 : index
    %c0_178 = arith.constant 0 : index
    %597 = vector.load %arg12[%c0_177, %c0_178] : memref<1x128xf32, #tpu.memory_space<vmem>>, vector<1x128xf32>
    %598 = vector.broadcast %597 : vector<1x128xf32> to vector<64x128xf32>
    %599 = arith.addf %596, %598 : vector<64x128xf32>
    %c0_179 = arith.constant 0 : index
    %c0_180 = arith.constant 0 : index
    %600 = vector.load %arg13[%c0_179, %c0_180] : memref<64x128xf32, #tpu.memory_space<vmem>>, vector<64x128xf32>
    tpu.vector_store %arg13[%c0_179, %c0_180], %599 {strides = array<i32>} : memref<64x128xf32, #tpu.memory_space<vmem>>, vector<64x128xf32>,
    return
  }
  func.func @transform_0(%arg0: i32) -> (i32, i32) {
    %c0_i32 = arith.constant 0 : i32
    %c0_i32_0 = arith.constant 0 : i32
    %c0_i32_1 = arith.constant 0 : i32
    return %c0_i32, %c0_i32_0 : i32, i32
  }
  func.func @transform_1(%arg0: i32) -> (i32, i32) {
    %c0_i32 = arith.constant 0 : i32
    %c0_i32_0 = arith.constant 0 : i32
    %c0_i32_1 = arith.constant 0 : i32
    return %c0_i32, %c0_i32_0 : i32, i32
  }
  func.func @transform_2(%arg0: i32) -> (i32, i32) {
    %c0_i32 = arith.constant 0 : i32
    %c0_i32_0 = arith.constant 0 : i32
    %c0_i32_1 = arith.constant 0 : i32
    return %c0_i32, %c0_i32_0 : i32, i32
  }
  func.func @transform_3(%arg0: i32) -> (i32, i32) {
    %c0_i32 = arith.constant 0 : i32
    %c0_i32_0 = arith.constant 0 : i32
    %c0_i32_1 = arith.constant 0 : i32
    return %c0_i32, %c0_i32_0 : i32, i32
  }
  func.func @transform_4(%arg0: i32) -> (i32, i32) {
    %c0_i32 = arith.constant 0 : i32
    %c0_i32_0 = arith.constant 0 : i32
    %c0_i32_1 = arith.constant 0 : i32
    return %c0_i32, %c0_i32_0 : i32, i32
  }
  func.func @transform_5(%arg0: i32) -> (i32, i32) {
    %c0_i32 = arith.constant 0 : i32
    %c0_i32_0 = arith.constant 0 : i32
    %c0_i32_1 = arith.constant 0 : i32
    return %c0_i32, %c0_i32_0 : i32, i32
  }
  func.func @transform_6(%arg0: i32) -> (i32, i32) {
    %c0_i32 = arith.constant 0 : i32
    %c0_i32_0 = arith.constant 0 : i32
    %c0_i32_1 = arith.constant 0 : i32
    return %c0_i32, %c0_i32_0 : i32, i32
  }
  func.func @transform_7(%arg0: i32) -> (i32, i32) {
    %c0_i32 = arith.constant 0 : i32
    %c0_i32_0 = arith.constant 0 : i32
    %c0_i32_1 = arith.constant 0 : i32
    return %c0_i32, %c0_i32_0 : i32, i32
  }
  func.func @transform_8(%arg0: i32) -> (i32, i32) {
    %c0_i32 = arith.constant 0 : i32
    %c0_i32_0 = arith.constant 0 : i32
    %c0_i32_1 = arith.constant 0 : i32
    return %c0_i32, %c0_i32_0 : i32, i32
  }
  func.func @transform_9(%arg0: i32) -> (i32, i32) {
    %c0_i32 = arith.constant 0 : i32
    %c0_i32_0 = arith.constant 0 : i32
    %c0_i32_1 = arith.constant 0 : i32
    return %c0_i32, %c0_i32_0 : i32, i32
  }
  func.func @transform_10(%arg0: i32) -> (i32, i32) {
    %c0_i32 = arith.constant 0 : i32
    %c0_i32_0 = arith.constant 0 : i32
    %c0_i32_1 = arith.constant 0 : i32
    return %c0_i32, %c0_i32_0 : i32, i32
  }
  func.func @transform_11(%arg0: i32) -> (i32, i32) {
    %c0_i32 = arith.constant 0 : i32
    %c0_i32_0 = arith.constant 0 : i32
    %c0_i32_1 = arith.constant 0 : i32
    return %c0_i32, %c0_i32_0 : i32, i32
  }
  func.func @transform_12(%arg0: i32) -> (i32, i32) {
    %c0_i32 = arith.constant 0 : i32
    %c0_i32_0 = arith.constant 0 : i32
    %c0_i32_1 = arith.constant 0 : i32
    return %c0_i32, %c0_i32_0 : i32, i32
  }
}

</mosaic_0001>

<llo_original>
// kernel: rnnlm_forward.1
$region0: #{rnnlm_forward.1}
  #allocation0 [shape = 'u32[]', space=smem, size = 0x4, offset = 0x4, fixed_abs, tag = 'smem constant byte address 0x4 - core index']
  #allocation1 [shape = 'u32[144,128]{1,0:T(1,128)}', space=vmem, size = 0x12000, scoped, tag = 'internal scratch']
  #allocation2 [shape = 'f32[64,512]{1,0:T(8,128)}', space=vmem, size = 0x20000, scoped, tag = 'scratch operand']
  #allocation3 [shape = 'f32[64,128]{1,0:T(8,128)}', space=vmem, size = 0x8000, scoped, tag = 'scratch operand']
  %s0 = inlined_call_operand.vmem [shape: bf16[64,64], index: 0, kind: input, shape index: {}]
  %s1 = inlined_call_operand.hbm [shape: bf16[64,512], index: 1, kind: input, shape index: {}]
  %s2 = inlined_call_operand.hbm [shape: bf16[128,512], index: 2, kind: input, shape index: {}]
  %s3 = inlined_call_operand.hbm [shape: f32[1,512], index: 3, kind: input, shape index: {}]
  %s4 = inlined_call_operand.vmem [shape: bf16[256,512], index: 4, kind: input, shape index: {}]
  %s5 = inlined_call_operand.hbm [shape: f32[1,512], index: 5, kind: input, shape index: {}]
  %s6 = inlined_call_operand.hbm [shape: bf16[128,128], index: 6, kind: input, shape index: {}]
  %s7 = inlined_call_operand.vmem [shape: f32[1,128], index: 7, kind: input, shape index: {}]
  %s8 = inlined_call_operand.hbm [shape: f32[1,128], index: 8, kind: input, shape index: {}]
  %s9 = inlined_call_operand.hbm [shape: f32[1,128], index: 9, kind: input, shape index: {}]
  %s10 = inlined_call_operand.vmem [shape: bf16[128,128], index: 10, kind: input, shape index: {}]
  %s11 = inlined_call_operand.hbm [shape: f32[1,128], index: 11, kind: input, shape index: {}]
  %s12 = inlined_call_operand.vmem [shape: f32[64,128], index: 12, kind: output, shape index: {}]
  %s13 = sld [smem:[#allocation0]]
  $region90: #{rnnlm_forward.1} parent=0
    _
  %s15 = ssub.s32 1, %s13
  %s16 = scalar_select 0, %s15, %s13
  $region1: #{rnnlm_forward.1} parent=0
    #allocation4 [shape = 'u8[65536]{0}', space=vmem, size = 0x10000, scoped, tag = 'input window, operand 1, single buffered']
    #allocation5 [shape = 's32[1]{0}', space=sflag, size = 0x4, scoped, tag = 'scoped memory for rnnlm_forward.1']
    #allocation6 [shape = 'u8[131072]{0}', space=vmem, size = 0x20000, scoped, tag = 'input window, operand 2, single buffered']
    #allocation7 [shape = 's32[1]{0}', space=sflag, size = 0x4, scoped, tag = 'scoped memory for rnnlm_forward.1']
    #allocation8 [shape = 'u8[2048]{0}', space=vmem, size = 0x800, scoped, tag = 'input window, operand 3, single buffered']
    #allocation9 [shape = 'u8[2048]{0}', space=vmem, size = 0x800, scoped, tag = 'input window, operand 5, single buffered']
    #allocation10 [shape = 's32[1]{0}', space=sflag, size = 0x4, scoped, tag = 'scoped memory for rnnlm_forward.1']
    #allocation11 [shape = 'u8[32768]{0}', space=vmem, size = 0x8000, scoped, tag = 'input window, operand 6, single buffered']
    #allocation12 [shape = 'u8[512]{0}', space=vmem, size = 0x400, scoped, tag = 'input window, operand 8, single buffered']
    #allocation13 [shape = 's32[1]{0}', space=sflag, size = 0x4, scoped, tag = 'scoped memory for rnnlm_forward.1']
    #allocation14 [shape = 'u8[512]{0}', space=vmem, size = 0x400, scoped, tag = 'input window, operand 9, single buffered']
    #allocation15 [shape = 'u8[512]{0}', space=vmem, size = 0x400, scoped, tag = 'input window, operand 11, single buffered']
    #allocation16 [shape = 's32[1]{0}', space=sflag, size = 0x4, scoped, tag = 'scoped memory for rnnlm_forward.1']
    %17 = vsyncpa [#allocation5], 0
    %18 = vsyncpa [#allocation7], 0
    %19 = vsyncpa [#allocation10], 0
    %20 = vsyncpa [#allocation13], 0
    %21 = vsyncpa [#allocation16], 0
    // Predicated region
    $region2: #{rnnlm_forward.1} parent=1 // pred_check
      _
    $region3: #{rnnlm_forward.1} parent=1 // pred_check_branch
      %23 = sbr.rel (0) target = $region5
    $region4: #{rnnlm_forward.1} parent=1 // pred_region
      _
    $region5: #{rnnlm_forward.1} parent=1 // pred_fallthru
      _
    // Predicated region
    $region6: #{rnnlm_forward.1} parent=1 // pred_check
      _
    $region7: #{rnnlm_forward.1} parent=1 // pred_check_branch
      %25 = sbr.rel (0) target = $region9
    $region8: #{rnnlm_forward.1} parent=1 // pred_region
      %s27 = ssub.s32 2048, 2048
      %28 = vsyncadd [#allocation5], %s27
      %s29 = sshll.u32 [#allocation4], 4
      %s30 = int_to_ptr.vmem [resolvable:$true] %s29
      %35 = dma.hbm_to_vmem [thread:$0]  %s1, 2048, %s30, [#allocation5], 256, 256, 16
    $region9: #{rnnlm_forward.1} parent=1 // pred_fallthru
      _
    // Predicated region
    $region10: #{rnnlm_forward.1} parent=1 // pred_check
      _
    $region11: #{rnnlm_forward.1} parent=1 // pred_check_branch
      %37 = sbr.rel (0) target = $region13
    $region12: #{rnnlm_forward.1} parent=1 // pred_region
      %s39 = ssub.s32 4096, 4096
      %40 = vsyncadd [#allocation7], %s39
      %s41 = sshll.u32 [#allocation6], 4
      %s42 = int_to_ptr.vmem [resolvable:$true] %s41
      %47 = dma.hbm_to_vmem [thread:$0]  %s2, 4096, %s42, [#allocation7], 256, 256, 16
    $region13: #{rnnlm_forward.1} parent=1 // pred_fallthru
      _
    // Predicated region
    $region14: #{rnnlm_forward.1} parent=1 // pred_check
      _
    $region15: #{rnnlm_forward.1} parent=1 // pred_check_branch
      %49 = sbr.rel (0) target = $region17
    $region16: #{rnnlm_forward.1} parent=1 // pred_region
      %s51 = ssub.s32 64, 64
      %52 = vsyncadd [#allocation7], %s51
      %s54 = sshll.u32 [#allocation8], 4
      %s55 = int_to_ptr.vmem [resolvable:$true] %s54
      %57 = dma.hbm_to_vmem [thread:$0]  %s3, 64, %s55, [#allocation7]
    $region17: #{rnnlm_forward.1} parent=1 // pred_fallthru
      _
    // Predicated region
    $region18: #{rnnlm_forward.1} parent=1 // pred_check
      _
    $region19: #{rnnlm_forward.1} parent=1 // pred_check_branch
      %59 = sbr.rel (0) target = $region21
    $region20: #{rnnlm_forward.1} parent=1 // pred_region
      _
    $region21: #{rnnlm_forward.1} parent=1 // pred_fallthru
      _
    // Predicated region
    $region22: #{rnnlm_forward.1} parent=1 // pred_check
      _
    $region23: #{rnnlm_forward.1} parent=1 // pred_check_branch
      %61 = sbr.rel (0) target = $region25
    $region24: #{rnnlm_forward.1} parent=1 // pred_region
      %s63 = ssub.s32 64, 64
      %64 = vsyncadd [#allocation10], %s63
      %s66 = sshll.u32 [#allocation9], 4
      %s67 = int_to_ptr.vmem [resolvable:$true] %s66
      %69 = dma.hbm_to_vmem [thread:$0]  %s5, 64, %s67, [#allocation10]
    $region25: #{rnnlm_forward.1} parent=1 // pred_fallthru
      _
    // Predicated region
    $region26: #{rnnlm_forward.1} parent=1 // pred_check
      _
    $region27: #{rnnlm_forward.1} parent=1 // pred_check_branch
      %71 = sbr.rel (0) target = $region29
    $region28: #{rnnlm_forward.1} parent=1 // pred_region
      %s73 = ssub.s32 1024, 1024
      %74 = vsyncadd [#allocation10], %s73
      %s75 = sshll.u32 [#allocation11], 4
      %s76 = int_to_ptr.vmem [resolvable:$true] %s75
      %81 = dma.hbm_to_vmem [thread:$0]  %s6, 1024, %s76, [#allocation10], 64, 64, 4
    $region29: #{rnnlm_forward.1} parent=1 // pred_fallthru
      _
    // Predicated region
    $region30: #{rnnlm_forward.1} parent=1 // pred_check
      _
    $region31: #{rnnlm_forward.1} parent=1 // pred_check_branch
      %83 = sbr.rel (0) target = $region33
    $region32: #{rnnlm_forward.1} parent=1 // pred_region
      _
    $region33: #{rnnlm_forward.1} parent=1 // pred_fallthru
      _
    // Predicated region
    $region34: #{rnnlm_forward.1} parent=1 // pred_check
      _
    $region35: #{rnnlm_forward.1} parent=1 // pred_check_branch
      %85 = sbr.rel (0) target = $region37
    $region36: #{rnnlm_forward.1} parent=1 // pred_region
      %s87 = ssub.s32 16, 16
      %88 = vsyncadd [#allocation13], %s87
      %s90 = sshll.u32 [#allocation12], 4
      %s91 = int_to_ptr.vmem [resolvable:$true] %s90
      %93 = dma.hbm_to_vmem [thread:$0]  %s8, 16, %s91, [#allocation13]
    $region37: #{rnnlm_forward.1} parent=1 // pred_fallthru
      _
    // Predicated region
    $region38: #{rnnlm_forward.1} parent=1 // pred_check
      _
    $region39: #{rnnlm_forward.1} parent=1 // pred_check_branch
      %95 = sbr.rel (0) target = $region41
    $region40: #{rnnlm_forward.1} parent=1 // pred_region
      %s97 = ssub.s32 16, 16
      %98 = vsyncadd [#allocation13], %s97
      %s100 = sshll.u32 [#allocation14], 4
      %s101 = int_to_ptr.vmem [resolvable:$true] %s100
      %103 = dma.hbm_to_vmem [thread:$0]  %s9, 16, %s101, [#allocation13]
    $region41: #{rnnlm_forward.1} parent=1 // pred_fallthru
      _
    // Predicated region
    $region42: #{rnnlm_forward.1} parent=1 // pred_check
      _
    $region43: #{rnnlm_forward.1} parent=1 // pred_check_branch
      %105 = sbr.rel (0) target = $region45
    $region44: #{rnnlm_forward.1} parent=1 // pred_region
      _
    $region45: #{rnnlm_forward.1} parent=1 // pred_fallthru
      _
    // Predicated region
    $region46: #{rnnlm_forward.1} parent=1 // pred_check
      _
    $region47: #{rnnlm_forward.1} parent=1 // pred_check_branch
      %107 = sbr.rel (0) target = $region49
    $region48: #{rnnlm_forward.1} parent=1 // pred_region
      %s109 = ssub.s32 16, 16
      %110 = vsyncadd [#allocation16], %s109
      %s112 = sshll.u32 [#allocation15], 4
      %s113 = int_to_ptr.vmem [resolvable:$true] %s112
      %115 = dma.hbm_to_vmem [thread:$0]  %s11, 16, %s113, [#allocation16]
    $region49: #{rnnlm_forward.1} parent=1 // pred_fallthru
      _
    // Predicated region
    $region50: #{rnnlm_forward.1} parent=1 // pred_check
      _
    $region51: #{rnnlm_forward.1} parent=1 // pred_check_branch
      %117 = sbr.rel (0) target = $region53
    $region52: #{rnnlm_forward.1} parent=1 // pred_region
      %118 = dma.done [#allocation5], 2048
    $region53: #{rnnlm_forward.1} parent=1 // pred_fallthru
      _
    // Predicated region
    $region54: #{rnnlm_forward.1} parent=1 // pred_check
      _
    $region55: #{rnnlm_forward.1} parent=1 // pred_check_branch
      %120 = sbr.rel (0) target = $region57
    $region56: #{rnnlm_forward.1} parent=1 // pred_region
      %121 = dma.done [#allocation7], 4096
    $region57: #{rnnlm_forward.1} parent=1 // pred_fallthru
      _
    // Predicated region
    $region58: #{rnnlm_forward.1} parent=1 // pred_check
      _
    $region59: #{rnnlm_forward.1} parent=1 // pred_check_branch
      %123 = sbr.rel (0) target = $region61
    $region60: #{rnnlm_forward.1} parent=1 // pred_region
      %124 = dma.done [#allocation7], 64
    $region61: #{rnnlm_forward.1} parent=1 // pred_fallthru
      _
    // Predicated region
    $region62: #{rnnlm_forward.1} parent=1 // pred_check
      _
    $region63: #{rnnlm_forward.1} parent=1 // pred_check_branch
      %126 = sbr.rel (0) target = $region65
    $region64: #{rnnlm_forward.1} parent=1 // pred_region
      %127 = dma.done [#allocation10], 64
    $region65: #{rnnlm_forward.1} parent=1 // pred_fallthru
      _
    // Predicated region
    $region66: #{rnnlm_forward.1} parent=1 // pred_check
      _
    $region67: #{rnnlm_forward.1} parent=1 // pred_check_branch
      %129 = sbr.rel (0) target = $region69
    $region68: #{rnnlm_forward.1} parent=1 // pred_region
      %130 = dma.done [#allocation10], 1024
    $region69: #{rnnlm_forward.1} parent=1 // pred_fallthru
      _
    // Predicated region
    $region70: #{rnnlm_forward.1} parent=1 // pred_check
      _
    $region71: #{rnnlm_forward.1} parent=1 // pred_check_branch
      %132 = sbr.rel (0) target = $region73
    $region72: #{rnnlm_forward.1} parent=1 // pred_region
      %133 = dma.done [#allocation13], 16
    $region73: #{rnnlm_forward.1} parent=1 // pred_fallthru
      _
    // Predicated region
    $region74: #{rnnlm_forward.1} parent=1 // pred_check
      _
    $region75: #{rnnlm_forward.1} parent=1 // pred_check_branch
      %135 = sbr.rel (0) target = $region77
    $region76: #{rnnlm_forward.1} parent=1 // pred_region
      %136 = dma.done [#allocation13], 16
    $region77: #{rnnlm_forward.1} parent=1 // pred_fallthru
      _
    // Predicated region
    $region78: #{rnnlm_forward.1} parent=1 // pred_check
      _
    $region79: #{rnnlm_forward.1} parent=1 // pred_check_branch
      %138 = sbr.rel (0) target = $region81
    $region80: #{rnnlm_forward.1} parent=1 // pred_region
      %139 = dma.done [#allocation16], 16
    $region81: #{rnnlm_forward.1} parent=1 // pred_fallthru
      _
    %v141 = vld [vmem:[%s0] sm:$0xf]
    %v142 = vld [vmem:[%s0 + $0x4] sm:$0xf]
    %v143 = vld [vmem:[%s0 + $0x8] sm:$0xf]
    %v144 = vld [vmem:[%s0 + $0xc] sm:$0xf]
    %v145 = vld [vmem:[%s0 + $0x10] sm:$0xf]
    %v146 = vld [vmem:[%s0 + $0x14] sm:$0xf]
    %v147 = vld [vmem:[%s0 + $0x18] sm:$0xf]
    %v148 = vld [vmem:[%s0 + $0x1c] sm:$0xf]
    %v149 = vld [vmem:[#allocation4] sm:$0xff]
    %v150 = vld [vmem:[#allocation4 + $0x8] sm:$0xff]
    %v151 = vld [vmem:[#allocation4 + $0x10] sm:$0xff]
    %v152 = vld [vmem:[#allocation4 + $0x18] sm:$0xff]
    %v153 = vld [vmem:[#allocation4 + $0x20] sm:$0xff]
    %v154 = vld [vmem:[#allocation4 + $0x28] sm:$0xff]
    %v155 = vld [vmem:[#allocation4 + $0x30] sm:$0xff]
    %v156 = vld [vmem:[#allocation4 + $0x38] sm:$0xff]
    %v157 = vld [vmem:[#allocation4 + $0x40] sm:$0xff]
    %v158 = vld [vmem:[#allocation4 + $0x48] sm:$0xff]
    %v159 = vld [vmem:[#allocation4 + $0x50] sm:$0xff]
    %v160 = vld [vmem:[#allocation4 + $0x58] sm:$0xff]
    %v161 = vld [vmem:[#allocation4 + $0x60] sm:$0xff]
    %v162 = vld [vmem:[#allocation4 + $0x68] sm:$0xff]
    %v163 = vld [vmem:[#allocation4 + $0x70] sm:$0xff]
    %v164 = vld [vmem:[#allocation4 + $0x78] sm:$0xff]
    %v165 = vld [vmem:[#allocation8] sm:$0xf]
    %v167 = vlaneseq
    %v168 = vshrl.u32 %v167, 7
    %v169 = vsub.s32 0, %v168
    %v170 = vrot.slane %v165, %v169
    %v171 = vlaneseq
    %v172 = vshrl.u32 %v171, 7
    %v173 = vsub.s32 1, %v172
    %v174 = vrot.slane %v165, %v173
    %v175 = vlaneseq
    %v176 = vshrl.u32 %v175, 7
    %v177 = vsub.s32 2, %v176
    %v178 = vrot.slane %v165, %v177
    %v179 = vlaneseq
    %v180 = vshrl.u32 %v179, 7
    %v181 = vsub.s32 3, %v180
    %v182 = vrot.slane %v165, %v181
    %v195 = vunpack.c.l.b16 %v141
    %v196 = vunpack.c.l.b16 %v142
    %v197 = vunpack.c.l.b16 %v143
    %v198 = vunpack.c.l.b16 %v144
    %v199 = vunpack.c.l.b16 %v145
    %v200 = vunpack.c.l.b16 %v146
    %v201 = vunpack.c.l.b16 %v147
    %v202 = vunpack.c.l.b16 %v148
    %v203 = vpack.c.b16 %v196, %v195
    %v204 = vpack.c.b16 %v198, %v197
    %v205 = vpack.c.b16 %v200, %v199
    %v206 = vpack.c.b16 %v202, %v201
    %v223 = vunpack.c.l.b16 %v149
    %v224 = vunpack.c.h.b16 %v149
    %v225 = vunpack.c.l.b16 %v150
    %v226 = vunpack.c.h.b16 %v150
    %v227 = vunpack.c.l.b16 %v151
    %v228 = vunpack.c.h.b16 %v151
    %v229 = vunpack.c.l.b16 %v152
    %v230 = vunpack.c.h.b16 %v152
    %v231 = vunpack.c.l.b16 %v153
    %v232 = vunpack.c.h.b16 %v153
    %v233 = vunpack.c.l.b16 %v154
    %v234 = vunpack.c.h.b16 %v154
    %v235 = vunpack.c.l.b16 %v155
    %v236 = vunpack.c.h.b16 %v155
    %v237 = vunpack.c.l.b16 %v156
    %v238 = vunpack.c.h.b16 %v156
    %v239 = vunpack.c.l.b16 %v157
    %v240 = vunpack.c.h.b16 %v157
    %v241 = vunpack.c.l.b16 %v158
    %v242 = vunpack.c.h.b16 %v158
    %v243 = vunpack.c.l.b16 %v159
    %v244 = vunpack.c.h.b16 %v159
    %v245 = vunpack.c.l.b16 %v160
    %v246 = vunpack.c.h.b16 %v160
    %v247 = vunpack.c.l.b16 %v161
    %v248 = vunpack.c.h.b16 %v161
    %v249 = vunpack.c.l.b16 %v162
    %v250 = vunpack.c.h.b16 %v162
    %v251 = vunpack.c.l.b16 %v163
    %v252 = vunpack.c.h.b16 %v163
    %v253 = vunpack.c.l.b16 %v164
    %v254 = vunpack.c.h.b16 %v164
    %v255 = vpack.c.b16 %v227, %v223
    %v256 = vpack.c.b16 %v228, %v224
    %v257 = vpack.c.b16 %v229, %v225
    %v258 = vpack.c.b16 %v230, %v226
    %v259 = vpack.c.b16 %v235, %v231
    %v260 = vpack.c.b16 %v236, %v232
    %v261 = vpack.c.b16 %v237, %v233
    %v262 = vpack.c.b16 %v238, %v234
    %v263 = vpack.c.b16 %v243, %v239
    %v264 = vpack.c.b16 %v244, %v240
    %v265 = vpack.c.b16 %v245, %v241
    %v266 = vpack.c.b16 %v246, %v242
    %v267 = vpack.c.b16 %v251, %v247
    %v268 = vpack.c.b16 %v252, %v248
    %v269 = vpack.c.b16 %v253, %v249
    %v270 = vpack.c.b16 %v254, %v250
    %vm287 = vcmask 523264
    %v289 = vsel %vm287, %v203, 0
    %v292 = vsel %vm287, %v204, 0
    %v295 = vsel %vm287, %v205, 0
    %v298 = vsel %vm287, %v206, 0
    %300 = vmatprep.subr.bf16.mxu0 %v256
    %301 = vmatpush1.bf16.msra.mxu0 %v255
    %302 = vmatprep.subr.bf16.mxu0 %v260
    %303 = vmatpush1.bf16.msra.mxu0 %v259
    %304 = vmatprep.subr.bf16.mxu0 %v264
    %305 = vmatpush1.bf16.msra.mxu0 %v263
    %306 = vmatprep.subr.bf16.mxu0 %v268
    %307 = vmatpush1.bf16.msra.mxu0 %v267
    %308 = vmatprep.subr.bf16.mxu0 0
    %309 = vmatpush1.bf16.msra.mxu0 0
    %310 = vmatprep.subr.bf16.mxu0 0
    %311 = vmatpush1.bf16.msra.mxu0 0
    %312 = vmatprep.subr.bf16.mxu0 0
    %313 = vmatpush1.bf16.msra.mxu0 0
    %314 = vmatprep.subr.bf16.mxu0 0
    %315 = vmatpush1.bf16.msra.mxu0 0
    %316 = vmatprep.subr.bf16.mxu0 0
    %317 = vmatpush1.bf16.msra.mxu0 0
    %318 = vmatprep.subr.bf16.mxu0 0
    %319 = vmatpush1.bf16.msra.mxu0 0
    %320 = vmatprep.subr.bf16.mxu0 0
    %321 = vmatpush1.bf16.msra.mxu0 0
    %322 = vmatprep.subr.bf16.mxu0 0
    %323 = vmatpush1.bf16.msra.mxu0 0
    %324 = vmatprep.subr.bf16.mxu0 0
    %325 = vmatpush1.bf16.msra.mxu0 0
    %326 = vmatprep.subr.bf16.mxu0 0
    %327 = vmatpush1.bf16.msra.mxu0 0
    %328 = vmatprep.subr.bf16.mxu0 0
    %329 = vmatpush1.bf16.msra.mxu0 0
    %330 = vmatprep.subr.bf16.mxu0 0
    %331 = vmatpush1.bf16.msra.mxu0 0
    %332 = vmatprep.mubr.bf16.mxu0 0
    %333 = vmatmul.mubr.bf16.gmra.mrb[0].mxu0 %v289
    %v334 = vpop.f32.mrb[0].mxu0
    %v335 = vadd.f32 %v170, %v334
    %v336 = vpop.f32.mrb[0].mxu0
    %v337 = vadd.f32 %v174, %v336
    %v338 = vpop.f32.mrb[0].mxu0
    %v339 = vadd.f32 %v170, %v338
    %v340 = vpop.f32.mrb[0].mxu0
    %v341 = vadd.f32 %v174, %v340
    %342 = vmatprep.mubr.bf16.mxu0 0
    %343 = vmatmul.mubr.bf16.gmra.mrb[0].mxu0 %v292
    %v344 = vpop.f32.mrb[0].mxu0
    %v345 = vadd.f32 %v170, %v344
    %v346 = vpop.f32.mrb[0].mxu0
    %v347 = vadd.f32 %v174, %v346
    %v348 = vpop.f32.mrb[0].mxu0
    %v349 = vadd.f32 %v170, %v348
    %v350 = vpop.f32.mrb[0].mxu0
    %v351 = vadd.f32 %v174, %v350
    %352 = vmatprep.mubr.bf16.mxu0 0
    %353 = vmatmul.mubr.bf16.gmra.mrb[0].mxu0 %v295
    %v354 = vpop.f32.mrb[0].mxu0
    %v355 = vadd.f32 %v170, %v354
    %v356 = vpop.f32.mrb[0].mxu0
    %v357 = vadd.f32 %v174, %v356
    %v358 = vpop.f32.mrb[0].mxu0
    %v359 = vadd.f32 %v170, %v358
    %v360 = vpop.f32.mrb[0].mxu0
    %v361 = vadd.f32 %v174, %v360
    %362 = vmatprep.mubr.bf16.mxu0 0
    %363 = vmatmul.mubr.bf16.gmra.mrb[0].mxu0 %v298
    %v364 = vpop.f32.mrb[0].mxu0
    %v365 = vadd.f32 %v170, %v364
    %v366 = vpop.f32.mrb[0].mxu0
    %v367 = vadd.f32 %v174, %v366
    %v368 = vpop.f32.mrb[0].mxu0
    %v369 = vadd.f32 %v170, %v368
    %v370 = vpop.f32.mrb[0].mxu0
    %v371 = vadd.f32 %v174, %v370
    %372 = vdwg.mxu0
    %373 = vmatprep.subr.bf16.mxu0 %v258
    %374 = vmatpush1.bf16.msra.mxu0 %v257
    %375 = vmatprep.subr.bf16.mxu0 %v262
    %376 = vmatpush1.bf16.msra.mxu0 %v261
    %377 = vmatprep.subr.bf16.mxu0 %v266
    %378 = vmatpush1.bf16.msra.mxu0 %v265
    %379 = vmatprep.subr.bf16.mxu0 %v270
    %380 = vmatpush1.bf16.msra.mxu0 %v269
    %381 = vmatprep.subr.bf16.mxu0 0
    %382 = vmatpush1.bf16.msra.mxu0 0
    %383 = vmatprep.subr.bf16.mxu0 0
    %384 = vmatpush1.bf16.msra.mxu0 0
    %385 = vmatprep.subr.bf16.mxu0 0
    %386 = vmatpush1.bf16.msra.mxu0 0
    %387 = vmatprep.subr.bf16.mxu0 0
    %388 = vmatpush1.bf16.msra.mxu0 0
    %389 = vmatprep.subr.bf16.mxu0 0
    %390 = vmatpush1.bf16.msra.mxu0 0
    %391 = vmatprep.subr.bf16.mxu0 0
    %392 = vmatpush1.bf16.msra.mxu0 0
    %393 = vmatprep.subr.bf16.mxu0 0
    %394 = vmatpush1.bf16.msra.mxu0 0
    %395 = vmatprep.subr.bf16.mxu0 0
    %396 = vmatpush1.bf16.msra.mxu0 0
    %397 = vmatprep.subr.bf16.mxu0 0
    %398 = vmatpush1.bf16.msra.mxu0 0
    %399 = vmatprep.subr.bf16.mxu0 0
    %400 = vmatpush1.bf16.msra.mxu0 0
    %401 = vmatprep.subr.bf16.mxu0 0
    %402 = vmatpush1.bf16.msra.mxu0 0
    %403 = vmatprep.subr.bf16.mxu0 0
    %404 = vmatpush1.bf16.msra.mxu0 0
    %405 = vmatprep.mubr.bf16.mxu0 0
    %406 = vmatmul.mubr.bf16.gmra.mrb[0].mxu0 %v289
    %v407 = vpop.f32.mrb[0].mxu0
    %v408 = vadd.f32 %v178, %v407
    %v409 = vpop.f32.mrb[0].mxu0
    %v410 = vadd.f32 %v182, %v409
    %v411 = vpop.f32.mrb[0].mxu0
    %v412 = vadd.f32 %v178, %v411
    %v413 = vpop.f32.mrb[0].mxu0
    %v414 = vadd.f32 %v182, %v413
    %415 = vmatprep.mubr.bf16.mxu0 0
    %416 = vmatmul.mubr.bf16.gmra.mrb[0].mxu0 %v292
    %v417 = vpop.f32.mrb[0].mxu0
    %v418 = vadd.f32 %v178, %v417
    %v419 = vpop.f32.mrb[0].mxu0
    %v420 = vadd.f32 %v182, %v419
    %v421 = vpop.f32.mrb[0].mxu0
    %v422 = vadd.f32 %v178, %v421
    %v423 = vpop.f32.mrb[0].mxu0
    %v424 = vadd.f32 %v182, %v423
    %425 = vmatprep.mubr.bf16.mxu0 0
    %426 = vmatmul.mubr.bf16.gmra.mrb[0].mxu0 %v295
    %v427 = vpop.f32.mrb[0].mxu0
    %v428 = vadd.f32 %v178, %v427
    %v429 = vpop.f32.mrb[0].mxu0
    %v430 = vadd.f32 %v182, %v429
    %v431 = vpop.f32.mrb[0].mxu0
    %v432 = vadd.f32 %v178, %v431
    %v433 = vpop.f32.mrb[0].mxu0
    %v434 = vadd.f32 %v182, %v433
    %435 = vmatprep.mubr.bf16.mxu0 0
    %436 = vmatmul.mubr.bf16.gmra.mrb[0].mxu0 %v298
    %v437 = vpop.f32.mrb[0].mxu0
    %v438 = vadd.f32 %v178, %v437
    %v439 = vpop.f32.mrb[0].mxu0
    %v440 = vadd.f32 %v182, %v439
    %v441 = vpop.f32.mrb[0].mxu0
    %v442 = vadd.f32 %v178, %v441
    %v443 = vpop.f32.mrb[0].mxu0
    %v444 = vadd.f32 %v182, %v443
    %445 = vdwg.mxu0
    %446 = vst [vmem:[#allocation2] sm:$0xff] %v335
    %447 = vst [vmem:[#allocation2 + $0x8] sm:$0xff] %v337
    %448 = vst [vmem:[#allocation2 + $0x10] sm:$0xff] %v408
    %449 = vst [vmem:[#allocation2 + $0x18] sm:$0xff] %v410
    %450 = vst [vmem:[#allocation2 + $0x20] sm:$0xff] %v339
    %451 = vst [vmem:[#allocation2 + $0x28] sm:$0xff] %v341
    %452 = vst [vmem:[#allocation2 + $0x30] sm:$0xff] %v412
    %453 = vst [vmem:[#allocation2 + $0x38] sm:$0xff] %v414
    %454 = vst [vmem:[#allocation2 + $0x40] sm:$0xff] %v345
    %455 = vst [vmem:[#allocation2 + $0x48] sm:$0xff] %v347
    %456 = vst [vmem:[#allocation2 + $0x50] sm:$0xff] %v418
    %457 = vst [vmem:[#allocation2 + $0x58] sm:$0xff] %v420
    %458 = vst [vmem:[#allocation2 + $0x60] sm:$0xff] %v349
    %459 = vst [vmem:[#allocation2 + $0x68] sm:$0xff] %v351
    %460 = vst [vmem:[#allocation2 + $0x70] sm:$0xff] %v422
    %461 = vst [vmem:[#allocation2 + $0x78] sm:$0xff] %v424
    %462 = vst [vmem:[#allocation2 + $0x80] sm:$0xff] %v355
    %463 = vst [vmem:[#allocation2 + $0x88] sm:$0xff] %v357
    %464 = vst [vmem:[#allocation2 + $0x90] sm:$0xff] %v428
    %465 = vst [vmem:[#allocation2 + $0x98] sm:$0xff] %v430
    %466 = vst [vmem:[#allocation2 + $0xa0] sm:$0xff] %v359
    %467 = vst [vmem:[#allocation2 + $0xa8] sm:$0xff] %v361
    %468 = vst [vmem:[#allocation2 + $0xb0] sm:$0xff] %v432
    %469 = vst [vmem:[#allocation2 + $0xb8] sm:$0xff] %v434
    %470 = vst [vmem:[#allocation2 + $0xc0] sm:$0xff] %v365
    %471 = vst [vmem:[#allocation2 + $0xc8] sm:$0xff] %v367
    %472 = vst [vmem:[#allocation2 + $0xd0] sm:$0xff] %v438
    %473 = vst [vmem:[#allocation2 + $0xd8] sm:$0xff] %v440
    %474 = vst [vmem:[#allocation2 + $0xe0] sm:$0xff] %v369
    %475 = vst [vmem:[#allocation2 + $0xe8] sm:$0xff] %v371
    %476 = vst [vmem:[#allocation2 + $0xf0] sm:$0xff] %v442
    %477 = vst [vmem:[#allocation2 + $0xf8] sm:$0xff] %v444
    %v478 = vld [vmem:[#allocation2] sm:$0xff]
    %v479 = vld [vmem:[#allocation2 + $0x8] sm:$0xff]
    %v480 = vld [vmem:[#allocation2 + $0x10] sm:$0xff]
    %v481 = vld [vmem:[#allocation2 + $0x18] sm:$0xff]
    %v482 = vxor.u32 %v478, 2147483648
    %v483 = vmul.f32 %v482, 1.442695
    %v484 = vpow.pop %v483
    %v485 = vadd.f32 %v484, 1.0
    %v486 = vrcp.pop %v485
    %v487 = vmul.f32 1.0, %v486
    %v488 = vxor.u32 %v479, 2147483648
    %v489 = vmul.f32 %v488, 1.442695
    %v490 = vpow.pop %v489
    %v491 = vadd.f32 %v490, 1.0
    %v492 = vrcp.pop %v491
    %v493 = vmul.f32 1.0, %v492
    %v494 = vtanh.pop %v480
    %v495 = vxor.u32 %v481, 2147483648
    %v496 = vmul.f32 %v495, 1.442695
    %v497 = vpow.pop %v496
    %v498 = vadd.f32 %v497, 1.0
    %v499 = vrcp.pop %v498
    %v500 = vmul.f32 1.0, %v499
    %v501 = vmul.f32 %v493, 0.0
    %v502 = vmul.f32 %v487, %v494
    %v503 = vadd.f32 %v501, %v502
    %v504 = vtanh.pop %v503
    %v505 = vmul.f32 %v500, %v504
    %v506 = vpack.c.bf16 %v505, %v505
    %s507 = smul.u32 1, 4
    %s508 = smul.addr %s507, 8
    %s509 = scalar_lea.vmem [#allocation2], %s508
    %v510 = vld [vmem:[%s509] sm:$0xff]
    %v511 = vld [vmem:[%s509 + $0x8] sm:$0xff]
    %v512 = vld [vmem:[%s509 + $0x10] sm:$0xff]
    %v513 = vld [vmem:[%s509 + $0x18] sm:$0xff]
    %v514 = vld [vmem:[#allocation6] sm:$0xff]
    %v515 = vld [vmem:[#allocation6 + $0x8] sm:$0xff]
    %v516 = vld [vmem:[#allocation6 + $0x10] sm:$0xff]
    %v517 = vld [vmem:[#allocation6 + $0x18] sm:$0xff]
    %v518 = vld [vmem:[#allocation6 + $0x20] sm:$0xff]
    %v519 = vld [vmem:[#allocation6 + $0x28] sm:$0xff]
    %v520 = vld [vmem:[#allocation6 + $0x30] sm:$0xff]
    %v521 = vld [vmem:[#allocation6 + $0x38] sm:$0xff]
    %v522 = vld [vmem:[#allocation6 + $0x40] sm:$0xff]
    %v523 = vld [vmem:[#allocation6 + $0x48] sm:$0xff]
    %v524 = vld [vmem:[#allocation6 + $0x50] sm:$0xff]
    %v525 = vld [vmem:[#allocation6 + $0x58] sm:$0xff]
    %v526 = vld [vmem:[#allocation6 + $0x60] sm:$0xff]
    %v527 = vld [vmem:[#allocation6 + $0x68] sm:$0xff]
    %v528 = vld [vmem:[#allocation6 + $0x70] sm:$0xff]
    %v529 = vld [vmem:[#allocation6 + $0x78] sm:$0xff]
    %v530 = vld [vmem:[#allocation6 + $0x80] sm:$0xff]
    %v531 = vld [vmem:[#allocation6 + $0x88] sm:$0xff]
    %v532 = vld [vmem:[#allocation6 + $0x90] sm:$0xff]
    %v533 = vld [vmem:[#allocation6 + $0x98] sm:$0xff]
    %v534 = vld [vmem:[#allocation6 + $0xa0] sm:$0xff]
    %v535 = vld [vmem:[#allocation6 + $0xa8] sm:$0xff]
    %v536 = vld [vmem:[#allocation6 + $0xb0] sm:$0xff]
    %v537 = vld [vmem:[#allocation6 + $0xb8] sm:$0xff]
    %v538 = vld [vmem:[#allocation6 + $0xc0] sm:$0xff]
    %v539 = vld [vmem:[#allocation6 + $0xc8] sm:$0xff]
    %v540 = vld [vmem:[#allocation6 + $0xd0] sm:$0xff]
    %v541 = vld [vmem:[#allocation6 + $0xd8] sm:$0xff]
    %v542 = vld [vmem:[#allocation6 + $0xe0] sm:$0xff]
    %v543 = vld [vmem:[#allocation6 + $0xe8] sm:$0xff]
    %v544 = vld [vmem:[#allocation6 + $0xf0] sm:$0xff]
    %v545 = vld [vmem:[#allocation6 + $0xf8] sm:$0xff]
    %v578 = vunpack.c.l.b16 %v514
    %v579 = vunpack.c.h.b16 %v514
    %v580 = vunpack.c.l.b16 %v515
    %v581 = vunpack.c.h.b16 %v515
    %v582 = vunpack.c.l.b16 %v516
    %v583 = vunpack.c.h.b16 %v516
    %v584 = vunpack.c.l.b16 %v517
    %v585 = vunpack.c.h.b16 %v517
    %v586 = vunpack.c.l.b16 %v518
    %v587 = vunpack.c.h.b16 %v518
    %v588 = vunpack.c.l.b16 %v519
    %v589 = vunpack.c.h.b16 %v519
    %v590 = vunpack.c.l.b16 %v520
    %v591 = vunpack.c.h.b16 %v520
    %v592 = vunpack.c.l.b16 %v521
    %v593 = vunpack.c.h.b16 %v521
    %v594 = vunpack.c.l.b16 %v522
    %v595 = vunpack.c.h.b16 %v522
    %v596 = vunpack.c.l.b16 %v523
    %v597 = vunpack.c.h.b16 %v523
    %v598 = vunpack.c.l.b16 %v524
    %v599 = vunpack.c.h.b16 %v524
    %v600 = vunpack.c.l.b16 %v525
    %v601 = vunpack.c.h.b16 %v525
    %v602 = vunpack.c.l.b16 %v526
    %v603 = vunpack.c.h.b16 %v526
    %v604 = vunpack.c.l.b16 %v527
    %v605 = vunpack.c.h.b16 %v527
    %v606 = vunpack.c.l.b16 %v528
    %v607 = vunpack.c.h.b16 %v528
    %v608 = vunpack.c.l.b16 %v529
    %v609 = vunpack.c.h.b16 %v529
    %v610 = vunpack.c.l.b16 %v530
    %v611 = vunpack.c.h.b16 %v530
    %v612 = vunpack.c.l.b16 %v531
    %v613 = vunpack.c.h.b16 %v531
    %v614 = vunpack.c.l.b16 %v532
    %v615 = vunpack.c.h.b16 %v532
    %v616 = vunpack.c.l.b16 %v533
    %v617 = vunpack.c.h.b16 %v533
    %v618 = vunpack.c.l.b16 %v534
    %v619 = vunpack.c.h.b16 %v534
    %v620 = vunpack.c.l.b16 %v535
    %v621 = vunpack.c.h.b16 %v535
    %v622 = vunpack.c.l.b16 %v536
    %v623 = vunpack.c.h.b16 %v536
    %v624 = vunpack.c.l.b16 %v537
    %v625 = vunpack.c.h.b16 %v537
    %v626 = vunpack.c.l.b16 %v538
    %v627 = vunpack.c.h.b16 %v538
    %v628 = vunpack.c.l.b16 %v539
    %v629 = vunpack.c.h.b16 %v539
    %v630 = vunpack.c.l.b16 %v540
    %v631 = vunpack.c.h.b16 %v540
    %v632 = vunpack.c.l.b16 %v541
    %v633 = vunpack.c.h.b16 %v541
    %v634 = vunpack.c.l.b16 %v542
    %v635 = vunpack.c.h.b16 %v542
    %v636 = vunpack.c.l.b16 %v543
    %v637 = vunpack.c.h.b16 %v543
    %v638 = vunpack.c.l.b16 %v544
    %v639 = vunpack.c.h.b16 %v544
    %v640 = vunpack.c.l.b16 %v545
    %v641 = vunpack.c.h.b16 %v545
    %v642 = vpack.c.b16 %v582, %v578
    %v643 = vpack.c.b16 %v583, %v579
    %v644 = vpack.c.b16 %v584, %v580
    %v645 = vpack.c.b16 %v585, %v581
    %v646 = vpack.c.b16 %v590, %v586
    %v647 = vpack.c.b16 %v591, %v587
    %v648 = vpack.c.b16 %v592, %v588
    %v649 = vpack.c.b16 %v593, %v589
    %v650 = vpack.c.b16 %v598, %v594
    %v651 = vpack.c.b16 %v599, %v595
    %v652 = vpack.c.b16 %v600, %v596
    %v653 = vpack.c.b16 %v601, %v597
    %v654 = vpack.c.b16 %v606, %v602
    %v655 = vpack.c.b16 %v607, %v603
    %v656 = vpack.c.b16 %v608, %v604
    %v657 = vpack.c.b16 %v609, %v605
    %v658 = vpack.c.b16 %v614, %v610
    %v659 = vpack.c.b16 %v615, %v611
    %v660 = vpack.c.b16 %v616, %v612
    %v661 = vpack.c.b16 %v617, %v613
    %v662 = vpack.c.b16 %v622, %v618
    %v663 = vpack.c.b16 %v623, %v619
    %v664 = vpack.c.b16 %v624, %v620
    %v665 = vpack.c.b16 %v625, %v621
    %v666 = vpack.c.b16 %v630, %v626
    %v667 = vpack.c.b16 %v631, %v627
    %v668 = vpack.c.b16 %v632, %v628
    %v669 = vpack.c.b16 %v633, %v629
    %v670 = vpack.c.b16 %v638, %v634
    %v671 = vpack.c.b16 %v639, %v635
    %v672 = vpack.c.b16 %v640, %v636
    %v673 = vpack.c.b16 %v641, %v637
    %706 = vmatprep.subr.bf16.mxu0 %v643
    %707 = vmatpush1.bf16.msra.mxu0 %v642
    %708 = vmatprep.subr.bf16.mxu0 %v647
    %709 = vmatpush1.bf16.msra.mxu0 %v646
    %710 = vmatprep.subr.bf16.mxu0 %v651
    %711 = vmatpush1.bf16.msra.mxu0 %v650
    %712 = vmatprep.subr.bf16.mxu0 %v655
    %713 = vmatpush1.bf16.msra.mxu0 %v654
    %714 = vmatprep.subr.bf16.mxu0 %v659
    %715 = vmatpush1.bf16.msra.mxu0 %v658
    %716 = vmatprep.subr.bf16.mxu0 %v663
    %717 = vmatpush1.bf16.msra.mxu0 %v662
    %718 = vmatprep.subr.bf16.mxu0 %v667
    %719 = vmatpush1.bf16.msra.mxu0 %v666
    %720 = vmatprep.subr.bf16.mxu0 %v671
    %721 = vmatpush1.bf16.msra.mxu0 %v670
    %722 = vmatprep.subr.bf16.mxu0 0
    %723 = vmatpush1.bf16.msra.mxu0 0
    %724 = vmatprep.subr.bf16.mxu0 0
    %725 = vmatpush1.bf16.msra.mxu0 0
    %726 = vmatprep.subr.bf16.mxu0 0
    %727 = vmatpush1.bf16.msra.mxu0 0
    %728 = vmatprep.subr.bf16.mxu0 0
    %729 = vmatpush1.bf16.msra.mxu0 0
    %730 = vmatprep.subr.bf16.mxu0 0
    %731 = vmatpush1.bf16.msra.mxu0 0
    %732 = vmatprep.subr.bf16.mxu0 0
    %733 = vmatpush1.bf16.msra.mxu0 0
    %734 = vmatprep.subr.bf16.mxu0 0
    %735 = vmatpush1.bf16.msra.mxu0 0
    %736 = vmatprep.subr.bf16.mxu0 0
    %737 = vmatpush1.bf16.msra.mxu0 0
    %738 = vmatprep.mubr.bf16.mxu0 0
    %739 = vmatmul.mubr.bf16.gmra.mrb[0].mxu0 %v506
    %v740 = vpop.f32.mrb[0].mxu0
    %v741 = vadd.f32 0.0, %v740
    %v742 = vpop.f32.mrb[0].mxu0
    %v743 = vadd.f32 0.0, %v742
    %v744 = vpop.f32.mrb[0].mxu0
    %v745 = vpop.f32.mrb[0].mxu0
    %746 = vdwg.mxu0
    %747 = vmatprep.subr.bf16.mxu0 %v645
    %748 = vmatpush1.bf16.msra.mxu0 %v644
    %749 = vmatprep.subr.bf16.mxu0 %v649
    %750 = vmatpush1.bf16.msra.mxu0 %v648
    %751 = vmatprep.subr.bf16.mxu0 %v653
    %752 = vmatpush1.bf16.msra.mxu0 %v652
    %753 = vmatprep.subr.bf16.mxu0 %v657
    %754 = vmatpush1.bf16.msra.mxu0 %v656
    %755 = vmatprep.subr.bf16.mxu0 %v661
    %756 = vmatpush1.bf16.msra.mxu0 %v660
    %757 = vmatprep.subr.bf16.mxu0 %v665
    %758 = vmatpush1.bf16.msra.mxu0 %v664
    %759 = vmatprep.subr.bf16.mxu0 %v669
    %760 = vmatpush1.bf16.msra.mxu0 %v668
    %761 = vmatprep.subr.bf16.mxu0 %v673
    %762 = vmatpush1.bf16.msra.mxu0 %v672
    %763 = vmatprep.subr.bf16.mxu0 0
    %764 = vmatpush1.bf16.msra.mxu0 0
    %765 = vmatprep.subr.bf16.mxu0 0
    %766 = vmatpush1.bf16.msra.mxu0 0
    %767 = vmatprep.subr.bf16.mxu0 0
    %768 = vmatpush1.bf16.msra.mxu0 0
    %769 = vmatprep.subr.bf16.mxu0 0
    %770 = vmatpush1.bf16.msra.mxu0 0
    %771 = vmatprep.subr.bf16.mxu0 0
    %772 = vmatpush1.bf16.msra.mxu0 0
    %773 = vmatprep.subr.bf16.mxu0 0
    %774 = vmatpush1.bf16.msra.mxu0 0
    %775 = vmatprep.subr.bf16.mxu0 0
    %776 = vmatpush1.bf16.msra.mxu0 0
    %777 = vmatprep.subr.bf16.mxu0 0
    %778 = vmatpush1.bf16.msra.mxu0 0
    %779 = vmatprep.mubr.bf16.mxu0 0
    %780 = vmatmul.mubr.bf16.gmra.mrb[0].mxu0 %v506
    %v781 = vpop.f32.mrb[0].mxu0
    %v782 = vadd.f32 0.0, %v781
    %v783 = vpop.f32.mrb[0].mxu0
    %v784 = vadd.f32 0.0, %v783
    %v785 = vpop.f32.mrb[0].mxu0
    %v786 = vpop.f32.mrb[0].mxu0
    %787 = vdwg.mxu0
    %v788 = vadd.f32 %v510, %v741
    %v789 = vadd.f32 %v511, %v743
    %v790 = vadd.f32 %v512, %v782
    %v791 = vadd.f32 %v513, %v784
    %v792 = vxor.u32 %v788, 2147483648
    %v793 = vmul.f32 %v792, 1.442695
    %v794 = vpow.pop %v793
    %v795 = vadd.f32 %v794, 1.0
    %v796 = vrcp.pop %v795
    %v797 = vmul.f32 1.0, %v796
    %v798 = vxor.u32 %v789, 2147483648
    %v799 = vmul.f32 %v798, 1.442695
    %v800 = vpow.pop %v799
    %v801 = vadd.f32 %v800, 1.0
    %v802 = vrcp.pop %v801
    %v803 = vmul.f32 1.0, %v802
    %v804 = vtanh.pop %v790
    %v805 = vxor.u32 %v791, 2147483648
    %v806 = vmul.f32 %v805, 1.442695
    %v807 = vpow.pop %v806
    %v808 = vadd.f32 %v807, 1.0
    %v809 = vrcp.pop %v808
    %v810 = vmul.f32 1.0, %v809
    %v811 = vmul.f32 %v803, %v503
    %v812 = vmul.f32 %v797, %v804
    %v813 = vadd.f32 %v811, %v812
    %v814 = vtanh.pop %v813
    %v815 = vmul.f32 %v810, %v814
    %v816 = vld [vmem:[%s4] sm:$0xff]
    %v817 = vld [vmem:[%s4 + $0x8] sm:$0xff]
    %v818 = vld [vmem:[%s4 + $0x10] sm:$0xff]
    %v819 = vld [vmem:[%s4 + $0x18] sm:$0xff]
    %v820 = vld [vmem:[%s4 + $0x20] sm:$0xff]
    %v821 = vld [vmem:[%s4 + $0x28] sm:$0xff]
    %v822 = vld [vmem:[%s4 + $0x30] sm:$0xff]
    %v823 = vld [vmem:[%s4 + $0x38] sm:$0xff]
    %v824 = vld [vmem:[%s4 + $0x40] sm:$0xff]
    %v825 = vld [vmem:[%s4 + $0x48] sm:$0xff]
    %v826 = vld [vmem:[%s4 + $0x50] sm:$0xff]
    %v827 = vld [vmem:[%s4 + $0x58] sm:$0xff]
    %v828 = vld [vmem:[%s4 + $0x60] sm:$0xff]
    %v829 = vld [vmem:[%s4 + $0x68] sm:$0xff]
    %v830 = vld [vmem:[%s4 + $0x70] sm:$0xff]
    %v831 = vld [vmem:[%s4 + $0x78] sm:$0xff]
    %v832 = vld [vmem:[%s4 + $0x80] sm:$0xff]
    %v833 = vld [vmem:[%s4 + $0x88] sm:$0xff]
    %v834 = vld [vmem:[%s4 + $0x90] sm:$0xff]
    %v835 = vld [vmem:[%s4 + $0x98] sm:$0xff]
    %v836 = vld [vmem:[%s4 + $0xa0] sm:$0xff]
    %v837 = vld [vmem:[%s4 + $0xa8] sm:$0xff]
    %v838 = vld [vmem:[%s4 + $0xb0] sm:$0xff]
    %v839 = vld [vmem:[%s4 + $0xb8] sm:$0xff]
    %v840 = vld [vmem:[%s4 + $0xc0] sm:$0xff]
    %v841 = vld [vmem:[%s4 + $0xc8] sm:$0xff]
    %v842 = vld [vmem:[%s4 + $0xd0] sm:$0xff]
    %v843 = vld [vmem:[%s4 + $0xd8] sm:$0xff]
    %v844 = vld [vmem:[%s4 + $0xe0] sm:$0xff]
    %v845 = vld [vmem:[%s4 + $0xe8] sm:$0xff]
    %v846 = vld [vmem:[%s4 + $0xf0] sm:$0xff]
    %v847 = vld [vmem:[%s4 + $0xf8] sm:$0xff]
    %v848 = vld [vmem:[%s4 + $0x100] sm:$0xff]
    %v849 = vld [vmem:[%s4 + $0x108] sm:$0xff]
    %v850 = vld [vmem:[%s4 + $0x110] sm:$0xff]
    %v851 = vld [vmem:[%s4 + $0x118] sm:$0xff]
    %v852 = vld [vmem:[%s4 + $0x120] sm:$0xff]
    %v853 = vld [vmem:[%s4 + $0x128] sm:$0xff]
    %v854 = vld [vmem:[%s4 + $0x130] sm:$0xff]
    %v855 = vld [vmem:[%s4 + $0x138] sm:$0xff]
    %v856 = vld [vmem:[%s4 + $0x140] sm:$0xff]
    %v857 = vld [vmem:[%s4 + $0x148] sm:$0xff]
    %v858 = vld [vmem:[%s4 + $0x150] sm:$0xff]
    %v859 = vld [vmem:[%s4 + $0x158] sm:$0xff]
    %v860 = vld [vmem:[%s4 + $0x160] sm:$0xff]
    %v861 = vld [vmem:[%s4 + $0x168] sm:$0xff]
    %v862 = vld [vmem:[%s4 + $0x170] sm:$0xff]
    %v863 = vld [vmem:[%s4 + $0x178] sm:$0xff]
    %v864 = vld [vmem:[%s4 + $0x180] sm:$0xff]
    %v865 = vld [vmem:[%s4 + $0x188] sm:$0xff]
    %v866 = vld [vmem:[%s4 + $0x190] sm:$0xff]
    %v867 = vld [vmem:[%s4 + $0x198] sm:$0xff]
    %v868 = vld [vmem:[%s4 + $0x1a0] sm:$0xff]
    %v869 = vld [vmem:[%s4 + $0x1a8] sm:$0xff]
    %v870 = vld [vmem:[%s4 + $0x1b0] sm:$0xff]
    %v871 = vld [vmem:[%s4 + $0x1b8] sm:$0xff]
    %v872 = vld [vmem:[%s4 + $0x1c0] sm:$0xff]
    %v873 = vld [vmem:[%s4 + $0x1c8] sm:$0xff]
    %v874 = vld [vmem:[%s4 + $0x1d0] sm:$0xff]
    %v875 = vld [vmem:[%s4 + $0x1d8] sm:$0xff]
    %v876 = vld [vmem:[%s4 + $0x1e0] sm:$0xff]
    %v877 = vld [vmem:[%s4 + $0x1e8] sm:$0xff]
    %v878 = vld [vmem:[%s4 + $0x1f0] sm:$0xff]
    %v879 = vld [vmem:[%s4 + $0x1f8] sm:$0xff]
    %v880 = vld [vmem:[#allocation9] sm:$0xf]
    %v882 = vlaneseq
    %v883 = vshrl.u32 %v882, 7
    %v884 = vsub.s32 0, %v883
    %v885 = vrot.slane %v880, %v884
    %v886 = vlaneseq
    %v887 = vshrl.u32 %v886, 7
    %v888 = vsub.s32 1, %v887
    %v889 = vrot.slane %v880, %v888
    %v890 = vlaneseq
    %v891 = vshrl.u32 %v890, 7
    %v892 = vsub.s32 2, %v891
    %v893 = vrot.slane %v880, %v892
    %v894 = vlaneseq
    %v895 = vshrl.u32 %v894, 7
    %v896 = vsub.s32 3, %v895
    %v897 = vrot.slane %v880, %v896
    %v966 = vunpack.c.l.b16 %v816
    %v967 = vunpack.c.h.b16 %v816
    %v968 = vunpack.c.l.b16 %v817
    %v969 = vunpack.c.h.b16 %v817
    %v970 = vunpack.c.l.b16 %v818
    %v971 = vunpack.c.h.b16 %v818
    %v972 = vunpack.c.l.b16 %v819
    %v973 = vunpack.c.h.b16 %v819
    %v974 = vunpack.c.l.b16 %v820
    %v975 = vunpack.c.h.b16 %v820
    %v976 = vunpack.c.l.b16 %v821
    %v977 = vunpack.c.h.b16 %v821
    %v978 = vunpack.c.l.b16 %v822
    %v979 = vunpack.c.h.b16 %v822
    %v980 = vunpack.c.l.b16 %v823
    %v981 = vunpack.c.h.b16 %v823
    %v982 = vunpack.c.l.b16 %v824
    %v983 = vunpack.c.h.b16 %v824
    %v984 = vunpack.c.l.b16 %v825
    %v985 = vunpack.c.h.b16 %v825
    %v986 = vunpack.c.l.b16 %v826
    %v987 = vunpack.c.h.b16 %v826
    %v988 = vunpack.c.l.b16 %v827
    %v989 = vunpack.c.h.b16 %v827
    %v990 = vunpack.c.l.b16 %v828
    %v991 = vunpack.c.h.b16 %v828
    %v992 = vunpack.c.l.b16 %v829
    %v993 = vunpack.c.h.b16 %v829
    %v994 = vunpack.c.l.b16 %v830
    %v995 = vunpack.c.h.b16 %v830
    %v996 = vunpack.c.l.b16 %v831
    %v997 = vunpack.c.h.b16 %v831
    %v998 = vunpack.c.l.b16 %v832
    %v999 = vunpack.c.h.b16 %v832
    %v1000 = vunpack.c.l.b16 %v833
    %v1001 = vunpack.c.h.b16 %v833
    %v1002 = vunpack.c.l.b16 %v834
    %v1003 = vunpack.c.h.b16 %v834
    %v1004 = vunpack.c.l.b16 %v835
    %v1005 = vunpack.c.h.b16 %v835
    %v1006 = vunpack.c.l.b16 %v836
    %v1007 = vunpack.c.h.b16 %v836
    %v1008 = vunpack.c.l.b16 %v837
    %v1009 = vunpack.c.h.b16 %v837
    %v1010 = vunpack.c.l.b16 %v838
    %v1011 = vunpack.c.h.b16 %v838
    %v1012 = vunpack.c.l.b16 %v839
    %v1013 = vunpack.c.h.b16 %v839
    %v1014 = vunpack.c.l.b16 %v840
    %v1015 = vunpack.c.h.b16 %v840
    %v1016 = vunpack.c.l.b16 %v841
    %v1017 = vunpack.c.h.b16 %v841
    %v1018 = vunpack.c.l.b16 %v842
    %v1019 = vunpack.c.h.b16 %v842
    %v1020 = vunpack.c.l.b16 %v843
    %v1021 = vunpack.c.h.b16 %v843
    %v1022 = vunpack.c.l.b16 %v844
    %v1023 = vunpack.c.h.b16 %v844
    %v1024 = vunpack.c.l.b16 %v845
    %v1025 = vunpack.c.h.b16 %v845
    %v1026 = vunpack.c.l.b16 %v846
    %v1027 = vunpack.c.h.b16 %v846
    %v1028 = vunpack.c.l.b16 %v847
    %v1029 = vunpack.c.h.b16 %v847
    %v1030 = vunpack.c.l.b16 %v848
    %v1031 = vunpack.c.h.b16 %v848
    %v1032 = vunpack.c.l.b16 %v849
    %v1033 = vunpack.c.h.b16 %v849
    %v1034 = vunpack.c.l.b16 %v850
    %v1035 = vunpack.c.h.b16 %v850
    %v1036 = vunpack.c.l.b16 %v851
    %v1037 = vunpack.c.h.b16 %v851
    %v1038 = vunpack.c.l.b16 %v852
    %v1039 = vunpack.c.h.b16 %v852
    %v1040 = vunpack.c.l.b16 %v853
    %v1041 = vunpack.c.h.b16 %v853
    %v1042 = vunpack.c.l.b16 %v854
    %v1043 = vunpack.c.h.b16 %v854
    %v1044 = vunpack.c.l.b16 %v855
    %v1045 = vunpack.c.h.b16 %v855
    %v1046 = vunpack.c.l.b16 %v856
    %v1047 = vunpack.c.h.b16 %v856
    %v1048 = vunpack.c.l.b16 %v857
    %v1049 = vunpack.c.h.b16 %v857
    %v1050 = vunpack.c.l.b16 %v858
    %v1051 = vunpack.c.h.b16 %v858
    %v1052 = vunpack.c.l.b16 %v859
    %v1053 = vunpack.c.h.b16 %v859
    %v1054 = vunpack.c.l.b16 %v860
    %v1055 = vunpack.c.h.b16 %v860
    %v1056 = vunpack.c.l.b16 %v861
    %v1057 = vunpack.c.h.b16 %v861
    %v1058 = vunpack.c.l.b16 %v862
    %v1059 = vunpack.c.h.b16 %v862
    %v1060 = vunpack.c.l.b16 %v863
    %v1061 = vunpack.c.h.b16 %v863
    %v1062 = vunpack.c.l.b16 %v864
    %v1063 = vunpack.c.h.b16 %v864
    %v1064 = vunpack.c.l.b16 %v865
    %v1065 = vunpack.c.h.b16 %v865
    %v1066 = vunpack.c.l.b16 %v866
    %v1067 = vunpack.c.h.b16 %v866
    %v1068 = vunpack.c.l.b16 %v867
    %v1069 = vunpack.c.h.b16 %v867
    %v1070 = vunpack.c.l.b16 %v868
    %v1071 = vunpack.c.h.b16 %v868
    %v1072 = vunpack.c.l.b16 %v869
    %v1073 = vunpack.c.h.b16 %v869
    %v1074 = vunpack.c.l.b16 %v870
    %v1075 = vunpack.c.h.b16 %v870
    %v1076 = vunpack.c.l.b16 %v871
    %v1077 = vunpack.c.h.b16 %v871
    %v1078 = vunpack.c.l.b16 %v872
    %v1079 = vunpack.c.h.b16 %v872
    %v1080 = vunpack.c.l.b16 %v873
    %v1081 = vunpack.c.h.b16 %v873
    %v1082 = vunpack.c.l.b16 %v874
    %v1083 = vunpack.c.h.b16 %v874
    %v1084 = vunpack.c.l.b16 %v875
    %v1085 = vunpack.c.h.b16 %v875
    %v1086 = vunpack.c.l.b16 %v876
    %v1087 = vunpack.c.h.b16 %v876
    %v1088 = vunpack.c.l.b16 %v877
    %v1089 = vunpack.c.h.b16 %v877
    %v1090 = vunpack.c.l.b16 %v878
    %v1091 = vunpack.c.h.b16 %v878
    %v1092 = vunpack.c.l.b16 %v879
    %v1093 = vunpack.c.h.b16 %v879
    %v1094 = vpack.c.b16 %v970, %v966
    %v1095 = vpack.c.b16 %v971, %v967
    %v1096 = vpack.c.b16 %v972, %v968
    %v1097 = vpack.c.b16 %v973, %v969
    %v1098 = vpack.c.b16 %v978, %v974
    %v1099 = vpack.c.b16 %v979, %v975
    %v1100 = vpack.c.b16 %v980, %v976
    %v1101 = vpack.c.b16 %v981, %v977
    %v1102 = vpack.c.b16 %v986, %v982
    %v1103 = vpack.c.b16 %v987, %v983
    %v1104 = vpack.c.b16 %v988, %v984
    %v1105 = vpack.c.b16 %v989, %v985
    %v1106 = vpack.c.b16 %v994, %v990
    %v1107 = vpack.c.b16 %v995, %v991
    %v1108 = vpack.c.b16 %v996, %v992
    %v1109 = vpack.c.b16 %v997, %v993
    %v1110 = vpack.c.b16 %v1002, %v998
    %v1111 = vpack.c.b16 %v1003, %v999
    %v1112 = vpack.c.b16 %v1004, %v1000
    %v1113 = vpack.c.b16 %v1005, %v1001
    %v1114 = vpack.c.b16 %v1010, %v1006
    %v1115 = vpack.c.b16 %v1011, %v1007
    %v1116 = vpack.c.b16 %v1012, %v1008
    %v1117 = vpack.c.b16 %v1013, %v1009
    %v1118 = vpack.c.b16 %v1018, %v1014
    %v1119 = vpack.c.b16 %v1019, %v1015
    %v1120 = vpack.c.b16 %v1020, %v1016
    %v1121 = vpack.c.b16 %v1021, %v1017
    %v1122 = vpack.c.b16 %v1026, %v1022
    %v1123 = vpack.c.b16 %v1027, %v1023
    %v1124 = vpack.c.b16 %v1028, %v1024
    %v1125 = vpack.c.b16 %v1029, %v1025
    %v1126 = vpack.c.b16 %v1034, %v1030
    %v1127 = vpack.c.b16 %v1035, %v1031
    %v1128 = vpack.c.b16 %v1036, %v1032
    %v1129 = vpack.c.b16 %v1037, %v1033
    %v1130 = vpack.c.b16 %v1042, %v1038
    %v1131 = vpack.c.b16 %v1043, %v1039
    %v1132 = vpack.c.b16 %v1044, %v1040
    %v1133 = vpack.c.b16 %v1045, %v1041
    %v1134 = vpack.c.b16 %v1050, %v1046
    %v1135 = vpack.c.b16 %v1051, %v1047
    %v1136 = vpack.c.b16 %v1052, %v1048
    %v1137 = vpack.c.b16 %v1053, %v1049
    %v1138 = vpack.c.b16 %v1058, %v1054
    %v1139 = vpack.c.b16 %v1059, %v1055
    %v1140 = vpack.c.b16 %v1060, %v1056
    %v1141 = vpack.c.b16 %v1061, %v1057
    %v1142 = vpack.c.b16 %v1066, %v1062
    %v1143 = vpack.c.b16 %v1067, %v1063
    %v1144 = vpack.c.b16 %v1068, %v1064
    %v1145 = vpack.c.b16 %v1069, %v1065
    %v1146 = vpack.c.b16 %v1074, %v1070
    %v1147 = vpack.c.b16 %v1075, %v1071
    %v1148 = vpack.c.b16 %v1076, %v1072
    %v1149 = vpack.c.b16 %v1077, %v1073
    %v1150 = vpack.c.b16 %v1082, %v1078
    %v1151 = vpack.c.b16 %v1083, %v1079
    %v1152 = vpack.c.b16 %v1084, %v1080
    %v1153 = vpack.c.b16 %v1085, %v1081
    %v1154 = vpack.c.b16 %v1090, %v1086
    %v1155 = vpack.c.b16 %v1091, %v1087
    %v1156 = vpack.c.b16 %v1092, %v1088
    %v1157 = vpack.c.b16 %v1093, %v1089
    %1222 = vmatprep.subr.bf16.mxu0 %v1095
    %1223 = vmatpush1.bf16.msra.mxu0 %v1094
    %1224 = vmatprep.subr.bf16.mxu0 %v1099
    %1225 = vmatpush1.bf16.msra.mxu0 %v1098
    %1226 = vmatprep.subr.bf16.mxu0 %v1103
    %1227 = vmatpush1.bf16.msra.mxu0 %v1102
    %1228 = vmatprep.subr.bf16.mxu0 %v1107
    %1229 = vmatpush1.bf16.msra.mxu0 %v1106
    %1230 = vmatprep.subr.bf16.mxu0 %v1111
    %1231 = vmatpush1.bf16.msra.mxu0 %v1110
    %1232 = vmatprep.subr.bf16.mxu0 %v1115
    %1233 = vmatpush1.bf16.msra.mxu0 %v1114
    %1234 = vmatprep.subr.bf16.mxu0 %v1119
    %1235 = vmatpush1.bf16.msra.mxu0 %v1118
    %1236 = vmatprep.subr.bf16.mxu0 %v1123
    %1237 = vmatpush1.bf16.msra.mxu0 %v1122
    %1238 = vmatprep.subr.bf16.mxu0 %v1127
    %1239 = vmatpush1.bf16.msra.mxu0 %v1126
    %1240 = vmatprep.subr.bf16.mxu0 %v1131
    %1241 = vmatpush1.bf16.msra.mxu0 %v1130
    %1242 = vmatprep.subr.bf16.mxu0 %v1135
    %1243 = vmatpush1.bf16.msra.mxu0 %v1134
    %1244 = vmatprep.subr.bf16.mxu0 %v1139
    %1245 = vmatpush1.bf16.msra.mxu0 %v1138
    %1246 = vmatprep.subr.bf16.mxu0 %v1143
    %1247 = vmatpush1.bf16.msra.mxu0 %v1142
    %1248 = vmatprep.subr.bf16.mxu0 %v1147
    %1249 = vmatpush1.bf16.msra.mxu0 %v1146
    %1250 = vmatprep.subr.bf16.mxu0 %v1151
    %1251 = vmatpush1.bf16.msra.mxu0 %v1150
    %1252 = vmatprep.subr.bf16.mxu0 %v1155
    %1253 = vmatpush1.bf16.msra.mxu0 %v1154
    %1254 = vmatprep.mubr.bf16.mxu0 0
    %1255 = vmatmul.mubr.bf16.gmra.mrb[0].mxu0 %v506
    %v1256 = vpop.f32.mrb[0].mxu0
    %v1257 = vadd.f32 %v885, %v1256
    %v1258 = vpop.f32.mrb[0].mxu0
    %v1259 = vadd.f32 %v889, %v1258
    %v1260 = vpop.f32.mrb[0].mxu0
    %v1261 = vpop.f32.mrb[0].mxu0
    %1262 = vdwg.mxu0
    %1263 = vmatprep.subr.bf16.mxu0 %v1097
    %1264 = vmatpush1.bf16.msra.mxu0 %v1096
    %1265 = vmatprep.subr.bf16.mxu0 %v1101
    %1266 = vmatpush1.bf16.msra.mxu0 %v1100
    %1267 = vmatprep.subr.bf16.mxu0 %v1105
    %1268 = vmatpush1.bf16.msra.mxu0 %v1104
    %1269 = vmatprep.subr.bf16.mxu0 %v1109
    %1270 = vmatpush1.bf16.msra.mxu0 %v1108
    %1271 = vmatprep.subr.bf16.mxu0 %v1113
    %1272 = vmatpush1.bf16.msra.mxu0 %v1112
    %1273 = vmatprep.subr.bf16.mxu0 %v1117
    %1274 = vmatpush1.bf16.msra.mxu0 %v1116
    %1275 = vmatprep.subr.bf16.mxu0 %v1121
    %1276 = vmatpush1.bf16.msra.mxu0 %v1120
    %1277 = vmatprep.subr.bf16.mxu0 %v1125
    %1278 = vmatpush1.bf16.msra.mxu0 %v1124
    %1279 = vmatprep.subr.bf16.mxu0 %v1129
    %1280 = vmatpush1.bf16.msra.mxu0 %v1128
    %1281 = vmatprep.subr.bf16.mxu0 %v1133
    %1282 = vmatpush1.bf16.msra.mxu0 %v1132
    %1283 = vmatprep.subr.bf16.mxu0 %v1137
    %1284 = vmatpush1.bf16.msra.mxu0 %v1136
    %1285 = vmatprep.subr.bf16.mxu0 %v1141
    %1286 = vmatpush1.bf16.msra.mxu0 %v1140
    %1287 = vmatprep.subr.bf16.mxu0 %v1145
    %1288 = vmatpush1.bf16.msra.mxu0 %v1144
    %1289 = vmatprep.subr.bf16.mxu0 %v1149
    %1290 = vmatpush1.bf16.msra.mxu0 %v1148
    %1291 = vmatprep.subr.bf16.mxu0 %v1153
    %1292 = vmatpush1.bf16.msra.mxu0 %v1152
    %1293 = vmatprep.subr.bf16.mxu0 %v1157
    %1294 = vmatpush1.bf16.msra.mxu0 %v1156
    %1295 = vmatprep.mubr.bf16.mxu0 0
    %1296 = vmatmul.mubr.bf16.gmra.mrb[0].mxu0 %v506
    %v1297 = vpop.f32.mrb[0].mxu0
    %v1298 = vadd.f32 %v893, %v1297
    %v1299 = vpop.f32.mrb[0].mxu0
    %v1300 = vadd.f32 %v897, %v1299
    %v1301 = vpop.f32.mrb[0].mxu0
    %v1302 = vpop.f32.mrb[0].mxu0
    %1303 = vdwg.mxu0
    %v1304 = vxor.u32 %v1257, 2147483648
    %v1305 = vmul.f32 %v1304, 1.442695
    %v1306 = vpow.pop %v1305
    %v1307 = vadd.f32 %v1306, 1.0
    %v1308 = vrcp.pop %v1307
    %v1309 = vmul.f32 1.0, %v1308
    %v1310 = vxor.u32 %v1259, 2147483648
    %v1311 = vmul.f32 %v1310, 1.442695
    %v1312 = vpow.pop %v1311
    %v1313 = vadd.f32 %v1312, 1.0
    %v1314 = vrcp.pop %v1313
    %v1315 = vmul.f32 1.0, %v1314
    %v1316 = vtanh.pop %v1298
    %v1317 = vxor.u32 %v1300, 2147483648
    %v1318 = vmul.f32 %v1317, 1.442695
    %v1319 = vpow.pop %v1318
    %v1320 = vadd.f32 %v1319, 1.0
    %v1321 = vrcp.pop %v1320
    %v1322 = vmul.f32 1.0, %v1321
    %v1323 = vmul.f32 %v1315, 0.0
    %v1324 = vmul.f32 %v1309, %v1316
    %v1325 = vadd.f32 %v1323, %v1324
    %v1326 = vtanh.pop %v1325
    %v1327 = vmul.f32 %v1322, %v1326
    %1328 = vst [vmem:[#allocation3] sm:$0xff] %v1327
    %v1329 = vpack.c.bf16 %v815, %v815
    %v1330 = vpack.c.bf16 %v1327, %v1327
    %s1331 = smul.u32 2, 4
    %s1332 = smul.addr %s1331, 8
    %s1333 = scalar_lea.vmem [#allocation2], %s1332
    %v1334 = vld [vmem:[%s1333] sm:$0xff]
    %v1335 = vld [vmem:[%s1333 + $0x8] sm:$0xff]
    %v1336 = vld [vmem:[%s1333 + $0x10] sm:$0xff]
    %v1337 = vld [vmem:[%s1333 + $0x18] sm:$0xff]
    %v1338 = vld [vmem:[#allocation6] sm:$0xff]
    %v1339 = vld [vmem:[#allocation6 + $0x8] sm:$0xff]
    %v1340 = vld [vmem:[#allocation6 + $0x10] sm:$0xff]
    %v1341 = vld [vmem:[#allocation6 + $0x18] sm:$0xff]
    %v1342 = vld [vmem:[#allocation6 + $0x20] sm:$0xff]
    %v1343 = vld [vmem:[#allocation6 + $0x28] sm:$0xff]
    %v1344 = vld [vmem:[#allocation6 + $0x30] sm:$0xff]
    %v1345 = vld [vmem:[#allocation6 + $0x38] sm:$0xff]
    %v1346 = vld [vmem:[#allocation6 + $0x40] sm:$0xff]
    %v1347 = vld [vmem:[#allocation6 + $0x48] sm:$0xff]
    %v1348 = vld [vmem:[#allocation6 + $0x50] sm:$0xff]
    %v1349 = vld [vmem:[#allocation6 + $0x58] sm:$0xff]
    %v1350 = vld [vmem:[#allocation6 + $0x60] sm:$0xff]
    %v1351 = vld [vmem:[#allocation6 + $0x68] sm:$0xff]
    %v1352 = vld [vmem:[#allocation6 + $0x70] sm:$0xff]
    %v1353 = vld [vmem:[#allocation6 + $0x78] sm:$0xff]
    %v1354 = vld [vmem:[#allocation6 + $0x80] sm:$0xff]
    %v1355 = vld [vmem:[#allocation6 + $0x88] sm:$0xff]
    %v1356 = vld [vmem:[#allocation6 + $0x90] sm:$0xff]
    %v1357 = vld [vmem:[#allocation6 + $0x98] sm:$0xff]
    %v1358 = vld [vmem:[#allocation6 + $0xa0] sm:$0xff]
    %v1359 = vld [vmem:[#allocation6 + $0xa8] sm:$0xff]
    %v1360 = vld [vmem:[#allocation6 + $0xb0] sm:$0xff]
    %v1361 = vld [vmem:[#allocation6 + $0xb8] sm:$0xff]
    %v1362 = vld [vmem:[#allocation6 + $0xc0] sm:$0xff]
    %v1363 = vld [vmem:[#allocation6 + $0xc8] sm:$0xff]
    %v1364 = vld [vmem:[#allocation6 + $0xd0] sm:$0xff]
    %v1365 = vld [vmem:[#allocation6 + $0xd8] sm:$0xff]
    %v1366 = vld [vmem:[#allocation6 + $0xe0] sm:$0xff]
    %v1367 = vld [vmem:[#allocation6 + $0xe8] sm:$0xff]
    %v1368 = vld [vmem:[#allocation6 + $0xf0] sm:$0xff]
    %v1369 = vld [vmem:[#allocation6 + $0xf8] sm:$0xff]
    %v1402 = vunpack.c.l.b16 %v1338
    %v1403 = vunpack.c.h.b16 %v1338
    %v1404 = vunpack.c.l.b16 %v1339
    %v1405 = vunpack.c.h.b16 %v1339
    %v1406 = vunpack.c.l.b16 %v1340
    %v1407 = vunpack.c.h.b16 %v1340
    %v1408 = vunpack.c.l.b16 %v1341
    %v1409 = vunpack.c.h.b16 %v1341
    %v1410 = vunpack.c.l.b16 %v1342
    %v1411 = vunpack.c.h.b16 %v1342
    %v1412 = vunpack.c.l.b16 %v1343
    %v1413 = vunpack.c.h.b16 %v1343
    %v1414 = vunpack.c.l.b16 %v1344
    %v1415 = vunpack.c.h.b16 %v1344
    %v1416 = vunpack.c.l.b16 %v1345
    %v1417 = vunpack.c.h.b16 %v1345
    %v1418 = vunpack.c.l.b16 %v1346
    %v1419 = vunpack.c.h.b16 %v1346
    %v1420 = vunpack.c.l.b16 %v1347
    %v1421 = vunpack.c.h.b16 %v1347
    %v1422 = vunpack.c.l.b16 %v1348
    %v1423 = vunpack.c.h.b16 %v1348
    %v1424 = vunpack.c.l.b16 %v1349
    %v1425 = vunpack.c.h.b16 %v1349
    %v1426 = vunpack.c.l.b16 %v1350
    %v1427 = vunpack.c.h.b16 %v1350
    %v1428 = vunpack.c.l.b16 %v1351
    %v1429 = vunpack.c.h.b16 %v1351
    %v1430 = vunpack.c.l.b16 %v1352
    %v1431 = vunpack.c.h.b16 %v1352
    %v1432 = vunpack.c.l.b16 %v1353
    %v1433 = vunpack.c.h.b16 %v1353
    %v1434 = vunpack.c.l.b16 %v1354
    %v1435 = vunpack.c.h.b16 %v1354
    %v1436 = vunpack.c.l.b16 %v1355
    %v1437 = vunpack.c.h.b16 %v1355
    %v1438 = vunpack.c.l.b16 %v1356
    %v1439 = vunpack.c.h.b16 %v1356
    %v1440 = vunpack.c.l.b16 %v1357
    %v1441 = vunpack.c.h.b16 %v1357
    %v1442 = vunpack.c.l.b16 %v1358
    %v1443 = vunpack.c.h.b16 %v1358
    %v1444 = vunpack.c.l.b16 %v1359
    %v1445 = vunpack.c.h.b16 %v1359
    %v1446 = vunpack.c.l.b16 %v1360
    %v1447 = vunpack.c.h.b16 %v1360
    %v1448 = vunpack.c.l.b16 %v1361
    %v1449 = vunpack.c.h.b16 %v1361
    %v1450 = vunpack.c.l.b16 %v1362
    %v1451 = vunpack.c.h.b16 %v1362
    %v1452 = vunpack.c.l.b16 %v1363
    %v1453 = vunpack.c.h.b16 %v1363
    %v1454 = vunpack.c.l.b16 %v1364
    %v1455 = vunpack.c.h.b16 %v1364
    %v1456 = vunpack.c.l.b16 %v1365
    %v1457 = vunpack.c.h.b16 %v1365
    %v1458 = vunpack.c.l.b16 %v1366
    %v1459 = vunpack.c.h.b16 %v1366
    %v1460 = vunpack.c.l.b16 %v1367
    %v1461 = vunpack.c.h.b16 %v1367
    %v1462 = vunpack.c.l.b16 %v1368
    %v1463 = vunpack.c.h.b16 %v1368
    %v1464 = vunpack.c.l.b16 %v1369
    %v1465 = vunpack.c.h.b16 %v1369
    %v1466 = vpack.c.b16 %v1406, %v1402
    %v1467 = vpack.c.b16 %v1407, %v1403
    %v1468 = vpack.c.b16 %v1408, %v1404
    %v1469 = vpack.c.b16 %v1409, %v1405
    %v1470 = vpack.c.b16 %v1414, %v1410
    %v1471 = vpack.c.b16 %v1415, %v1411
    %v1472 = vpack.c.b16 %v1416, %v1412
    %v1473 = vpack.c.b16 %v1417, %v1413
    %v1474 = vpack.c.b16 %v1422, %v1418
    %v1475 = vpack.c.b16 %v1423, %v1419
    %v1476 = vpack.c.b16 %v1424, %v1420
    %v1477 = vpack.c.b16 %v1425, %v1421
    %v1478 = vpack.c.b16 %v1430, %v1426
    %v1479 = vpack.c.b16 %v1431, %v1427
    %v1480 = vpack.c.b16 %v1432, %v1428
    %v1481 = vpack.c.b16 %v1433, %v1429
    %v1482 = vpack.c.b16 %v1438, %v1434
    %v1483 = vpack.c.b16 %v1439, %v1435
    %v1484 = vpack.c.b16 %v1440, %v1436
    %v1485 = vpack.c.b16 %v1441, %v1437
    %v1486 = vpack.c.b16 %v1446, %v1442
    %v1487 = vpack.c.b16 %v1447, %v1443
    %v1488 = vpack.c.b16 %v1448, %v1444
    %v1489 = vpack.c.b16 %v1449, %v1445
    %v1490 = vpack.c.b16 %v1454, %v1450
    %v1491 = vpack.c.b16 %v1455, %v1451
    %v1492 = vpack.c.b16 %v1456, %v1452
    %v1493 = vpack.c.b16 %v1457, %v1453
    %v1494 = vpack.c.b16 %v1462, %v1458
    %v1495 = vpack.c.b16 %v1463, %v1459
    %v1496 = vpack.c.b16 %v1464, %v1460
    %v1497 = vpack.c.b16 %v1465, %v1461
    %1530 = vmatprep.subr.bf16.mxu0 %v1467
    %1531 = vmatpush1.bf16.msra.mxu0 %v1466
    %1532 = vmatprep.subr.bf16.mxu0 %v1471
    %1533 = vmatpush1.bf16.msra.mxu0 %v1470
    %1534 = vmatprep.subr.bf16.mxu0 %v1475
    %1535 = vmatpush1.bf16.msra.mxu0 %v1474
    %1536 = vmatprep.subr.bf16.mxu0 %v1479
    %1537 = vmatpush1.bf16.msra.mxu0 %v1478
    %1538 = vmatprep.subr.bf16.mxu0 %v1483
    %1539 = vmatpush1.bf16.msra.mxu0 %v1482
    %1540 = vmatprep.subr.bf16.mxu0 %v1487
    %1541 = vmatpush1.bf16.msra.mxu0 %v1486
    %1542 = vmatprep.subr.bf16.mxu0 %v1491
    %1543 = vmatpush1.bf16.msra.mxu0 %v1490
    %1544 = vmatprep.subr.bf16.mxu0 %v1495
    %1545 = vmatpush1.bf16.msra.mxu0 %v1494
    %1546 = vmatprep.subr.bf16.mxu0 0
    %1547 = vmatpush1.bf16.msra.mxu0 0
    %1548 = vmatprep.subr.bf16.mxu0 0
    %1549 = vmatpush1.bf16.msra.mxu0 0
    %1550 = vmatprep.subr.bf16.mxu0 0
    %1551 = vmatpush1.bf16.msra.mxu0 0
    %1552 = vmatprep.subr.bf16.mxu0 0
    %1553 = vmatpush1.bf16.msra.mxu0 0
    %1554 = vmatprep.subr.bf16.mxu0 0
    %1555 = vmatpush1.bf16.msra.mxu0 0
    %1556 = vmatprep.subr.bf16.mxu0 0
    %1557 = vmatpush1.bf16.msra.mxu0 0
    %1558 = vmatprep.subr.bf16.mxu0 0
    %1559 = vmatpush1.bf16.msra.mxu0 0
    %1560 = vmatprep.subr.bf16.mxu0 0
    %1561 = vmatpush1.bf16.msra.mxu0 0
    %1562 = vmatprep.mubr.bf16.mxu0 0
    %1563 = vmatmul.mubr.bf16.gmra.mrb[0].mxu0 %v1329
    %v1564 = vpop.f32.mrb[0].mxu0
    %v1565 = vadd.f32 0.0, %v1564
    %v1566 = vpop.f32.mrb[0].mxu0
    %v1567 = vadd.f32 0.0, %v1566
    %v1568 = vpop.f32.mrb[0].mxu0
    %v1569 = vpop.f32.mrb[0].mxu0
    %1570 = vdwg.mxu0
    %1571 = vmatprep.subr.bf16.mxu0 %v1469
    %1572 = vmatpush1.bf16.msra.mxu0 %v1468
    %1573 = vmatprep.subr.bf16.mxu0 %v1473
    %1574 = vmatpush1.bf16.msra.mxu0 %v1472
    %1575 = vmatprep.subr.bf16.mxu0 %v1477
    %1576 = vmatpush1.bf16.msra.mxu0 %v1476
    %1577 = vmatprep.subr.bf16.mxu0 %v1481
    %1578 = vmatpush1.bf16.msra.mxu0 %v1480
    %1579 = vmatprep.subr.bf16.mxu0 %v1485
    %1580 = vmatpush1.bf16.msra.mxu0 %v1484
    %1581 = vmatprep.subr.bf16.mxu0 %v1489
    %1582 = vmatpush1.bf16.msra.mxu0 %v1488
    %1583 = vmatprep.subr.bf16.mxu0 %v1493
    %1584 = vmatpush1.bf16.msra.mxu0 %v1492
    %1585 = vmatprep.subr.bf16.mxu0 %v1497
    %1586 = vmatpush1.bf16.msra.mxu0 %v1496
    %1587 = vmatprep.subr.bf16.mxu0 0
    %1588 = vmatpush1.bf16.msra.mxu0 0
    %1589 = vmatprep.subr.bf16.mxu0 0
    %1590 = vmatpush1.bf16.msra.mxu0 0
    %1591 = vmatprep.subr.bf16.mxu0 0
    %1592 = vmatpush1.bf16.msra.mxu0 0
    %1593 = vmatprep.subr.bf16.mxu0 0
    %1594 = vmatpush1.bf16.msra.mxu0 0
    %1595 = vmatprep.subr.bf16.mxu0 0
    %1596 = vmatpush1.bf16.msra.mxu0 0
    %1597 = vmatprep.subr.bf16.mxu0 0
    %1598 = vmatpush1.bf16.msra.mxu0 0
    %1599 = vmatprep.subr.bf16.mxu0 0
    %1600 = vmatpush1.bf16.msra.mxu0 0
    %1601 = vmatprep.subr.bf16.mxu0 0
    %1602 = vmatpush1.bf16.msra.mxu0 0
    %1603 = vmatprep.mubr.bf16.mxu0 0
    %1604 = vmatmul.mubr.bf16.gmra.mrb[0].mxu0 %v1329
    %v1605 = vpop.f32.mrb[0].mxu0
    %v1606 = vadd.f32 0.0, %v1605
    %v1607 = vpop.f32.mrb[0].mxu0
    %v1608 = vadd.f32 0.0, %v1607
    %v1609 = vpop.f32.mrb[0].mxu0
    %v1610 = vpop.f32.mrb[0].mxu0
    %1611 = vdwg.mxu0
    %v1612 = vadd.f32 %v1334, %v1565
    %v1613 = vadd.f32 %v1335, %v1567
    %v1614 = vadd.f32 %v1336, %v1606
    %v1615 = vadd.f32 %v1337, %v1608
    %v1616 = vxor.u32 %v1612, 2147483648
    %v1617 = vmul.f32 %v1616, 1.442695
    %v1618 = vpow.pop %v1617
    %v1619 = vadd.f32 %v1618, 1.0
    %v1620 = vrcp.pop %v1619
    %v1621 = vmul.f32 1.0, %v1620
    %v1622 = vxor.u32 %v1613, 2147483648
    %v1623 = vmul.f32 %v1622, 1.442695
    %v1624 = vpow.pop %v1623
    %v1625 = vadd.f32 %v1624, 1.0
    %v1626 = vrcp.pop %v1625
    %v1627 = vmul.f32 1.0, %v1626
    %v1628 = vtanh.pop %v1614
    %v1629 = vxor.u32 %v1615, 2147483648
    %v1630 = vmul.f32 %v1629, 1.442695
    %v1631 = vpow.pop %v1630
    %v1632 = vadd.f32 %v1631, 1.0
    %v1633 = vrcp.pop %v1632
    %v1634 = vmul.f32 1.0, %v1633
    %v1635 = vmul.f32 %v1627, %v813
    %v1636 = vmul.f32 %v1621, %v1628
    %v1637 = vadd.f32 %v1635, %v1636
    %v1638 = vtanh.pop %v1637
    %v1639 = vmul.f32 %v1634, %v1638
    %v1640 = vld [vmem:[%s4] sm:$0xff]
    %v1641 = vld [vmem:[%s4 + $0x8] sm:$0xff]
    %v1642 = vld [vmem:[%s4 + $0x10] sm:$0xff]
    %v1643 = vld [vmem:[%s4 + $0x18] sm:$0xff]
    %v1644 = vld [vmem:[%s4 + $0x20] sm:$0xff]
    %v1645 = vld [vmem:[%s4 + $0x28] sm:$0xff]
    %v1646 = vld [vmem:[%s4 + $0x30] sm:$0xff]
    %v1647 = vld [vmem:[%s4 + $0x38] sm:$0xff]
    %v1648 = vld [vmem:[%s4 + $0x40] sm:$0xff]
    %v1649 = vld [vmem:[%s4 + $0x48] sm:$0xff]
    %v1650 = vld [vmem:[%s4 + $0x50] sm:$0xff]
    %v1651 = vld [vmem:[%s4 + $0x58] sm:$0xff]
    %v1652 = vld [vmem:[%s4 + $0x60] sm:$0xff]
    %v1653 = vld [vmem:[%s4 + $0x68] sm:$0xff]
    %v1654 = vld [vmem:[%s4 + $0x70] sm:$0xff]
    %v1655 = vld [vmem:[%s4 + $0x78] sm:$0xff]
    %v1656 = vld [vmem:[%s4 + $0x80] sm:$0xff]
    %v1657 = vld [vmem:[%s4 + $0x88] sm:$0xff]
    %v1658 = vld [vmem:[%s4 + $0x90] sm:$0xff]
    %v1659 = vld [vmem:[%s4 + $0x98] sm:$0xff]
    %v1660 = vld [vmem:[%s4 + $0xa0] sm:$0xff]
    %v1661 = vld [vmem:[%s4 + $0xa8] sm:$0xff]
    %v1662 = vld [vmem:[%s4 + $0xb0] sm:$0xff]
    %v1663 = vld [vmem:[%s4 + $0xb8] sm:$0xff]
    %v1664 = vld [vmem:[%s4 + $0xc0] sm:$0xff]
    %v1665 = vld [vmem:[%s4 + $0xc8] sm:$0xff]
    %v1666 = vld [vmem:[%s4 + $0xd0] sm:$0xff]
    %v1667 = vld [vmem:[%s4 + $0xd8] sm:$0xff]
    %v1668 = vld [vmem:[%s4 + $0xe0] sm:$0xff]
    %v1669 = vld [vmem:[%s4 + $0xe8] sm:$0xff]
    %v1670 = vld [vmem:[%s4 + $0xf0] sm:$0xff]
    %v1671 = vld [vmem:[%s4 + $0xf8] sm:$0xff]
    %v1672 = vld [vmem:[%s4 + $0x100] sm:$0xff]
    %v1673 = vld [vmem:[%s4 + $0x108] sm:$0xff]
    %v1674 = vld [vmem:[%s4 + $0x110] sm:$0xff]
    %v1675 = vld [vmem:[%s4 + $0x118] sm:$0xff]
    %v1676 = vld [vmem:[%s4 + $0x120] sm:$0xff]
    %v1677 = vld [vmem:[%s4 + $0x128] sm:$0xff]
    %v1678 = vld [vmem:[%s4 + $0x130] sm:$0xff]
    %v1679 = vld [vmem:[%s4 + $0x138] sm:$0xff]
    %v1680 = vld [vmem:[%s4 + $0x140] sm:$0xff]
    %v1681 = vld [vmem:[%s4 + $0x148] sm:$0xff]
    %v1682 = vld [vmem:[%s4 + $0x150] sm:$0xff]
    %v1683 = vld [vmem:[%s4 + $0x158] sm:$0xff]
    %v1684 = vld [vmem:[%s4 + $0x160] sm:$0xff]
    %v1685 = vld [vmem:[%s4 + $0x168] sm:$0xff]
    %v1686 = vld [vmem:[%s4 + $0x170] sm:$0xff]
    %v1687 = vld [vmem:[%s4 + $0x178] sm:$0xff]
    %v1688 = vld [vmem:[%s4 + $0x180] sm:$0xff]
    %v1689 = vld [vmem:[%s4 + $0x188] sm:$0xff]
    %v1690 = vld [vmem:[%s4 + $0x190] sm:$0xff]
    %v1691 = vld [vmem:[%s4 + $0x198] sm:$0xff]
    %v1692 = vld [vmem:[%s4 + $0x1a0] sm:$0xff]
    %v1693 = vld [vmem:[%s4 + $0x1a8] sm:$0xff]
    %v1694 = vld [vmem:[%s4 + $0x1b0] sm:$0xff]
    %v1695 = vld [vmem:[%s4 + $0x1b8] sm:$0xff]
    %v1696 = vld [vmem:[%s4 + $0x1c0] sm:$0xff]
    %v1697 = vld [vmem:[%s4 + $0x1c8] sm:$0xff]
    %v1698 = vld [vmem:[%s4 + $0x1d0] sm:$0xff]
    %v1699 = vld [vmem:[%s4 + $0x1d8] sm:$0xff]
    %v1700 = vld [vmem:[%s4 + $0x1e0] sm:$0xff]
    %v1701 = vld [vmem:[%s4 + $0x1e8] sm:$0xff]
    %v1702 = vld [vmem:[%s4 + $0x1f0] sm:$0xff]
    %v1703 = vld [vmem:[%s4 + $0x1f8] sm:$0xff]
    %v1704 = vld [vmem:[#allocation9] sm:$0xf]
    %v1706 = vlaneseq
    %v1707 = vshrl.u32 %v1706, 7
    %v1708 = vsub.s32 0, %v1707
    %v1709 = vrot.slane %v1704, %v1708
    %v1710 = vlaneseq
    %v1711 = vshrl.u32 %v1710, 7
    %v1712 = vsub.s32 1, %v1711
    %v1713 = vrot.slane %v1704, %v1712
    %v1714 = vlaneseq
    %v1715 = vshrl.u32 %v1714, 7
    %v1716 = vsub.s32 2, %v1715
    %v1717 = vrot.slane %v1704, %v1716
    %v1718 = vlaneseq
    %v1719 = vshrl.u32 %v1718, 7
    %v1720 = vsub.s32 3, %v1719
    %v1721 = vrot.slane %v1704, %v1720
    %v1790 = vunpack.c.l.b16 %v1640
    %v1791 = vunpack.c.h.b16 %v1640
    %v1792 = vunpack.c.l.b16 %v1641
    %v1793 = vunpack.c.h.b16 %v1641
    %v1794 = vunpack.c.l.b16 %v1642
    %v1795 = vunpack.c.h.b16 %v1642
    %v1796 = vunpack.c.l.b16 %v1643
    %v1797 = vunpack.c.h.b16 %v1643
    %v1798 = vunpack.c.l.b16 %v1644
    %v1799 = vunpack.c.h.b16 %v1644
    %v1800 = vunpack.c.l.b16 %v1645
    %v1801 = vunpack.c.h.b16 %v1645
    %v1802 = vunpack.c.l.b16 %v1646
    %v1803 = vunpack.c.h.b16 %v1646
    %v1804 = vunpack.c.l.b16 %v1647
    %v1805 = vunpack.c.h.b16 %v1647
    %v1806 = vunpack.c.l.b16 %v1648
    %v1807 = vunpack.c.h.b16 %v1648
    %v1808 = vunpack.c.l.b16 %v1649
    %v1809 = vunpack.c.h.b16 %v1649
    %v1810 = vunpack.c.l.b16 %v1650
    %v1811 = vunpack.c.h.b16 %v1650
    %v1812 = vunpack.c.l.b16 %v1651
    %v1813 = vunpack.c.h.b16 %v1651
    %v1814 = vunpack.c.l.b16 %v1652
    %v1815 = vunpack.c.h.b16 %v1652
    %v1816 = vunpack.c.l.b16 %v1653
    %v1817 = vunpack.c.h.b16 %v1653
    %v1818 = vunpack.c.l.b16 %v1654
    %v1819 = vunpack.c.h.b16 %v1654
    %v1820 = vunpack.c.l.b16 %v1655
    %v1821 = vunpack.c.h.b16 %v1655
    %v1822 = vunpack.c.l.b16 %v1656
    %v1823 = vunpack.c.h.b16 %v1656
    %v1824 = vunpack.c.l.b16 %v1657
    %v1825 = vunpack.c.h.b16 %v1657
    %v1826 = vunpack.c.l.b16 %v1658
    %v1827 = vunpack.c.h.b16 %v1658
    %v1828 = vunpack.c.l.b16 %v1659
    %v1829 = vunpack.c.h.b16 %v1659
    %v1830 = vunpack.c.l.b16 %v1660
    %v1831 = vunpack.c.h.b16 %v1660
    %v1832 = vunpack.c.l.b16 %v1661
    %v1833 = vunpack.c.h.b16 %v1661
    %v1834 = vunpack.c.l.b16 %v1662
    %v1835 = vunpack.c.h.b16 %v1662
    %v1836 = vunpack.c.l.b16 %v1663
    %v1837 = vunpack.c.h.b16 %v1663
    %v1838 = vunpack.c.l.b16 %v1664
    %v1839 = vunpack.c.h.b16 %v1664
    %v1840 = vunpack.c.l.b16 %v1665
    %v1841 = vunpack.c.h.b16 %v1665
    %v1842 = vunpack.c.l.b16 %v1666
    %v1843 = vunpack.c.h.b16 %v1666
    %v1844 = vunpack.c.l.b16 %v1667
    %v1845 = vunpack.c.h.b16 %v1667
    %v1846 = vunpack.c.l.b16 %v1668
    %v1847 = vunpack.c.h.b16 %v1668
    %v1848 = vunpack.c.l.b16 %v1669
    %v1849 = vunpack.c.h.b16 %v1669
    %v1850 = vunpack.c.l.b16 %v1670
    %v1851 = vunpack.c.h.b16 %v1670
    %v1852 = vunpack.c.l.b16 %v1671
    %v1853 = vunpack.c.h.b16 %v1671
    %v1854 = vunpack.c.l.b16 %v1672
    %v1855 = vunpack.c.h.b16 %v1672
    %v1856 = vunpack.c.l.b16 %v1673
    %v1857 = vunpack.c.h.b16 %v1673
    %v1858 = vunpack.c.l.b16 %v1674
    %v1859 = vunpack.c.h.b16 %v1674
    %v1860 = vunpack.c.l.b16 %v1675
    %v1861 = vunpack.c.h.b16 %v1675
    %v1862 = vunpack.c.l.b16 %v1676
    %v1863 = vunpack.c.h.b16 %v1676
    %v1864 = vunpack.c.l.b16 %v1677
    %v1865 = vunpack.c.h.b16 %v1677
    %v1866 = vunpack.c.l.b16 %v1678
    %v1867 = vunpack.c.h.b16 %v1678
    %v1868 = vunpack.c.l.b16 %v1679
    %v1869 = vunpack.c.h.b16 %v1679
    %v1870 = vunpack.c.l.b16 %v1680
    %v1871 = vunpack.c.h.b16 %v1680
    %v1872 = vunpack.c.l.b16 %v1681
    %v1873 = vunpack.c.h.b16 %v1681
    %v1874 = vunpack.c.l.b16 %v1682
    %v1875 = vunpack.c.h.b16 %v1682
    %v1876 = vunpack.c.l.b16 %v1683
    %v1877 = vunpack.c.h.b16 %v1683
    %v1878 = vunpack.c.l.b16 %v1684
    %v1879 = vunpack.c.h.b16 %v1684
    %v1880 = vunpack.c.l.b16 %v1685
    %v1881 = vunpack.c.h.b16 %v1685
    %v1882 = vunpack.c.l.b16 %v1686
    %v1883 = vunpack.c.h.b16 %v1686
    %v1884 = vunpack.c.l.b16 %v1687
    %v1885 = vunpack.c.h.b16 %v1687
    %v1886 = vunpack.c.l.b16 %v1688
    %v1887 = vunpack.c.h.b16 %v1688
    %v1888 = vunpack.c.l.b16 %v1689
    %v1889 = vunpack.c.h.b16 %v1689
    %v1890 = vunpack.c.l.b16 %v1690
    %v1891 = vunpack.c.h.b16 %v1690
    %v1892 = vunpack.c.l.b16 %v1691
    %v1893 = vunpack.c.h.b16 %v1691
    %v1894 = vunpack.c.l.b16 %v1692
    %v1895 = vunpack.c.h.b16 %v1692
    %v1896 = vunpack.c.l.b16 %v1693
    %v1897 = vunpack.c.h.b16 %v1693
    %v1898 = vunpack.c.l.b16 %v1694
    %v1899 = vunpack.c.h.b16 %v1694
    %v1900 = vunpack.c.l.b16 %v1695
    %v1901 = vunpack.c.h.b16 %v1695
    %v1902 = vunpack.c.l.b16 %v1696
    %v1903 = vunpack.c.h.b16 %v1696
    %v1904 = vunpack.c.l.b16 %v1697
    %v1905 = vunpack.c.h.b16 %v1697
    %v1906 = vunpack.c.l.b16 %v1698
    %v1907 = vunpack.c.h.b16 %v1698
    %v1908 = vunpack.c.l.b16 %v1699
    %v1909 = vunpack.c.h.b16 %v1699
    %v1910 = vunpack.c.l.b16 %v1700
    %v1911 = vunpack.c.h.b16 %v1700
    %v1912 = vunpack.c.l.b16 %v1701
    %v1913 = vunpack.c.h.b16 %v1701
    %v1914 = vunpack.c.l.b16 %v1702
    %v1915 = vunpack.c.h.b16 %v1702
    %v1916 = vunpack.c.l.b16 %v1703
    %v1917 = vunpack.c.h.b16 %v1703
    %v1918 = vpack.c.b16 %v1794, %v1790
    %v1919 = vpack.c.b16 %v1795, %v1791
    %v1920 = vpack.c.b16 %v1796, %v1792
    %v1921 = vpack.c.b16 %v1797, %v1793
    %v1922 = vpack.c.b16 %v1802, %v1798
    %v1923 = vpack.c.b16 %v1803, %v1799
    %v1924 = vpack.c.b16 %v1804, %v1800
    %v1925 = vpack.c.b16 %v1805, %v1801
    %v1926 = vpack.c.b16 %v1810, %v1806
    %v1927 = vpack.c.b16 %v1811, %v1807
    %v1928 = vpack.c.b16 %v1812, %v1808
    %v1929 = vpack.c.b16 %v1813, %v1809
    %v1930 = vpack.c.b16 %v1818, %v1814
    %v1931 = vpack.c.b16 %v1819, %v1815
    %v1932 = vpack.c.b16 %v1820, %v1816
    %v1933 = vpack.c.b16 %v1821, %v1817
    %v1934 = vpack.c.b16 %v1826, %v1822
    %v1935 = vpack.c.b16 %v1827, %v1823
    %v1936 = vpack.c.b16 %v1828, %v1824
    %v1937 = vpack.c.b16 %v1829, %v1825
    %v1938 = vpack.c.b16 %v1834, %v1830
    %v1939 = vpack.c.b16 %v1835, %v1831
    %v1940 = vpack.c.b16 %v1836, %v1832
    %v1941 = vpack.c.b16 %v1837, %v1833
    %v1942 = vpack.c.b16 %v1842, %v1838
    %v1943 = vpack.c.b16 %v1843, %v1839
    %v1944 = vpack.c.b16 %v1844, %v1840
    %v1945 = vpack.c.b16 %v1845, %v1841
    %v1946 = vpack.c.b16 %v1850, %v1846
    %v1947 = vpack.c.b16 %v1851, %v1847
    %v1948 = vpack.c.b16 %v1852, %v1848
    %v1949 = vpack.c.b16 %v1853, %v1849
    %v1950 = vpack.c.b16 %v1858, %v1854
    %v1951 = vpack.c.b16 %v1859, %v1855
    %v1952 = vpack.c.b16 %v1860, %v1856
    %v1953 = vpack.c.b16 %v1861, %v1857
    %v1954 = vpack.c.b16 %v1866, %v1862
    %v1955 = vpack.c.b16 %v1867, %v1863
    %v1956 = vpack.c.b16 %v1868, %v1864
    %v1957 = vpack.c.b16 %v1869, %v1865
    %v1958 = vpack.c.b16 %v1874, %v1870
    %v1959 = vpack.c.b16 %v1875, %v1871
    %v1960 = vpack.c.b16 %v1876, %v1872
    %v1961 = vpack.c.b16 %v1877, %v1873
    %v1962 = vpack.c.b16 %v1882, %v1878
    %v1963 = vpack.c.b16 %v1883, %v1879
    %v1964 = vpack.c.b16 %v1884, %v1880
    %v1965 = vpack.c.b16 %v1885, %v1881
    %v1966 = vpack.c.b16 %v1890, %v1886
    %v1967 = vpack.c.b16 %v1891, %v1887
    %v1968 = vpack.c.b16 %v1892, %v1888
    %v1969 = vpack.c.b16 %v1893, %v1889
    %v1970 = vpack.c.b16 %v1898, %v1894
    %v1971 = vpack.c.b16 %v1899, %v1895
    %v1972 = vpack.c.b16 %v1900, %v1896
    %v1973 = vpack.c.b16 %v1901, %v1897
    %v1974 = vpack.c.b16 %v1906, %v1902
    %v1975 = vpack.c.b16 %v1907, %v1903
    %v1976 = vpack.c.b16 %v1908, %v1904
    %v1977 = vpack.c.b16 %v1909, %v1905
    %v1978 = vpack.c.b16 %v1914, %v1910
    %v1979 = vpack.c.b16 %v1915, %v1911
    %v1980 = vpack.c.b16 %v1916, %v1912
    %v1981 = vpack.c.b16 %v1917, %v1913
    %2046 = vmatprep.subr.bf16.mxu0 %v1919
    %2047 = vmatpush1.bf16.msra.mxu0 %v1918
    %2048 = vmatprep.subr.bf16.mxu0 %v1923
    %2049 = vmatpush1.bf16.msra.mxu0 %v1922
    %2050 = vmatprep.subr.bf16.mxu0 %v1927
    %2051 = vmatpush1.bf16.msra.mxu0 %v1926
    %2052 = vmatprep.subr.bf16.mxu0 %v1931
    %2053 = vmatpush1.bf16.msra.mxu0 %v1930
    %2054 = vmatprep.subr.bf16.mxu0 %v1935
    %2055 = vmatpush1.bf16.msra.mxu0 %v1934
    %2056 = vmatprep.subr.bf16.mxu0 %v1939
    %2057 = vmatpush1.bf16.msra.mxu0 %v1938
    %2058 = vmatprep.subr.bf16.mxu0 %v1943
    %2059 = vmatpush1.bf16.msra.mxu0 %v1942
    %2060 = vmatprep.subr.bf16.mxu0 %v1947
    %2061 = vmatpush1.bf16.msra.mxu0 %v1946
    %2062 = vmatprep.subr.bf16.mxu0 %v1951
    %2063 = vmatpush1.bf16.msra.mxu0 %v1950
    %2064 = vmatprep.subr.bf16.mxu0 %v1955
    %2065 = vmatpush1.bf16.msra.mxu0 %v1954
    %2066 = vmatprep.subr.bf16.mxu0 %v1959
    %2067 = vmatpush1.bf16.msra.mxu0 %v1958
    %2068 = vmatprep.subr.bf16.mxu0 %v1963
    %2069 = vmatpush1.bf16.msra.mxu0 %v1962
    %2070 = vmatprep.subr.bf16.mxu0 %v1967
    %2071 = vmatpush1.bf16.msra.mxu0 %v1966
    %2072 = vmatprep.subr.bf16.mxu0 %v1971
    %2073 = vmatpush1.bf16.msra.mxu0 %v1970
    %2074 = vmatprep.subr.bf16.mxu0 %v1975
    %2075 = vmatpush1.bf16.msra.mxu0 %v1974
    %2076 = vmatprep.subr.bf16.mxu0 %v1979
    %2077 = vmatpush1.bf16.msra.mxu0 %v1978
    %2078 = vmatprep.mubr.bf16.mxu0 %v1330
    %2079 = vmatmul.mubr.bf16.gmra.mrb[0].mxu0 %v1329
    %v2080 = vpop.f32.mrb[0].mxu0
    %v2081 = vadd.f32 %v1709, %v2080
    %v2082 = vpop.f32.mrb[0].mxu0
    %v2083 = vadd.f32 %v1713, %v2082
    %v2084 = vpop.f32.mrb[0].mxu0
    %v2085 = vpop.f32.mrb[0].mxu0
    %2086 = vdwg.mxu0
    %2087 = vmatprep.subr.bf16.mxu0 %v1921
    %2088 = vmatpush1.bf16.msra.mxu0 %v1920
    %2089 = vmatprep.subr.bf16.mxu0 %v1925
    %2090 = vmatpush1.bf16.msra.mxu0 %v1924
    %2091 = vmatprep.subr.bf16.mxu0 %v1929
    %2092 = vmatpush1.bf16.msra.mxu0 %v1928
    %2093 = vmatprep.subr.bf16.mxu0 %v1933
    %2094 = vmatpush1.bf16.msra.mxu0 %v1932
    %2095 = vmatprep.subr.bf16.mxu0 %v1937
    %2096 = vmatpush1.bf16.msra.mxu0 %v1936
    %2097 = vmatprep.subr.bf16.mxu0 %v1941
    %2098 = vmatpush1.bf16.msra.mxu0 %v1940
    %2099 = vmatprep.subr.bf16.mxu0 %v1945
    %2100 = vmatpush1.bf16.msra.mxu0 %v1944
    %2101 = vmatprep.subr.bf16.mxu0 %v1949
    %2102 = vmatpush1.bf16.msra.mxu0 %v1948
    %2103 = vmatprep.subr.bf16.mxu0 %v1953
    %2104 = vmatpush1.bf16.msra.mxu0 %v1952
    %2105 = vmatprep.subr.bf16.mxu0 %v1957
    %2106 = vmatpush1.bf16.msra.mxu0 %v1956
    %2107 = vmatprep.subr.bf16.mxu0 %v1961
    %2108 = vmatpush1.bf16.msra.mxu0 %v1960
    %2109 = vmatprep.subr.bf16.mxu0 %v1965
    %2110 = vmatpush1.bf16.msra.mxu0 %v1964
    %2111 = vmatprep.subr.bf16.mxu0 %v1969
    %2112 = vmatpush1.bf16.msra.mxu0 %v1968
    %2113 = vmatprep.subr.bf16.mxu0 %v1973
    %2114 = vmatpush1.bf16.msra.mxu0 %v1972
    %2115 = vmatprep.subr.bf16.mxu0 %v1977
    %2116 = vmatpush1.bf16.msra.mxu0 %v1976
    %2117 = vmatprep.subr.bf16.mxu0 %v1981
    %2118 = vmatpush1.bf16.msra.mxu0 %v1980
    %2119 = vmatprep.mubr.bf16.mxu0 %v1330
    %2120 = vmatmul.mubr.bf16.gmra.mrb[0].mxu0 %v1329
    %v2121 = vpop.f32.mrb[0].mxu0
    %v2122 = vadd.f32 %v1717, %v2121
    %v2123 = vpop.f32.mrb[0].mxu0
    %v2124 = vadd.f32 %v1721, %v2123
    %v2125 = vpop.f32.mrb[0].mxu0
    %v2126 = vpop.f32.mrb[0].mxu0
    %2127 = vdwg.mxu0
    %v2128 = vxor.u32 %v2081, 2147483648
    %v2129 = vmul.f32 %v2128, 1.442695
    %v2130 = vpow.pop %v2129
    %v2131 = vadd.f32 %v2130, 1.0
    %v2132 = vrcp.pop %v2131
    %v2133 = vmul.f32 1.0, %v2132
    %v2134 = vxor.u32 %v2083, 2147483648
    %v2135 = vmul.f32 %v2134, 1.442695
    %v2136 = vpow.pop %v2135
    %v2137 = vadd.f32 %v2136, 1.0
    %v2138 = vrcp.pop %v2137
    %v2139 = vmul.f32 1.0, %v2138
    %v2140 = vtanh.pop %v2122
    %v2141 = vxor.u32 %v2124, 2147483648
    %v2142 = vmul.f32 %v2141, 1.442695
    %v2143 = vpow.pop %v2142
    %v2144 = vadd.f32 %v2143, 1.0
    %v2145 = vrcp.pop %v2144
    %v2146 = vmul.f32 1.0, %v2145
    %v2147 = vmul.f32 %v2139, %v1325
    %v2148 = vmul.f32 %v2133, %v2140
    %v2149 = vadd.f32 %v2147, %v2148
    %v2150 = vtanh.pop %v2149
    %v2151 = vmul.f32 %v2146, %v2150
    %s2152 = scalar_lea.vmem [#allocation3], 8
    %2153 = vst [vmem:[%s2152] sm:$0xff] %v2151
    %v2154 = vpack.c.bf16 %v1639, %v1639
    %v2155 = vpack.c.bf16 %v2151, %v2151
    %s2156 = smul.u32 3, 4
    %s2157 = smul.addr %s2156, 8
    %s2158 = scalar_lea.vmem [#allocation2], %s2157
    %v2159 = vld [vmem:[%s2158] sm:$0xff]
    %v2160 = vld [vmem:[%s2158 + $0x8] sm:$0xff]
    %v2161 = vld [vmem:[%s2158 + $0x10] sm:$0xff]
    %v2162 = vld [vmem:[%s2158 + $0x18] sm:$0xff]
    %v2163 = vld [vmem:[#allocation6] sm:$0xff]
    %v2164 = vld [vmem:[#allocation6 + $0x8] sm:$0xff]
    %v2165 = vld [vmem:[#allocation6 + $0x10] sm:$0xff]
    %v2166 = vld [vmem:[#allocation6 + $0x18] sm:$0xff]
    %v2167 = vld [vmem:[#allocation6 + $0x20] sm:$0xff]
    %v2168 = vld [vmem:[#allocation6 + $0x28] sm:$0xff]
    %v2169 = vld [vmem:[#allocation6 + $0x30] sm:$0xff]
    %v2170 = vld [vmem:[#allocation6 + $0x38] sm:$0xff]
    %v2171 = vld [vmem:[#allocation6 + $0x40] sm:$0xff]
    %v2172 = vld [vmem:[#allocation6 + $0x48] sm:$0xff]
    %v2173 = vld [vmem:[#allocation6 + $0x50] sm:$0xff]
    %v2174 = vld [vmem:[#allocation6 + $0x58] sm:$0xff]
    %v2175 = vld [vmem:[#allocation6 + $0x60] sm:$0xff]
    %v2176 = vld [vmem:[#allocation6 + $0x68] sm:$0xff]
    %v2177 = vld [vmem:[#allocation6 + $0x70] sm:$0xff]
    %v2178 = vld [vmem:[#allocation6 + $0x78] sm:$0xff]
    %v2179 = vld [vmem:[#allocation6 + $0x80] sm:$0xff]
    %v2180 = vld [vmem:[#allocation6 + $0x88] sm:$0xff]
    %v2181 = vld [vmem:[#allocation6 + $0x90] sm:$0xff]
    %v2182 = vld [vmem:[#allocation6 + $0x98] sm:$0xff]
    %v2183 = vld [vmem:[#allocation6 + $0xa0] sm:$0xff]
    %v2184 = vld [vmem:[#allocation6 + $0xa8] sm:$0xff]
    %v2185 = vld [vmem:[#allocation6 + $0xb0] sm:$0xff]
    %v2186 = vld [vmem:[#allocation6 + $0xb8] sm:$0xff]
    %v2187 = vld [vmem:[#allocation6 + $0xc0] sm:$0xff]
    %v2188 = vld [vmem:[#allocation6 + $0xc8] sm:$0xff]
    %v2189 = vld [vmem:[#allocation6 + $0xd0] sm:$0xff]
    %v2190 = vld [vmem:[#allocation6 + $0xd8] sm:$0xff]
    %v2191 = vld [vmem:[#allocation6 + $0xe0] sm:$0xff]
    %v2192 = vld [vmem:[#allocation6 + $0xe8] sm:$0xff]
    %v2193 = vld [vmem:[#allocation6 + $0xf0] sm:$0xff]
    %v2194 = vld [vmem:[#allocation6 + $0xf8] sm:$0xff]
    %v2227 = vunpack.c.l.b16 %v2163
    %v2228 = vunpack.c.h.b16 %v2163
    %v2229 = vunpack.c.l.b16 %v2164
    %v2230 = vunpack.c.h.b16 %v2164
    %v2231 = vunpack.c.l.b16 %v2165
    %v2232 = vunpack.c.h.b16 %v2165
    %v2233 = vunpack.c.l.b16 %v2166
    %v2234 = vunpack.c.h.b16 %v2166
    %v2235 = vunpack.c.l.b16 %v2167
    %v2236 = vunpack.c.h.b16 %v2167
    %v2237 = vunpack.c.l.b16 %v2168
    %v2238 = vunpack.c.h.b16 %v2168
    %v2239 = vunpack.c.l.b16 %v2169
    %v2240 = vunpack.c.h.b16 %v2169
    %v2241 = vunpack.c.l.b16 %v2170
    %v2242 = vunpack.c.h.b16 %v2170
    %v2243 = vunpack.c.l.b16 %v2171
    %v2244 = vunpack.c.h.b16 %v2171
    %v2245 = vunpack.c.l.b16 %v2172
    %v2246 = vunpack.c.h.b16 %v2172
    %v2247 = vunpack.c.l.b16 %v2173
    %v2248 = vunpack.c.h.b16 %v2173
    %v2249 = vunpack.c.l.b16 %v2174
    %v2250 = vunpack.c.h.b16 %v2174
    %v2251 = vunpack.c.l.b16 %v2175
    %v2252 = vunpack.c.h.b16 %v2175
    %v2253 = vunpack.c.l.b16 %v2176
    %v2254 = vunpack.c.h.b16 %v2176
    %v2255 = vunpack.c.l.b16 %v2177
    %v2256 = vunpack.c.h.b16 %v2177
    %v2257 = vunpack.c.l.b16 %v2178
    %v2258 = vunpack.c.h.b16 %v2178
    %v2259 = vunpack.c.l.b16 %v2179
    %v2260 = vunpack.c.h.b16 %v2179
    %v2261 = vunpack.c.l.b16 %v2180
    %v2262 = vunpack.c.h.b16 %v2180
    %v2263 = vunpack.c.l.b16 %v2181
    %v2264 = vunpack.c.h.b16 %v2181
    %v2265 = vunpack.c.l.b16 %v2182
    %v2266 = vunpack.c.h.b16 %v2182
    %v2267 = vunpack.c.l.b16 %v2183
    %v2268 = vunpack.c.h.b16 %v2183
    %v2269 = vunpack.c.l.b16 %v2184
    %v2270 = vunpack.c.h.b16 %v2184
    %v2271 = vunpack.c.l.b16 %v2185
    %v2272 = vunpack.c.h.b16 %v2185
    %v2273 = vunpack.c.l.b16 %v2186
    %v2274 = vunpack.c.h.b16 %v2186
    %v2275 = vunpack.c.l.b16 %v2187
    %v2276 = vunpack.c.h.b16 %v2187
    %v2277 = vunpack.c.l.b16 %v2188
    %v2278 = vunpack.c.h.b16 %v2188
    %v2279 = vunpack.c.l.b16 %v2189
    %v2280 = vunpack.c.h.b16 %v2189
    %v2281 = vunpack.c.l.b16 %v2190
    %v2282 = vunpack.c.h.b16 %v2190
    %v2283 = vunpack.c.l.b16 %v2191
    %v2284 = vunpack.c.h.b16 %v2191
    %v2285 = vunpack.c.l.b16 %v2192
    %v2286 = vunpack.c.h.b16 %v2192
    %v2287 = vunpack.c.l.b16 %v2193
    %v2288 = vunpack.c.h.b16 %v2193
    %v2289 = vunpack.c.l.b16 %v2194
    %v2290 = vunpack.c.h.b16 %v2194
    %v2291 = vpack.c.b16 %v2231, %v2227
    %v2292 = vpack.c.b16 %v2232, %v2228
    %v2293 = vpack.c.b16 %v2233, %v2229
    %v2294 = vpack.c.b16 %v2234, %v2230
    %v2295 = vpack.c.b16 %v2239, %v2235
    %v2296 = vpack.c.b16 %v2240, %v2236
    %v2297 = vpack.c.b16 %v2241, %v2237
    %v2298 = vpack.c.b16 %v2242, %v2238
    %v2299 = vpack.c.b16 %v2247, %v2243
    %v2300 = vpack.c.b16 %v2248, %v2244
    %v2301 = vpack.c.b16 %v2249, %v2245
    %v2302 = vpack.c.b16 %v2250, %v2246
    %v2303 = vpack.c.b16 %v2255, %v2251
    %v2304 = vpack.c.b16 %v2256, %v2252
    %v2305 = vpack.c.b16 %v2257, %v2253
    %v2306 = vpack.c.b16 %v2258, %v2254
    %v2307 = vpack.c.b16 %v2263, %v2259
    %v2308 = vpack.c.b16 %v2264, %v2260
    %v2309 = vpack.c.b16 %v2265, %v2261
    %v2310 = vpack.c.b16 %v2266, %v2262
    %v2311 = vpack.c.b16 %v2271, %v2267
    %v2312 = vpack.c.b16 %v2272, %v2268
    %v2313 = vpack.c.b16 %v2273, %v2269
    %v2314 = vpack.c.b16 %v2274, %v2270
    %v2315 = vpack.c.b16 %v2279, %v2275
    %v2316 = vpack.c.b16 %v2280, %v2276
    %v2317 = vpack.c.b16 %v2281, %v2277
    %v2318 = vpack.c.b16 %v2282, %v2278
    %v2319 = vpack.c.b16 %v2287, %v2283
    %v2320 = vpack.c.b16 %v2288, %v2284
    %v2321 = vpack.c.b16 %v2289, %v2285
    %v2322 = vpack.c.b16 %v2290, %v2286
    %2355 = vmatprep.subr.bf16.mxu0 %v2292
    %2356 = vmatpush1.bf16.msra.mxu0 %v2291
    %2357 = vmatprep.subr.bf16.mxu0 %v2296
    %2358 = vmatpush1.bf16.msra.mxu0 %v2295
    %2359 = vmatprep.subr.bf16.mxu0 %v2300
    %2360 = vmatpush1.bf16.msra.mxu0 %v2299
    %2361 = vmatprep.subr.bf16.mxu0 %v2304
    %2362 = vmatpush1.bf16.msra.mxu0 %v2303
    %2363 = vmatprep.subr.bf16.mxu0 %v2308
    %2364 = vmatpush1.bf16.msra.mxu0 %v2307
    %2365 = vmatprep.subr.bf16.mxu0 %v2312
    %2366 = vmatpush1.bf16.msra.mxu0 %v2311
    %2367 = vmatprep.subr.bf16.mxu0 %v2316
    %2368 = vmatpush1.bf16.msra.mxu0 %v2315
    %2369 = vmatprep.subr.bf16.mxu0 %v2320
    %2370 = vmatpush1.bf16.msra.mxu0 %v2319
    %2371 = vmatprep.subr.bf16.mxu0 0
    %2372 = vmatpush1.bf16.msra.mxu0 0
    %2373 = vmatprep.subr.bf16.mxu0 0
    %2374 = vmatpush1.bf16.msra.mxu0 0
    %2375 = vmatprep.subr.bf16.mxu0 0
    %2376 = vmatpush1.bf16.msra.mxu0 0
    %2377 = vmatprep.subr.bf16.mxu0 0
    %2378 = vmatpush1.bf16.msra.mxu0 0
    %2379 = vmatprep.subr.bf16.mxu0 0
    %2380 = vmatpush1.bf16.msra.mxu0 0
    %2381 = vmatprep.subr.bf16.mxu0 0
    %2382 = vmatpush1.bf16.msra.mxu0 0
    %2383 = vmatprep.subr.bf16.mxu0 0
    %2384 = vmatpush1.bf16.msra.mxu0 0
    %2385 = vmatprep.subr.bf16.mxu0 0
    %2386 = vmatpush1.bf16.msra.mxu0 0
    %2387 = vmatprep.mubr.bf16.mxu0 0
    %2388 = vmatmul.mubr.bf16.gmra.mrb[0].mxu0 %v2154
    %v2389 = vpop.f32.mrb[0].mxu0
    %v2390 = vadd.f32 0.0, %v2389
    %v2391 = vpop.f32.mrb[0].mxu0
    %v2392 = vadd.f32 0.0, %v2391
    %v2393 = vpop.f32.mrb[0].mxu0
    %v2394 = vpop.f32.mrb[0].mxu0
    %2395 = vdwg.mxu0
    %2396 = vmatprep.subr.bf16.mxu0 %v2294
    %2397 = vmatpush1.bf16.msra.mxu0 %v2293
    %2398 = vmatprep.subr.bf16.mxu0 %v2298
    %2399 = vmatpush1.bf16.msra.mxu0 %v2297
    %2400 = vmatprep.subr.bf16.mxu0 %v2302
    %2401 = vmatpush1.bf16.msra.mxu0 %v2301
    %2402 = vmatprep.subr.bf16.mxu0 %v2306
    %2403 = vmatpush1.bf16.msra.mxu0 %v2305
    %2404 = vmatprep.subr.bf16.mxu0 %v2310
    %2405 = vmatpush1.bf16.msra.mxu0 %v2309
    %2406 = vmatprep.subr.bf16.mxu0 %v2314
    %2407 = vmatpush1.bf16.msra.mxu0 %v2313
    %2408 = vmatprep.subr.bf16.mxu0 %v2318
    %2409 = vmatpush1.bf16.msra.mxu0 %v2317
    %2410 = vmatprep.subr.bf16.mxu0 %v2322
    %2411 = vmatpush1.bf16.msra.mxu0 %v2321
    %2412 = vmatprep.subr.bf16.mxu0 0
    %2413 = vmatpush1.bf16.msra.mxu0 0
    %2414 = vmatprep.subr.bf16.mxu0 0
    %2415 = vmatpush1.bf16.msra.mxu0 0
    %2416 = vmatprep.subr.bf16.mxu0 0
    %2417 = vmatpush1.bf16.msra.mxu0 0
    %2418 = vmatprep.subr.bf16.mxu0 0
    %2419 = vmatpush1.bf16.msra.mxu0 0
    %2420 = vmatprep.subr.bf16.mxu0 0
    %2421 = vmatpush1.bf16.msra.mxu0 0
    %2422 = vmatprep.subr.bf16.mxu0 0
    %2423 = vmatpush1.bf16.msra.mxu0 0
    %2424 = vmatprep.subr.bf16.mxu0 0
    %2425 = vmatpush1.bf16.msra.mxu0 0
    %2426 = vmatprep.subr.bf16.mxu0 0
    %2427 = vmatpush1.bf16.msra.mxu0 0
    %2428 = vmatprep.mubr.bf16.mxu0 0
    %2429 = vmatmul.mubr.bf16.gmra.mrb[0].mxu0 %v2154
    %v2430 = vpop.f32.mrb[0].mxu0
    %v2431 = vadd.f32 0.0, %v2430
    %v2432 = vpop.f32.mrb[0].mxu0
    %v2433 = vadd.f32 0.0, %v2432
    %v2434 = vpop.f32.mrb[0].mxu0
    %v2435 = vpop.f32.mrb[0].mxu0
    %2436 = vdwg.mxu0
    %v2437 = vadd.f32 %v2159, %v2390
    %v2438 = vadd.f32 %v2160, %v2392
    %v2439 = vadd.f32 %v2161, %v2431
    %v2440 = vadd.f32 %v2162, %v2433
    %v2441 = vxor.u32 %v2437, 2147483648
    %v2442 = vmul.f32 %v2441, 1.442695
    %v2443 = vpow.pop %v2442
    %v2444 = vadd.f32 %v2443, 1.0
    %v2445 = vrcp.pop %v2444
    %v2446 = vmul.f32 1.0, %v2445
    %v2447 = vxor.u32 %v2438, 2147483648
    %v2448 = vmul.f32 %v2447, 1.442695
    %v2449 = vpow.pop %v2448
    %v2450 = vadd.f32 %v2449, 1.0
    %v2451 = vrcp.pop %v2450
    %v2452 = vmul.f32 1.0, %v2451
    %v2453 = vtanh.pop %v2439
    %v2454 = vxor.u32 %v2440, 2147483648
    %v2455 = vmul.f32 %v2454, 1.442695
    %v2456 = vpow.pop %v2455
    %v2457 = vadd.f32 %v2456, 1.0
    %v2458 = vrcp.pop %v2457
    %v2459 = vmul.f32 1.0, %v2458
    %v2460 = vmul.f32 %v2452, %v1637
    %v2461 = vmul.f32 %v2446, %v2453
    %v2462 = vadd.f32 %v2460, %v2461
    %v2463 = vtanh.pop %v2462
    %v2464 = vmul.f32 %v2459, %v2463
    %v2465 = vld [vmem:[%s4] sm:$0xff]
    %v2466 = vld [vmem:[%s4 + $0x8] sm:$0xff]
    %v2467 = vld [vmem:[%s4 + $0x10] sm:$0xff]
    %v2468 = vld [vmem:[%s4 + $0x18] sm:$0xff]
    %v2469 = vld [vmem:[%s4 + $0x20] sm:$0xff]
    %v2470 = vld [vmem:[%s4 + $0x28] sm:$0xff]
    %v2471 = vld [vmem:[%s4 + $0x30] sm:$0xff]
    %v2472 = vld [vmem:[%s4 + $0x38] sm:$0xff]
    %v2473 = vld [vmem:[%s4 + $0x40] sm:$0xff]
    %v2474 = vld [vmem:[%s4 + $0x48] sm:$0xff]
    %v2475 = vld [vmem:[%s4 + $0x50] sm:$0xff]
    %v2476 = vld [vmem:[%s4 + $0x58] sm:$0xff]
    %v2477 = vld [vmem:[%s4 + $0x60] sm:$0xff]
    %v2478 = vld [vmem:[%s4 + $0x68] sm:$0xff]
    %v2479 = vld [vmem:[%s4 + $0x70] sm:$0xff]
    %v2480 = vld [vmem:[%s4 + $0x78] sm:$0xff]
    %v2481 = vld [vmem:[%s4 + $0x80] sm:$0xff]
    %v2482 = vld [vmem:[%s4 + $0x88] sm:$0xff]
    %v2483 = vld [vmem:[%s4 + $0x90] sm:$0xff]
    %v2484 = vld [vmem:[%s4 + $0x98] sm:$0xff]
    %v2485 = vld [vmem:[%s4 + $0xa0] sm:$0xff]
    %v2486 = vld [vmem:[%s4 + $0xa8] sm:$0xff]
    %v2487 = vld [vmem:[%s4 + $0xb0] sm:$0xff]
    %v2488 = vld [vmem:[%s4 + $0xb8] sm:$0xff]
    %v2489 = vld [vmem:[%s4 + $0xc0] sm:$0xff]
    %v2490 = vld [vmem:[%s4 + $0xc8] sm:$0xff]
    %v2491 = vld [vmem:[%s4 + $0xd0] sm:$0xff]
    %v2492 = vld [vmem:[%s4 + $0xd8] sm:$0xff]
    %v2493 = vld [vmem:[%s4 + $0xe0] sm:$0xff]
    %v2494 = vld [vmem:[%s4 + $0xe8] sm:$0xff]
    %v2495 = vld [vmem:[%s4 + $0xf0] sm:$0xff]
    %v2496 = vld [vmem:[%s4 + $0xf8] sm:$0xff]
    %v2497 = vld [vmem:[%s4 + $0x100] sm:$0xff]
    %v2498 = vld [vmem:[%s4 + $0x108] sm:$0xff]
    %v2499 = vld [vmem:[%s4 + $0x110] sm:$0xff]
    %v2500 = vld [vmem:[%s4 + $0x118] sm:$0xff]
    %v2501 = vld [vmem:[%s4 + $0x120] sm:$0xff]
    %v2502 = vld [vmem:[%s4 + $0x128] sm:$0xff]
    %v2503 = vld [vmem:[%s4 + $0x130] sm:$0xff]
    %v2504 = vld [vmem:[%s4 + $0x138] sm:$0xff]
    %v2505 = vld [vmem:[%s4 + $0x140] sm:$0xff]
    %v2506 = vld [vmem:[%s4 + $0x148] sm:$0xff]
    %v2507 = vld [vmem:[%s4 + $0x150] sm:$0xff]
    %v2508 = vld [vmem:[%s4 + $0x158] sm:$0xff]
    %v2509 = vld [vmem:[%s4 + $0x160] sm:$0xff]
    %v2510 = vld [vmem:[%s4 + $0x168] sm:$0xff]
    %v2511 = vld [vmem:[%s4 + $0x170] sm:$0xff]
    %v2512 = vld [vmem:[%s4 + $0x178] sm:$0xff]
    %v2513 = vld [vmem:[%s4 + $0x180] sm:$0xff]
    %v2514 = vld [vmem:[%s4 + $0x188] sm:$0xff]
    %v2515 = vld [vmem:[%s4 + $0x190] sm:$0xff]
    %v2516 = vld [vmem:[%s4 + $0x198] sm:$0xff]
    %v2517 = vld [vmem:[%s4 + $0x1a0] sm:$0xff]
    %v2518 = vld [vmem:[%s4 + $0x1a8] sm:$0xff]
    %v2519 = vld [vmem:[%s4 + $0x1b0] sm:$0xff]
    %v2520 = vld [vmem:[%s4 + $0x1b8] sm:$0xff]
    %v2521 = vld [vmem:[%s4 + $0x1c0] sm:$0xff]
    %v2522 = vld [vmem:[%s4 + $0x1c8] sm:$0xff]
    %v2523 = vld [vmem:[%s4 + $0x1d0] sm:$0xff]
    %v2524 = vld [vmem:[%s4 + $0x1d8] sm:$0xff]
    %v2525 = vld [vmem:[%s4 + $0x1e0] sm:$0xff]
    %v2526 = vld [vmem:[%s4 + $0x1e8] sm:$0xff]
    %v2527 = vld [vmem:[%s4 + $0x1f0] sm:$0xff]
    %v2528 = vld [vmem:[%s4 + $0x1f8] sm:$0xff]
    %v2529 = vld [vmem:[#allocation9] sm:$0xf]
    %v2531 = vlaneseq
    %v2532 = vshrl.u32 %v2531, 7
    %v2533 = vsub.s32 0, %v2532
    %v2534 = vrot.slane %v2529, %v2533
    %v2535 = vlaneseq
    %v2536 = vshrl.u32 %v2535, 7
    %v2537 = vsub.s32 1, %v2536
    %v2538 = vrot.slane %v2529, %v2537
    %v2539 = vlaneseq
    %v2540 = vshrl.u32 %v2539, 7
    %v2541 = vsub.s32 2, %v2540
    %v2542 = vrot.slane %v2529, %v2541
    %v2543 = vlaneseq
    %v2544 = vshrl.u32 %v2543, 7
    %v2545 = vsub.s32 3, %v2544
    %v2546 = vrot.slane %v2529, %v2545
    %v2615 = vunpack.c.l.b16 %v2465
    %v2616 = vunpack.c.h.b16 %v2465
    %v2617 = vunpack.c.l.b16 %v2466
    %v2618 = vunpack.c.h.b16 %v2466
    %v2619 = vunpack.c.l.b16 %v2467
    %v2620 = vunpack.c.h.b16 %v2467
    %v2621 = vunpack.c.l.b16 %v2468
    %v2622 = vunpack.c.h.b16 %v2468
    %v2623 = vunpack.c.l.b16 %v2469
    %v2624 = vunpack.c.h.b16 %v2469
    %v2625 = vunpack.c.l.b16 %v2470
    %v2626 = vunpack.c.h.b16 %v2470
    %v2627 = vunpack.c.l.b16 %v2471
    %v2628 = vunpack.c.h.b16 %v2471
    %v2629 = vunpack.c.l.b16 %v2472
    %v2630 = vunpack.c.h.b16 %v2472
    %v2631 = vunpack.c.l.b16 %v2473
    %v2632 = vunpack.c.h.b16 %v2473
    %v2633 = vunpack.c.l.b16 %v2474
    %v2634 = vunpack.c.h.b16 %v2474
    %v2635 = vunpack.c.l.b16 %v2475
    %v2636 = vunpack.c.h.b16 %v2475
    %v2637 = vunpack.c.l.b16 %v2476
    %v2638 = vunpack.c.h.b16 %v2476
    %v2639 = vunpack.c.l.b16 %v2477
    %v2640 = vunpack.c.h.b16 %v2477
    %v2641 = vunpack.c.l.b16 %v2478
    %v2642 = vunpack.c.h.b16 %v2478
    %v2643 = vunpack.c.l.b16 %v2479
    %v2644 = vunpack.c.h.b16 %v2479
    %v2645 = vunpack.c.l.b16 %v2480
    %v2646 = vunpack.c.h.b16 %v2480
    %v2647 = vunpack.c.l.b16 %v2481
    %v2648 = vunpack.c.h.b16 %v2481
    %v2649 = vunpack.c.l.b16 %v2482
    %v2650 = vunpack.c.h.b16 %v2482
    %v2651 = vunpack.c.l.b16 %v2483
    %v2652 = vunpack.c.h.b16 %v2483
    %v2653 = vunpack.c.l.b16 %v2484
    %v2654 = vunpack.c.h.b16 %v2484
    %v2655 = vunpack.c.l.b16 %v2485
    %v2656 = vunpack.c.h.b16 %v2485
    %v2657 = vunpack.c.l.b16 %v2486
    %v2658 = vunpack.c.h.b16 %v2486
    %v2659 = vunpack.c.l.b16 %v2487
    %v2660 = vunpack.c.h.b16 %v2487
    %v2661 = vunpack.c.l.b16 %v2488
    %v2662 = vunpack.c.h.b16 %v2488
    %v2663 = vunpack.c.l.b16 %v2489
    %v2664 = vunpack.c.h.b16 %v2489
    %v2665 = vunpack.c.l.b16 %v2490
    %v2666 = vunpack.c.h.b16 %v2490
    %v2667 = vunpack.c.l.b16 %v2491
    %v2668 = vunpack.c.h.b16 %v2491
    %v2669 = vunpack.c.l.b16 %v2492
    %v2670 = vunpack.c.h.b16 %v2492
    %v2671 = vunpack.c.l.b16 %v2493
    %v2672 = vunpack.c.h.b16 %v2493
    %v2673 = vunpack.c.l.b16 %v2494
    %v2674 = vunpack.c.h.b16 %v2494
    %v2675 = vunpack.c.l.b16 %v2495
    %v2676 = vunpack.c.h.b16 %v2495
    %v2677 = vunpack.c.l.b16 %v2496
    %v2678 = vunpack.c.h.b16 %v2496
    %v2679 = vunpack.c.l.b16 %v2497
    %v2680 = vunpack.c.h.b16 %v2497
    %v2681 = vunpack.c.l.b16 %v2498
    %v2682 = vunpack.c.h.b16 %v2498
    %v2683 = vunpack.c.l.b16 %v2499
    %v2684 = vunpack.c.h.b16 %v2499
    %v2685 = vunpack.c.l.b16 %v2500
    %v2686 = vunpack.c.h.b16 %v2500
    %v2687 = vunpack.c.l.b16 %v2501
    %v2688 = vunpack.c.h.b16 %v2501
    %v2689 = vunpack.c.l.b16 %v2502
    %v2690 = vunpack.c.h.b16 %v2502
    %v2691 = vunpack.c.l.b16 %v2503
    %v2692 = vunpack.c.h.b16 %v2503
    %v2693 = vunpack.c.l.b16 %v2504
    %v2694 = vunpack.c.h.b16 %v2504
    %v2695 = vunpack.c.l.b16 %v2505
    %v2696 = vunpack.c.h.b16 %v2505
    %v2697 = vunpack.c.l.b16 %v2506
    %v2698 = vunpack.c.h.b16 %v2506
    %v2699 = vunpack.c.l.b16 %v2507
    %v2700 = vunpack.c.h.b16 %v2507
    %v2701 = vunpack.c.l.b16 %v2508
    %v2702 = vunpack.c.h.b16 %v2508
    %v2703 = vunpack.c.l.b16 %v2509
    %v2704 = vunpack.c.h.b16 %v2509
    %v2705 = vunpack.c.l.b16 %v2510
    %v2706 = vunpack.c.h.b16 %v2510
    %v2707 = vunpack.c.l.b16 %v2511
    %v2708 = vunpack.c.h.b16 %v2511
    %v2709 = vunpack.c.l.b16 %v2512
    %v2710 = vunpack.c.h.b16 %v2512
    %v2711 = vunpack.c.l.b16 %v2513
    %v2712 = vunpack.c.h.b16 %v2513
    %v2713 = vunpack.c.l.b16 %v2514
    %v2714 = vunpack.c.h.b16 %v2514
    %v2715 = vunpack.c.l.b16 %v2515
    %v2716 = vunpack.c.h.b16 %v2515
    %v2717 = vunpack.c.l.b16 %v2516
    %v2718 = vunpack.c.h.b16 %v2516
    %v2719 = vunpack.c.l.b16 %v2517
    %v2720 = vunpack.c.h.b16 %v2517
    %v2721 = vunpack.c.l.b16 %v2518
    %v2722 = vunpack.c.h.b16 %v2518
    %v2723 = vunpack.c.l.b16 %v2519
    %v2724 = vunpack.c.h.b16 %v2519
    %v2725 = vunpack.c.l.b16 %v2520
    %v2726 = vunpack.c.h.b16 %v2520
    %v2727 = vunpack.c.l.b16 %v2521
    %v2728 = vunpack.c.h.b16 %v2521
    %v2729 = vunpack.c.l.b16 %v2522
    %v2730 = vunpack.c.h.b16 %v2522
    %v2731 = vunpack.c.l.b16 %v2523
    %v2732 = vunpack.c.h.b16 %v2523
    %v2733 = vunpack.c.l.b16 %v2524
    %v2734 = vunpack.c.h.b16 %v2524
    %v2735 = vunpack.c.l.b16 %v2525
    %v2736 = vunpack.c.h.b16 %v2525
    %v2737 = vunpack.c.l.b16 %v2526
    %v2738 = vunpack.c.h.b16 %v2526
    %v2739 = vunpack.c.l.b16 %v2527
    %v2740 = vunpack.c.h.b16 %v2527
    %v2741 = vunpack.c.l.b16 %v2528
    %v2742 = vunpack.c.h.b16 %v2528
    %v2743 = vpack.c.b16 %v2619, %v2615
    %v2744 = vpack.c.b16 %v2620, %v2616
    %v2745 = vpack.c.b16 %v2621, %v2617
    %v2746 = vpack.c.b16 %v2622, %v2618
    %v2747 = vpack.c.b16 %v2627, %v2623
    %v2748 = vpack.c.b16 %v2628, %v2624
    %v2749 = vpack.c.b16 %v2629, %v2625
    %v2750 = vpack.c.b16 %v2630, %v2626
    %v2751 = vpack.c.b16 %v2635, %v2631
    %v2752 = vpack.c.b16 %v2636, %v2632
    %v2753 = vpack.c.b16 %v2637, %v2633
    %v2754 = vpack.c.b16 %v2638, %v2634
    %v2755 = vpack.c.b16 %v2643, %v2639
    %v2756 = vpack.c.b16 %v2644, %v2640
    %v2757 = vpack.c.b16 %v2645, %v2641
    %v2758 = vpack.c.b16 %v2646, %v2642
    %v2759 = vpack.c.b16 %v2651, %v2647
    %v2760 = vpack.c.b16 %v2652, %v2648
    %v2761 = vpack.c.b16 %v2653, %v2649
    %v2762 = vpack.c.b16 %v2654, %v2650
    %v2763 = vpack.c.b16 %v2659, %v2655
    %v2764 = vpack.c.b16 %v2660, %v2656
    %v2765 = vpack.c.b16 %v2661, %v2657
    %v2766 = vpack.c.b16 %v2662, %v2658
    %v2767 = vpack.c.b16 %v2667, %v2663
    %v2768 = vpack.c.b16 %v2668, %v2664
    %v2769 = vpack.c.b16 %v2669, %v2665
    %v2770 = vpack.c.b16 %v2670, %v2666
    %v2771 = vpack.c.b16 %v2675, %v2671
    %v2772 = vpack.c.b16 %v2676, %v2672
    %v2773 = vpack.c.b16 %v2677, %v2673
    %v2774 = vpack.c.b16 %v2678, %v2674
    %v2775 = vpack.c.b16 %v2683, %v2679
    %v2776 = vpack.c.b16 %v2684, %v2680
    %v2777 = vpack.c.b16 %v2685, %v2681
    %v2778 = vpack.c.b16 %v2686, %v2682
    %v2779 = vpack.c.b16 %v2691, %v2687
    %v2780 = vpack.c.b16 %v2692, %v2688
    %v2781 = vpack.c.b16 %v2693, %v2689
    %v2782 = vpack.c.b16 %v2694, %v2690
    %v2783 = vpack.c.b16 %v2699, %v2695
    %v2784 = vpack.c.b16 %v2700, %v2696
    %v2785 = vpack.c.b16 %v2701, %v2697
    %v2786 = vpack.c.b16 %v2702, %v2698
    %v2787 = vpack.c.b16 %v2707, %v2703
    %v2788 = vpack.c.b16 %v2708, %v2704
    %v2789 = vpack.c.b16 %v2709, %v2705
    %v2790 = vpack.c.b16 %v2710, %v2706
    %v2791 = vpack.c.b16 %v2715, %v2711
    %v2792 = vpack.c.b16 %v2716, %v2712
    %v2793 = vpack.c.b16 %v2717, %v2713
    %v2794 = vpack.c.b16 %v2718, %v2714
    %v2795 = vpack.c.b16 %v2723, %v2719
    %v2796 = vpack.c.b16 %v2724, %v2720
    %v2797 = vpack.c.b16 %v2725, %v2721
    %v2798 = vpack.c.b16 %v2726, %v2722
    %v2799 = vpack.c.b16 %v2731, %v2727
    %v2800 = vpack.c.b16 %v2732, %v2728
    %v2801 = vpack.c.b16 %v2733, %v2729
    %v2802 = vpack.c.b16 %v2734, %v2730
    %v2803 = vpack.c.b16 %v2739, %v2735
    %v2804 = vpack.c.b16 %v2740, %v2736
    %v2805 = vpack.c.b16 %v2741, %v2737
    %v2806 = vpack.c.b16 %v2742, %v2738
    %2871 = vmatprep.subr.bf16.mxu0 %v2744
    %2872 = vmatpush1.bf16.msra.mxu0 %v2743
    %2873 = vmatprep.subr.bf16.mxu0 %v2748
    %2874 = vmatpush1.bf16.msra.mxu0 %v2747
    %2875 = vmatprep.subr.bf16.mxu0 %v2752
    %2876 = vmatpush1.bf16.msra.mxu0 %v2751
    %2877 = vmatprep.subr.bf16.mxu0 %v2756
    %2878 = vmatpush1.bf16.msra.mxu0 %v2755
    %2879 = vmatprep.subr.bf16.mxu0 %v2760
    %2880 = vmatpush1.bf16.msra.mxu0 %v2759
    %2881 = vmatprep.subr.bf16.mxu0 %v2764
    %2882 = vmatpush1.bf16.msra.mxu0 %v2763
    %2883 = vmatprep.subr.bf16.mxu0 %v2768
    %2884 = vmatpush1.bf16.msra.mxu0 %v2767
    %2885 = vmatprep.subr.bf16.mxu0 %v2772
    %2886 = vmatpush1.bf16.msra.mxu0 %v2771
    %2887 = vmatprep.subr.bf16.mxu0 %v2776
    %2888 = vmatpush1.bf16.msra.mxu0 %v2775
    %2889 = vmatprep.subr.bf16.mxu0 %v2780
    %2890 = vmatpush1.bf16.msra.mxu0 %v2779
    %2891 = vmatprep.subr.bf16.mxu0 %v2784
    %2892 = vmatpush1.bf16.msra.mxu0 %v2783
    %2893 = vmatprep.subr.bf16.mxu0 %v2788
    %2894 = vmatpush1.bf16.msra.mxu0 %v2787
    %2895 = vmatprep.subr.bf16.mxu0 %v2792
    %2896 = vmatpush1.bf16.msra.mxu0 %v2791
    %2897 = vmatprep.subr.bf16.mxu0 %v2796
    %2898 = vmatpush1.bf16.msra.mxu0 %v2795
    %2899 = vmatprep.subr.bf16.mxu0 %v2800
    %2900 = vmatpush1.bf16.msra.mxu0 %v2799
    %2901 = vmatprep.subr.bf16.mxu0 %v2804
    %2902 = vmatpush1.bf16.msra.mxu0 %v2803
    %2903 = vmatprep.mubr.bf16.mxu0 %v2155
    %2904 = vmatmul.mubr.bf16.gmra.mrb[0].mxu0 %v2154
    %v2905 = vpop.f32.mrb[0].mxu0
    %v2906 = vadd.f32 %v2534, %v2905
    %v2907 = vpop.f32.mrb[0].mxu0
    %v2908 = vadd.f32 %v2538, %v2907
    %v2909 = vpop.f32.mrb[0].mxu0
    %v2910 = vpop.f32.mrb[0].mxu0
    %2911 = vdwg.mxu0
    %2912 = vmatprep.subr.bf16.mxu0 %v2746
    %2913 = vmatpush1.bf16.msra.mxu0 %v2745
    %2914 = vmatprep.subr.bf16.mxu0 %v2750
    %2915 = vmatpush1.bf16.msra.mxu0 %v2749
    %2916 = vmatprep.subr.bf16.mxu0 %v2754
    %2917 = vmatpush1.bf16.msra.mxu0 %v2753
    %2918 = vmatprep.subr.bf16.mxu0 %v2758
    %2919 = vmatpush1.bf16.msra.mxu0 %v2757
    %2920 = vmatprep.subr.bf16.mxu0 %v2762
    %2921 = vmatpush1.bf16.msra.mxu0 %v2761
    %2922 = vmatprep.subr.bf16.mxu0 %v2766
    %2923 = vmatpush1.bf16.msra.mxu0 %v2765
    %2924 = vmatprep.subr.bf16.mxu0 %v2770
    %2925 = vmatpush1.bf16.msra.mxu0 %v2769
    %2926 = vmatprep.subr.bf16.mxu0 %v2774
    %2927 = vmatpush1.bf16.msra.mxu0 %v2773
    %2928 = vmatprep.subr.bf16.mxu0 %v2778
    %2929 = vmatpush1.bf16.msra.mxu0 %v2777
    %2930 = vmatprep.subr.bf16.mxu0 %v2782
    %2931 = vmatpush1.bf16.msra.mxu0 %v2781
    %2932 = vmatprep.subr.bf16.mxu0 %v2786
    %2933 = vmatpush1.bf16.msra.mxu0 %v2785
    %2934 = vmatprep.subr.bf16.mxu0 %v2790
    %2935 = vmatpush1.bf16.msra.mxu0 %v2789
    %2936 = vmatprep.subr.bf16.mxu0 %v2794
    %2937 = vmatpush1.bf16.msra.mxu0 %v2793
    %2938 = vmatprep.subr.bf16.mxu0 %v2798
    %2939 = vmatpush1.bf16.msra.mxu0 %v2797
    %2940 = vmatprep.subr.bf16.mxu0 %v2802
    %2941 = vmatpush1.bf16.msra.mxu0 %v2801
    %2942 = vmatprep.subr.bf16.mxu0 %v2806
    %2943 = vmatpush1.bf16.msra.mxu0 %v2805
    %2944 = vmatprep.mubr.bf16.mxu0 %v2155
    %2945 = vmatmul.mubr.bf16.gmra.mrb[0].mxu0 %v2154
    %v2946 = vpop.f32.mrb[0].mxu0
    %v2947 = vadd.f32 %v2542, %v2946
    %v2948 = vpop.f32.mrb[0].mxu0
    %v2949 = vadd.f32 %v2546, %v2948
    %v2950 = vpop.f32.mrb[0].mxu0
    %v2951 = vpop.f32.mrb[0].mxu0
    %2952 = vdwg.mxu0
    %v2953 = vxor.u32 %v2906, 2147483648
    %v2954 = vmul.f32 %v2953, 1.442695
    %v2955 = vpow.pop %v2954
    %v2956 = vadd.f32 %v2955, 1.0
    %v2957 = vrcp.pop %v2956
    %v2958 = vmul.f32 1.0, %v2957
    %v2959 = vxor.u32 %v2908, 2147483648
    %v2960 = vmul.f32 %v2959, 1.442695
    %v2961 = vpow.pop %v2960
    %v2962 = vadd.f32 %v2961, 1.0
    %v2963 = vrcp.pop %v2962
    %v2964 = vmul.f32 1.0, %v2963
    %v2965 = vtanh.pop %v2947
    %v2966 = vxor.u32 %v2949, 2147483648
    %v2967 = vmul.f32 %v2966, 1.442695
    %v2968 = vpow.pop %v2967
    %v2969 = vadd.f32 %v2968, 1.0
    %v2970 = vrcp.pop %v2969
    %v2971 = vmul.f32 1.0, %v2970
    %v2972 = vmul.f32 %v2964, %v2149
    %v2973 = vmul.f32 %v2958, %v2965
    %v2974 = vadd.f32 %v2972, %v2973
    %v2975 = vtanh.pop %v2974
    %v2976 = vmul.f32 %v2971, %v2975
    %s2977 = scalar_lea.vmem [#allocation3], 16
    %2978 = vst [vmem:[%s2977] sm:$0xff] %v2976
    %v2979 = vpack.c.bf16 %v2464, %v2464
    %v2980 = vpack.c.bf16 %v2976, %v2976
    %s2981 = smul.u32 4, 4
    %s2982 = smul.addr %s2981, 8
    %s2983 = scalar_lea.vmem [#allocation2], %s2982
    %v2984 = vld [vmem:[%s2983] sm:$0xff]
    %v2985 = vld [vmem:[%s2983 + $0x8] sm:$0xff]
    %v2986 = vld [vmem:[%s2983 + $0x10] sm:$0xff]
    %v2987 = vld [vmem:[%s2983 + $0x18] sm:$0xff]
    %v2988 = vld [vmem:[#allocation6] sm:$0xff]
    %v2989 = vld [vmem:[#allocation6 + $0x8] sm:$0xff]
    %v2990 = vld [vmem:[#allocation6 + $0x10] sm:$0xff]
    %v2991 = vld [vmem:[#allocation6 + $0x18] sm:$0xff]
    %v2992 = vld [vmem:[#allocation6 + $0x20] sm:$0xff]
    %v2993 = vld [vmem:[#allocation6 + $0x28] sm:$0xff]
    %v2994 = vld [vmem:[#allocation6 + $0x30] sm:$0xff]
    %v2995 = vld [vmem:[#allocation6 + $0x38] sm:$0xff]
    %v2996 = vld [vmem:[#allocation6 + $0x40] sm:$0xff]
    %v2997 = vld [vmem:[#allocation6 + $0x48] sm:$0xff]
    %v2998 = vld [vmem:[#allocation6 + $0x50] sm:$0xff]
    %v2999 = vld [vmem:[#allocation6 + $0x58] sm:$0xff]
    %v3000 = vld [vmem:[#allocation6 + $0x60] sm:$0xff]
    %v3001 = vld [vmem:[#allocation6 + $0x68] sm:$0xff]
    %v3002 = vld [vmem:[#allocation6 + $0x70] sm:$0xff]
    %v3003 = vld [vmem:[#allocation6 + $0x78] sm:$0xff]
    %v3004 = vld [vmem:[#allocation6 + $0x80] sm:$0xff]
    %v3005 = vld [vmem:[#allocation6 + $0x88] sm:$0xff]
    %v3006 = vld [vmem:[#allocation6 + $0x90] sm:$0xff]
    %v3007 = vld [vmem:[#allocation6 + $0x98] sm:$0xff]
    %v3008 = vld [vmem:[#allocation6 + $0xa0] sm:$0xff]
    %v3009 = vld [vmem:[#allocation6 + $0xa8] sm:$0xff]
    %v3010 = vld [vmem:[#allocation6 + $0xb0] sm:$0xff]
    %v3011 = vld [vmem:[#allocation6 + $0xb8] sm:$0xff]
    %v3012 = vld [vmem:[#allocation6 + $0xc0] sm:$0xff]
    %v3013 = vld [vmem:[#allocation6 + $0xc8] sm:$0xff]
    %v3014 = vld [vmem:[#allocation6 + $0xd0] sm:$0xff]
    %v3015 = vld [vmem:[#allocation6 + $0xd8] sm:$0xff]
    %v3016 = vld [vmem:[#allocation6 + $0xe0] sm:$0xff]
    %v3017 = vld [vmem:[#allocation6 + $0xe8] sm:$0xff]
    %v3018 = vld [vmem:[#allocation6 + $0xf0] sm:$0xff]
    %v3019 = vld [vmem:[#allocation6 + $0xf8] sm:$0xff]
    %v3052 = vunpack.c.l.b16 %v2988
    %v3053 = vunpack.c.h.b16 %v2988
    %v3054 = vunpack.c.l.b16 %v2989
    %v3055 = vunpack.c.h.b16 %v2989
    %v3056 = vunpack.c.l.b16 %v2990
    %v3057 = vunpack.c.h.b16 %v2990
    %v3058 = vunpack.c.l.b16 %v2991
    %v3059 = vunpack.c.h.b16 %v2991
    %v3060 = vunpack.c.l.b16 %v2992
    %v3061 = vunpack.c.h.b16 %v2992
    %v3062 = vunpack.c.l.b16 %v2993
    %v3063 = vunpack.c.h.b16 %v2993
    %v3064 = vunpack.c.l.b16 %v2994
    %v3065 = vunpack.c.h.b16 %v2994
    %v3066 = vunpack.c.l.b16 %v2995
    %v3067 = vunpack.c.h.b16 %v2995
    %v3068 = vunpack.c.l.b16 %v2996
    %v3069 = vunpack.c.h.b16 %v2996
    %v3070 = vunpack.c.l.b16 %v2997
    %v3071 = vunpack.c.h.b16 %v2997
    %v3072 = vunpack.c.l.b16 %v2998
    %v3073 = vunpack.c.h.b16 %v2998
    %v3074 = vunpack.c.l.b16 %v2999
    %v3075 = vunpack.c.h.b16 %v2999
    %v3076 = vunpack.c.l.b16 %v3000
    %v3077 = vunpack.c.h.b16 %v3000
    %v3078 = vunpack.c.l.b16 %v3001
    %v3079 = vunpack.c.h.b16 %v3001
    %v3080 = vunpack.c.l.b16 %v3002
    %v3081 = vunpack.c.h.b16 %v3002
    %v3082 = vunpack.c.l.b16 %v3003
    %v3083 = vunpack.c.h.b16 %v3003
    %v3084 = vunpack.c.l.b16 %v3004
    %v3085 = vunpack.c.h.b16 %v3004
    %v3086 = vunpack.c.l.b16 %v3005
    %v3087 = vunpack.c.h.b16 %v3005
    %v3088 = vunpack.c.l.b16 %v3006
    %v3089 = vunpack.c.h.b16 %v3006
    %v3090 = vunpack.c.l.b16 %v3007
    %v3091 = vunpack.c.h.b16 %v3007
    %v3092 = vunpack.c.l.b16 %v3008
    %v3093 = vunpack.c.h.b16 %v3008
    %v3094 = vunpack.c.l.b16 %v3009
    %v3095 = vunpack.c.h.b16 %v3009
    %v3096 = vunpack.c.l.b16 %v3010
    %v3097 = vunpack.c.h.b16 %v3010
    %v3098 = vunpack.c.l.b16 %v3011
    %v3099 = vunpack.c.h.b16 %v3011
    %v3100 = vunpack.c.l.b16 %v3012
    %v3101 = vunpack.c.h.b16 %v3012
    %v3102 = vunpack.c.l.b16 %v3013
    %v3103 = vunpack.c.h.b16 %v3013
    %v3104 = vunpack.c.l.b16 %v3014
    %v3105 = vunpack.c.h.b16 %v3014
    %v3106 = vunpack.c.l.b16 %v3015
    %v3107 = vunpack.c.h.b16 %v3015
    %v3108 = vunpack.c.l.b16 %v3016
    %v3109 = vunpack.c.h.b16 %v3016
    %v3110 = vunpack.c.l.b16 %v3017
    %v3111 = vunpack.c.h.b16 %v3017
    %v3112 = vunpack.c.l.b16 %v3018
    %v3113 = vunpack.c.h.b16 %v3018
    %v3114 = vunpack.c.l.b16 %v3019
    %v3115 = vunpack.c.h.b16 %v3019
    %v3116 = vpack.c.b16 %v3056, %v3052
    %v3117 = vpack.c.b16 %v3057, %v3053
    %v3118 = vpack.c.b16 %v3058, %v3054
    %v3119 = vpack.c.b16 %v3059, %v3055
    %v3120 = vpack.c.b16 %v3064, %v3060
    %v3121 = vpack.c.b16 %v3065, %v3061
    %v3122 = vpack.c.b16 %v3066, %v3062
    %v3123 = vpack.c.b16 %v3067, %v3063
    %v3124 = vpack.c.b16 %v3072, %v3068
    %v3125 = vpack.c.b16 %v3073, %v3069
    %v3126 = vpack.c.b16 %v3074, %v3070
    %v3127 = vpack.c.b16 %v3075, %v3071
    %v3128 = vpack.c.b16 %v3080, %v3076
    %v3129 = vpack.c.b16 %v3081, %v3077
    %v3130 = vpack.c.b16 %v3082, %v3078
    %v3131 = vpack.c.b16 %v3083, %v3079
    %v3132 = vpack.c.b16 %v3088, %v3084
    %v3133 = vpack.c.b16 %v3089, %v3085
    %v3134 = vpack.c.b16 %v3090, %v3086
    %v3135 = vpack.c.b16 %v3091, %v3087
    %v3136 = vpack.c.b16 %v3096, %v3092
    %v3137 = vpack.c.b16 %v3097, %v3093
    %v3138 = vpack.c.b16 %v3098, %v3094
    %v3139 = vpack.c.b16 %v3099, %v3095
    %v3140 = vpack.c.b16 %v3104, %v3100
    %v3141 = vpack.c.b16 %v3105, %v3101
    %v3142 = vpack.c.b16 %v3106, %v3102
    %v3143 = vpack.c.b16 %v3107, %v3103
    %v3144 = vpack.c.b16 %v3112, %v3108
    %v3145 = vpack.c.b16 %v3113, %v3109
    %v3146 = vpack.c.b16 %v3114, %v3110
    %v3147 = vpack.c.b16 %v3115, %v3111
    %3180 = vmatprep.subr.bf16.mxu0 %v3117
    %3181 = vmatpush1.bf16.msra.mxu0 %v3116
    %3182 = vmatprep.subr.bf16.mxu0 %v3121
    %3183 = vmatpush1.bf16.msra.mxu0 %v3120
    %3184 = vmatprep.subr.bf16.mxu0 %v3125
    %3185 = vmatpush1.bf16.msra.mxu0 %v3124
    %3186 = vmatprep.subr.bf16.mxu0 %v3129
    %3187 = vmatpush1.bf16.msra.mxu0 %v3128
    %3188 = vmatprep.subr.bf16.mxu0 %v3133
    %3189 = vmatpush1.bf16.msra.mxu0 %v3132
    %3190 = vmatprep.subr.bf16.mxu0 %v3137
    %3191 = vmatpush1.bf16.msra.mxu0 %v3136
    %3192 = vmatprep.subr.bf16.mxu0 %v3141
    %3193 = vmatpush1.bf16.msra.mxu0 %v3140
    %3194 = vmatprep.subr.bf16.mxu0 %v3145
    %3195 = vmatpush1.bf16.msra.mxu0 %v3144
    %3196 = vmatprep.subr.bf16.mxu0 0
    %3197 = vmatpush1.bf16.msra.mxu0 0
    %3198 = vmatprep.subr.bf16.mxu0 0
    %3199 = vmatpush1.bf16.msra.mxu0 0
    %3200 = vmatprep.subr.bf16.mxu0 0
    %3201 = vmatpush1.bf16.msra.mxu0 0
    %3202 = vmatprep.subr.bf16.mxu0 0
    %3203 = vmatpush1.bf16.msra.mxu0 0
    %3204 = vmatprep.subr.bf16.mxu0 0
    %3205 = vmatpush1.bf16.msra.mxu0 0
    %3206 = vmatprep.subr.bf16.mxu0 0
    %3207 = vmatpush1.bf16.msra.mxu0 0
    %3208 = vmatprep.subr.bf16.mxu0 0
    %3209 = vmatpush1.bf16.msra.mxu0 0
    %3210 = vmatprep.subr.bf16.mxu0 0
    %3211 = vmatpush1.bf16.msra.mxu0 0
    %3212 = vmatprep.mubr.bf16.mxu0 0
    %3213 = vmatmul.mubr.bf16.gmra.mrb[0].mxu0 %v2979
    %v3214 = vpop.f32.mrb[0].mxu0
    %v3215 = vadd.f32 0.0, %v3214
    %v3216 = vpop.f32.mrb[0].mxu0
    %v3217 = vadd.f32 0.0, %v3216
    %v3218 = vpop.f32.mrb[0].mxu0
    %v3219 = vpop.f32.mrb[0].mxu0
    %3220 = vdwg.mxu0
    %3221 = vmatprep.subr.bf16.mxu0 %v3119
    %3222 = vmatpush1.bf16.msra.mxu0 %v3118
    %3223 = vmatprep.subr.bf16.mxu0 %v3123
    %3224 = vmatpush1.bf16.msra.mxu0 %v3122
    %3225 = vmatprep.subr.bf16.mxu0 %v3127
    %3226 = vmatpush1.bf16.msra.mxu0 %v3126
    %3227 = vmatprep.subr.bf16.mxu0 %v3131
    %3228 = vmatpush1.bf16.msra.mxu0 %v3130
    %3229 = vmatprep.subr.bf16.mxu0 %v3135
    %3230 = vmatpush1.bf16.msra.mxu0 %v3134
    %3231 = vmatprep.subr.bf16.mxu0 %v3139
    %3232 = vmatpush1.bf16.msra.mxu0 %v3138
    %3233 = vmatprep.subr.bf16.mxu0 %v3143
    %3234 = vmatpush1.bf16.msra.mxu0 %v3142
    %3235 = vmatprep.subr.bf16.mxu0 %v3147
    %3236 = vmatpush1.bf16.msra.mxu0 %v3146
    %3237 = vmatprep.subr.bf16.mxu0 0
    %3238 = vmatpush1.bf16.msra.mxu0 0
    %3239 = vmatprep.subr.bf16.mxu0 0
    %3240 = vmatpush1.bf16.msra.mxu0 0
    %3241 = vmatprep.subr.bf16.mxu0 0
    %3242 = vmatpush1.bf16.msra.mxu0 0
    %3243 = vmatprep.subr.bf16.mxu0 0
    %3244 = vmatpush1.bf16.msra.mxu0 0
    %3245 = vmatprep.subr.bf16.mxu0 0
    %3246 = vmatpush1.bf16.msra.mxu0 0
    %3247 = vmatprep.subr.bf16.mxu0 0
    %3248 = vmatpush1.bf16.msra.mxu0 0
    %3249 = vmatprep.subr.bf16.mxu0 0
    %3250 = vmatpush1.bf16.msra.mxu0 0
    %3251 = vmatprep.subr.bf16.mxu0 0
    %3252 = vmatpush1.bf16.msra.mxu0 0
    %3253 = vmatprep.mubr.bf16.mxu0 0
    %3254 = vmatmul.mubr.bf16.gmra.mrb[0].mxu0 %v2979
    %v3255 = vpop.f32.mrb[0].mxu0
    %v3256 = vadd.f32 0.0, %v3255
    %v3257 = vpop.f32.mrb[0].mxu0
    %v3258 = vadd.f32 0.0, %v3257
    %v3259 = vpop.f32.mrb[0].mxu0
    %v3260 = vpop.f32.mrb[0].mxu0
    %3261 = vdwg.mxu0
    %v3262 = vadd.f32 %v2984, %v3215
    %v3263 = vadd.f32 %v2985, %v3217
    %v3264 = vadd.f32 %v2986, %v3256
    %v3265 = vadd.f32 %v2987, %v3258
    %v3266 = vxor.u32 %v3262, 2147483648
    %v3267 = vmul.f32 %v3266, 1.442695
    %v3268 = vpow.pop %v3267
    %v3269 = vadd.f32 %v3268, 1.0
    %v3270 = vrcp.pop %v3269
    %v3271 = vmul.f32 1.0, %v3270
    %v3272 = vxor.u32 %v3263, 2147483648
    %v3273 = vmul.f32 %v3272, 1.442695
    %v3274 = vpow.pop %v3273
    %v3275 = vadd.f32 %v3274, 1.0
    %v3276 = vrcp.pop %v3275
    %v3277 = vmul.f32 1.0, %v3276
    %v3278 = vtanh.pop %v3264
    %v3279 = vxor.u32 %v3265, 2147483648
    %v3280 = vmul.f32 %v3279, 1.442695
    %v3281 = vpow.pop %v3280
    %v3282 = vadd.f32 %v3281, 1.0
    %v3283 = vrcp.pop %v3282
    %v3284 = vmul.f32 1.0, %v3283
    %v3285 = vmul.f32 %v3277, %v2462
    %v3286 = vmul.f32 %v3271, %v3278
    %v3287 = vadd.f32 %v3285, %v3286
    %v3288 = vtanh.pop %v3287
    %v3289 = vmul.f32 %v3284, %v3288
    %v3290 = vld [vmem:[%s4] sm:$0xff]
    %v3291 = vld [vmem:[%s4 + $0x8] sm:$0xff]
    %v3292 = vld [vmem:[%s4 + $0x10] sm:$0xff]
    %v3293 = vld [vmem:[%s4 + $0x18] sm:$0xff]
    %v3294 = vld [vmem:[%s4 + $0x20] sm:$0xff]
    %v3295 = vld [vmem:[%s4 + $0x28] sm:$0xff]
    %v3296 = vld [vmem:[%s4 + $0x30] sm:$0xff]
    %v3297 = vld [vmem:[%s4 + $0x38] sm:$0xff]
    %v3298 = vld [vmem:[%s4 + $0x40] sm:$0xff]
    %v3299 = vld [vmem:[%s4 + $0x48] sm:$0xff]
    %v3300 = vld [vmem:[%s4 + $0x50] sm:$0xff]
    %v3301 = vld [vmem:[%s4 + $0x58] sm:$0xff]
    %v3302 = vld [vmem:[%s4 + $0x60] sm:$0xff]
    %v3303 = vld [vmem:[%s4 + $0x68] sm:$0xff]
    %v3304 = vld [vmem:[%s4 + $0x70] sm:$0xff]
    %v3305 = vld [vmem:[%s4 + $0x78] sm:$0xff]
    %v3306 = vld [vmem:[%s4 + $0x80] sm:$0xff]
    %v3307 = vld [vmem:[%s4 + $0x88] sm:$0xff]
    %v3308 = vld [vmem:[%s4 + $0x90] sm:$0xff]
    %v3309 = vld [vmem:[%s4 + $0x98] sm:$0xff]
    %v3310 = vld [vmem:[%s4 + $0xa0] sm:$0xff]
    %v3311 = vld [vmem:[%s4 + $0xa8] sm:$0xff]
    %v3312 = vld [vmem:[%s4 + $0xb0] sm:$0xff]
    %v3313 = vld [vmem:[%s4 + $0xb8] sm:$0xff]
    %v3314 = vld [vmem:[%s4 + $0xc0] sm:$0xff]
    %v3315 = vld [vmem:[%s4 + $0xc8] sm:$0xff]
    %v3316 = vld [vmem:[%s4 + $0xd0] sm:$0xff]
    %v3317 = vld [vmem:[%s4 + $0xd8] sm:$0xff]
    %v3318 = vld [vmem:[%s4 + $0xe0] sm:$0xff]
    %v3319 = vld [vmem:[%s4 + $0xe8] sm:$0xff]
    %v3320 = vld [vmem:[%s4 + $0xf0] sm:$0xff]
    %v3321 = vld [vmem:[%s4 + $0xf8] sm:$0xff]
    %v3322 = vld [vmem:[%s4 + $0x100] sm:$0xff]
    %v3323 = vld [vmem:[%s4 + $0x108] sm:$0xff]
    %v3324 = vld [vmem:[%s4 + $0x110] sm:$0xff]
    %v3325 = vld [vmem:[%s4 + $0x118] sm:$0xff]
    %v3326 = vld [vmem:[%s4 + $0x120] sm:$0xff]
    %v3327 = vld [vmem:[%s4 + $0x128] sm:$0xff]
    %v3328 = vld [vmem:[%s4 + $0x130] sm:$0xff]
    %v3329 = vld [vmem:[%s4 + $0x138] sm:$0xff]
    %v3330 = vld [vmem:[%s4 + $0x140] sm:$0xff]
    %v3331 = vld [vmem:[%s4 + $0x148] sm:$0xff]
    %v3332 = vld [vmem:[%s4 + $0x150] sm:$0xff]
    %v3333 = vld [vmem:[%s4 + $0x158] sm:$0xff]
    %v3334 = vld [vmem:[%s4 + $0x160] sm:$0xff]
    %v3335 = vld [vmem:[%s4 + $0x168] sm:$0xff]
    %v3336 = vld [vmem:[%s4 + $0x170] sm:$0xff]
    %v3337 = vld [vmem:[%s4 + $0x178] sm:$0xff]
    %v3338 = vld [vmem:[%s4 + $0x180] sm:$0xff]
    %v3339 = vld [vmem:[%s4 + $0x188] sm:$0xff]
    %v3340 = vld [vmem:[%s4 + $0x190] sm:$0xff]
    %v3341 = vld [vmem:[%s4 + $0x198] sm:$0xff]
    %v3342 = vld [vmem:[%s4 + $0x1a0] sm:$0xff]
    %v3343 = vld [vmem:[%s4 + $0x1a8] sm:$0xff]
    %v3344 = vld [vmem:[%s4 + $0x1b0] sm:$0xff]
    %v3345 = vld [vmem:[%s4 + $0x1b8] sm:$0xff]
    %v3346 = vld [vmem:[%s4 + $0x1c0] sm:$0xff]
    %v3347 = vld [vmem:[%s4 + $0x1c8] sm:$0xff]
    %v3348 = vld [vmem:[%s4 + $0x1d0] sm:$0xff]
    %v3349 = vld [vmem:[%s4 + $0x1d8] sm:$0xff]
    %v3350 = vld [vmem:[%s4 + $0x1e0] sm:$0xff]
    %v3351 = vld [vmem:[%s4 + $0x1e8] sm:$0xff]
    %v3352 = vld [vmem:[%s4 + $0x1f0] sm:$0xff]
    %v3353 = vld [vmem:[%s4 + $0x1f8] sm:$0xff]
    %v3354 = vld [vmem:[#allocation9] sm:$0xf]
    %v3356 = vlaneseq
    %v3357 = vshrl.u32 %v3356, 7
    %v3358 = vsub.s32 0, %v3357
    %v3359 = vrot.slane %v3354, %v3358
    %v3360 = vlaneseq
    %v3361 = vshrl.u32 %v3360, 7
    %v3362 = vsub.s32 1, %v3361
    %v3363 = vrot.slane %v3354, %v3362
    %v3364 = vlaneseq
    %v3365 = vshrl.u32 %v3364, 7
    %v3366 = vsub.s32 2, %v3365
    %v3367 = vrot.slane %v3354, %v3366
    %v3368 = vlaneseq
    %v3369 = vshrl.u32 %v3368, 7
    %v3370 = vsub.s32 3, %v3369
    %v3371 = vrot.slane %v3354, %v3370
    %v3440 = vunpack.c.l.b16 %v3290
    %v3441 = vunpack.c.h.b16 %v3290
    %v3442 = vunpack.c.l.b16 %v3291
    %v3443 = vunpack.c.h.b16 %v3291
    %v3444 = vunpack.c.l.b16 %v3292
    %v3445 = vunpack.c.h.b16 %v3292
    %v3446 = vunpack.c.l.b16 %v3293
    %v3447 = vunpack.c.h.b16 %v3293
    %v3448 = vunpack.c.l.b16 %v3294
    %v3449 = vunpack.c.h.b16 %v3294
    %v3450 = vunpack.c.l.b16 %v3295
    %v3451 = vunpack.c.h.b16 %v3295
    %v3452 = vunpack.c.l.b16 %v3296
    %v3453 = vunpack.c.h.b16 %v3296
    %v3454 = vunpack.c.l.b16 %v3297
    %v3455 = vunpack.c.h.b16 %v3297
    %v3456 = vunpack.c.l.b16 %v3298
    %v3457 = vunpack.c.h.b16 %v3298
    %v3458 = vunpack.c.l.b16 %v3299
    %v3459 = vunpack.c.h.b16 %v3299
    %v3460 = vunpack.c.l.b16 %v3300
    %v3461 = vunpack.c.h.b16 %v3300
    %v3462 = vunpack.c.l.b16 %v3301
    %v3463 = vunpack.c.h.b16 %v3301
    %v3464 = vunpack.c.l.b16 %v3302
    %v3465 = vunpack.c.h.b16 %v3302
    %v3466 = vunpack.c.l.b16 %v3303
    %v3467 = vunpack.c.h.b16 %v3303
    %v3468 = vunpack.c.l.b16 %v3304
    %v3469 = vunpack.c.h.b16 %v3304
    %v3470 = vunpack.c.l.b16 %v3305
    %v3471 = vunpack.c.h.b16 %v3305
    %v3472 = vunpack.c.l.b16 %v3306
    %v3473 = vunpack.c.h.b16 %v3306
    %v3474 = vunpack.c.l.b16 %v3307
    %v3475 = vunpack.c.h.b16 %v3307
    %v3476 = vunpack.c.l.b16 %v3308
    %v3477 = vunpack.c.h.b16 %v3308
    %v3478 = vunpack.c.l.b16 %v3309
    %v3479 = vunpack.c.h.b16 %v3309
    %v3480 = vunpack.c.l.b16 %v3310
    %v3481 = vunpack.c.h.b16 %v3310
    %v3482 = vunpack.c.l.b16 %v3311
    %v3483 = vunpack.c.h.b16 %v3311
    %v3484 = vunpack.c.l.b16 %v3312
    %v3485 = vunpack.c.h.b16 %v3312
    %v3486 = vunpack.c.l.b16 %v3313
    %v3487 = vunpack.c.h.b16 %v3313
    %v3488 = vunpack.c.l.b16 %v3314
    %v3489 = vunpack.c.h.b16 %v3314
    %v3490 = vunpack.c.l.b16 %v3315
    %v3491 = vunpack.c.h.b16 %v3315
    %v3492 = vunpack.c.l.b16 %v3316
    %v3493 = vunpack.c.h.b16 %v3316
    %v3494 = vunpack.c.l.b16 %v3317
    %v3495 = vunpack.c.h.b16 %v3317
    %v3496 = vunpack.c.l.b16 %v3318
    %v3497 = vunpack.c.h.b16 %v3318
    %v3498 = vunpack.c.l.b16 %v3319
    %v3499 = vunpack.c.h.b16 %v3319
    %v3500 = vunpack.c.l.b16 %v3320
    %v3501 = vunpack.c.h.b16 %v3320
    %v3502 = vunpack.c.l.b16 %v3321
    %v3503 = vunpack.c.h.b16 %v3321
    %v3504 = vunpack.c.l.b16 %v3322
    %v3505 = vunpack.c.h.b16 %v3322
    %v3506 = vunpack.c.l.b16 %v3323
    %v3507 = vunpack.c.h.b16 %v3323
    %v3508 = vunpack.c.l.b16 %v3324
    %v3509 = vunpack.c.h.b16 %v3324
    %v3510 = vunpack.c.l.b16 %v3325
    %v3511 = vunpack.c.h.b16 %v3325
    %v3512 = vunpack.c.l.b16 %v3326
    %v3513 = vunpack.c.h.b16 %v3326
    %v3514 = vunpack.c.l.b16 %v3327
    %v3515 = vunpack.c.h.b16 %v3327
    %v3516 = vunpack.c.l.b16 %v3328
    %v3517 = vunpack.c.h.b16 %v3328
    %v3518 = vunpack.c.l.b16 %v3329
    %v3519 = vunpack.c.h.b16 %v3329
    %v3520 = vunpack.c.l.b16 %v3330
    %v3521 = vunpack.c.h.b16 %v3330
    %v3522 = vunpack.c.l.b16 %v3331
    %v3523 = vunpack.c.h.b16 %v3331
    %v3524 = vunpack.c.l.b16 %v3332
    %v3525 = vunpack.c.h.b16 %v3332
    %v3526 = vunpack.c.l.b16 %v3333
    %v3527 = vunpack.c.h.b16 %v3333
    %v3528 = vunpack.c.l.b16 %v3334
    %v3529 = vunpack.c.h.b16 %v3334
    %v3530 = vunpack.c.l.b16 %v3335
    %v3531 = vunpack.c.h.b16 %v3335
    %v3532 = vunpack.c.l.b16 %v3336
    %v3533 = vunpack.c.h.b16 %v3336
    %v3534 = vunpack.c.l.b16 %v3337
    %v3535 = vunpack.c.h.b16 %v3337
    %v3536 = vunpack.c.l.b16 %v3338
    %v3537 = vunpack.c.h.b16 %v3338
    %v3538 = vunpack.c.l.b16 %v3339
    %v3539 = vunpack.c.h.b16 %v3339
    %v3540 = vunpack.c.l.b16 %v3340
    %v3541 = vunpack.c.h.b16 %v3340
    %v3542 = vunpack.c.l.b16 %v3341
    %v3543 = vunpack.c.h.b16 %v3341
    %v3544 = vunpack.c.l.b16 %v3342
    %v3545 = vunpack.c.h.b16 %v3342
    %v3546 = vunpack.c.l.b16 %v3343
    %v3547 = vunpack.c.h.b16 %v3343
    %v3548 = vunpack.c.l.b16 %v3344
    %v3549 = vunpack.c.h.b16 %v3344
    %v3550 = vunpack.c.l.b16 %v3345
    %v3551 = vunpack.c.h.b16 %v3345
    %v3552 = vunpack.c.l.b16 %v3346
    %v3553 = vunpack.c.h.b16 %v3346
    %v3554 = vunpack.c.l.b16 %v3347
    %v3555 = vunpack.c.h.b16 %v3347
    %v3556 = vunpack.c.l.b16 %v3348
    %v3557 = vunpack.c.h.b16 %v3348
    %v3558 = vunpack.c.l.b16 %v3349
    %v3559 = vunpack.c.h.b16 %v3349
    %v3560 = vunpack.c.l.b16 %v3350
    %v3561 = vunpack.c.h.b16 %v3350
    %v3562 = vunpack.c.l.b16 %v3351
    %v3563 = vunpack.c.h.b16 %v3351
    %v3564 = vunpack.c.l.b16 %v3352
    %v3565 = vunpack.c.h.b16 %v3352
    %v3566 = vunpack.c.l.b16 %v3353
    %v3567 = vunpack.c.h.b16 %v3353
    %v3568 = vpack.c.b16 %v3444, %v3440
    %v3569 = vpack.c.b16 %v3445, %v3441
    %v3570 = vpack.c.b16 %v3446, %v3442
    %v3571 = vpack.c.b16 %v3447, %v3443
    %v3572 = vpack.c.b16 %v3452, %v3448
    %v3573 = vpack.c.b16 %v3453, %v3449
    %v3574 = vpack.c.b16 %v3454, %v3450
    %v3575 = vpack.c.b16 %v3455, %v3451
    %v3576 = vpack.c.b16 %v3460, %v3456
    %v3577 = vpack.c.b16 %v3461, %v3457
    %v3578 = vpack.c.b16 %v3462, %v3458
    %v3579 = vpack.c.b16 %v3463, %v3459
    %v3580 = vpack.c.b16 %v3468, %v3464
    %v3581 = vpack.c.b16 %v3469, %v3465
    %v3582 = vpack.c.b16 %v3470, %v3466
    %v3583 = vpack.c.b16 %v3471, %v3467
    %v3584 = vpack.c.b16 %v3476, %v3472
    %v3585 = vpack.c.b16 %v3477, %v3473
    %v3586 = vpack.c.b16 %v3478, %v3474
    %v3587 = vpack.c.b16 %v3479, %v3475
    %v3588 = vpack.c.b16 %v3484, %v3480
    %v3589 = vpack.c.b16 %v3485, %v3481
    %v3590 = vpack.c.b16 %v3486, %v3482
    %v3591 = vpack.c.b16 %v3487, %v3483
    %v3592 = vpack.c.b16 %v3492, %v3488
    %v3593 = vpack.c.b16 %v3493, %v3489
    %v3594 = vpack.c.b16 %v3494, %v3490
    %v3595 = vpack.c.b16 %v3495, %v3491
    %v3596 = vpack.c.b16 %v3500, %v3496
    %v3597 = vpack.c.b16 %v3501, %v3497
    %v3598 = vpack.c.b16 %v3502, %v3498
    %v3599 = vpack.c.b16 %v3503, %v3499
    %v3600 = vpack.c.b16 %v3508, %v3504
    %v3601 = vpack.c.b16 %v3509, %v3505
    %v3602 = vpack.c.b16 %v3510, %v3506
    %v3603 = vpack.c.b16 %v3511, %v3507
    %v3604 = vpack.c.b16 %v3516, %v3512
    %v3605 = vpack.c.b16 %v3517, %v3513
    %v3606 = vpack.c.b16 %v3518, %v3514
    %v3607 = vpack.c.b16 %v3519, %v3515
    %v3608 = vpack.c.b16 %v3524, %v3520
    %v3609 = vpack.c.b16 %v3525, %v3521
    %v3610 = vpack.c.b16 %v3526, %v3522
    %v3611 = vpack.c.b16 %v3527, %v3523
    %v3612 = vpack.c.b16 %v3532, %v3528
    %v3613 = vpack.c.b16 %v3533, %v3529
    %v3614 = vpack.c.b16 %v3534, %v3530
    %v3615 = vpack.c.b16 %v3535, %v3531
    %v3616 = vpack.c.b16 %v3540, %v3536
    %v3617 = vpack.c.b16 %v3541, %v3537
    %v3618 = vpack.c.b16 %v3542, %v3538
    %v3619 = vpack.c.b16 %v3543, %v3539
    %v3620 = vpack.c.b16 %v3548, %v3544
    %v3621 = vpack.c.b16 %v3549, %v3545
    %v3622 = vpack.c.b16 %v3550, %v3546
    %v3623 = vpack.c.b16 %v3551, %v3547
    %v3624 = vpack.c.b16 %v3556, %v3552
    %v3625 = vpack.c.b16 %v3557, %v3553
    %v3626 = vpack.c.b16 %v3558, %v3554
    %v3627 = vpack.c.b16 %v3559, %v3555
    %v3628 = vpack.c.b16 %v3564, %v3560
    %v3629 = vpack.c.b16 %v3565, %v3561
    %v3630 = vpack.c.b16 %v3566, %v3562
    %v3631 = vpack.c.b16 %v3567, %v3563
    %3696 = vmatprep.subr.bf16.mxu0 %v3569
    %3697 = vmatpush1.bf16.msra.mxu0 %v3568
    %3698 = vmatprep.subr.bf16.mxu0 %v3573
    %3699 = vmatpush1.bf16.msra.mxu0 %v3572
    %3700 = vmatprep.subr.bf16.mxu0 %v3577
    %3701 = vmatpush1.bf16.msra.mxu0 %v3576
    %3702 = vmatprep.subr.bf16.mxu0 %v3581
    %3703 = vmatpush1.bf16.msra.mxu0 %v3580
    %3704 = vmatprep.subr.bf16.mxu0 %v3585
    %3705 = vmatpush1.bf16.msra.mxu0 %v3584
    %3706 = vmatprep.subr.bf16.mxu0 %v3589
    %3707 = vmatpush1.bf16.msra.mxu0 %v3588
    %3708 = vmatprep.subr.bf16.mxu0 %v3593
    %3709 = vmatpush1.bf16.msra.mxu0 %v3592
    %3710 = vmatprep.subr.bf16.mxu0 %v3597
    %3711 = vmatpush1.bf16.msra.mxu0 %v3596
    %3712 = vmatprep.subr.bf16.mxu0 %v3601
    %3713 = vmatpush1.bf16.msra.mxu0 %v3600
    %3714 = vmatprep.subr.bf16.mxu0 %v3605
    %3715 = vmatpush1.bf16.msra.mxu0 %v3604
    %3716 = vmatprep.subr.bf16.mxu0 %v3609
    %3717 = vmatpush1.bf16.msra.mxu0 %v3608
    %3718 = vmatprep.subr.bf16.mxu0 %v3613
    %3719 = vmatpush1.bf16.msra.mxu0 %v3612
    %3720 = vmatprep.subr.bf16.mxu0 %v3617
    %3721 = vmatpush1.bf16.msra.mxu0 %v3616
    %3722 = vmatprep.subr.bf16.mxu0 %v3621
    %3723 = vmatpush1.bf16.msra.mxu0 %v3620
    %3724 = vmatprep.subr.bf16.mxu0 %v3625
    %3725 = vmatpush1.bf16.msra.mxu0 %v3624
    %3726 = vmatprep.subr.bf16.mxu0 %v3629
    %3727 = vmatpush1.bf16.msra.mxu0 %v3628
    %3728 = vmatprep.mubr.bf16.mxu0 %v2980
    %3729 = vmatmul.mubr.bf16.gmra.mrb[0].mxu0 %v2979
    %v3730 = vpop.f32.mrb[0].mxu0
    %v3731 = vadd.f32 %v3359, %v3730
    %v3732 = vpop.f32.mrb[0].mxu0
    %v3733 = vadd.f32 %v3363, %v3732
    %v3734 = vpop.f32.mrb[0].mxu0
    %v3735 = vpop.f32.mrb[0].mxu0
    %3736 = vdwg.mxu0
    %3737 = vmatprep.subr.bf16.mxu0 %v3571
    %3738 = vmatpush1.bf16.msra.mxu0 %v3570
    %3739 = vmatprep.subr.bf16.mxu0 %v3575
    %3740 = vmatpush1.bf16.msra.mxu0 %v3574
    %3741 = vmatprep.subr.bf16.mxu0 %v3579
    %3742 = vmatpush1.bf16.msra.mxu0 %v3578
    %3743 = vmatprep.subr.bf16.mxu0 %v3583
    %3744 = vmatpush1.bf16.msra.mxu0 %v3582
    %3745 = vmatprep.subr.bf16.mxu0 %v3587
    %3746 = vmatpush1.bf16.msra.mxu0 %v3586
    %3747 = vmatprep.subr.bf16.mxu0 %v3591
    %3748 = vmatpush1.bf16.msra.mxu0 %v3590
    %3749 = vmatprep.subr.bf16.mxu0 %v3595
    %3750 = vmatpush1.bf16.msra.mxu0 %v3594
    %3751 = vmatprep.subr.bf16.mxu0 %v3599
    %3752 = vmatpush1.bf16.msra.mxu0 %v3598
    %3753 = vmatprep.subr.bf16.mxu0 %v3603
    %3754 = vmatpush1.bf16.msra.mxu0 %v3602
    %3755 = vmatprep.subr.bf16.mxu0 %v3607
    %3756 = vmatpush1.bf16.msra.mxu0 %v3606
    %3757 = vmatprep.subr.bf16.mxu0 %v3611
    %3758 = vmatpush1.bf16.msra.mxu0 %v3610
    %3759 = vmatprep.subr.bf16.mxu0 %v3615
    %3760 = vmatpush1.bf16.msra.mxu0 %v3614
    %3761 = vmatprep.subr.bf16.mxu0 %v3619
    %3762 = vmatpush1.bf16.msra.mxu0 %v3618
    %3763 = vmatprep.subr.bf16.mxu0 %v3623
    %3764 = vmatpush1.bf16.msra.mxu0 %v3622
    %3765 = vmatprep.subr.bf16.mxu0 %v3627
    %3766 = vmatpush1.bf16.msra.mxu0 %v3626
    %3767 = vmatprep.subr.bf16.mxu0 %v3631
    %3768 = vmatpush1.bf16.msra.mxu0 %v3630
    %3769 = vmatprep.mubr.bf16.mxu0 %v2980
    %3770 = vmatmul.mubr.bf16.gmra.mrb[0].mxu0 %v2979
    %v3771 = vpop.f32.mrb[0].mxu0
    %v3772 = vadd.f32 %v3367, %v3771
    %v3773 = vpop.f32.mrb[0].mxu0
    %v3774 = vadd.f32 %v3371, %v3773
    %v3775 = vpop.f32.mrb[0].mxu0
    %v3776 = vpop.f32.mrb[0].mxu0
    %3777 = vdwg.mxu0
    %v3778 = vxor.u32 %v3731, 2147483648
    %v3779 = vmul.f32 %v3778, 1.442695
    %v3780 = vpow.pop %v3779
    %v3781 = vadd.f32 %v3780, 1.0
    %v3782 = vrcp.pop %v3781
    %v3783 = vmul.f32 1.0, %v3782
    %v3784 = vxor.u32 %v3733, 2147483648
    %v3785 = vmul.f32 %v3784, 1.442695
    %v3786 = vpow.pop %v3785
    %v3787 = vadd.f32 %v3786, 1.0
    %v3788 = vrcp.pop %v3787
    %v3789 = vmul.f32 1.0, %v3788
    %v3790 = vtanh.pop %v3772
    %v3791 = vxor.u32 %v3774, 2147483648
    %v3792 = vmul.f32 %v3791, 1.442695
    %v3793 = vpow.pop %v3792
    %v3794 = vadd.f32 %v3793, 1.0
    %v3795 = vrcp.pop %v3794
    %v3796 = vmul.f32 1.0, %v3795
    %v3797 = vmul.f32 %v3789, %v2974
    %v3798 = vmul.f32 %v3783, %v3790
    %v3799 = vadd.f32 %v3797, %v3798
    %v3800 = vtanh.pop %v3799
    %v3801 = vmul.f32 %v3796, %v3800
    %s3802 = scalar_lea.vmem [#allocation3], 24
    %3803 = vst [vmem:[%s3802] sm:$0xff] %v3801
    %v3804 = vpack.c.bf16 %v3289, %v3289
    %v3805 = vpack.c.bf16 %v3801, %v3801
    %s3806 = smul.u32 5, 4
    %s3807 = smul.addr %s3806, 8
    %s3808 = scalar_lea.vmem [#allocation2], %s3807
    %v3809 = vld [vmem:[%s3808] sm:$0xff]
    %v3810 = vld [vmem:[%s3808 + $0x8] sm:$0xff]
    %v3811 = vld [vmem:[%s3808 + $0x10] sm:$0xff]
    %v3812 = vld [vmem:[%s3808 + $0x18] sm:$0xff]
    %v3813 = vld [vmem:[#allocation6] sm:$0xff]
    %v3814 = vld [vmem:[#allocation6 + $0x8] sm:$0xff]
    %v3815 = vld [vmem:[#allocation6 + $0x10] sm:$0xff]
    %v3816 = vld [vmem:[#allocation6 + $0x18] sm:$0xff]
    %v3817 = vld [vmem:[#allocation6 + $0x20] sm:$0xff]
    %v3818 = vld [vmem:[#allocation6 + $0x28] sm:$0xff]
    %v3819 = vld [vmem:[#allocation6 + $0x30] sm:$0xff]
    %v3820 = vld [vmem:[#allocation6 + $0x38] sm:$0xff]
    %v3821 = vld [vmem:[#allocation6 + $0x40] sm:$0xff]
    %v3822 = vld [vmem:[#allocation6 + $0x48] sm:$0xff]
    %v3823 = vld [vmem:[#allocation6 + $0x50] sm:$0xff]
    %v3824 = vld [vmem:[#allocation6 + $0x58] sm:$0xff]
    %v3825 = vld [vmem:[#allocation6 + $0x60] sm:$0xff]
    %v3826 = vld [vmem:[#allocation6 + $0x68] sm:$0xff]
    %v3827 = vld [vmem:[#allocation6 + $0x70] sm:$0xff]
    %v3828 = vld [vmem:[#allocation6 + $0x78] sm:$0xff]
    %v3829 = vld [vmem:[#allocation6 + $0x80] sm:$0xff]
    %v3830 = vld [vmem:[#allocation6 + $0x88] sm:$0xff]
    %v3831 = vld [vmem:[#allocation6 + $0x90] sm:$0xff]
    %v3832 = vld [vmem:[#allocation6 + $0x98] sm:$0xff]
    %v3833 = vld [vmem:[#allocation6 + $0xa0] sm:$0xff]
    %v3834 = vld [vmem:[#allocation6 + $0xa8] sm:$0xff]
    %v3835 = vld [vmem:[#allocation6 + $0xb0] sm:$0xff]
    %v3836 = vld [vmem:[#allocation6 + $0xb8] sm:$0xff]
    %v3837 = vld [vmem:[#allocation6 + $0xc0] sm:$0xff]
    %v3838 = vld [vmem:[#allocation6 + $0xc8] sm:$0xff]
    %v3839 = vld [vmem:[#allocation6 + $0xd0] sm:$0xff]
    %v3840 = vld [vmem:[#allocation6 + $0xd8] sm:$0xff]
    %v3841 = vld [vmem:[#allocation6 + $0xe0] sm:$0xff]
    %v3842 = vld [vmem:[#allocation6 + $0xe8] sm:$0xff]
    %v3843 = vld [vmem:[#allocation6 + $0xf0] sm:$0xff]
    %v3844 = vld [vmem:[#allocation6 + $0xf8] sm:$0xff]
    %v3877 = vunpack.c.l.b16 %v3813
    %v3878 = vunpack.c.h.b16 %v3813
    %v3879 = vunpack.c.l.b16 %v3814
    %v3880 = vunpack.c.h.b16 %v3814
    %v3881 = vunpack.c.l.b16 %v3815
    %v3882 = vunpack.c.h.b16 %v3815
    %v3883 = vunpack.c.l.b16 %v3816
    %v3884 = vunpack.c.h.b16 %v3816
    %v3885 = vunpack.c.l.b16 %v3817
    %v3886 = vunpack.c.h.b16 %v3817
    %v3887 = vunpack.c.l.b16 %v3818
    %v3888 = vunpack.c.h.b16 %v3818
    %v3889 = vunpack.c.l.b16 %v3819
    %v3890 = vunpack.c.h.b16 %v3819
    %v3891 = vunpack.c.l.b16 %v3820
    %v3892 = vunpack.c.h.b16 %v3820
    %v3893 = vunpack.c.l.b16 %v3821
    %v3894 = vunpack.c.h.b16 %v3821
    %v3895 = vunpack.c.l.b16 %v3822
    %v3896 = vunpack.c.h.b16 %v3822
    %v3897 = vunpack.c.l.b16 %v3823
    %v3898 = vunpack.c.h.b16 %v3823
    %v3899 = vunpack.c.l.b16 %v3824
    %v3900 = vunpack.c.h.b16 %v3824
    %v3901 = vunpack.c.l.b16 %v3825
    %v3902 = vunpack.c.h.b16 %v3825
    %v3903 = vunpack.c.l.b16 %v3826
    %v3904 = vunpack.c.h.b16 %v3826
    %v3905 = vunpack.c.l.b16 %v3827
    %v3906 = vunpack.c.h.b16 %v3827
    %v3907 = vunpack.c.l.b16 %v3828
    %v3908 = vunpack.c.h.b16 %v3828
    %v3909 = vunpack.c.l.b16 %v3829
    %v3910 = vunpack.c.h.b16 %v3829
    %v3911 = vunpack.c.l.b16 %v3830
    %v3912 = vunpack.c.h.b16 %v3830
    %v3913 = vunpack.c.l.b16 %v3831
    %v3914 = vunpack.c.h.b16 %v3831
    %v3915 = vunpack.c.l.b16 %v3832
    %v3916 = vunpack.c.h.b16 %v3832
    %v3917 = vunpack.c.l.b16 %v3833
    %v3918 = vunpack.c.h.b16 %v3833
    %v3919 = vunpack.c.l.b16 %v3834
    %v3920 = vunpack.c.h.b16 %v3834
    %v3921 = vunpack.c.l.b16 %v3835
    %v3922 = vunpack.c.h.b16 %v3835
    %v3923 = vunpack.c.l.b16 %v3836
    %v3924 = vunpack.c.h.b16 %v3836
    %v3925 = vunpack.c.l.b16 %v3837
    %v3926 = vunpack.c.h.b16 %v3837
    %v3927 = vunpack.c.l.b16 %v3838
    %v3928 = vunpack.c.h.b16 %v3838
    %v3929 = vunpack.c.l.b16 %v3839
    %v3930 = vunpack.c.h.b16 %v3839
    %v3931 = vunpack.c.l.b16 %v3840
    %v3932 = vunpack.c.h.b16 %v3840
    %v3933 = vunpack.c.l.b16 %v3841
    %v3934 = vunpack.c.h.b16 %v3841
    %v3935 = vunpack.c.l.b16 %v3842
    %v3936 = vunpack.c.h.b16 %v3842
    %v3937 = vunpack.c.l.b16 %v3843
    %v3938 = vunpack.c.h.b16 %v3843
    %v3939 = vunpack.c.l.b16 %v3844
    %v3940 = vunpack.c.h.b16 %v3844
    %v3941 = vpack.c.b16 %v3881, %v3877
    %v3942 = vpack.c.b16 %v3882, %v3878
    %v3943 = vpack.c.b16 %v3883, %v3879
    %v3944 = vpack.c.b16 %v3884, %v3880
    %v3945 = vpack.c.b16 %v3889, %v3885
    %v3946 = vpack.c.b16 %v3890, %v3886
    %v3947 = vpack.c.b16 %v3891, %v3887
    %v3948 = vpack.c.b16 %v3892, %v3888
    %v3949 = vpack.c.b16 %v3897, %v3893
    %v3950 = vpack.c.b16 %v3898, %v3894
    %v3951 = vpack.c.b16 %v3899, %v3895
    %v3952 = vpack.c.b16 %v3900, %v3896
    %v3953 = vpack.c.b16 %v3905, %v3901
    %v3954 = vpack.c.b16 %v3906, %v3902
    %v3955 = vpack.c.b16 %v3907, %v3903
    %v3956 = vpack.c.b16 %v3908, %v3904
    %v3957 = vpack.c.b16 %v3913, %v3909
    %v3958 = vpack.c.b16 %v3914, %v3910
    %v3959 = vpack.c.b16 %v3915, %v3911
    %v3960 = vpack.c.b16 %v3916, %v3912
    %v3961 = vpack.c.b16 %v3921, %v3917
    %v3962 = vpack.c.b16 %v3922, %v3918
    %v3963 = vpack.c.b16 %v3923, %v3919
    %v3964 = vpack.c.b16 %v3924, %v3920
    %v3965 = vpack.c.b16 %v3929, %v3925
    %v3966 = vpack.c.b16 %v3930, %v3926
    %v3967 = vpack.c.b16 %v3931, %v3927
    %v3968 = vpack.c.b16 %v3932, %v3928
    %v3969 = vpack.c.b16 %v3937, %v3933
    %v3970 = vpack.c.b16 %v3938, %v3934
    %v3971 = vpack.c.b16 %v3939, %v3935
    %v3972 = vpack.c.b16 %v3940, %v3936
    %4005 = vmatprep.subr.bf16.mxu0 %v3942
    %4006 = vmatpush1.bf16.msra.mxu0 %v3941
    %4007 = vmatprep.subr.bf16.mxu0 %v3946
    %4008 = vmatpush1.bf16.msra.mxu0 %v3945
    %4009 = vmatprep.subr.bf16.mxu0 %v3950
    %4010 = vmatpush1.bf16.msra.mxu0 %v3949
    %4011 = vmatprep.subr.bf16.mxu0 %v3954
    %4012 = vmatpush1.bf16.msra.mxu0 %v3953
    %4013 = vmatprep.subr.bf16.mxu0 %v3958
    %4014 = vmatpush1.bf16.msra.mxu0 %v3957
    %4015 = vmatprep.subr.bf16.mxu0 %v3962
    %4016 = vmatpush1.bf16.msra.mxu0 %v3961
    %4017 = vmatprep.subr.bf16.mxu0 %v3966
    %4018 = vmatpush1.bf16.msra.mxu0 %v3965
    %4019 = vmatprep.subr.bf16.mxu0 %v3970
    %4020 = vmatpush1.bf16.msra.mxu0 %v3969
    %4021 = vmatprep.subr.bf16.mxu0 0
    %4022 = vmatpush1.bf16.msra.mxu0 0
    %4023 = vmatprep.subr.bf16.mxu0 0
    %4024 = vmatpush1.bf16.msra.mxu0 0
    %4025 = vmatprep.subr.bf16.mxu0 0
    %4026 = vmatpush1.bf16.msra.mxu0 0
    %4027 = vmatprep.subr.bf16.mxu0 0
    %4028 = vmatpush1.bf16.msra.mxu0 0
    %4029 = vmatprep.subr.bf16.mxu0 0
    %4030 = vmatpush1.bf16.msra.mxu0 0
    %4031 = vmatprep.subr.bf16.mxu0 0
    %4032 = vmatpush1.bf16.msra.mxu0 0
    %4033 = vmatprep.subr.bf16.mxu0 0
    %4034 = vmatpush1.bf16.msra.mxu0 0
    %4035 = vmatprep.subr.bf16.mxu0 0
    %4036 = vmatpush1.bf16.msra.mxu0 0
    %4037 = vmatprep.mubr.bf16.mxu0 0
    %4038 = vmatmul.mubr.bf16.gmra.mrb[0].mxu0 %v3804
    %v4039 = vpop.f32.mrb[0].mxu0
    %v4040 = vadd.f32 0.0, %v4039
    %v4041 = vpop.f32.mrb[0].mxu0
    %v4042 = vadd.f32 0.0, %v4041
    %v4043 = vpop.f32.mrb[0].mxu0
    %v4044 = vpop.f32.mrb[0].mxu0
    %4045 = vdwg.mxu0
    %4046 = vmatprep.subr.bf16.mxu0 %v3944
    %4047 = vmatpush1.bf16.msra.mxu0 %v3943
    %4048 = vmatprep.subr.bf16.mxu0 %v3948
    %4049 = vmatpush1.bf16.msra.mxu0 %v3947
    %4050 = vmatprep.subr.bf16.mxu0 %v3952
    %4051 = vmatpush1.bf16.msra.mxu0 %v3951
    %4052 = vmatprep.subr.bf16.mxu0 %v3956
    %4053 = vmatpush1.bf16.msra.mxu0 %v3955
    %4054 = vmatprep.subr.bf16.mxu0 %v3960
    %4055 = vmatpush1.bf16.msra.mxu0 %v3959
    %4056 = vmatprep.subr.bf16.mxu0 %v3964
    %4057 = vmatpush1.bf16.msra.mxu0 %v3963
    %4058 = vmatprep.subr.bf16.mxu0 %v3968
    %4059 = vmatpush1.bf16.msra.mxu0 %v3967
    %4060 = vmatprep.subr.bf16.mxu0 %v3972
    %4061 = vmatpush1.bf16.msra.mxu0 %v3971
    %4062 = vmatprep.subr.bf16.mxu0 0
    %4063 = vmatpush1.bf16.msra.mxu0 0
    %4064 = vmatprep.subr.bf16.mxu0 0
    %4065 = vmatpush1.bf16.msra.mxu0 0
    %4066 = vmatprep.subr.bf16.mxu0 0
    %4067 = vmatpush1.bf16.msra.mxu0 0
    %4068 = vmatprep.subr.bf16.mxu0 0
    %4069 = vmatpush1.bf16.msra.mxu0 0
    %4070 = vmatprep.subr.bf16.mxu0 0
    %4071 = vmatpush1.bf16.msra.mxu0 0
    %4072 = vmatprep.subr.bf16.mxu0 0
    %4073 = vmatpush1.bf16.msra.mxu0 0
    %4074 = vmatprep.subr.bf16.mxu0 0
    %4075 = vmatpush1.bf16.msra.mxu0 0
    %4076 = vmatprep.subr.bf16.mxu0 0
    %4077 = vmatpush1.bf16.msra.mxu0 0
    %4078 = vmatprep.mubr.bf16.mxu0 0
    %4079 = vmatmul.mubr.bf16.gmra.mrb[0].mxu0 %v3804
    %v4080 = vpop.f32.mrb[0].mxu0
    %v4081 = vadd.f32 0.0, %v4080
    %v4082 = vpop.f32.mrb[0].mxu0
    %v4083 = vadd.f32 0.0, %v4082
    %v4084 = vpop.f32.mrb[0].mxu0
    %v4085 = vpop.f32.mrb[0].mxu0
    %4086 = vdwg.mxu0
    %v4087 = vadd.f32 %v3809, %v4040
    %v4088 = vadd.f32 %v3810, %v4042
    %v4089 = vadd.f32 %v3811, %v4081
    %v4090 = vadd.f32 %v3812, %v4083
    %v4091 = vxor.u32 %v4087, 2147483648
    %v4092 = vmul.f32 %v4091, 1.442695
    %v4093 = vpow.pop %v4092
    %v4094 = vadd.f32 %v4093, 1.0
    %v4095 = vrcp.pop %v4094
    %v4096 = vmul.f32 1.0, %v4095
    %v4097 = vxor.u32 %v4088, 2147483648
    %v4098 = vmul.f32 %v4097, 1.442695
    %v4099 = vpow.pop %v4098
    %v4100 = vadd.f32 %v4099, 1.0
    %v4101 = vrcp.pop %v4100
    %v4102 = vmul.f32 1.0, %v4101
    %v4103 = vtanh.pop %v4089
    %v4104 = vxor.u32 %v4090, 2147483648
    %v4105 = vmul.f32 %v4104, 1.442695
    %v4106 = vpow.pop %v4105
    %v4107 = vadd.f32 %v4106, 1.0
    %v4108 = vrcp.pop %v4107
    %v4109 = vmul.f32 1.0, %v4108
    %v4110 = vmul.f32 %v4102, %v3287
    %v4111 = vmul.f32 %v4096, %v4103
    %v4112 = vadd.f32 %v4110, %v4111
    %v4113 = vtanh.pop %v4112
    %v4114 = vmul.f32 %v4109, %v4113
    %v4115 = vld [vmem:[%s4] sm:$0xff]
    %v4116 = vld [vmem:[%s4 + $0x8] sm:$0xff]
    %v4117 = vld [vmem:[%s4 + $0x10] sm:$0xff]
    %v4118 = vld [vmem:[%s4 + $0x18] sm:$0xff]
    %v4119 = vld [vmem:[%s4 + $0x20] sm:$0xff]
    %v4120 = vld [vmem:[%s4 + $0x28] sm:$0xff]
    %v4121 = vld [vmem:[%s4 + $0x30] sm:$0xff]
    %v4122 = vld [vmem:[%s4 + $0x38] sm:$0xff]
    %v4123 = vld [vmem:[%s4 + $0x40] sm:$0xff]
    %v4124 = vld [vmem:[%s4 + $0x48] sm:$0xff]
    %v4125 = vld [vmem:[%s4 + $0x50] sm:$0xff]
    %v4126 = vld [vmem:[%s4 + $0x58] sm:$0xff]
    %v4127 = vld [vmem:[%s4 + $0x60] sm:$0xff]
    %v4128 = vld [vmem:[%s4 + $0x68] sm:$0xff]
    %v4129 = vld [vmem:[%s4 + $0x70] sm:$0xff]
    %v4130 = vld [vmem:[%s4 + $0x78] sm:$0xff]
    %v4131 = vld [vmem:[%s4 + $0x80] sm:$0xff]
    %v4132 = vld [vmem:[%s4 + $0x88] sm:$0xff]
    %v4133 = vld [vmem:[%s4 + $0x90] sm:$0xff]
    %v4134 = vld [vmem:[%s4 + $0x98] sm:$0xff]
    %v4135 = vld [vmem:[%s4 + $0xa0] sm:$0xff]
    %v4136 = vld [vmem:[%s4 + $0xa8] sm:$0xff]
    %v4137 = vld [vmem:[%s4 + $0xb0] sm:$0xff]
    %v4138 = vld [vmem:[%s4 + $0xb8] sm:$0xff]
    %v4139 = vld [vmem:[%s4 + $0xc0] sm:$0xff]
    %v4140 = vld [vmem:[%s4 + $0xc8] sm:$0xff]
    %v4141 = vld [vmem:[%s4 + $0xd0] sm:$0xff]
    %v4142 = vld [vmem:[%s4 + $0xd8] sm:$0xff]
    %v4143 = vld [vmem:[%s4 + $0xe0] sm:$0xff]
    %v4144 = vld [vmem:[%s4 + $0xe8] sm:$0xff]
    %v4145 = vld [vmem:[%s4 + $0xf0] sm:$0xff]
    %v4146 = vld [vmem:[%s4 + $0xf8] sm:$0xff]
    %v4147 = vld [vmem:[%s4 + $0x100] sm:$0xff]
    %v4148 = vld [vmem:[%s4 + $0x108] sm:$0xff]
    %v4149 = vld [vmem:[%s4 + $0x110] sm:$0xff]
    %v4150 = vld [vmem:[%s4 + $0x118] sm:$0xff]
    %v4151 = vld [vmem:[%s4 + $0x120] sm:$0xff]
    %v4152 = vld [vmem:[%s4 + $0x128] sm:$0xff]
    %v4153 = vld [vmem:[%s4 + $0x130] sm:$0xff]
    %v4154 = vld [vmem:[%s4 + $0x138] sm:$0xff]
    %v4155 = vld [vmem:[%s4 + $0x140] sm:$0xff]
    %v4156 = vld [vmem:[%s4 + $0x148] sm:$0xff]
    %v4157 = vld [vmem:[%s4 + $0x150] sm:$0xff]
    %v4158 = vld [vmem:[%s4 + $0x158] sm:$0xff]
    %v4159 = vld [vmem:[%s4 + $0x160] sm:$0xff]
    %v4160 = vld [vmem:[%s4 + $0x168] sm:$0xff]
    %v4161 = vld [vmem:[%s4 + $0x170] sm:$0xff]
    %v4162 = vld [vmem:[%s4 + $0x178] sm:$0xff]
    %v4163 = vld [vmem:[%s4 + $0x180] sm:$0xff]
    %v4164 = vld [vmem:[%s4 + $0x188] sm:$0xff]
    %v4165 = vld [vmem:[%s4 + $0x190] sm:$0xff]
    %v4166 = vld [vmem:[%s4 + $0x198] sm:$0xff]
    %v4167 = vld [vmem:[%s4 + $0x1a0] sm:$0xff]
    %v4168 = vld [vmem:[%s4 + $0x1a8] sm:$0xff]
    %v4169 = vld [vmem:[%s4 + $0x1b0] sm:$0xff]
    %v4170 = vld [vmem:[%s4 + $0x1b8] sm:$0xff]
    %v4171 = vld [vmem:[%s4 + $0x1c0] sm:$0xff]
    %v4172 = vld [vmem:[%s4 + $0x1c8] sm:$0xff]
    %v4173 = vld [vmem:[%s4 + $0x1d0] sm:$0xff]
    %v4174 = vld [vmem:[%s4 + $0x1d8] sm:$0xff]
    %v4175 = vld [vmem:[%s4 + $0x1e0] sm:$0xff]
    %v4176 = vld [vmem:[%s4 + $0x1e8] sm:$0xff]
    %v4177 = vld [vmem:[%s4 + $0x1f0] sm:$0xff]
    %v4178 = vld [vmem:[%s4 + $0x1f8] sm:$0xff]
    %v4179 = vld [vmem:[#allocation9] sm:$0xf]
    %v4181 = vlaneseq
    %v4182 = vshrl.u32 %v4181, 7
    %v4183 = vsub.s32 0, %v4182
    %v4184 = vrot.slane %v4179, %v4183
    %v4185 = vlaneseq
    %v4186 = vshrl.u32 %v4185, 7
    %v4187 = vsub.s32 1, %v4186
    %v4188 = vrot.slane %v4179, %v4187
    %v4189 = vlaneseq
    %v4190 = vshrl.u32 %v4189, 7
    %v4191 = vsub.s32 2, %v4190
    %v4192 = vrot.slane %v4179, %v4191
    %v4193 = vlaneseq
    %v4194 = vshrl.u32 %v4193, 7
    %v4195 = vsub.s32 3, %v4194
    %v4196 = vrot.slane %v4179, %v4195
    %v4265 = vunpack.c.l.b16 %v4115
    %v4266 = vunpack.c.h.b16 %v4115
    %v4267 = vunpack.c.l.b16 %v4116
    %v4268 = vunpack.c.h.b16 %v4116
    %v4269 = vunpack.c.l.b16 %v4117
    %v4270 = vunpack.c.h.b16 %v4117
    %v4271 = vunpack.c.l.b16 %v4118
    %v4272 = vunpack.c.h.b16 %v4118
    %v4273 = vunpack.c.l.b16 %v4119
    %v4274 = vunpack.c.h.b16 %v4119
    %v4275 = vunpack.c.l.b16 %v4120
    %v4276 = vunpack.c.h.b16 %v4120
    %v4277 = vunpack.c.l.b16 %v4121
    %v4278 = vunpack.c.h.b16 %v4121
    %v4279 = vunpack.c.l.b16 %v4122
    %v4280 = vunpack.c.h.b16 %v4122
    %v4281 = vunpack.c.l.b16 %v4123
    %v4282 = vunpack.c.h.b16 %v4123
    %v4283 = vunpack.c.l.b16 %v4124
    %v4284 = vunpack.c.h.b16 %v4124
    %v4285 = vunpack.c.l.b16 %v4125
    %v4286 = vunpack.c.h.b16 %v4125
    %v4287 = vunpack.c.l.b16 %v4126
    %v4288 = vunpack.c.h.b16 %v4126
    %v4289 = vunpack.c.l.b16 %v4127
    %v4290 = vunpack.c.h.b16 %v4127
    %v4291 = vunpack.c.l.b16 %v4128
    %v4292 = vunpack.c.h.b16 %v4128
    %v4293 = vunpack.c.l.b16 %v4129
    %v4294 = vunpack.c.h.b16 %v4129
    %v4295 = vunpack.c.l.b16 %v4130
    %v4296 = vunpack.c.h.b16 %v4130
    %v4297 = vunpack.c.l.b16 %v4131
    %v4298 = vunpack.c.h.b16 %v4131
    %v4299 = vunpack.c.l.b16 %v4132
    %v4300 = vunpack.c.h.b16 %v4132
    %v4301 = vunpack.c.l.b16 %v4133
    %v4302 = vunpack.c.h.b16 %v4133
    %v4303 = vunpack.c.l.b16 %v4134
    %v4304 = vunpack.c.h.b16 %v4134
    %v4305 = vunpack.c.l.b16 %v4135
    %v4306 = vunpack.c.h.b16 %v4135
    %v4307 = vunpack.c.l.b16 %v4136
    %v4308 = vunpack.c.h.b16 %v4136
    %v4309 = vunpack.c.l.b16 %v4137
    %v4310 = vunpack.c.h.b16 %v4137
    %v4311 = vunpack.c.l.b16 %v4138
    %v4312 = vunpack.c.h.b16 %v4138
    %v4313 = vunpack.c.l.b16 %v4139
    %v4314 = vunpack.c.h.b16 %v4139
    %v4315 = vunpack.c.l.b16 %v4140
    %v4316 = vunpack.c.h.b16 %v4140
    %v4317 = vunpack.c.l.b16 %v4141
    %v4318 = vunpack.c.h.b16 %v4141
    %v4319 = vunpack.c.l.b16 %v4142
    %v4320 = vunpack.c.h.b16 %v4142
    %v4321 = vunpack.c.l.b16 %v4143
    %v4322 = vunpack.c.h.b16 %v4143
    %v4323 = vunpack.c.l.b16 %v4144
    %v4324 = vunpack.c.h.b16 %v4144
    %v4325 = vunpack.c.l.b16 %v4145
    %v4326 = vunpack.c.h.b16 %v4145
    %v4327 = vunpack.c.l.b16 %v4146
    %v4328 = vunpack.c.h.b16 %v4146
    %v4329 = vunpack.c.l.b16 %v4147
    %v4330 = vunpack.c.h.b16 %v4147
    %v4331 = vunpack.c.l.b16 %v4148
    %v4332 = vunpack.c.h.b16 %v4148
    %v4333 = vunpack.c.l.b16 %v4149
    %v4334 = vunpack.c.h.b16 %v4149
    %v4335 = vunpack.c.l.b16 %v4150
    %v4336 = vunpack.c.h.b16 %v4150
    %v4337 = vunpack.c.l.b16 %v4151
    %v4338 = vunpack.c.h.b16 %v4151
    %v4339 = vunpack.c.l.b16 %v4152
    %v4340 = vunpack.c.h.b16 %v4152
    %v4341 = vunpack.c.l.b16 %v4153
    %v4342 = vunpack.c.h.b16 %v4153
    %v4343 = vunpack.c.l.b16 %v4154
    %v4344 = vunpack.c.h.b16 %v4154
    %v4345 = vunpack.c.l.b16 %v4155
    %v4346 = vunpack.c.h.b16 %v4155
    %v4347 = vunpack.c.l.b16 %v4156
    %v4348 = vunpack.c.h.b16 %v4156
    %v4349 = vunpack.c.l.b16 %v4157
    %v4350 = vunpack.c.h.b16 %v4157
    %v4351 = vunpack.c.l.b16 %v4158
    %v4352 = vunpack.c.h.b16 %v4158
    %v4353 = vunpack.c.l.b16 %v4159
    %v4354 = vunpack.c.h.b16 %v4159
    %v4355 = vunpack.c.l.b16 %v4160
    %v4356 = vunpack.c.h.b16 %v4160
    %v4357 = vunpack.c.l.b16 %v4161
    %v4358 = vunpack.c.h.b16 %v4161
    %v4359 = vunpack.c.l.b16 %v4162
    %v4360 = vunpack.c.h.b16 %v4162
    %v4361 = vunpack.c.l.b16 %v4163
    %v4362 = vunpack.c.h.b16 %v4163
    %v4363 = vunpack.c.l.b16 %v4164
    %v4364 = vunpack.c.h.b16 %v4164
    %v4365 = vunpack.c.l.b16 %v4165
    %v4366 = vunpack.c.h.b16 %v4165
    %v4367 = vunpack.c.l.b16 %v4166
    %v4368 = vunpack.c.h.b16 %v4166
    %v4369 = vunpack.c.l.b16 %v4167
    %v4370 = vunpack.c.h.b16 %v4167
    %v4371 = vunpack.c.l.b16 %v4168
    %v4372 = vunpack.c.h.b16 %v4168
    %v4373 = vunpack.c.l.b16 %v4169
    %v4374 = vunpack.c.h.b16 %v4169
    %v4375 = vunpack.c.l.b16 %v4170
    %v4376 = vunpack.c.h.b16 %v4170
    %v4377 = vunpack.c.l.b16 %v4171
    %v4378 = vunpack.c.h.b16 %v4171
    %v4379 = vunpack.c.l.b16 %v4172
    %v4380 = vunpack.c.h.b16 %v4172
    %v4381 = vunpack.c.l.b16 %v4173
    %v4382 = vunpack.c.h.b16 %v4173
    %v4383 = vunpack.c.l.b16 %v4174
    %v4384 = vunpack.c.h.b16 %v4174
    %v4385 = vunpack.c.l.b16 %v4175
    %v4386 = vunpack.c.h.b16 %v4175
    %v4387 = vunpack.c.l.b16 %v4176
    %v4388 = vunpack.c.h.b16 %v4176
    %v4389 = vunpack.c.l.b16 %v4177
    %v4390 = vunpack.c.h.b16 %v4177
    %v4391 = vunpack.c.l.b16 %v4178
    %v4392 = vunpack.c.h.b16 %v4178
    %v4393 = vpack.c.b16 %v4269, %v4265
    %v4394 = vpack.c.b16 %v4270, %v4266
    %v4395 = vpack.c.b16 %v4271, %v4267
    %v4396 = vpack.c.b16 %v4272, %v4268
    %v4397 = vpack.c.b16 %v4277, %v4273
    %v4398 = vpack.c.b16 %v4278, %v4274
    %v4399 = vpack.c.b16 %v4279, %v4275
    %v4400 = vpack.c.b16 %v4280, %v4276
    %v4401 = vpack.c.b16 %v4285, %v4281
    %v4402 = vpack.c.b16 %v4286, %v4282
    %v4403 = vpack.c.b16 %v4287, %v4283
    %v4404 = vpack.c.b16 %v4288, %v4284
    %v4405 = vpack.c.b16 %v4293, %v4289
    %v4406 = vpack.c.b16 %v4294, %v4290
    %v4407 = vpack.c.b16 %v4295, %v4291
    %v4408 = vpack.c.b16 %v4296, %v4292
    %v4409 = vpack.c.b16 %v4301, %v4297
    %v4410 = vpack.c.b16 %v4302, %v4298
    %v4411 = vpack.c.b16 %v4303, %v4299
    %v4412 = vpack.c.b16 %v4304, %v4300
    %v4413 = vpack.c.b16 %v4309, %v4305
    %v4414 = vpack.c.b16 %v4310, %v4306
    %v4415 = vpack.c.b16 %v4311, %v4307
    %v4416 = vpack.c.b16 %v4312, %v4308
    %v4417 = vpack.c.b16 %v4317, %v4313
    %v4418 = vpack.c.b16 %v4318, %v4314
    %v4419 = vpack.c.b16 %v4319, %v4315
    %v4420 = vpack.c.b16 %v4320, %v4316
    %v4421 = vpack.c.b16 %v4325, %v4321
    %v4422 = vpack.c.b16 %v4326, %v4322
    %v4423 = vpack.c.b16 %v4327, %v4323
    %v4424 = vpack.c.b16 %v4328, %v4324
    %v4425 = vpack.c.b16 %v4333, %v4329
    %v4426 = vpack.c.b16 %v4334, %v4330
    %v4427 = vpack.c.b16 %v4335, %v4331
    %v4428 = vpack.c.b16 %v4336, %v4332
    %v4429 = vpack.c.b16 %v4341, %v4337
    %v4430 = vpack.c.b16 %v4342, %v4338
    %v4431 = vpack.c.b16 %v4343, %v4339
    %v4432 = vpack.c.b16 %v4344, %v4340
    %v4433 = vpack.c.b16 %v4349, %v4345
    %v4434 = vpack.c.b16 %v4350, %v4346
    %v4435 = vpack.c.b16 %v4351, %v4347
    %v4436 = vpack.c.b16 %v4352, %v4348
    %v4437 = vpack.c.b16 %v4357, %v4353
    %v4438 = vpack.c.b16 %v4358, %v4354
    %v4439 = vpack.c.b16 %v4359, %v4355
    %v4440 = vpack.c.b16 %v4360, %v4356
    %v4441 = vpack.c.b16 %v4365, %v4361
    %v4442 = vpack.c.b16 %v4366, %v4362
    %v4443 = vpack.c.b16 %v4367, %v4363
    %v4444 = vpack.c.b16 %v4368, %v4364
    %v4445 = vpack.c.b16 %v4373, %v4369
    %v4446 = vpack.c.b16 %v4374, %v4370
    %v4447 = vpack.c.b16 %v4375, %v4371
    %v4448 = vpack.c.b16 %v4376, %v4372
    %v4449 = vpack.c.b16 %v4381, %v4377
    %v4450 = vpack.c.b16 %v4382, %v4378
    %v4451 = vpack.c.b16 %v4383, %v4379
    %v4452 = vpack.c.b16 %v4384, %v4380
    %v4453 = vpack.c.b16 %v4389, %v4385
    %v4454 = vpack.c.b16 %v4390, %v4386
    %v4455 = vpack.c.b16 %v4391, %v4387
    %v4456 = vpack.c.b16 %v4392, %v4388
    %4521 = vmatprep.subr.bf16.mxu0 %v4394
    %4522 = vmatpush1.bf16.msra.mxu0 %v4393
    %4523 = vmatprep.subr.bf16.mxu0 %v4398
    %4524 = vmatpush1.bf16.msra.mxu0 %v4397
    %4525 = vmatprep.subr.bf16.mxu0 %v4402
    %4526 = vmatpush1.bf16.msra.mxu0 %v4401
    %4527 = vmatprep.subr.bf16.mxu0 %v4406
    %4528 = vmatpush1.bf16.msra.mxu0 %v4405
    %4529 = vmatprep.subr.bf16.mxu0 %v4410
    %4530 = vmatpush1.bf16.msra.mxu0 %v4409
    %4531 = vmatprep.subr.bf16.mxu0 %v4414
    %4532 = vmatpush1.bf16.msra.mxu0 %v4413
    %4533 = vmatprep.subr.bf16.mxu0 %v4418
    %4534 = vmatpush1.bf16.msra.mxu0 %v4417
    %4535 = vmatprep.subr.bf16.mxu0 %v4422
    %4536 = vmatpush1.bf16.msra.mxu0 %v4421
    %4537 = vmatprep.subr.bf16.mxu0 %v4426
    %4538 = vmatpush1.bf16.msra.mxu0 %v4425
    %4539 = vmatprep.subr.bf16.mxu0 %v4430
    %4540 = vmatpush1.bf16.msra.mxu0 %v4429
    %4541 = vmatprep.subr.bf16.mxu0 %v4434
    %4542 = vmatpush1.bf16.msra.mxu0 %v4433
    %4543 = vmatprep.subr.bf16.mxu0 %v4438
    %4544 = vmatpush1.bf16.msra.mxu0 %v4437
    %4545 = vmatprep.subr.bf16.mxu0 %v4442
    %4546 = vmatpush1.bf16.msra.mxu0 %v4441
    %4547 = vmatprep.subr.bf16.mxu0 %v4446
    %4548 = vmatpush1.bf16.msra.mxu0 %v4445
    %4549 = vmatprep.subr.bf16.mxu0 %v4450
    %4550 = vmatpush1.bf16.msra.mxu0 %v4449
    %4551 = vmatprep.subr.bf16.mxu0 %v4454
    %4552 = vmatpush1.bf16.msra.mxu0 %v4453
    %4553 = vmatprep.mubr.bf16.mxu0 %v3805
    %4554 = vmatmul.mubr.bf16.gmra.mrb[0].mxu0 %v3804
    %v4555 = vpop.f32.mrb[0].mxu0
    %v4556 = vadd.f32 %v4184, %v4555
    %v4557 = vpop.f32.mrb[0].mxu0
    %v4558 = vadd.f32 %v4188, %v4557
    %v4559 = vpop.f32.mrb[0].mxu0
    %v4560 = vpop.f32.mrb[0].mxu0
    %4561 = vdwg.mxu0
    %4562 = vmatprep.subr.bf16.mxu0 %v4396
    %4563 = vmatpush1.bf16.msra.mxu0 %v4395
    %4564 = vmatprep.subr.bf16.mxu0 %v4400
    %4565 = vmatpush1.bf16.msra.mxu0 %v4399
    %4566 = vmatprep.subr.bf16.mxu0 %v4404
    %4567 = vmatpush1.bf16.msra.mxu0 %v4403
    %4568 = vmatprep.subr.bf16.mxu0 %v4408
    %4569 = vmatpush1.bf16.msra.mxu0 %v4407
    %4570 = vmatprep.subr.bf16.mxu0 %v4412
    %4571 = vmatpush1.bf16.msra.mxu0 %v4411
    %4572 = vmatprep.subr.bf16.mxu0 %v4416
    %4573 = vmatpush1.bf16.msra.mxu0 %v4415
    %4574 = vmatprep.subr.bf16.mxu0 %v4420
    %4575 = vmatpush1.bf16.msra.mxu0 %v4419
    %4576 = vmatprep.subr.bf16.mxu0 %v4424
    %4577 = vmatpush1.bf16.msra.mxu0 %v4423
    %4578 = vmatprep.subr.bf16.mxu0 %v4428
    %4579 = vmatpush1.bf16.msra.mxu0 %v4427
    %4580 = vmatprep.subr.bf16.mxu0 %v4432
    %4581 = vmatpush1.bf16.msra.mxu0 %v4431
    %4582 = vmatprep.subr.bf16.mxu0 %v4436
    %4583 = vmatpush1.bf16.msra.mxu0 %v4435
    %4584 = vmatprep.subr.bf16.mxu0 %v4440
    %4585 = vmatpush1.bf16.msra.mxu0 %v4439
    %4586 = vmatprep.subr.bf16.mxu0 %v4444
    %4587 = vmatpush1.bf16.msra.mxu0 %v4443
    %4588 = vmatprep.subr.bf16.mxu0 %v4448
    %4589 = vmatpush1.bf16.msra.mxu0 %v4447
    %4590 = vmatprep.subr.bf16.mxu0 %v4452
    %4591 = vmatpush1.bf16.msra.mxu0 %v4451
    %4592 = vmatprep.subr.bf16.mxu0 %v4456
    %4593 = vmatpush1.bf16.msra.mxu0 %v4455
    %4594 = vmatprep.mubr.bf16.mxu0 %v3805
    %4595 = vmatmul.mubr.bf16.gmra.mrb[0].mxu0 %v3804
    %v4596 = vpop.f32.mrb[0].mxu0
    %v4597 = vadd.f32 %v4192, %v4596
    %v4598 = vpop.f32.mrb[0].mxu0
    %v4599 = vadd.f32 %v4196, %v4598
    %v4600 = vpop.f32.mrb[0].mxu0
    %v4601 = vpop.f32.mrb[0].mxu0
    %4602 = vdwg.mxu0
    %v4603 = vxor.u32 %v4556, 2147483648
    %v4604 = vmul.f32 %v4603, 1.442695
    %v4605 = vpow.pop %v4604
    %v4606 = vadd.f32 %v4605, 1.0
    %v4607 = vrcp.pop %v4606
    %v4608 = vmul.f32 1.0, %v4607
    %v4609 = vxor.u32 %v4558, 2147483648
    %v4610 = vmul.f32 %v4609, 1.442695
    %v4611 = vpow.pop %v4610
    %v4612 = vadd.f32 %v4611, 1.0
    %v4613 = vrcp.pop %v4612
    %v4614 = vmul.f32 1.0, %v4613
    %v4615 = vtanh.pop %v4597
    %v4616 = vxor.u32 %v4599, 2147483648
    %v4617 = vmul.f32 %v4616, 1.442695
    %v4618 = vpow.pop %v4617
    %v4619 = vadd.f32 %v4618, 1.0
    %v4620 = vrcp.pop %v4619
    %v4621 = vmul.f32 1.0, %v4620
    %v4622 = vmul.f32 %v4614, %v3799
    %v4623 = vmul.f32 %v4608, %v4615
    %v4624 = vadd.f32 %v4622, %v4623
    %v4625 = vtanh.pop %v4624
    %v4626 = vmul.f32 %v4621, %v4625
    %s4627 = scalar_lea.vmem [#allocation3], 32
    %4628 = vst [vmem:[%s4627] sm:$0xff] %v4626
    %v4629 = vpack.c.bf16 %v4114, %v4114
    %v4630 = vpack.c.bf16 %v4626, %v4626
    %s4631 = smul.u32 6, 4
    %s4632 = smul.addr %s4631, 8
    %s4633 = scalar_lea.vmem [#allocation2], %s4632
    %v4634 = vld [vmem:[%s4633] sm:$0xff]
    %v4635 = vld [vmem:[%s4633 + $0x8] sm:$0xff]
    %v4636 = vld [vmem:[%s4633 + $0x10] sm:$0xff]
    %v4637 = vld [vmem:[%s4633 + $0x18] sm:$0xff]
    %v4638 = vld [vmem:[#allocation6] sm:$0xff]
    %v4639 = vld [vmem:[#allocation6 + $0x8] sm:$0xff]
    %v4640 = vld [vmem:[#allocation6 + $0x10] sm:$0xff]
    %v4641 = vld [vmem:[#allocation6 + $0x18] sm:$0xff]
    %v4642 = vld [vmem:[#allocation6 + $0x20] sm:$0xff]
    %v4643 = vld [vmem:[#allocation6 + $0x28] sm:$0xff]
    %v4644 = vld [vmem:[#allocation6 + $0x30] sm:$0xff]
    %v4645 = vld [vmem:[#allocation6 + $0x38] sm:$0xff]
    %v4646 = vld [vmem:[#allocation6 + $0x40] sm:$0xff]
    %v4647 = vld [vmem:[#allocation6 + $0x48] sm:$0xff]
    %v4648 = vld [vmem:[#allocation6 + $0x50] sm:$0xff]
    %v4649 = vld [vmem:[#allocation6 + $0x58] sm:$0xff]
    %v4650 = vld [vmem:[#allocation6 + $0x60] sm:$0xff]
    %v4651 = vld [vmem:[#allocation6 + $0x68] sm:$0xff]
    %v4652 = vld [vmem:[#allocation6 + $0x70] sm:$0xff]
    %v4653 = vld [vmem:[#allocation6 + $0x78] sm:$0xff]
    %v4654 = vld [vmem:[#allocation6 + $0x80] sm:$0xff]
    %v4655 = vld [vmem:[#allocation6 + $0x88] sm:$0xff]
    %v4656 = vld [vmem:[#allocation6 + $0x90] sm:$0xff]
    %v4657 = vld [vmem:[#allocation6 + $0x98] sm:$0xff]
    %v4658 = vld [vmem:[#allocation6 + $0xa0] sm:$0xff]
    %v4659 = vld [vmem:[#allocation6 + $0xa8] sm:$0xff]
    %v4660 = vld [vmem:[#allocation6 + $0xb0] sm:$0xff]
    %v4661 = vld [vmem:[#allocation6 + $0xb8] sm:$0xff]
    %v4662 = vld [vmem:[#allocation6 + $0xc0] sm:$0xff]
    %v4663 = vld [vmem:[#allocation6 + $0xc8] sm:$0xff]
    %v4664 = vld [vmem:[#allocation6 + $0xd0] sm:$0xff]
    %v4665 = vld [vmem:[#allocation6 + $0xd8] sm:$0xff]
    %v4666 = vld [vmem:[#allocation6 + $0xe0] sm:$0xff]
    %v4667 = vld [vmem:[#allocation6 + $0xe8] sm:$0xff]
    %v4668 = vld [vmem:[#allocation6 + $0xf0] sm:$0xff]
    %v4669 = vld [vmem:[#allocation6 + $0xf8] sm:$0xff]
    %v4702 = vunpack.c.l.b16 %v4638
    %v4703 = vunpack.c.h.b16 %v4638
    %v4704 = vunpack.c.l.b16 %v4639
    %v4705 = vunpack.c.h.b16 %v4639
    %v4706 = vunpack.c.l.b16 %v4640
    %v4707 = vunpack.c.h.b16 %v4640
    %v4708 = vunpack.c.l.b16 %v4641
    %v4709 = vunpack.c.h.b16 %v4641
    %v4710 = vunpack.c.l.b16 %v4642
    %v4711 = vunpack.c.h.b16 %v4642
    %v4712 = vunpack.c.l.b16 %v4643
    %v4713 = vunpack.c.h.b16 %v4643
    %v4714 = vunpack.c.l.b16 %v4644
    %v4715 = vunpack.c.h.b16 %v4644
    %v4716 = vunpack.c.l.b16 %v4645
    %v4717 = vunpack.c.h.b16 %v4645
    %v4718 = vunpack.c.l.b16 %v4646
    %v4719 = vunpack.c.h.b16 %v4646
    %v4720 = vunpack.c.l.b16 %v4647
    %v4721 = vunpack.c.h.b16 %v4647
    %v4722 = vunpack.c.l.b16 %v4648
    %v4723 = vunpack.c.h.b16 %v4648
    %v4724 = vunpack.c.l.b16 %v4649
    %v4725 = vunpack.c.h.b16 %v4649
    %v4726 = vunpack.c.l.b16 %v4650
    %v4727 = vunpack.c.h.b16 %v4650
    %v4728 = vunpack.c.l.b16 %v4651
    %v4729 = vunpack.c.h.b16 %v4651
    %v4730 = vunpack.c.l.b16 %v4652
    %v4731 = vunpack.c.h.b16 %v4652
    %v4732 = vunpack.c.l.b16 %v4653
    %v4733 = vunpack.c.h.b16 %v4653
    %v4734 = vunpack.c.l.b16 %v4654
    %v4735 = vunpack.c.h.b16 %v4654
    %v4736 = vunpack.c.l.b16 %v4655
    %v4737 = vunpack.c.h.b16 %v4655
    %v4738 = vunpack.c.l.b16 %v4656
    %v4739 = vunpack.c.h.b16 %v4656
    %v4740 = vunpack.c.l.b16 %v4657
    %v4741 = vunpack.c.h.b16 %v4657
    %v4742 = vunpack.c.l.b16 %v4658
    %v4743 = vunpack.c.h.b16 %v4658
    %v4744 = vunpack.c.l.b16 %v4659
    %v4745 = vunpack.c.h.b16 %v4659
    %v4746 = vunpack.c.l.b16 %v4660
    %v4747 = vunpack.c.h.b16 %v4660
    %v4748 = vunpack.c.l.b16 %v4661
    %v4749 = vunpack.c.h.b16 %v4661
    %v4750 = vunpack.c.l.b16 %v4662
    %v4751 = vunpack.c.h.b16 %v4662
    %v4752 = vunpack.c.l.b16 %v4663
    %v4753 = vunpack.c.h.b16 %v4663
    %v4754 = vunpack.c.l.b16 %v4664
    %v4755 = vunpack.c.h.b16 %v4664
    %v4756 = vunpack.c.l.b16 %v4665
    %v4757 = vunpack.c.h.b16 %v4665
    %v4758 = vunpack.c.l.b16 %v4666
    %v4759 = vunpack.c.h.b16 %v4666
    %v4760 = vunpack.c.l.b16 %v4667
    %v4761 = vunpack.c.h.b16 %v4667
    %v4762 = vunpack.c.l.b16 %v4668
    %v4763 = vunpack.c.h.b16 %v4668
    %v4764 = vunpack.c.l.b16 %v4669
    %v4765 = vunpack.c.h.b16 %v4669
    %v4766 = vpack.c.b16 %v4706, %v4702
    %v4767 = vpack.c.b16 %v4707, %v4703
    %v4768 = vpack.c.b16 %v4708, %v4704
    %v4769 = vpack.c.b16 %v4709, %v4705
    %v4770 = vpack.c.b16 %v4714, %v4710
    %v4771 = vpack.c.b16 %v4715, %v4711
    %v4772 = vpack.c.b16 %v4716, %v4712
    %v4773 = vpack.c.b16 %v4717, %v4713
    %v4774 = vpack.c.b16 %v4722, %v4718
    %v4775 = vpack.c.b16 %v4723, %v4719
    %v4776 = vpack.c.b16 %v4724, %v4720
    %v4777 = vpack.c.b16 %v4725, %v4721
    %v4778 = vpack.c.b16 %v4730, %v4726
    %v4779 = vpack.c.b16 %v4731, %v4727
    %v4780 = vpack.c.b16 %v4732, %v4728
    %v4781 = vpack.c.b16 %v4733, %v4729
    %v4782 = vpack.c.b16 %v4738, %v4734
    %v4783 = vpack.c.b16 %v4739, %v4735
    %v4784 = vpack.c.b16 %v4740, %v4736
    %v4785 = vpack.c.b16 %v4741, %v4737
    %v4786 = vpack.c.b16 %v4746, %v4742
    %v4787 = vpack.c.b16 %v4747, %v4743
    %v4788 = vpack.c.b16 %v4748, %v4744
    %v4789 = vpack.c.b16 %v4749, %v4745
    %v4790 = vpack.c.b16 %v4754, %v4750
    %v4791 = vpack.c.b16 %v4755, %v4751
    %v4792 = vpack.c.b16 %v4756, %v4752
    %v4793 = vpack.c.b16 %v4757, %v4753
    %v4794 = vpack.c.b16 %v4762, %v4758
    %v4795 = vpack.c.b16 %v4763, %v4759
    %v4796 = vpack.c.b16 %v4764, %v4760
    %v4797 = vpack.c.b16 %v4765, %v4761
    %4830 = vmatprep.subr.bf16.mxu0 %v4767
    %4831 = vmatpush1.bf16.msra.mxu0 %v4766
    %4832 = vmatprep.subr.bf16.mxu0 %v4771
    %4833 = vmatpush1.bf16.msra.mxu0 %v4770
    %4834 = vmatprep.subr.bf16.mxu0 %v4775
    %4835 = vmatpush1.bf16.msra.mxu0 %v4774
    %4836 = vmatprep.subr.bf16.mxu0 %v4779
    %4837 = vmatpush1.bf16.msra.mxu0 %v4778
    %4838 = vmatprep.subr.bf16.mxu0 %v4783
    %4839 = vmatpush1.bf16.msra.mxu0 %v4782
    %4840 = vmatprep.subr.bf16.mxu0 %v4787
    %4841 = vmatpush1.bf16.msra.mxu0 %v4786
    %4842 = vmatprep.subr.bf16.mxu0 %v4791
    %4843 = vmatpush1.bf16.msra.mxu0 %v4790
    %4844 = vmatprep.subr.bf16.mxu0 %v4795
    %4845 = vmatpush1.bf16.msra.mxu0 %v4794
    %4846 = vmatprep.subr.bf16.mxu0 0
    %4847 = vmatpush1.bf16.msra.mxu0 0
    %4848 = vmatprep.subr.bf16.mxu0 0
    %4849 = vmatpush1.bf16.msra.mxu0 0
    %4850 = vmatprep.subr.bf16.mxu0 0
    %4851 = vmatpush1.bf16.msra.mxu0 0
    %4852 = vmatprep.subr.bf16.mxu0 0
    %4853 = vmatpush1.bf16.msra.mxu0 0
    %4854 = vmatprep.subr.bf16.mxu0 0
    %4855 = vmatpush1.bf16.msra.mxu0 0
    %4856 = vmatprep.subr.bf16.mxu0 0
    %4857 = vmatpush1.bf16.msra.mxu0 0
    %4858 = vmatprep.subr.bf16.mxu0 0
    %4859 = vmatpush1.bf16.msra.mxu0 0
    %4860 = vmatprep.subr.bf16.mxu0 0
    %4861 = vmatpush1.bf16.msra.mxu0 0
    %4862 = vmatprep.mubr.bf16.mxu0 0
    %4863 = vmatmul.mubr.bf16.gmra.mrb[0].mxu0 %v4629
    %v4864 = vpop.f32.mrb[0].mxu0
    %v4865 = vadd.f32 0.0, %v4864
    %v4866 = vpop.f32.mrb[0].mxu0
    %v4867 = vadd.f32 0.0, %v4866
    %v4868 = vpop.f32.mrb[0].mxu0
    %v4869 = vpop.f32.mrb[0].mxu0
    %4870 = vdwg.mxu0
    %4871 = vmatprep.subr.bf16.mxu0 %v4769
    %4872 = vmatpush1.bf16.msra.mxu0 %v4768
    %4873 = vmatprep.subr.bf16.mxu0 %v4773
    %4874 = vmatpush1.bf16.msra.mxu0 %v4772
    %4875 = vmatprep.subr.bf16.mxu0 %v4777
    %4876 = vmatpush1.bf16.msra.mxu0 %v4776
    %4877 = vmatprep.subr.bf16.mxu0 %v4781
    %4878 = vmatpush1.bf16.msra.mxu0 %v4780
    %4879 = vmatprep.subr.bf16.mxu0 %v4785
    %4880 = vmatpush1.bf16.msra.mxu0 %v4784
    %4881 = vmatprep.subr.bf16.mxu0 %v4789
    %4882 = vmatpush1.bf16.msra.mxu0 %v4788
    %4883 = vmatprep.subr.bf16.mxu0 %v4793
    %4884 = vmatpush1.bf16.msra.mxu0 %v4792
    %4885 = vmatprep.subr.bf16.mxu0 %v4797
    %4886 = vmatpush1.bf16.msra.mxu0 %v4796
    %4887 = vmatprep.subr.bf16.mxu0 0
    %4888 = vmatpush1.bf16.msra.mxu0 0
    %4889 = vmatprep.subr.bf16.mxu0 0
    %4890 = vmatpush1.bf16.msra.mxu0 0
    %4891 = vmatprep.subr.bf16.mxu0 0
    %4892 = vmatpush1.bf16.msra.mxu0 0
    %4893 = vmatprep.subr.bf16.mxu0 0
    %4894 = vmatpush1.bf16.msra.mxu0 0
    %4895 = vmatprep.subr.bf16.mxu0 0
    %4896 = vmatpush1.bf16.msra.mxu0 0
    %4897 = vmatprep.subr.bf16.mxu0 0
    %4898 = vmatpush1.bf16.msra.mxu0 0
    %4899 = vmatprep.subr.bf16.mxu0 0
    %4900 = vmatpush1.bf16.msra.mxu0 0
    %4901 = vmatprep.subr.bf16.mxu0 0
    %4902 = vmatpush1.bf16.msra.mxu0 0
    %4903 = vmatprep.mubr.bf16.mxu0 0
    %4904 = vmatmul.mubr.bf16.gmra.mrb[0].mxu0 %v4629
    %v4905 = vpop.f32.mrb[0].mxu0
    %v4906 = vadd.f32 0.0, %v4905
    %v4907 = vpop.f32.mrb[0].mxu0
    %v4908 = vadd.f32 0.0, %v4907
    %v4909 = vpop.f32.mrb[0].mxu0
    %v4910 = vpop.f32.mrb[0].mxu0
    %4911 = vdwg.mxu0
    %v4912 = vadd.f32 %v4634, %v4865
    %v4913 = vadd.f32 %v4635, %v4867
    %v4914 = vadd.f32 %v4636, %v4906
    %v4915 = vadd.f32 %v4637, %v4908
    %v4916 = vxor.u32 %v4912, 2147483648
    %v4917 = vmul.f32 %v4916, 1.442695
    %v4918 = vpow.pop %v4917
    %v4919 = vadd.f32 %v4918, 1.0
    %v4920 = vrcp.pop %v4919
    %v4921 = vmul.f32 1.0, %v4920
    %v4922 = vxor.u32 %v4913, 2147483648
    %v4923 = vmul.f32 %v4922, 1.442695
    %v4924 = vpow.pop %v4923
    %v4925 = vadd.f32 %v4924, 1.0
    %v4926 = vrcp.pop %v4925
    %v4927 = vmul.f32 1.0, %v4926
    %v4928 = vtanh.pop %v4914
    %v4929 = vxor.u32 %v4915, 2147483648
    %v4930 = vmul.f32 %v4929, 1.442695
    %v4931 = vpow.pop %v4930
    %v4932 = vadd.f32 %v4931, 1.0
    %v4933 = vrcp.pop %v4932
    %v4934 = vmul.f32 1.0, %v4933
    %v4935 = vmul.f32 %v4927, %v4112
    %v4936 = vmul.f32 %v4921, %v4928
    %v4937 = vadd.f32 %v4935, %v4936
    %v4938 = vtanh.pop %v4937
    %v4939 = vmul.f32 %v4934, %v4938
    %v4940 = vld [vmem:[%s4] sm:$0xff]
    %v4941 = vld [vmem:[%s4 + $0x8] sm:$0xff]
    %v4942 = vld [vmem:[%s4 + $0x10] sm:$0xff]
    %v4943 = vld [vmem:[%s4 + $0x18] sm:$0xff]
    %v4944 = vld [vmem:[%s4 + $0x20] sm:$0xff]
    %v4945 = vld [vmem:[%s4 + $0x28] sm:$0xff]
    %v4946 = vld [vmem:[%s4 + $0x30] sm:$0xff]
    %v4947 = vld [vmem:[%s4 + $0x38] sm:$0xff]
    %v4948 = vld [vmem:[%s4 + $0x40] sm:$0xff]
    %v4949 = vld [vmem:[%s4 + $0x48] sm:$0xff]
    %v4950 = vld [vmem:[%s4 + $0x50] sm:$0xff]
    %v4951 = vld [vmem:[%s4 + $0x58] sm:$0xff]
    %v4952 = vld [vmem:[%s4 + $0x60] sm:$0xff]
    %v4953 = vld [vmem:[%s4 + $0x68] sm:$0xff]
    %v4954 = vld [vmem:[%s4 + $0x70] sm:$0xff]
    %v4955 = vld [vmem:[%s4 + $0x78] sm:$0xff]
    %v4956 = vld [vmem:[%s4 + $0x80] sm:$0xff]
    %v4957 = vld [vmem:[%s4 + $0x88] sm:$0xff]
    %v4958 = vld [vmem:[%s4 + $0x90] sm:$0xff]
    %v4959 = vld [vmem:[%s4 + $0x98] sm:$0xff]
    %v4960 = vld [vmem:[%s4 + $0xa0] sm:$0xff]
    %v4961 = vld [vmem:[%s4 + $0xa8] sm:$0xff]
    %v4962 = vld [vmem:[%s4 + $0xb0] sm:$0xff]
    %v4963 = vld [vmem:[%s4 + $0xb8] sm:$0xff]
    %v4964 = vld [vmem:[%s4 + $0xc0] sm:$0xff]
    %v4965 = vld [vmem:[%s4 + $0xc8] sm:$0xff]
    %v4966 = vld [vmem:[%s4 + $0xd0] sm:$0xff]
    %v4967 = vld [vmem:[%s4 + $0xd8] sm:$0xff]
    %v4968 = vld [vmem:[%s4 + $0xe0] sm:$0xff]
    %v4969 = vld [vmem:[%s4 + $0xe8] sm:$0xff]
    %v4970 = vld [vmem:[%s4 + $0xf0] sm:$0xff]
    %v4971 = vld [vmem:[%s4 + $0xf8] sm:$0xff]
    %v4972 = vld [vmem:[%s4 + $0x100] sm:$0xff]
    %v4973 = vld [vmem:[%s4 + $0x108] sm:$0xff]
    %v4974 = vld [vmem:[%s4 + $0x110] sm:$0xff]
    %v4975 = vld [vmem:[%s4 + $0x118] sm:$0xff]
    %v4976 = vld [vmem:[%s4 + $0x120] sm:$0xff]
    %v4977 = vld [vmem:[%s4 + $0x128] sm:$0xff]
    %v4978 = vld [vmem:[%s4 + $0x130] sm:$0xff]
    %v4979 = vld [vmem:[%s4 + $0x138] sm:$0xff]
    %v4980 = vld [vmem:[%s4 + $0x140] sm:$0xff]
    %v4981 = vld [vmem:[%s4 + $0x148] sm:$0xff]
    %v4982 = vld [vmem:[%s4 + $0x150] sm:$0xff]
    %v4983 = vld [vmem:[%s4 + $0x158] sm:$0xff]
    %v4984 = vld [vmem:[%s4 + $0x160] sm:$0xff]
    %v4985 = vld [vmem:[%s4 + $0x168] sm:$0xff]
    %v4986 = vld [vmem:[%s4 + $0x170] sm:$0xff]
    %v4987 = vld [vmem:[%s4 + $0x178] sm:$0xff]
    %v4988 = vld [vmem:[%s4 + $0x180] sm:$0xff]
    %v4989 = vld [vmem:[%s4 + $0x188] sm:$0xff]
    %v4990 = vld [vmem:[%s4 + $0x190] sm:$0xff]
    %v4991 = vld [vmem:[%s4 + $0x198] sm:$0xff]
    %v4992 = vld [vmem:[%s4 + $0x1a0] sm:$0xff]
    %v4993 = vld [vmem:[%s4 + $0x1a8] sm:$0xff]
    %v4994 = vld [vmem:[%s4 + $0x1b0] sm:$0xff]
    %v4995 = vld [vmem:[%s4 + $0x1b8] sm:$0xff]
    %v4996 = vld [vmem:[%s4 + $0x1c0] sm:$0xff]
    %v4997 = vld [vmem:[%s4 + $0x1c8] sm:$0xff]
    %v4998 = vld [vmem:[%s4 + $0x1d0] sm:$0xff]
    %v4999 = vld [vmem:[%s4 + $0x1d8] sm:$0xff]
    %v5000 = vld [vmem:[%s4 + $0x1e0] sm:$0xff]
    %v5001 = vld [vmem:[%s4 + $0x1e8] sm:$0xff]
    %v5002 = vld [vmem:[%s4 + $0x1f0] sm:$0xff]
    %v5003 = vld [vmem:[%s4 + $0x1f8] sm:$0xff]
    %v5004 = vld [vmem:[#allocation9] sm:$0xf]
    %v5006 = vlaneseq
    %v5007 = vshrl.u32 %v5006, 7
    %v5008 = vsub.s32 0, %v5007
    %v5009 = vrot.slane %v5004, %v5008
    %v5010 = vlaneseq
    %v5011 = vshrl.u32 %v5010, 7
    %v5012 = vsub.s32 1, %v5011
    %v5013 = vrot.slane %v5004, %v5012
    %v5014 = vlaneseq
    %v5015 = vshrl.u32 %v5014, 7
    %v5016 = vsub.s32 2, %v5015
    %v5017 = vrot.slane %v5004, %v5016
    %v5018 = vlaneseq
    %v5019 = vshrl.u32 %v5018, 7
    %v5020 = vsub.s32 3, %v5019
    %v5021 = vrot.slane %v5004, %v5020
    %v5090 = vunpack.c.l.b16 %v4940
    %v5091 = vunpack.c.h.b16 %v4940
    %v5092 = vunpack.c.l.b16 %v4941
    %v5093 = vunpack.c.h.b16 %v4941
    %v5094 = vunpack.c.l.b16 %v4942
    %v5095 = vunpack.c.h.b16 %v4942
    %v5096 = vunpack.c.l.b16 %v4943
    %v5097 = vunpack.c.h.b16 %v4943
    %v5098 = vunpack.c.l.b16 %v4944
    %v5099 = vunpack.c.h.b16 %v4944
    %v5100 = vunpack.c.l.b16 %v4945
    %v5101 = vunpack.c.h.b16 %v4945
    %v5102 = vunpack.c.l.b16 %v4946
    %v5103 = vunpack.c.h.b16 %v4946
    %v5104 = vunpack.c.l.b16 %v4947
    %v5105 = vunpack.c.h.b16 %v4947
    %v5106 = vunpack.c.l.b16 %v4948
    %v5107 = vunpack.c.h.b16 %v4948
    %v5108 = vunpack.c.l.b16 %v4949
    %v5109 = vunpack.c.h.b16 %v4949
    %v5110 = vunpack.c.l.b16 %v4950
    %v5111 = vunpack.c.h.b16 %v4950
    %v5112 = vunpack.c.l.b16 %v4951
    %v5113 = vunpack.c.h.b16 %v4951
    %v5114 = vunpack.c.l.b16 %v4952
    %v5115 = vunpack.c.h.b16 %v4952
    %v5116 = vunpack.c.l.b16 %v4953
    %v5117 = vunpack.c.h.b16 %v4953
    %v5118 = vunpack.c.l.b16 %v4954
    %v5119 = vunpack.c.h.b16 %v4954
    %v5120 = vunpack.c.l.b16 %v4955
    %v5121 = vunpack.c.h.b16 %v4955
    %v5122 = vunpack.c.l.b16 %v4956
    %v5123 = vunpack.c.h.b16 %v4956
    %v5124 = vunpack.c.l.b16 %v4957
    %v5125 = vunpack.c.h.b16 %v4957
    %v5126 = vunpack.c.l.b16 %v4958
    %v5127 = vunpack.c.h.b16 %v4958
    %v5128 = vunpack.c.l.b16 %v4959
    %v5129 = vunpack.c.h.b16 %v4959
    %v5130 = vunpack.c.l.b16 %v4960
    %v5131 = vunpack.c.h.b16 %v4960
    %v5132 = vunpack.c.l.b16 %v4961
    %v5133 = vunpack.c.h.b16 %v4961
    %v5134 = vunpack.c.l.b16 %v4962
    %v5135 = vunpack.c.h.b16 %v4962
    %v5136 = vunpack.c.l.b16 %v4963
    %v5137 = vunpack.c.h.b16 %v4963
    %v5138 = vunpack.c.l.b16 %v4964
    %v5139 = vunpack.c.h.b16 %v4964
    %v5140 = vunpack.c.l.b16 %v4965
    %v5141 = vunpack.c.h.b16 %v4965
    %v5142 = vunpack.c.l.b16 %v4966
    %v5143 = vunpack.c.h.b16 %v4966
    %v5144 = vunpack.c.l.b16 %v4967
    %v5145 = vunpack.c.h.b16 %v4967
    %v5146 = vunpack.c.l.b16 %v4968
    %v5147 = vunpack.c.h.b16 %v4968
    %v5148 = vunpack.c.l.b16 %v4969
    %v5149 = vunpack.c.h.b16 %v4969
    %v5150 = vunpack.c.l.b16 %v4970
    %v5151 = vunpack.c.h.b16 %v4970
    %v5152 = vunpack.c.l.b16 %v4971
    %v5153 = vunpack.c.h.b16 %v4971
    %v5154 = vunpack.c.l.b16 %v4972
    %v5155 = vunpack.c.h.b16 %v4972
    %v5156 = vunpack.c.l.b16 %v4973
    %v5157 = vunpack.c.h.b16 %v4973
    %v5158 = vunpack.c.l.b16 %v4974
    %v5159 = vunpack.c.h.b16 %v4974
    %v5160 = vunpack.c.l.b16 %v4975
    %v5161 = vunpack.c.h.b16 %v4975
    %v5162 = vunpack.c.l.b16 %v4976
    %v5163 = vunpack.c.h.b16 %v4976
    %v5164 = vunpack.c.l.b16 %v4977
    %v5165 = vunpack.c.h.b16 %v4977
    %v5166 = vunpack.c.l.b16 %v4978
    %v5167 = vunpack.c.h.b16 %v4978
    %v5168 = vunpack.c.l.b16 %v4979
    %v5169 = vunpack.c.h.b16 %v4979
    %v5170 = vunpack.c.l.b16 %v4980
    %v5171 = vunpack.c.h.b16 %v4980
    %v5172 = vunpack.c.l.b16 %v4981
    %v5173 = vunpack.c.h.b16 %v4981
    %v5174 = vunpack.c.l.b16 %v4982
    %v5175 = vunpack.c.h.b16 %v4982
    %v5176 = vunpack.c.l.b16 %v4983
    %v5177 = vunpack.c.h.b16 %v4983
    %v5178 = vunpack.c.l.b16 %v4984
    %v5179 = vunpack.c.h.b16 %v4984
    %v5180 = vunpack.c.l.b16 %v4985
    %v5181 = vunpack.c.h.b16 %v4985
    %v5182 = vunpack.c.l.b16 %v4986
    %v5183 = vunpack.c.h.b16 %v4986
    %v5184 = vunpack.c.l.b16 %v4987
    %v5185 = vunpack.c.h.b16 %v4987
    %v5186 = vunpack.c.l.b16 %v4988
    %v5187 = vunpack.c.h.b16 %v4988
    %v5188 = vunpack.c.l.b16 %v4989
    %v5189 = vunpack.c.h.b16 %v4989
    %v5190 = vunpack.c.l.b16 %v4990
    %v5191 = vunpack.c.h.b16 %v4990
    %v5192 = vunpack.c.l.b16 %v4991
    %v5193 = vunpack.c.h.b16 %v4991
    %v5194 = vunpack.c.l.b16 %v4992
    %v5195 = vunpack.c.h.b16 %v4992
    %v5196 = vunpack.c.l.b16 %v4993
    %v5197 = vunpack.c.h.b16 %v4993
    %v5198 = vunpack.c.l.b16 %v4994
    %v5199 = vunpack.c.h.b16 %v4994
    %v5200 = vunpack.c.l.b16 %v4995
    %v5201 = vunpack.c.h.b16 %v4995
    %v5202 = vunpack.c.l.b16 %v4996
    %v5203 = vunpack.c.h.b16 %v4996
    %v5204 = vunpack.c.l.b16 %v4997
    %v5205 = vunpack.c.h.b16 %v4997
    %v5206 = vunpack.c.l.b16 %v4998
    %v5207 = vunpack.c.h.b16 %v4998
    %v5208 = vunpack.c.l.b16 %v4999
    %v5209 = vunpack.c.h.b16 %v4999
    %v5210 = vunpack.c.l.b16 %v5000
    %v5211 = vunpack.c.h.b16 %v5000
    %v5212 = vunpack.c.l.b16 %v5001
    %v5213 = vunpack.c.h.b16 %v5001
    %v5214 = vunpack.c.l.b16 %v5002
    %v5215 = vunpack.c.h.b16 %v5002
    %v5216 = vunpack.c.l.b16 %v5003
    %v5217 = vunpack.c.h.b16 %v5003
    %v5218 = vpack.c.b16 %v5094, %v5090
    %v5219 = vpack.c.b16 %v5095, %v5091
    %v5220 = vpack.c.b16 %v5096, %v5092
    %v5221 = vpack.c.b16 %v5097, %v5093
    %v5222 = vpack.c.b16 %v5102, %v5098
    %v5223 = vpack.c.b16 %v5103, %v5099
    %v5224 = vpack.c.b16 %v5104, %v5100
    %v5225 = vpack.c.b16 %v5105, %v5101
    %v5226 = vpack.c.b16 %v5110, %v5106
    %v5227 = vpack.c.b16 %v5111, %v5107
    %v5228 = vpack.c.b16 %v5112, %v5108
    %v5229 = vpack.c.b16 %v5113, %v5109
    %v5230 = vpack.c.b16 %v5118, %v5114
    %v5231 = vpack.c.b16 %v5119, %v5115
    %v5232 = vpack.c.b16 %v5120, %v5116
    %v5233 = vpack.c.b16 %v5121, %v5117
    %v5234 = vpack.c.b16 %v5126, %v5122
    %v5235 = vpack.c.b16 %v5127, %v5123
    %v5236 = vpack.c.b16 %v5128, %v5124
    %v5237 = vpack.c.b16 %v5129, %v5125
    %v5238 = vpack.c.b16 %v5134, %v5130
    %v5239 = vpack.c.b16 %v5135, %v5131
    %v5240 = vpack.c.b16 %v5136, %v5132
    %v5241 = vpack.c.b16 %v5137, %v5133
    %v5242 = vpack.c.b16 %v5142, %v5138
    %v5243 = vpack.c.b16 %v5143, %v5139
    %v5244 = vpack.c.b16 %v5144, %v5140
    %v5245 = vpack.c.b16 %v5145, %v5141
    %v5246 = vpack.c.b16 %v5150, %v5146
    %v5247 = vpack.c.b16 %v5151, %v5147
    %v5248 = vpack.c.b16 %v5152, %v5148
    %v5249 = vpack.c.b16 %v5153, %v5149
    %v5250 = vpack.c.b16 %v5158, %v5154
    %v5251 = vpack.c.b16 %v5159, %v5155
    %v5252 = vpack.c.b16 %v5160, %v5156
    %v5253 = vpack.c.b16 %v5161, %v5157
    %v5254 = vpack.c.b16 %v5166, %v5162
    %v5255 = vpack.c.b16 %v5167, %v5163
    %v5256 = vpack.c.b16 %v5168, %v5164
    %v5257 = vpack.c.b16 %v5169, %v5165
    %v5258 = vpack.c.b16 %v5174, %v5170
    %v5259 = vpack.c.b16 %v5175, %v5171
    %v5260 = vpack.c.b16 %v5176, %v5172
    %v5261 = vpack.c.b16 %v5177, %v5173
    %v5262 = vpack.c.b16 %v5182, %v5178
    %v5263 = vpack.c.b16 %v5183, %v5179
    %v5264 = vpack.c.b16 %v5184, %v5180
    %v5265 = vpack.c.b16 %v5185, %v5181
    %v5266 = vpack.c.b16 %v5190, %v5186
    %v5267 = vpack.c.b16 %v5191, %v5187
    %v5268 = vpack.c.b16 %v5192, %v5188
    %v5269 = vpack.c.b16 %v5193, %v5189
    %v5270 = vpack.c.b16 %v5198, %v5194
    %v5271 = vpack.c.b16 %v5199, %v5195
    %v5272 = vpack.c.b16 %v5200, %v5196
    %v5273 = vpack.c.b16 %v5201, %v5197
    %v5274 = vpack.c.b16 %v5206, %v5202
    %v5275 = vpack.c.b16 %v5207, %v5203
    %v5276 = vpack.c.b16 %v5208, %v5204
    %v5277 = vpack.c.b16 %v5209, %v5205
    %v5278 = vpack.c.b16 %v5214, %v5210
    %v5279 = vpack.c.b16 %v5215, %v5211
    %v5280 = vpack.c.b16 %v5216, %v5212
    %v5281 = vpack.c.b16 %v5217, %v5213
    %5346 = vmatprep.subr.bf16.mxu0 %v5219
    %5347 = vmatpush1.bf16.msra.mxu0 %v5218
    %5348 = vmatprep.subr.bf16.mxu0 %v5223
    %5349 = vmatpush1.bf16.msra.mxu0 %v5222
    %5350 = vmatprep.subr.bf16.mxu0 %v5227
    %5351 = vmatpush1.bf16.msra.mxu0 %v5226
    %5352 = vmatprep.subr.bf16.mxu0 %v5231
    %5353 = vmatpush1.bf16.msra.mxu0 %v5230
    %5354 = vmatprep.subr.bf16.mxu0 %v5235
    %5355 = vmatpush1.bf16.msra.mxu0 %v5234
    %5356 = vmatprep.subr.bf16.mxu0 %v5239
    %5357 = vmatpush1.bf16.msra.mxu0 %v5238
    %5358 = vmatprep.subr.bf16.mxu0 %v5243
    %5359 = vmatpush1.bf16.msra.mxu0 %v5242
    %5360 = vmatprep.subr.bf16.mxu0 %v5247
    %5361 = vmatpush1.bf16.msra.mxu0 %v5246
    %5362 = vmatprep.subr.bf16.mxu0 %v5251
    %5363 = vmatpush1.bf16.msra.mxu0 %v5250
    %5364 = vmatprep.subr.bf16.mxu0 %v5255
    %5365 = vmatpush1.bf16.msra.mxu0 %v5254
    %5366 = vmatprep.subr.bf16.mxu0 %v5259
    %5367 = vmatpush1.bf16.msra.mxu0 %v5258
    %5368 = vmatprep.subr.bf16.mxu0 %v5263
    %5369 = vmatpush1.bf16.msra.mxu0 %v5262
    %5370 = vmatprep.subr.bf16.mxu0 %v5267
    %5371 = vmatpush1.bf16.msra.mxu0 %v5266
    %5372 = vmatprep.subr.bf16.mxu0 %v5271
    %5373 = vmatpush1.bf16.msra.mxu0 %v5270
    %5374 = vmatprep.subr.bf16.mxu0 %v5275
    %5375 = vmatpush1.bf16.msra.mxu0 %v5274
    %5376 = vmatprep.subr.bf16.mxu0 %v5279
    %5377 = vmatpush1.bf16.msra.mxu0 %v5278
    %5378 = vmatprep.mubr.bf16.mxu0 %v4630
    %5379 = vmatmul.mubr.bf16.gmra.mrb[0].mxu0 %v4629
    %v5380 = vpop.f32.mrb[0].mxu0
    %v5381 = vadd.f32 %v5009, %v5380
    %v5382 = vpop.f32.mrb[0].mxu0
    %v5383 = vadd.f32 %v5013, %v5382
    %v5384 = vpop.f32.mrb[0].mxu0
    %v5385 = vpop.f32.mrb[0].mxu0
    %5386 = vdwg.mxu0
    %5387 = vmatprep.subr.bf16.mxu0 %v5221
    %5388 = vmatpush1.bf16.msra.mxu0 %v5220
    %5389 = vmatprep.subr.bf16.mxu0 %v5225
    %5390 = vmatpush1.bf16.msra.mxu0 %v5224
    %5391 = vmatprep.subr.bf16.mxu0 %v5229
    %5392 = vmatpush1.bf16.msra.mxu0 %v5228
    %5393 = vmatprep.subr.bf16.mxu0 %v5233
    %5394 = vmatpush1.bf16.msra.mxu0 %v5232
    %5395 = vmatprep.subr.bf16.mxu0 %v5237
    %5396 = vmatpush1.bf16.msra.mxu0 %v5236
    %5397 = vmatprep.subr.bf16.mxu0 %v5241
    %5398 = vmatpush1.bf16.msra.mxu0 %v5240
    %5399 = vmatprep.subr.bf16.mxu0 %v5245
    %5400 = vmatpush1.bf16.msra.mxu0 %v5244
    %5401 = vmatprep.subr.bf16.mxu0 %v5249
    %5402 = vmatpush1.bf16.msra.mxu0 %v5248
    %5403 = vmatprep.subr.bf16.mxu0 %v5253
    %5404 = vmatpush1.bf16.msra.mxu0 %v5252
    %5405 = vmatprep.subr.bf16.mxu0 %v5257
    %5406 = vmatpush1.bf16.msra.mxu0 %v5256
    %5407 = vmatprep.subr.bf16.mxu0 %v5261
    %5408 = vmatpush1.bf16.msra.mxu0 %v5260
    %5409 = vmatprep.subr.bf16.mxu0 %v5265
    %5410 = vmatpush1.bf16.msra.mxu0 %v5264
    %5411 = vmatprep.subr.bf16.mxu0 %v5269
    %5412 = vmatpush1.bf16.msra.mxu0 %v5268
    %5413 = vmatprep.subr.bf16.mxu0 %v5273
    %5414 = vmatpush1.bf16.msra.mxu0 %v5272
    %5415 = vmatprep.subr.bf16.mxu0 %v5277
    %5416 = vmatpush1.bf16.msra.mxu0 %v5276
    %5417 = vmatprep.subr.bf16.mxu0 %v5281
    %5418 = vmatpush1.bf16.msra.mxu0 %v5280
    %5419 = vmatprep.mubr.bf16.mxu0 %v4630
    %5420 = vmatmul.mubr.bf16.gmra.mrb[0].mxu0 %v4629
    %v5421 = vpop.f32.mrb[0].mxu0
    %v5422 = vadd.f32 %v5017, %v5421
    %v5423 = vpop.f32.mrb[0].mxu0
    %v5424 = vadd.f32 %v5021, %v5423
    %v5425 = vpop.f32.mrb[0].mxu0
    %v5426 = vpop.f32.mrb[0].mxu0
    %5427 = vdwg.mxu0
    %v5428 = vxor.u32 %v5381, 2147483648
    %v5429 = vmul.f32 %v5428, 1.442695
    %v5430 = vpow.pop %v5429
    %v5431 = vadd.f32 %v5430, 1.0
    %v5432 = vrcp.pop %v5431
    %v5433 = vmul.f32 1.0, %v5432
    %v5434 = vxor.u32 %v5383, 2147483648
    %v5435 = vmul.f32 %v5434, 1.442695
    %v5436 = vpow.pop %v5435
    %v5437 = vadd.f32 %v5436, 1.0
    %v5438 = vrcp.pop %v5437
    %v5439 = vmul.f32 1.0, %v5438
    %v5440 = vtanh.pop %v5422
    %v5441 = vxor.u32 %v5424, 2147483648
    %v5442 = vmul.f32 %v5441, 1.442695
    %v5443 = vpow.pop %v5442
    %v5444 = vadd.f32 %v5443, 1.0
    %v5445 = vrcp.pop %v5444
    %v5446 = vmul.f32 1.0, %v5445
    %v5447 = vmul.f32 %v5439, %v4624
    %v5448 = vmul.f32 %v5433, %v5440
    %v5449 = vadd.f32 %v5447, %v5448
    %v5450 = vtanh.pop %v5449
    %v5451 = vmul.f32 %v5446, %v5450
    %s5452 = scalar_lea.vmem [#allocation3], 40
    %5453 = vst [vmem:[%s5452] sm:$0xff] %v5451
    %v5454 = vpack.c.bf16 %v4939, %v4939
    %v5455 = vpack.c.bf16 %v5451, %v5451
    %s5456 = smul.u32 7, 4
    %s5457 = smul.addr %s5456, 8
    %s5458 = scalar_lea.vmem [#allocation2], %s5457
    %v5459 = vld [vmem:[%s5458] sm:$0xff]
    %v5460 = vld [vmem:[%s5458 + $0x8] sm:$0xff]
    %v5461 = vld [vmem:[%s5458 + $0x10] sm:$0xff]
    %v5462 = vld [vmem:[%s5458 + $0x18] sm:$0xff]
    %v5463 = vld [vmem:[#allocation6] sm:$0xff]
    %v5464 = vld [vmem:[#allocation6 + $0x8] sm:$0xff]
    %v5465 = vld [vmem:[#allocation6 + $0x10] sm:$0xff]
    %v5466 = vld [vmem:[#allocation6 + $0x18] sm:$0xff]
    %v5467 = vld [vmem:[#allocation6 + $0x20] sm:$0xff]
    %v5468 = vld [vmem:[#allocation6 + $0x28] sm:$0xff]
    %v5469 = vld [vmem:[#allocation6 + $0x30] sm:$0xff]
    %v5470 = vld [vmem:[#allocation6 + $0x38] sm:$0xff]
    %v5471 = vld [vmem:[#allocation6 + $0x40] sm:$0xff]
    %v5472 = vld [vmem:[#allocation6 + $0x48] sm:$0xff]
    %v5473 = vld [vmem:[#allocation6 + $0x50] sm:$0xff]
    %v5474 = vld [vmem:[#allocation6 + $0x58] sm:$0xff]
    %v5475 = vld [vmem:[#allocation6 + $0x60] sm:$0xff]
    %v5476 = vld [vmem:[#allocation6 + $0x68] sm:$0xff]
    %v5477 = vld [vmem:[#allocation6 + $0x70] sm:$0xff]
    %v5478 = vld [vmem:[#allocation6 + $0x78] sm:$0xff]
    %v5479 = vld [vmem:[#allocation6 + $0x80] sm:$0xff]
    %v5480 = vld [vmem:[#allocation6 + $0x88] sm:$0xff]
    %v5481 = vld [vmem:[#allocation6 + $0x90] sm:$0xff]
    %v5482 = vld [vmem:[#allocation6 + $0x98] sm:$0xff]
    %v5483 = vld [vmem:[#allocation6 + $0xa0] sm:$0xff]
    %v5484 = vld [vmem:[#allocation6 + $0xa8] sm:$0xff]
    %v5485 = vld [vmem:[#allocation6 + $0xb0] sm:$0xff]
    %v5486 = vld [vmem:[#allocation6 + $0xb8] sm:$0xff]
    %v5487 = vld [vmem:[#allocation6 + $0xc0] sm:$0xff]
    %v5488 = vld [vmem:[#allocation6 + $0xc8] sm:$0xff]
    %v5489 = vld [vmem:[#allocation6 + $0xd0] sm:$0xff]
    %v5490 = vld [vmem:[#allocation6 + $0xd8] sm:$0xff]
    %v5491 = vld [vmem:[#allocation6 + $0xe0] sm:$0xff]
    %v5492 = vld [vmem:[#allocation6 + $0xe8] sm:$0xff]
    %v5493 = vld [vmem:[#allocation6 + $0xf0] sm:$0xff]
    %v5494 = vld [vmem:[#allocation6 + $0xf8] sm:$0xff]
    %v5527 = vunpack.c.l.b16 %v5463
    %v5528 = vunpack.c.h.b16 %v5463
    %v5529 = vunpack.c.l.b16 %v5464
    %v5530 = vunpack.c.h.b16 %v5464
    %v5531 = vunpack.c.l.b16 %v5465
    %v5532 = vunpack.c.h.b16 %v5465
    %v5533 = vunpack.c.l.b16 %v5466
    %v5534 = vunpack.c.h.b16 %v5466
    %v5535 = vunpack.c.l.b16 %v5467
    %v5536 = vunpack.c.h.b16 %v5467
    %v5537 = vunpack.c.l.b16 %v5468
    %v5538 = vunpack.c.h.b16 %v5468
    %v5539 = vunpack.c.l.b16 %v5469
    %v5540 = vunpack.c.h.b16 %v5469
    %v5541 = vunpack.c.l.b16 %v5470
    %v5542 = vunpack.c.h.b16 %v5470
    %v5543 = vunpack.c.l.b16 %v5471
    %v5544 = vunpack.c.h.b16 %v5471
    %v5545 = vunpack.c.l.b16 %v5472
    %v5546 = vunpack.c.h.b16 %v5472
    %v5547 = vunpack.c.l.b16 %v5473
    %v5548 = vunpack.c.h.b16 %v5473
    %v5549 = vunpack.c.l.b16 %v5474
    %v5550 = vunpack.c.h.b16 %v5474
    %v5551 = vunpack.c.l.b16 %v5475
    %v5552 = vunpack.c.h.b16 %v5475
    %v5553 = vunpack.c.l.b16 %v5476
    %v5554 = vunpack.c.h.b16 %v5476
    %v5555 = vunpack.c.l.b16 %v5477
    %v5556 = vunpack.c.h.b16 %v5477
    %v5557 = vunpack.c.l.b16 %v5478
    %v5558 = vunpack.c.h.b16 %v5478
    %v5559 = vunpack.c.l.b16 %v5479
    %v5560 = vunpack.c.h.b16 %v5479
    %v5561 = vunpack.c.l.b16 %v5480
    %v5562 = vunpack.c.h.b16 %v5480
    %v5563 = vunpack.c.l.b16 %v5481
    %v5564 = vunpack.c.h.b16 %v5481
    %v5565 = vunpack.c.l.b16 %v5482
    %v5566 = vunpack.c.h.b16 %v5482
    %v5567 = vunpack.c.l.b16 %v5483
    %v5568 = vunpack.c.h.b16 %v5483
    %v5569 = vunpack.c.l.b16 %v5484
    %v5570 = vunpack.c.h.b16 %v5484
    %v5571 = vunpack.c.l.b16 %v5485
    %v5572 = vunpack.c.h.b16 %v5485
    %v5573 = vunpack.c.l.b16 %v5486
    %v5574 = vunpack.c.h.b16 %v5486
    %v5575 = vunpack.c.l.b16 %v5487
    %v5576 = vunpack.c.h.b16 %v5487
    %v5577 = vunpack.c.l.b16 %v5488
    %v5578 = vunpack.c.h.b16 %v5488
    %v5579 = vunpack.c.l.b16 %v5489
    %v5580 = vunpack.c.h.b16 %v5489
    %v5581 = vunpack.c.l.b16 %v5490
    %v5582 = vunpack.c.h.b16 %v5490
    %v5583 = vunpack.c.l.b16 %v5491
    %v5584 = vunpack.c.h.b16 %v5491
    %v5585 = vunpack.c.l.b16 %v5492
    %v5586 = vunpack.c.h.b16 %v5492
    %v5587 = vunpack.c.l.b16 %v5493
    %v5588 = vunpack.c.h.b16 %v5493
    %v5589 = vunpack.c.l.b16 %v5494
    %v5590 = vunpack.c.h.b16 %v5494
    %v5591 = vpack.c.b16 %v5531, %v5527
    %v5592 = vpack.c.b16 %v5532, %v5528
    %v5593 = vpack.c.b16 %v5533, %v5529
    %v5594 = vpack.c.b16 %v5534, %v5530
    %v5595 = vpack.c.b16 %v5539, %v5535
    %v5596 = vpack.c.b16 %v5540, %v5536
    %v5597 = vpack.c.b16 %v5541, %v5537
    %v5598 = vpack.c.b16 %v5542, %v5538
    %v5599 = vpack.c.b16 %v5547, %v5543
    %v5600 = vpack.c.b16 %v5548, %v5544
    %v5601 = vpack.c.b16 %v5549, %v5545
    %v5602 = vpack.c.b16 %v5550, %v5546
    %v5603 = vpack.c.b16 %v5555, %v5551
    %v5604 = vpack.c.b16 %v5556, %v5552
    %v5605 = vpack.c.b16 %v5557, %v5553
    %v5606 = vpack.c.b16 %v5558, %v5554
    %v5607 = vpack.c.b16 %v5563, %v5559
    %v5608 = vpack.c.b16 %v5564, %v5560
    %v5609 = vpack.c.b16 %v5565, %v5561
    %v5610 = vpack.c.b16 %v5566, %v5562
    %v5611 = vpack.c.b16 %v5571, %v5567
    %v5612 = vpack.c.b16 %v5572, %v5568
    %v5613 = vpack.c.b16 %v5573, %v5569
    %v5614 = vpack.c.b16 %v5574, %v5570
    %v5615 = vpack.c.b16 %v5579, %v5575
    %v5616 = vpack.c.b16 %v5580, %v5576
    %v5617 = vpack.c.b16 %v5581, %v5577
    %v5618 = vpack.c.b16 %v5582, %v5578
    %v5619 = vpack.c.b16 %v5587, %v5583
    %v5620 = vpack.c.b16 %v5588, %v5584
    %v5621 = vpack.c.b16 %v5589, %v5585
    %v5622 = vpack.c.b16 %v5590, %v5586
    %5655 = vmatprep.subr.bf16.mxu0 %v5592
    %5656 = vmatpush1.bf16.msra.mxu0 %v5591
    %5657 = vmatprep.subr.bf16.mxu0 %v5596
    %5658 = vmatpush1.bf16.msra.mxu0 %v5595
    %5659 = vmatprep.subr.bf16.mxu0 %v5600
    %5660 = vmatpush1.bf16.msra.mxu0 %v5599
    %5661 = vmatprep.subr.bf16.mxu0 %v5604
    %5662 = vmatpush1.bf16.msra.mxu0 %v5603
    %5663 = vmatprep.subr.bf16.mxu0 %v5608
    %5664 = vmatpush1.bf16.msra.mxu0 %v5607
    %5665 = vmatprep.subr.bf16.mxu0 %v5612
    %5666 = vmatpush1.bf16.msra.mxu0 %v5611
    %5667 = vmatprep.subr.bf16.mxu0 %v5616
    %5668 = vmatpush1.bf16.msra.mxu0 %v5615
    %5669 = vmatprep.subr.bf16.mxu0 %v5620
    %5670 = vmatpush1.bf16.msra.mxu0 %v5619
    %5671 = vmatprep.subr.bf16.mxu0 0
    %5672 = vmatpush1.bf16.msra.mxu0 0
    %5673 = vmatprep.subr.bf16.mxu0 0
    %5674 = vmatpush1.bf16.msra.mxu0 0
    %5675 = vmatprep.subr.bf16.mxu0 0
    %5676 = vmatpush1.bf16.msra.mxu0 0
    %5677 = vmatprep.subr.bf16.mxu0 0
    %5678 = vmatpush1.bf16.msra.mxu0 0
    %5679 = vmatprep.subr.bf16.mxu0 0
    %5680 = vmatpush1.bf16.msra.mxu0 0
    %5681 = vmatprep.subr.bf16.mxu0 0
    %5682 = vmatpush1.bf16.msra.mxu0 0
    %5683 = vmatprep.subr.bf16.mxu0 0
    %5684 = vmatpush1.bf16.msra.mxu0 0
    %5685 = vmatprep.subr.bf16.mxu0 0
    %5686 = vmatpush1.bf16.msra.mxu0 0
    %5687 = vmatprep.mubr.bf16.mxu0 0
    %5688 = vmatmul.mubr.bf16.gmra.mrb[0].mxu0 %v5454
    %v5689 = vpop.f32.mrb[0].mxu0
    %v5690 = vadd.f32 0.0, %v5689
    %v5691 = vpop.f32.mrb[0].mxu0
    %v5692 = vadd.f32 0.0, %v5691
    %v5693 = vpop.f32.mrb[0].mxu0
    %v5694 = vpop.f32.mrb[0].mxu0
    %5695 = vdwg.mxu0
    %5696 = vmatprep.subr.bf16.mxu0 %v5594
    %5697 = vmatpush1.bf16.msra.mxu0 %v5593
    %5698 = vmatprep.subr.bf16.mxu0 %v5598
    %5699 = vmatpush1.bf16.msra.mxu0 %v5597
    %5700 = vmatprep.subr.bf16.mxu0 %v5602
    %5701 = vmatpush1.bf16.msra.mxu0 %v5601
    %5702 = vmatprep.subr.bf16.mxu0 %v5606
    %5703 = vmatpush1.bf16.msra.mxu0 %v5605
    %5704 = vmatprep.subr.bf16.mxu0 %v5610
    %5705 = vmatpush1.bf16.msra.mxu0 %v5609
    %5706 = vmatprep.subr.bf16.mxu0 %v5614
    %5707 = vmatpush1.bf16.msra.mxu0 %v5613
    %5708 = vmatprep.subr.bf16.mxu0 %v5618
    %5709 = vmatpush1.bf16.msra.mxu0 %v5617
    %5710 = vmatprep.subr.bf16.mxu0 %v5622
    %5711 = vmatpush1.bf16.msra.mxu0 %v5621
    %5712 = vmatprep.subr.bf16.mxu0 0
    %5713 = vmatpush1.bf16.msra.mxu0 0
    %5714 = vmatprep.subr.bf16.mxu0 0
    %5715 = vmatpush1.bf16.msra.mxu0 0
    %5716 = vmatprep.subr.bf16.mxu0 0
    %5717 = vmatpush1.bf16.msra.mxu0 0
    %5718 = vmatprep.subr.bf16.mxu0 0
    %5719 = vmatpush1.bf16.msra.mxu0 0
    %5720 = vmatprep.subr.bf16.mxu0 0
    %5721 = vmatpush1.bf16.msra.mxu0 0
    %5722 = vmatprep.subr.bf16.mxu0 0
    %5723 = vmatpush1.bf16.msra.mxu0 0
    %5724 = vmatprep.subr.bf16.mxu0 0
    %5725 = vmatpush1.bf16.msra.mxu0 0
    %5726 = vmatprep.subr.bf16.mxu0 0
    %5727 = vmatpush1.bf16.msra.mxu0 0
    %5728 = vmatprep.mubr.bf16.mxu0 0
    %5729 = vmatmul.mubr.bf16.gmra.mrb[0].mxu0 %v5454
    %v5730 = vpop.f32.mrb[0].mxu0
    %v5731 = vadd.f32 0.0, %v5730
    %v5732 = vpop.f32.mrb[0].mxu0
    %v5733 = vadd.f32 0.0, %v5732
    %v5734 = vpop.f32.mrb[0].mxu0
    %v5735 = vpop.f32.mrb[0].mxu0
    %5736 = vdwg.mxu0
    %v5737 = vadd.f32 %v5459, %v5690
    %v5738 = vadd.f32 %v5460, %v5692
    %v5739 = vadd.f32 %v5461, %v5731
    %v5740 = vadd.f32 %v5462, %v5733
    %v5741 = vxor.u32 %v5737, 2147483648
    %v5742 = vmul.f32 %v5741, 1.442695
    %v5743 = vpow.pop %v5742
    %v5744 = vadd.f32 %v5743, 1.0
    %v5745 = vrcp.pop %v5744
    %v5746 = vmul.f32 1.0, %v5745
    %v5747 = vxor.u32 %v5738, 2147483648
    %v5748 = vmul.f32 %v5747, 1.442695
    %v5749 = vpow.pop %v5748
    %v5750 = vadd.f32 %v5749, 1.0
    %v5751 = vrcp.pop %v5750
    %v5752 = vmul.f32 1.0, %v5751
    %v5753 = vtanh.pop %v5739
    %v5754 = vxor.u32 %v5740, 2147483648
    %v5755 = vmul.f32 %v5754, 1.442695
    %v5756 = vpow.pop %v5755
    %v5757 = vadd.f32 %v5756, 1.0
    %v5758 = vrcp.pop %v5757
    %v5759 = vmul.f32 1.0, %v5758
    %v5760 = vmul.f32 %v5752, %v4937
    %v5761 = vmul.f32 %v5746, %v5753
    %v5762 = vadd.f32 %v5760, %v5761
    %v5763 = vtanh.pop %v5762
    %v5764 = vmul.f32 %v5759, %v5763
    %v5765 = vld [vmem:[%s4] sm:$0xff]
    %v5766 = vld [vmem:[%s4 + $0x8] sm:$0xff]
    %v5767 = vld [vmem:[%s4 + $0x10] sm:$0xff]
    %v5768 = vld [vmem:[%s4 + $0x18] sm:$0xff]
    %v5769 = vld [vmem:[%s4 + $0x20] sm:$0xff]
    %v5770 = vld [vmem:[%s4 + $0x28] sm:$0xff]
    %v5771 = vld [vmem:[%s4 + $0x30] sm:$0xff]
    %v5772 = vld [vmem:[%s4 + $0x38] sm:$0xff]
    %v5773 = vld [vmem:[%s4 + $0x40] sm:$0xff]
    %v5774 = vld [vmem:[%s4 + $0x48] sm:$0xff]
    %v5775 = vld [vmem:[%s4 + $0x50] sm:$0xff]
    %v5776 = vld [vmem:[%s4 + $0x58] sm:$0xff]
    %v5777 = vld [vmem:[%s4 + $0x60] sm:$0xff]
    %v5778 = vld [vmem:[%s4 + $0x68] sm:$0xff]
    %v5779 = vld [vmem:[%s4 + $0x70] sm:$0xff]
    %v5780 = vld [vmem:[%s4 + $0x78] sm:$0xff]
    %v5781 = vld [vmem:[%s4 + $0x80] sm:$0xff]
    %v5782 = vld [vmem:[%s4 + $0x88] sm:$0xff]
    %v5783 = vld [vmem:[%s4 + $0x90] sm:$0xff]
    %v5784 = vld [vmem:[%s4 + $0x98] sm:$0xff]
    %v5785 = vld [vmem:[%s4 + $0xa0] sm:$0xff]
    %v5786 = vld [vmem:[%s4 + $0xa8] sm:$0xff]
    %v5787 = vld [vmem:[%s4 + $0xb0] sm:$0xff]
    %v5788 = vld [vmem:[%s4 + $0xb8] sm:$0xff]
    %v5789 = vld [vmem:[%s4 + $0xc0] sm:$0xff]
    %v5790 = vld [vmem:[%s4 + $0xc8] sm:$0xff]
    %v5791 = vld [vmem:[%s4 + $0xd0] sm:$0xff]
    %v5792 = vld [vmem:[%s4 + $0xd8] sm:$0xff]
    %v5793 = vld [vmem:[%s4 + $0xe0] sm:$0xff]
    %v5794 = vld [vmem:[%s4 + $0xe8] sm:$0xff]
    %v5795 = vld [vmem:[%s4 + $0xf0] sm:$0xff]
    %v5796 = vld [vmem:[%s4 + $0xf8] sm:$0xff]
    %v5797 = vld [vmem:[%s4 + $0x100] sm:$0xff]
    %v5798 = vld [vmem:[%s4 + $0x108] sm:$0xff]
    %v5799 = vld [vmem:[%s4 + $0x110] sm:$0xff]
    %v5800 = vld [vmem:[%s4 + $0x118] sm:$0xff]
    %v5801 = vld [vmem:[%s4 + $0x120] sm:$0xff]
    %v5802 = vld [vmem:[%s4 + $0x128] sm:$0xff]
    %v5803 = vld [vmem:[%s4 + $0x130] sm:$0xff]
    %v5804 = vld [vmem:[%s4 + $0x138] sm:$0xff]
    %v5805 = vld [vmem:[%s4 + $0x140] sm:$0xff]
    %v5806 = vld [vmem:[%s4 + $0x148] sm:$0xff]
    %v5807 = vld [vmem:[%s4 + $0x150] sm:$0xff]
    %v5808 = vld [vmem:[%s4 + $0x158] sm:$0xff]
    %v5809 = vld [vmem:[%s4 + $0x160] sm:$0xff]
    %v5810 = vld [vmem:[%s4 + $0x168] sm:$0xff]
    %v5811 = vld [vmem:[%s4 + $0x170] sm:$0xff]
    %v5812 = vld [vmem:[%s4 + $0x178] sm:$0xff]
    %v5813 = vld [vmem:[%s4 + $0x180] sm:$0xff]
    %v5814 = vld [vmem:[%s4 + $0x188] sm:$0xff]
    %v5815 = vld [vmem:[%s4 + $0x190] sm:$0xff]
    %v5816 = vld [vmem:[%s4 + $0x198] sm:$0xff]
    %v5817 = vld [vmem:[%s4 + $0x1a0] sm:$0xff]
    %v5818 = vld [vmem:[%s4 + $0x1a8] sm:$0xff]
    %v5819 = vld [vmem:[%s4 + $0x1b0] sm:$0xff]
    %v5820 = vld [vmem:[%s4 + $0x1b8] sm:$0xff]
    %v5821 = vld [vmem:[%s4 + $0x1c0] sm:$0xff]
    %v5822 = vld [vmem:[%s4 + $0x1c8] sm:$0xff]
    %v5823 = vld [vmem:[%s4 + $0x1d0] sm:$0xff]
    %v5824 = vld [vmem:[%s4 + $0x1d8] sm:$0xff]
    %v5825 = vld [vmem:[%s4 + $0x1e0] sm:$0xff]
    %v5826 = vld [vmem:[%s4 + $0x1e8] sm:$0xff]
    %v5827 = vld [vmem:[%s4 + $0x1f0] sm:$0xff]
    %v5828 = vld [vmem:[%s4 + $0x1f8] sm:$0xff]
    %v5829 = vld [vmem:[#allocation9] sm:$0xf]
    %v5831 = vlaneseq
    %v5832 = vshrl.u32 %v5831, 7
    %v5833 = vsub.s32 0, %v5832
    %v5834 = vrot.slane %v5829, %v5833
    %v5835 = vlaneseq
    %v5836 = vshrl.u32 %v5835, 7
    %v5837 = vsub.s32 1, %v5836
    %v5838 = vrot.slane %v5829, %v5837
    %v5839 = vlaneseq
    %v5840 = vshrl.u32 %v5839, 7
    %v5841 = vsub.s32 2, %v5840
    %v5842 = vrot.slane %v5829, %v5841
    %v5843 = vlaneseq
    %v5844 = vshrl.u32 %v5843, 7
    %v5845 = vsub.s32 3, %v5844
    %v5846 = vrot.slane %v5829, %v5845
    %v5915 = vunpack.c.l.b16 %v5765
    %v5916 = vunpack.c.h.b16 %v5765
    %v5917 = vunpack.c.l.b16 %v5766
    %v5918 = vunpack.c.h.b16 %v5766
    %v5919 = vunpack.c.l.b16 %v5767
    %v5920 = vunpack.c.h.b16 %v5767
    %v5921 = vunpack.c.l.b16 %v5768
    %v5922 = vunpack.c.h.b16 %v5768
    %v5923 = vunpack.c.l.b16 %v5769
    %v5924 = vunpack.c.h.b16 %v5769
    %v5925 = vunpack.c.l.b16 %v5770
    %v5926 = vunpack.c.h.b16 %v5770
    %v5927 = vunpack.c.l.b16 %v5771
    %v5928 = vunpack.c.h.b16 %v5771
    %v5929 = vunpack.c.l.b16 %v5772
    %v5930 = vunpack.c.h.b16 %v5772
    %v5931 = vunpack.c.l.b16 %v5773
    %v5932 = vunpack.c.h.b16 %v5773
    %v5933 = vunpack.c.l.b16 %v5774
    %v5934 = vunpack.c.h.b16 %v5774
    %v5935 = vunpack.c.l.b16 %v5775
    %v5936 = vunpack.c.h.b16 %v5775
    %v5937 = vunpack.c.l.b16 %v5776
    %v5938 = vunpack.c.h.b16 %v5776
    %v5939 = vunpack.c.l.b16 %v5777
    %v5940 = vunpack.c.h.b16 %v5777
    %v5941 = vunpack.c.l.b16 %v5778
    %v5942 = vunpack.c.h.b16 %v5778
    %v5943 = vunpack.c.l.b16 %v5779
    %v5944 = vunpack.c.h.b16 %v5779
    %v5945 = vunpack.c.l.b16 %v5780
    %v5946 = vunpack.c.h.b16 %v5780
    %v5947 = vunpack.c.l.b16 %v5781
    %v5948 = vunpack.c.h.b16 %v5781
    %v5949 = vunpack.c.l.b16 %v5782
    %v5950 = vunpack.c.h.b16 %v5782
    %v5951 = vunpack.c.l.b16 %v5783
    %v5952 = vunpack.c.h.b16 %v5783
    %v5953 = vunpack.c.l.b16 %v5784
    %v5954 = vunpack.c.h.b16 %v5784
    %v5955 = vunpack.c.l.b16 %v5785
    %v5956 = vunpack.c.h.b16 %v5785
    %v5957 = vunpack.c.l.b16 %v5786
    %v5958 = vunpack.c.h.b16 %v5786
    %v5959 = vunpack.c.l.b16 %v5787
    %v5960 = vunpack.c.h.b16 %v5787
    %v5961 = vunpack.c.l.b16 %v5788
    %v5962 = vunpack.c.h.b16 %v5788
    %v5963 = vunpack.c.l.b16 %v5789
    %v5964 = vunpack.c.h.b16 %v5789
    %v5965 = vunpack.c.l.b16 %v5790
    %v5966 = vunpack.c.h.b16 %v5790
    %v5967 = vunpack.c.l.b16 %v5791
    %v5968 = vunpack.c.h.b16 %v5791
    %v5969 = vunpack.c.l.b16 %v5792
    %v5970 = vunpack.c.h.b16 %v5792
    %v5971 = vunpack.c.l.b16 %v5793
    %v5972 = vunpack.c.h.b16 %v5793
    %v5973 = vunpack.c.l.b16 %v5794
    %v5974 = vunpack.c.h.b16 %v5794
    %v5975 = vunpack.c.l.b16 %v5795
    %v5976 = vunpack.c.h.b16 %v5795
    %v5977 = vunpack.c.l.b16 %v5796
    %v5978 = vunpack.c.h.b16 %v5796
    %v5979 = vunpack.c.l.b16 %v5797
    %v5980 = vunpack.c.h.b16 %v5797
    %v5981 = vunpack.c.l.b16 %v5798
    %v5982 = vunpack.c.h.b16 %v5798
    %v5983 = vunpack.c.l.b16 %v5799
    %v5984 = vunpack.c.h.b16 %v5799
    %v5985 = vunpack.c.l.b16 %v5800
    %v5986 = vunpack.c.h.b16 %v5800
    %v5987 = vunpack.c.l.b16 %v5801
    %v5988 = vunpack.c.h.b16 %v5801
    %v5989 = vunpack.c.l.b16 %v5802
    %v5990 = vunpack.c.h.b16 %v5802
    %v5991 = vunpack.c.l.b16 %v5803
    %v5992 = vunpack.c.h.b16 %v5803
    %v5993 = vunpack.c.l.b16 %v5804
    %v5994 = vunpack.c.h.b16 %v5804
    %v5995 = vunpack.c.l.b16 %v5805
    %v5996 = vunpack.c.h.b16 %v5805
    %v5997 = vunpack.c.l.b16 %v5806
    %v5998 = vunpack.c.h.b16 %v5806
    %v5999 = vunpack.c.l.b16 %v5807
    %v6000 = vunpack.c.h.b16 %v5807
    %v6001 = vunpack.c.l.b16 %v5808
    %v6002 = vunpack.c.h.b16 %v5808
    %v6003 = vunpack.c.l.b16 %v5809
    %v6004 = vunpack.c.h.b16 %v5809
    %v6005 = vunpack.c.l.b16 %v5810
    %v6006 = vunpack.c.h.b16 %v5810
    %v6007 = vunpack.c.l.b16 %v5811
    %v6008 = vunpack.c.h.b16 %v5811
    %v6009 = vunpack.c.l.b16 %v5812
    %v6010 = vunpack.c.h.b16 %v5812
    %v6011 = vunpack.c.l.b16 %v5813
    %v6012 = vunpack.c.h.b16 %v5813
    %v6013 = vunpack.c.l.b16 %v5814
    %v6014 = vunpack.c.h.b16 %v5814
    %v6015 = vunpack.c.l.b16 %v5815
    %v6016 = vunpack.c.h.b16 %v5815
    %v6017 = vunpack.c.l.b16 %v5816
    %v6018 = vunpack.c.h.b16 %v5816
    %v6019 = vunpack.c.l.b16 %v5817
    %v6020 = vunpack.c.h.b16 %v5817
    %v6021 = vunpack.c.l.b16 %v5818
    %v6022 = vunpack.c.h.b16 %v5818
    %v6023 = vunpack.c.l.b16 %v5819
    %v6024 = vunpack.c.h.b16 %v5819
    %v6025 = vunpack.c.l.b16 %v5820
    %v6026 = vunpack.c.h.b16 %v5820
    %v6027 = vunpack.c.l.b16 %v5821
    %v6028 = vunpack.c.h.b16 %v5821
    %v6029 = vunpack.c.l.b16 %v5822
    %v6030 = vunpack.c.h.b16 %v5822
    %v6031 = vunpack.c.l.b16 %v5823
    %v6032 = vunpack.c.h.b16 %v5823
    %v6033 = vunpack.c.l.b16 %v5824
    %v6034 = vunpack.c.h.b16 %v5824
    %v6035 = vunpack.c.l.b16 %v5825
    %v6036 = vunpack.c.h.b16 %v5825
    %v6037 = vunpack.c.l.b16 %v5826
    %v6038 = vunpack.c.h.b16 %v5826
    %v6039 = vunpack.c.l.b16 %v5827
    %v6040 = vunpack.c.h.b16 %v5827
    %v6041 = vunpack.c.l.b16 %v5828
    %v6042 = vunpack.c.h.b16 %v5828
    %v6043 = vpack.c.b16 %v5919, %v5915
    %v6044 = vpack.c.b16 %v5920, %v5916
    %v6045 = vpack.c.b16 %v5921, %v5917
    %v6046 = vpack.c.b16 %v5922, %v5918
    %v6047 = vpack.c.b16 %v5927, %v5923
    %v6048 = vpack.c.b16 %v5928, %v5924
    %v6049 = vpack.c.b16 %v5929, %v5925
    %v6050 = vpack.c.b16 %v5930, %v5926
    %v6051 = vpack.c.b16 %v5935, %v5931
    %v6052 = vpack.c.b16 %v5936, %v5932
    %v6053 = vpack.c.b16 %v5937, %v5933
    %v6054 = vpack.c.b16 %v5938, %v5934
    %v6055 = vpack.c.b16 %v5943, %v5939
    %v6056 = vpack.c.b16 %v5944, %v5940
    %v6057 = vpack.c.b16 %v5945, %v5941
    %v6058 = vpack.c.b16 %v5946, %v5942
    %v6059 = vpack.c.b16 %v5951, %v5947
    %v6060 = vpack.c.b16 %v5952, %v5948
    %v6061 = vpack.c.b16 %v5953, %v5949
    %v6062 = vpack.c.b16 %v5954, %v5950
    %v6063 = vpack.c.b16 %v5959, %v5955
    %v6064 = vpack.c.b16 %v5960, %v5956
    %v6065 = vpack.c.b16 %v5961, %v5957
    %v6066 = vpack.c.b16 %v5962, %v5958
    %v6067 = vpack.c.b16 %v5967, %v5963
    %v6068 = vpack.c.b16 %v5968, %v5964
    %v6069 = vpack.c.b16 %v5969, %v5965
    %v6070 = vpack.c.b16 %v5970, %v5966
    %v6071 = vpack.c.b16 %v5975, %v5971
    %v6072 = vpack.c.b16 %v5976, %v5972
    %v6073 = vpack.c.b16 %v5977, %v5973
    %v6074 = vpack.c.b16 %v5978, %v5974
    %v6075 = vpack.c.b16 %v5983, %v5979
    %v6076 = vpack.c.b16 %v5984, %v5980
    %v6077 = vpack.c.b16 %v5985, %v5981
    %v6078 = vpack.c.b16 %v5986, %v5982
    %v6079 = vpack.c.b16 %v5991, %v5987
    %v6080 = vpack.c.b16 %v5992, %v5988
    %v6081 = vpack.c.b16 %v5993, %v5989
    %v6082 = vpack.c.b16 %v5994, %v5990
    %v6083 = vpack.c.b16 %v5999, %v5995
    %v6084 = vpack.c.b16 %v6000, %v5996
    %v6085 = vpack.c.b16 %v6001, %v5997
    %v6086 = vpack.c.b16 %v6002, %v5998
    %v6087 = vpack.c.b16 %v6007, %v6003
    %v6088 = vpack.c.b16 %v6008, %v6004
    %v6089 = vpack.c.b16 %v6009, %v6005
    %v6090 = vpack.c.b16 %v6010, %v6006
    %v6091 = vpack.c.b16 %v6015, %v6011
    %v6092 = vpack.c.b16 %v6016, %v6012
    %v6093 = vpack.c.b16 %v6017, %v6013
    %v6094 = vpack.c.b16 %v6018, %v6014
    %v6095 = vpack.c.b16 %v6023, %v6019
    %v6096 = vpack.c.b16 %v6024, %v6020
    %v6097 = vpack.c.b16 %v6025, %v6021
    %v6098 = vpack.c.b16 %v6026, %v6022
    %v6099 = vpack.c.b16 %v6031, %v6027
    %v6100 = vpack.c.b16 %v6032, %v6028
    %v6101 = vpack.c.b16 %v6033, %v6029
    %v6102 = vpack.c.b16 %v6034, %v6030
    %v6103 = vpack.c.b16 %v6039, %v6035
    %v6104 = vpack.c.b16 %v6040, %v6036
    %v6105 = vpack.c.b16 %v6041, %v6037
    %v6106 = vpack.c.b16 %v6042, %v6038
    %6171 = vmatprep.subr.bf16.mxu0 %v6044
    %6172 = vmatpush1.bf16.msra.mxu0 %v6043
    %6173 = vmatprep.subr.bf16.mxu0 %v6048
    %6174 = vmatpush1.bf16.msra.mxu0 %v6047
    %6175 = vmatprep.subr.bf16.mxu0 %v6052
    %6176 = vmatpush1.bf16.msra.mxu0 %v6051
    %6177 = vmatprep.subr.bf16.mxu0 %v6056
    %6178 = vmatpush1.bf16.msra.mxu0 %v6055
    %6179 = vmatprep.subr.bf16.mxu0 %v6060
    %6180 = vmatpush1.bf16.msra.mxu0 %v6059
    %6181 = vmatprep.subr.bf16.mxu0 %v6064
    %6182 = vmatpush1.bf16.msra.mxu0 %v6063
    %6183 = vmatprep.subr.bf16.mxu0 %v6068
    %6184 = vmatpush1.bf16.msra.mxu0 %v6067
    %6185 = vmatprep.subr.bf16.mxu0 %v6072
    %6186 = vmatpush1.bf16.msra.mxu0 %v6071
    %6187 = vmatprep.subr.bf16.mxu0 %v6076
    %6188 = vmatpush1.bf16.msra.mxu0 %v6075
    %6189 = vmatprep.subr.bf16.mxu0 %v6080
    %6190 = vmatpush1.bf16.msra.mxu0 %v6079
    %6191 = vmatprep.subr.bf16.mxu0 %v6084
    %6192 = vmatpush1.bf16.msra.mxu0 %v6083
    %6193 = vmatprep.subr.bf16.mxu0 %v6088
    %6194 = vmatpush1.bf16.msra.mxu0 %v6087
    %6195 = vmatprep.subr.bf16.mxu0 %v6092
    %6196 = vmatpush1.bf16.msra.mxu0 %v6091
    %6197 = vmatprep.subr.bf16.mxu0 %v6096
    %6198 = vmatpush1.bf16.msra.mxu0 %v6095
    %6199 = vmatprep.subr.bf16.mxu0 %v6100
    %6200 = vmatpush1.bf16.msra.mxu0 %v6099
    %6201 = vmatprep.subr.bf16.mxu0 %v6104
    %6202 = vmatpush1.bf16.msra.mxu0 %v6103
    %6203 = vmatprep.mubr.bf16.mxu0 %v5455
    %6204 = vmatmul.mubr.bf16.gmra.mrb[0].mxu0 %v5454
    %v6205 = vpop.f32.mrb[0].mxu0
    %v6206 = vadd.f32 %v5834, %v6205
    %v6207 = vpop.f32.mrb[0].mxu0
    %v6208 = vadd.f32 %v5838, %v6207
    %v6209 = vpop.f32.mrb[0].mxu0
    %v6210 = vpop.f32.mrb[0].mxu0
    %6211 = vdwg.mxu0
    %6212 = vmatprep.subr.bf16.mxu0 %v6046
    %6213 = vmatpush1.bf16.msra.mxu0 %v6045
    %6214 = vmatprep.subr.bf16.mxu0 %v6050
    %6215 = vmatpush1.bf16.msra.mxu0 %v6049
    %6216 = vmatprep.subr.bf16.mxu0 %v6054
    %6217 = vmatpush1.bf16.msra.mxu0 %v6053
    %6218 = vmatprep.subr.bf16.mxu0 %v6058
    %6219 = vmatpush1.bf16.msra.mxu0 %v6057
    %6220 = vmatprep.subr.bf16.mxu0 %v6062
    %6221 = vmatpush1.bf16.msra.mxu0 %v6061
    %6222 = vmatprep.subr.bf16.mxu0 %v6066
    %6223 = vmatpush1.bf16.msra.mxu0 %v6065
    %6224 = vmatprep.subr.bf16.mxu0 %v6070
    %6225 = vmatpush1.bf16.msra.mxu0 %v6069
    %6226 = vmatprep.subr.bf16.mxu0 %v6074
    %6227 = vmatpush1.bf16.msra.mxu0 %v6073
    %6228 = vmatprep.subr.bf16.mxu0 %v6078
    %6229 = vmatpush1.bf16.msra.mxu0 %v6077
    %6230 = vmatprep.subr.bf16.mxu0 %v6082
    %6231 = vmatpush1.bf16.msra.mxu0 %v6081
    %6232 = vmatprep.subr.bf16.mxu0 %v6086
    %6233 = vmatpush1.bf16.msra.mxu0 %v6085
    %6234 = vmatprep.subr.bf16.mxu0 %v6090
    %6235 = vmatpush1.bf16.msra.mxu0 %v6089
    %6236 = vmatprep.subr.bf16.mxu0 %v6094
    %6237 = vmatpush1.bf16.msra.mxu0 %v6093
    %6238 = vmatprep.subr.bf16.mxu0 %v6098
    %6239 = vmatpush1.bf16.msra.mxu0 %v6097
    %6240 = vmatprep.subr.bf16.mxu0 %v6102
    %6241 = vmatpush1.bf16.msra.mxu0 %v6101
    %6242 = vmatprep.subr.bf16.mxu0 %v6106
    %6243 = vmatpush1.bf16.msra.mxu0 %v6105
    %6244 = vmatprep.mubr.bf16.mxu0 %v5455
    %6245 = vmatmul.mubr.bf16.gmra.mrb[0].mxu0 %v5454
    %v6246 = vpop.f32.mrb[0].mxu0
    %v6247 = vadd.f32 %v5842, %v6246
    %v6248 = vpop.f32.mrb[0].mxu0
    %v6249 = vadd.f32 %v5846, %v6248
    %v6250 = vpop.f32.mrb[0].mxu0
    %v6251 = vpop.f32.mrb[0].mxu0
    %6252 = vdwg.mxu0
    %v6253 = vxor.u32 %v6206, 2147483648
    %v6254 = vmul.f32 %v6253, 1.442695
    %v6255 = vpow.pop %v6254
    %v6256 = vadd.f32 %v6255, 1.0
    %v6257 = vrcp.pop %v6256
    %v6258 = vmul.f32 1.0, %v6257
    %v6259 = vxor.u32 %v6208, 2147483648
    %v6260 = vmul.f32 %v6259, 1.442695
    %v6261 = vpow.pop %v6260
    %v6262 = vadd.f32 %v6261, 1.0
    %v6263 = vrcp.pop %v6262
    %v6264 = vmul.f32 1.0, %v6263
    %v6265 = vtanh.pop %v6247
    %v6266 = vxor.u32 %v6249, 2147483648
    %v6267 = vmul.f32 %v6266, 1.442695
    %v6268 = vpow.pop %v6267
    %v6269 = vadd.f32 %v6268, 1.0
    %v6270 = vrcp.pop %v6269
    %v6271 = vmul.f32 1.0, %v6270
    %v6272 = vmul.f32 %v6264, %v5449
    %v6273 = vmul.f32 %v6258, %v6265
    %v6274 = vadd.f32 %v6272, %v6273
    %v6275 = vtanh.pop %v6274
    %v6276 = vmul.f32 %v6271, %v6275
    %s6277 = scalar_lea.vmem [#allocation3], 48
    %6278 = vst [vmem:[%s6277] sm:$0xff] %v6276
    %v6279 = vpack.c.bf16 %v5764, %v5764
    %v6280 = vpack.c.bf16 %v6276, %v6276
    %v6281 = vld [vmem:[%s4] sm:$0xff]
    %v6282 = vld [vmem:[%s4 + $0x8] sm:$0xff]
    %v6283 = vld [vmem:[%s4 + $0x10] sm:$0xff]
    %v6284 = vld [vmem:[%s4 + $0x18] sm:$0xff]
    %v6285 = vld [vmem:[%s4 + $0x20] sm:$0xff]
    %v6286 = vld [vmem:[%s4 + $0x28] sm:$0xff]
    %v6287 = vld [vmem:[%s4 + $0x30] sm:$0xff]
    %v6288 = vld [vmem:[%s4 + $0x38] sm:$0xff]
    %v6289 = vld [vmem:[%s4 + $0x40] sm:$0xff]
    %v6290 = vld [vmem:[%s4 + $0x48] sm:$0xff]
    %v6291 = vld [vmem:[%s4 + $0x50] sm:$0xff]
    %v6292 = vld [vmem:[%s4 + $0x58] sm:$0xff]
    %v6293 = vld [vmem:[%s4 + $0x60] sm:$0xff]
    %v6294 = vld [vmem:[%s4 + $0x68] sm:$0xff]
    %v6295 = vld [vmem:[%s4 + $0x70] sm:$0xff]
    %v6296 = vld [vmem:[%s4 + $0x78] sm:$0xff]
    %v6297 = vld [vmem:[%s4 + $0x80] sm:$0xff]
    %v6298 = vld [vmem:[%s4 + $0x88] sm:$0xff]
    %v6299 = vld [vmem:[%s4 + $0x90] sm:$0xff]
    %v6300 = vld [vmem:[%s4 + $0x98] sm:$0xff]
    %v6301 = vld [vmem:[%s4 + $0xa0] sm:$0xff]
    %v6302 = vld [vmem:[%s4 + $0xa8] sm:$0xff]
    %v6303 = vld [vmem:[%s4 + $0xb0] sm:$0xff]
    %v6304 = vld [vmem:[%s4 + $0xb8] sm:$0xff]
    %v6305 = vld [vmem:[%s4 + $0xc0] sm:$0xff]
    %v6306 = vld [vmem:[%s4 + $0xc8] sm:$0xff]
    %v6307 = vld [vmem:[%s4 + $0xd0] sm:$0xff]
    %v6308 = vld [vmem:[%s4 + $0xd8] sm:$0xff]
    %v6309 = vld [vmem:[%s4 + $0xe0] sm:$0xff]
    %v6310 = vld [vmem:[%s4 + $0xe8] sm:$0xff]
    %v6311 = vld [vmem:[%s4 + $0xf0] sm:$0xff]
    %v6312 = vld [vmem:[%s4 + $0xf8] sm:$0xff]
    %v6313 = vld [vmem:[%s4 + $0x100] sm:$0xff]
    %v6314 = vld [vmem:[%s4 + $0x108] sm:$0xff]
    %v6315 = vld [vmem:[%s4 + $0x110] sm:$0xff]
    %v6316 = vld [vmem:[%s4 + $0x118] sm:$0xff]
    %v6317 = vld [vmem:[%s4 + $0x120] sm:$0xff]
    %v6318 = vld [vmem:[%s4 + $0x128] sm:$0xff]
    %v6319 = vld [vmem:[%s4 + $0x130] sm:$0xff]
    %v6320 = vld [vmem:[%s4 + $0x138] sm:$0xff]
    %v6321 = vld [vmem:[%s4 + $0x140] sm:$0xff]
    %v6322 = vld [vmem:[%s4 + $0x148] sm:$0xff]
    %v6323 = vld [vmem:[%s4 + $0x150] sm:$0xff]
    %v6324 = vld [vmem:[%s4 + $0x158] sm:$0xff]
    %v6325 = vld [vmem:[%s4 + $0x160] sm:$0xff]
    %v6326 = vld [vmem:[%s4 + $0x168] sm:$0xff]
    %v6327 = vld [vmem:[%s4 + $0x170] sm:$0xff]
    %v6328 = vld [vmem:[%s4 + $0x178] sm:$0xff]
    %v6329 = vld [vmem:[%s4 + $0x180] sm:$0xff]
    %v6330 = vld [vmem:[%s4 + $0x188] sm:$0xff]
    %v6331 = vld [vmem:[%s4 + $0x190] sm:$0xff]
    %v6332 = vld [vmem:[%s4 + $0x198] sm:$0xff]
    %v6333 = vld [vmem:[%s4 + $0x1a0] sm:$0xff]
    %v6334 = vld [vmem:[%s4 + $0x1a8] sm:$0xff]
    %v6335 = vld [vmem:[%s4 + $0x1b0] sm:$0xff]
    %v6336 = vld [vmem:[%s4 + $0x1b8] sm:$0xff]
    %v6337 = vld [vmem:[%s4 + $0x1c0] sm:$0xff]
    %v6338 = vld [vmem:[%s4 + $0x1c8] sm:$0xff]
    %v6339 = vld [vmem:[%s4 + $0x1d0] sm:$0xff]
    %v6340 = vld [vmem:[%s4 + $0x1d8] sm:$0xff]
    %v6341 = vld [vmem:[%s4 + $0x1e0] sm:$0xff]
    %v6342 = vld [vmem:[%s4 + $0x1e8] sm:$0xff]
    %v6343 = vld [vmem:[%s4 + $0x1f0] sm:$0xff]
    %v6344 = vld [vmem:[%s4 + $0x1f8] sm:$0xff]
    %v6345 = vld [vmem:[#allocation9] sm:$0xf]
    %v6347 = vlaneseq
    %v6348 = vshrl.u32 %v6347, 7
    %v6349 = vsub.s32 0, %v6348
    %v6350 = vrot.slane %v6345, %v6349
    %v6351 = vlaneseq
    %v6352 = vshrl.u32 %v6351, 7
    %v6353 = vsub.s32 1, %v6352
    %v6354 = vrot.slane %v6345, %v6353
    %v6355 = vlaneseq
    %v6356 = vshrl.u32 %v6355, 7
    %v6357 = vsub.s32 2, %v6356
    %v6358 = vrot.slane %v6345, %v6357
    %v6359 = vlaneseq
    %v6360 = vshrl.u32 %v6359, 7
    %v6361 = vsub.s32 3, %v6360
    %v6362 = vrot.slane %v6345, %v6361
    %v6431 = vunpack.c.l.b16 %v6281
    %v6432 = vunpack.c.h.b16 %v6281
    %v6433 = vunpack.c.l.b16 %v6282
    %v6434 = vunpack.c.h.b16 %v6282
    %v6435 = vunpack.c.l.b16 %v6283
    %v6436 = vunpack.c.h.b16 %v6283
    %v6437 = vunpack.c.l.b16 %v6284
    %v6438 = vunpack.c.h.b16 %v6284
    %v6439 = vunpack.c.l.b16 %v6285
    %v6440 = vunpack.c.h.b16 %v6285
    %v6441 = vunpack.c.l.b16 %v6286
    %v6442 = vunpack.c.h.b16 %v6286
    %v6443 = vunpack.c.l.b16 %v6287
    %v6444 = vunpack.c.h.b16 %v6287
    %v6445 = vunpack.c.l.b16 %v6288
    %v6446 = vunpack.c.h.b16 %v6288
    %v6447 = vunpack.c.l.b16 %v6289
    %v6448 = vunpack.c.h.b16 %v6289
    %v6449 = vunpack.c.l.b16 %v6290
    %v6450 = vunpack.c.h.b16 %v6290
    %v6451 = vunpack.c.l.b16 %v6291
    %v6452 = vunpack.c.h.b16 %v6291
    %v6453 = vunpack.c.l.b16 %v6292
    %v6454 = vunpack.c.h.b16 %v6292
    %v6455 = vunpack.c.l.b16 %v6293
    %v6456 = vunpack.c.h.b16 %v6293
    %v6457 = vunpack.c.l.b16 %v6294
    %v6458 = vunpack.c.h.b16 %v6294
    %v6459 = vunpack.c.l.b16 %v6295
    %v6460 = vunpack.c.h.b16 %v6295
    %v6461 = vunpack.c.l.b16 %v6296
    %v6462 = vunpack.c.h.b16 %v6296
    %v6463 = vunpack.c.l.b16 %v6297
    %v6464 = vunpack.c.h.b16 %v6297
    %v6465 = vunpack.c.l.b16 %v6298
    %v6466 = vunpack.c.h.b16 %v6298
    %v6467 = vunpack.c.l.b16 %v6299
    %v6468 = vunpack.c.h.b16 %v6299
    %v6469 = vunpack.c.l.b16 %v6300
    %v6470 = vunpack.c.h.b16 %v6300
    %v6471 = vunpack.c.l.b16 %v6301
    %v6472 = vunpack.c.h.b16 %v6301
    %v6473 = vunpack.c.l.b16 %v6302
    %v6474 = vunpack.c.h.b16 %v6302
    %v6475 = vunpack.c.l.b16 %v6303
    %v6476 = vunpack.c.h.b16 %v6303
    %v6477 = vunpack.c.l.b16 %v6304
    %v6478 = vunpack.c.h.b16 %v6304
    %v6479 = vunpack.c.l.b16 %v6305
    %v6480 = vunpack.c.h.b16 %v6305
    %v6481 = vunpack.c.l.b16 %v6306
    %v6482 = vunpack.c.h.b16 %v6306
    %v6483 = vunpack.c.l.b16 %v6307
    %v6484 = vunpack.c.h.b16 %v6307
    %v6485 = vunpack.c.l.b16 %v6308
    %v6486 = vunpack.c.h.b16 %v6308
    %v6487 = vunpack.c.l.b16 %v6309
    %v6488 = vunpack.c.h.b16 %v6309
    %v6489 = vunpack.c.l.b16 %v6310
    %v6490 = vunpack.c.h.b16 %v6310
    %v6491 = vunpack.c.l.b16 %v6311
    %v6492 = vunpack.c.h.b16 %v6311
    %v6493 = vunpack.c.l.b16 %v6312
    %v6494 = vunpack.c.h.b16 %v6312
    %v6495 = vunpack.c.l.b16 %v6313
    %v6496 = vunpack.c.h.b16 %v6313
    %v6497 = vunpack.c.l.b16 %v6314
    %v6498 = vunpack.c.h.b16 %v6314
    %v6499 = vunpack.c.l.b16 %v6315
    %v6500 = vunpack.c.h.b16 %v6315
    %v6501 = vunpack.c.l.b16 %v6316
    %v6502 = vunpack.c.h.b16 %v6316
    %v6503 = vunpack.c.l.b16 %v6317
    %v6504 = vunpack.c.h.b16 %v6317
    %v6505 = vunpack.c.l.b16 %v6318
    %v6506 = vunpack.c.h.b16 %v6318
    %v6507 = vunpack.c.l.b16 %v6319
    %v6508 = vunpack.c.h.b16 %v6319
    %v6509 = vunpack.c.l.b16 %v6320
    %v6510 = vunpack.c.h.b16 %v6320
    %v6511 = vunpack.c.l.b16 %v6321
    %v6512 = vunpack.c.h.b16 %v6321
    %v6513 = vunpack.c.l.b16 %v6322
    %v6514 = vunpack.c.h.b16 %v6322
    %v6515 = vunpack.c.l.b16 %v6323
    %v6516 = vunpack.c.h.b16 %v6323
    %v6517 = vunpack.c.l.b16 %v6324
    %v6518 = vunpack.c.h.b16 %v6324
    %v6519 = vunpack.c.l.b16 %v6325
    %v6520 = vunpack.c.h.b16 %v6325
    %v6521 = vunpack.c.l.b16 %v6326
    %v6522 = vunpack.c.h.b16 %v6326
    %v6523 = vunpack.c.l.b16 %v6327
    %v6524 = vunpack.c.h.b16 %v6327
    %v6525 = vunpack.c.l.b16 %v6328
    %v6526 = vunpack.c.h.b16 %v6328
    %v6527 = vunpack.c.l.b16 %v6329
    %v6528 = vunpack.c.h.b16 %v6329
    %v6529 = vunpack.c.l.b16 %v6330
    %v6530 = vunpack.c.h.b16 %v6330
    %v6531 = vunpack.c.l.b16 %v6331
    %v6532 = vunpack.c.h.b16 %v6331
    %v6533 = vunpack.c.l.b16 %v6332
    %v6534 = vunpack.c.h.b16 %v6332
    %v6535 = vunpack.c.l.b16 %v6333
    %v6536 = vunpack.c.h.b16 %v6333
    %v6537 = vunpack.c.l.b16 %v6334
    %v6538 = vunpack.c.h.b16 %v6334
    %v6539 = vunpack.c.l.b16 %v6335
    %v6540 = vunpack.c.h.b16 %v6335
    %v6541 = vunpack.c.l.b16 %v6336
    %v6542 = vunpack.c.h.b16 %v6336
    %v6543 = vunpack.c.l.b16 %v6337
    %v6544 = vunpack.c.h.b16 %v6337
    %v6545 = vunpack.c.l.b16 %v6338
    %v6546 = vunpack.c.h.b16 %v6338
    %v6547 = vunpack.c.l.b16 %v6339
    %v6548 = vunpack.c.h.b16 %v6339
    %v6549 = vunpack.c.l.b16 %v6340
    %v6550 = vunpack.c.h.b16 %v6340
    %v6551 = vunpack.c.l.b16 %v6341
    %v6552 = vunpack.c.h.b16 %v6341
    %v6553 = vunpack.c.l.b16 %v6342
    %v6554 = vunpack.c.h.b16 %v6342
    %v6555 = vunpack.c.l.b16 %v6343
    %v6556 = vunpack.c.h.b16 %v6343
    %v6557 = vunpack.c.l.b16 %v6344
    %v6558 = vunpack.c.h.b16 %v6344
    %v6559 = vpack.c.b16 %v6435, %v6431
    %v6560 = vpack.c.b16 %v6436, %v6432
    %v6561 = vpack.c.b16 %v6437, %v6433
    %v6562 = vpack.c.b16 %v6438, %v6434
    %v6563 = vpack.c.b16 %v6443, %v6439
    %v6564 = vpack.c.b16 %v6444, %v6440
    %v6565 = vpack.c.b16 %v6445, %v6441
    %v6566 = vpack.c.b16 %v6446, %v6442
    %v6567 = vpack.c.b16 %v6451, %v6447
    %v6568 = vpack.c.b16 %v6452, %v6448
    %v6569 = vpack.c.b16 %v6453, %v6449
    %v6570 = vpack.c.b16 %v6454, %v6450
    %v6571 = vpack.c.b16 %v6459, %v6455
    %v6572 = vpack.c.b16 %v6460, %v6456
    %v6573 = vpack.c.b16 %v6461, %v6457
    %v6574 = vpack.c.b16 %v6462, %v6458
    %v6575 = vpack.c.b16 %v6467, %v6463
    %v6576 = vpack.c.b16 %v6468, %v6464
    %v6577 = vpack.c.b16 %v6469, %v6465
    %v6578 = vpack.c.b16 %v6470, %v6466
    %v6579 = vpack.c.b16 %v6475, %v6471
    %v6580 = vpack.c.b16 %v6476, %v6472
    %v6581 = vpack.c.b16 %v6477, %v6473
    %v6582 = vpack.c.b16 %v6478, %v6474
    %v6583 = vpack.c.b16 %v6483, %v6479
    %v6584 = vpack.c.b16 %v6484, %v6480
    %v6585 = vpack.c.b16 %v6485, %v6481
    %v6586 = vpack.c.b16 %v6486, %v6482
    %v6587 = vpack.c.b16 %v6491, %v6487
    %v6588 = vpack.c.b16 %v6492, %v6488
    %v6589 = vpack.c.b16 %v6493, %v6489
    %v6590 = vpack.c.b16 %v6494, %v6490
    %v6591 = vpack.c.b16 %v6499, %v6495
    %v6592 = vpack.c.b16 %v6500, %v6496
    %v6593 = vpack.c.b16 %v6501, %v6497
    %v6594 = vpack.c.b16 %v6502, %v6498
    %v6595 = vpack.c.b16 %v6507, %v6503
    %v6596 = vpack.c.b16 %v6508, %v6504
    %v6597 = vpack.c.b16 %v6509, %v6505
    %v6598 = vpack.c.b16 %v6510, %v6506
    %v6599 = vpack.c.b16 %v6515, %v6511
    %v6600 = vpack.c.b16 %v6516, %v6512
    %v6601 = vpack.c.b16 %v6517, %v6513
    %v6602 = vpack.c.b16 %v6518, %v6514
    %v6603 = vpack.c.b16 %v6523, %v6519
    %v6604 = vpack.c.b16 %v6524, %v6520
    %v6605 = vpack.c.b16 %v6525, %v6521
    %v6606 = vpack.c.b16 %v6526, %v6522
    %v6607 = vpack.c.b16 %v6531, %v6527
    %v6608 = vpack.c.b16 %v6532, %v6528
    %v6609 = vpack.c.b16 %v6533, %v6529
    %v6610 = vpack.c.b16 %v6534, %v6530
    %v6611 = vpack.c.b16 %v6539, %v6535
    %v6612 = vpack.c.b16 %v6540, %v6536
    %v6613 = vpack.c.b16 %v6541, %v6537
    %v6614 = vpack.c.b16 %v6542, %v6538
    %v6615 = vpack.c.b16 %v6547, %v6543
    %v6616 = vpack.c.b16 %v6548, %v6544
    %v6617 = vpack.c.b16 %v6549, %v6545
    %v6618 = vpack.c.b16 %v6550, %v6546
    %v6619 = vpack.c.b16 %v6555, %v6551
    %v6620 = vpack.c.b16 %v6556, %v6552
    %v6621 = vpack.c.b16 %v6557, %v6553
    %v6622 = vpack.c.b16 %v6558, %v6554
    %6687 = vmatprep.subr.bf16.mxu0 %v6560
    %6688 = vmatpush1.bf16.msra.mxu0 %v6559
    %6689 = vmatprep.subr.bf16.mxu0 %v6564
    %6690 = vmatpush1.bf16.msra.mxu0 %v6563
    %6691 = vmatprep.subr.bf16.mxu0 %v6568
    %6692 = vmatpush1.bf16.msra.mxu0 %v6567
    %6693 = vmatprep.subr.bf16.mxu0 %v6572
    %6694 = vmatpush1.bf16.msra.mxu0 %v6571
    %6695 = vmatprep.subr.bf16.mxu0 %v6576
    %6696 = vmatpush1.bf16.msra.mxu0 %v6575
    %6697 = vmatprep.subr.bf16.mxu0 %v6580
    %6698 = vmatpush1.bf16.msra.mxu0 %v6579
    %6699 = vmatprep.subr.bf16.mxu0 %v6584
    %6700 = vmatpush1.bf16.msra.mxu0 %v6583
    %6701 = vmatprep.subr.bf16.mxu0 %v6588
    %6702 = vmatpush1.bf16.msra.mxu0 %v6587
    %6703 = vmatprep.subr.bf16.mxu0 %v6592
    %6704 = vmatpush1.bf16.msra.mxu0 %v6591
    %6705 = vmatprep.subr.bf16.mxu0 %v6596
    %6706 = vmatpush1.bf16.msra.mxu0 %v6595
    %6707 = vmatprep.subr.bf16.mxu0 %v6600
    %6708 = vmatpush1.bf16.msra.mxu0 %v6599
    %6709 = vmatprep.subr.bf16.mxu0 %v6604
    %6710 = vmatpush1.bf16.msra.mxu0 %v6603
    %6711 = vmatprep.subr.bf16.mxu0 %v6608
    %6712 = vmatpush1.bf16.msra.mxu0 %v6607
    %6713 = vmatprep.subr.bf16.mxu0 %v6612
    %6714 = vmatpush1.bf16.msra.mxu0 %v6611
    %6715 = vmatprep.subr.bf16.mxu0 %v6616
    %6716 = vmatpush1.bf16.msra.mxu0 %v6615
    %6717 = vmatprep.subr.bf16.mxu0 %v6620
    %6718 = vmatpush1.bf16.msra.mxu0 %v6619
    %6719 = vmatprep.mubr.bf16.mxu0 %v6280
    %6720 = vmatmul.mubr.bf16.gmra.mrb[0].mxu0 %v6279
    %v6721 = vpop.f32.mrb[0].mxu0
    %v6722 = vadd.f32 %v6350, %v6721
    %v6723 = vpop.f32.mrb[0].mxu0
    %v6724 = vadd.f32 %v6354, %v6723
    %v6725 = vpop.f32.mrb[0].mxu0
    %v6726 = vpop.f32.mrb[0].mxu0
    %6727 = vdwg.mxu0
    %6728 = vmatprep.subr.bf16.mxu0 %v6562
    %6729 = vmatpush1.bf16.msra.mxu0 %v6561
    %6730 = vmatprep.subr.bf16.mxu0 %v6566
    %6731 = vmatpush1.bf16.msra.mxu0 %v6565
    %6732 = vmatprep.subr.bf16.mxu0 %v6570
    %6733 = vmatpush1.bf16.msra.mxu0 %v6569
    %6734 = vmatprep.subr.bf16.mxu0 %v6574
    %6735 = vmatpush1.bf16.msra.mxu0 %v6573
    %6736 = vmatprep.subr.bf16.mxu0 %v6578
    %6737 = vmatpush1.bf16.msra.mxu0 %v6577
    %6738 = vmatprep.subr.bf16.mxu0 %v6582
    %6739 = vmatpush1.bf16.msra.mxu0 %v6581
    %6740 = vmatprep.subr.bf16.mxu0 %v6586
    %6741 = vmatpush1.bf16.msra.mxu0 %v6585
    %6742 = vmatprep.subr.bf16.mxu0 %v6590
    %6743 = vmatpush1.bf16.msra.mxu0 %v6589
    %6744 = vmatprep.subr.bf16.mxu0 %v6594
    %6745 = vmatpush1.bf16.msra.mxu0 %v6593
    %6746 = vmatprep.subr.bf16.mxu0 %v6598
    %6747 = vmatpush1.bf16.msra.mxu0 %v6597
    %6748 = vmatprep.subr.bf16.mxu0 %v6602
    %6749 = vmatpush1.bf16.msra.mxu0 %v6601
    %6750 = vmatprep.subr.bf16.mxu0 %v6606
    %6751 = vmatpush1.bf16.msra.mxu0 %v6605
    %6752 = vmatprep.subr.bf16.mxu0 %v6610
    %6753 = vmatpush1.bf16.msra.mxu0 %v6609
    %6754 = vmatprep.subr.bf16.mxu0 %v6614
    %6755 = vmatpush1.bf16.msra.mxu0 %v6613
    %6756 = vmatprep.subr.bf16.mxu0 %v6618
    %6757 = vmatpush1.bf16.msra.mxu0 %v6617
    %6758 = vmatprep.subr.bf16.mxu0 %v6622
    %6759 = vmatpush1.bf16.msra.mxu0 %v6621
    %6760 = vmatprep.mubr.bf16.mxu0 %v6280
    %6761 = vmatmul.mubr.bf16.gmra.mrb[0].mxu0 %v6279
    %v6762 = vpop.f32.mrb[0].mxu0
    %v6763 = vadd.f32 %v6358, %v6762
    %v6764 = vpop.f32.mrb[0].mxu0
    %v6765 = vadd.f32 %v6362, %v6764
    %v6766 = vpop.f32.mrb[0].mxu0
    %v6767 = vpop.f32.mrb[0].mxu0
    %6768 = vdwg.mxu0
    %v6769 = vxor.u32 %v6722, 2147483648
    %v6770 = vmul.f32 %v6769, 1.442695
    %v6771 = vpow.pop %v6770
    %v6772 = vadd.f32 %v6771, 1.0
    %v6773 = vrcp.pop %v6772
    %v6774 = vmul.f32 1.0, %v6773
    %v6775 = vxor.u32 %v6724, 2147483648
    %v6776 = vmul.f32 %v6775, 1.442695
    %v6777 = vpow.pop %v6776
    %v6778 = vadd.f32 %v6777, 1.0
    %v6779 = vrcp.pop %v6778
    %v6780 = vmul.f32 1.0, %v6779
    %v6781 = vtanh.pop %v6763
    %v6782 = vxor.u32 %v6765, 2147483648
    %v6783 = vmul.f32 %v6782, 1.442695
    %v6784 = vpow.pop %v6783
    %v6785 = vadd.f32 %v6784, 1.0
    %v6786 = vrcp.pop %v6785
    %v6787 = vmul.f32 1.0, %v6786
    %v6788 = vmul.f32 %v6780, %v6274
    %v6789 = vmul.f32 %v6774, %v6781
    %v6790 = vadd.f32 %v6788, %v6789
    %v6791 = vtanh.pop %v6790
    %v6792 = vmul.f32 %v6787, %v6791
    %6793 = vst [vmem:[#allocation3 + $0x38] sm:$0xff] %v6792
    %v6794 = vld [vmem:[#allocation3] sm:$0xff]
    %v6795 = vld [vmem:[#allocation3 + $0x8] sm:$0xff]
    %v6796 = vld [vmem:[#allocation3 + $0x10] sm:$0xff]
    %v6797 = vld [vmem:[#allocation3 + $0x18] sm:$0xff]
    %v6798 = vld [vmem:[#allocation3 + $0x20] sm:$0xff]
    %v6799 = vld [vmem:[#allocation3 + $0x28] sm:$0xff]
    %v6800 = vld [vmem:[#allocation3 + $0x30] sm:$0xff]
    %v6801 = vld [vmem:[#allocation3 + $0x38] sm:$0xff]
    %v6802 = vpack.c.bf16 %v6795, %v6794
    %v6803 = vpack.c.bf16 %v6797, %v6796
    %v6804 = vpack.c.bf16 %v6799, %v6798
    %v6805 = vpack.c.bf16 %v6801, %v6800
    %v6806 = vld [vmem:[#allocation11] sm:$0xf]
    %v6807 = vld [vmem:[#allocation11 + $0x4] sm:$0xf]
    %v6808 = vld [vmem:[#allocation11 + $0x8] sm:$0xf]
    %v6809 = vld [vmem:[#allocation11 + $0xc] sm:$0xf]
    %v6810 = vld [vmem:[#allocation11 + $0x10] sm:$0xf]
    %v6811 = vld [vmem:[#allocation11 + $0x14] sm:$0xf]
    %v6812 = vld [vmem:[#allocation11 + $0x18] sm:$0xf]
    %v6813 = vld [vmem:[#allocation11 + $0x1c] sm:$0xf]
    %v6814 = vld [vmem:[#allocation11 + $0x20] sm:$0xf]
    %v6815 = vld [vmem:[#allocation11 + $0x24] sm:$0xf]
    %v6816 = vld [vmem:[#allocation11 + $0x28] sm:$0xf]
    %v6817 = vld [vmem:[#allocation11 + $0x2c] sm:$0xf]
    %v6818 = vld [vmem:[#allocation11 + $0x30] sm:$0xf]
    %v6819 = vld [vmem:[#allocation11 + $0x34] sm:$0xf]
    %v6820 = vld [vmem:[#allocation11 + $0x38] sm:$0xf]
    %v6821 = vld [vmem:[#allocation11 + $0x3c] sm:$0xf]
    %v6822 = vld [vmem:[%s7] sm:$0x1]
    %v6824 = vlaneseq
    %v6825 = vshrl.u32 %v6824, 7
    %v6826 = vsub.s32 0, %v6825
    %v6827 = vrot.slane %v6822, %v6826
    %v6845 = vunpack.c.l.b16 %v6806
    %v6846 = vunpack.c.l.b16 %v6807
    %v6847 = vunpack.c.l.b16 %v6808
    %v6848 = vunpack.c.l.b16 %v6809
    %v6849 = vunpack.c.l.b16 %v6810
    %v6850 = vunpack.c.l.b16 %v6811
    %v6851 = vunpack.c.l.b16 %v6812
    %v6852 = vunpack.c.l.b16 %v6813
    %v6853 = vunpack.c.l.b16 %v6814
    %v6854 = vunpack.c.l.b16 %v6815
    %v6855 = vunpack.c.l.b16 %v6816
    %v6856 = vunpack.c.l.b16 %v6817
    %v6857 = vunpack.c.l.b16 %v6818
    %v6858 = vunpack.c.l.b16 %v6819
    %v6859 = vunpack.c.l.b16 %v6820
    %v6860 = vunpack.c.l.b16 %v6821
    %v6861 = vpack.c.b16 %v6846, %v6845
    %v6862 = vpack.c.b16 %v6848, %v6847
    %v6863 = vpack.c.b16 %v6850, %v6849
    %v6864 = vpack.c.b16 %v6852, %v6851
    %v6865 = vpack.c.b16 %v6854, %v6853
    %v6866 = vpack.c.b16 %v6856, %v6855
    %v6867 = vpack.c.b16 %v6858, %v6857
    %v6868 = vpack.c.b16 %v6860, %v6859
    %6877 = vmatprep.subr.bf16.mxu0 0
    %6878 = vmatpush1.bf16.msra.mxu0 %v6861
    %6879 = vmatprep.subr.bf16.mxu0 0
    %6880 = vmatpush1.bf16.msra.mxu0 %v6862
    %6881 = vmatprep.subr.bf16.mxu0 0
    %6882 = vmatpush1.bf16.msra.mxu0 %v6863
    %6883 = vmatprep.subr.bf16.mxu0 0
    %6884 = vmatpush1.bf16.msra.mxu0 %v6864
    %6885 = vmatprep.subr.bf16.mxu0 0
    %6886 = vmatpush1.bf16.msra.mxu0 %v6865
    %6887 = vmatprep.subr.bf16.mxu0 0
    %6888 = vmatpush1.bf16.msra.mxu0 %v6866
    %6889 = vmatprep.subr.bf16.mxu0 0
    %6890 = vmatpush1.bf16.msra.mxu0 %v6867
    %6891 = vmatprep.subr.bf16.mxu0 0
    %6892 = vmatpush1.bf16.msra.mxu0 %v6868
    %6893 = vmatprep.subr.bf16.mxu0 0
    %6894 = vmatpush1.bf16.msra.mxu0 0
    %6895 = vmatprep.subr.bf16.mxu0 0
    %6896 = vmatpush1.bf16.msra.mxu0 0
    %6897 = vmatprep.subr.bf16.mxu0 0
    %6898 = vmatpush1.bf16.msra.mxu0 0
    %6899 = vmatprep.subr.bf16.mxu0 0
    %6900 = vmatpush1.bf16.msra.mxu0 0
    %6901 = vmatprep.subr.bf16.mxu0 0
    %6902 = vmatpush1.bf16.msra.mxu0 0
    %6903 = vmatprep.subr.bf16.mxu0 0
    %6904 = vmatpush1.bf16.msra.mxu0 0
    %6905 = vmatprep.subr.bf16.mxu0 0
    %6906 = vmatpush1.bf16.msra.mxu0 0
    %6907 = vmatprep.subr.bf16.mxu0 0
    %6908 = vmatpush1.bf16.msra.mxu0 0
    %6909 = vmatprep.mubr.bf16.mxu0 0
    %6910 = vmatmul.mubr.bf16.gmra.mrb[0].mxu0 %v6802
    %v6911 = vpop.f32.mrb[0].mxu0
    %v6912 = vadd.f32 %v6827, %v6911
    %v6913 = vpop.f32.mrb[0].mxu0
    %v6914 = vpop.f32.mrb[0].mxu0
    %v6915 = vadd.f32 %v6827, %v6914
    %v6916 = vpop.f32.mrb[0].mxu0
    %6917 = vmatprep.mubr.bf16.mxu0 0
    %6918 = vmatmul.mubr.bf16.gmra.mrb[0].mxu0 %v6803
    %v6919 = vpop.f32.mrb[0].mxu0
    %v6920 = vadd.f32 %v6827, %v6919
    %v6921 = vpop.f32.mrb[0].mxu0
    %v6922 = vpop.f32.mrb[0].mxu0
    %v6923 = vadd.f32 %v6827, %v6922
    %v6924 = vpop.f32.mrb[0].mxu0
    %6925 = vmatprep.mubr.bf16.mxu0 0
    %6926 = vmatmul.mubr.bf16.gmra.mrb[0].mxu0 %v6804
    %v6927 = vpop.f32.mrb[0].mxu0
    %v6928 = vadd.f32 %v6827, %v6927
    %v6929 = vpop.f32.mrb[0].mxu0
    %v6930 = vpop.f32.mrb[0].mxu0
    %v6931 = vadd.f32 %v6827, %v6930
    %v6932 = vpop.f32.mrb[0].mxu0
    %6933 = vmatprep.mubr.bf16.mxu0 0
    %6934 = vmatmul.mubr.bf16.gmra.mrb[0].mxu0 %v6805
    %v6935 = vpop.f32.mrb[0].mxu0
    %v6936 = vadd.f32 %v6827, %v6935
    %v6937 = vpop.f32.mrb[0].mxu0
    %v6938 = vpop.f32.mrb[0].mxu0
    %v6939 = vadd.f32 %v6827, %v6938
    %v6940 = vpop.f32.mrb[0].mxu0
    %6941 = vdwg.mxu0
    %6942 = vadd.xlane.f32.xlu0 %v6912
    %v6943 = vpop.xlane.xlu0 %6942
    %6944 = vadd.xlane.f32.xlu0 %v6915
    %v6945 = vpop.xlane.xlu0 %6944
    %6946 = vadd.xlane.f32.xlu0 %v6920
    %v6947 = vpop.xlane.xlu0 %6946
    %6948 = vadd.xlane.f32.xlu0 %v6923
    %v6949 = vpop.xlane.xlu0 %6948
    %6950 = vadd.xlane.f32.xlu0 %v6928
    %v6951 = vpop.xlane.xlu0 %6950
    %6952 = vadd.xlane.f32.xlu0 %v6931
    %v6953 = vpop.xlane.xlu0 %6952
    %6954 = vadd.xlane.f32.xlu0 %v6936
    %v6955 = vpop.xlane.xlu0 %6954
    %6956 = vadd.xlane.f32.xlu0 %v6939
    %v6957 = vpop.xlane.xlu0 %6956
    %v6958 = vrcp.pop 128.0
    %v6959 = vmul.f32 %v6943, %v6958
    %v6960 = vmul.f32 %v6945, %v6958
    %v6961 = vmul.f32 %v6947, %v6958
    %v6962 = vmul.f32 %v6949, %v6958
    %v6963 = vmul.f32 %v6951, %v6958
    %v6964 = vmul.f32 %v6953, %v6958
    %v6965 = vmul.f32 %v6955, %v6958
    %v6966 = vmul.f32 %v6957, %v6958
    %v6967 = vmul.f32 %v6912, %v6912
    %v6968 = vmul.f32 %v6915, %v6915
    %v6969 = vmul.f32 %v6920, %v6920
    %v6970 = vmul.f32 %v6923, %v6923
    %v6971 = vmul.f32 %v6928, %v6928
    %v6972 = vmul.f32 %v6931, %v6931
    %v6973 = vmul.f32 %v6936, %v6936
    %v6974 = vmul.f32 %v6939, %v6939
    %6975 = vadd.xlane.f32.xlu0 %v6967
    %v6976 = vpop.xlane.xlu0 %6975
    %6977 = vadd.xlane.f32.xlu0 %v6968
    %v6978 = vpop.xlane.xlu0 %6977
    %6979 = vadd.xlane.f32.xlu0 %v6969
    %v6980 = vpop.xlane.xlu0 %6979
    %6981 = vadd.xlane.f32.xlu0 %v6970
    %v6982 = vpop.xlane.xlu0 %6981
    %6983 = vadd.xlane.f32.xlu0 %v6971
    %v6984 = vpop.xlane.xlu0 %6983
    %6985 = vadd.xlane.f32.xlu0 %v6972
    %v6986 = vpop.xlane.xlu0 %6985
    %6987 = vadd.xlane.f32.xlu0 %v6973
    %v6988 = vpop.xlane.xlu0 %6987
    %6989 = vadd.xlane.f32.xlu0 %v6974
    %v6990 = vpop.xlane.xlu0 %6989
    %v6991 = vmul.f32 %v6976, %v6958
    %v6992 = vmul.f32 %v6978, %v6958
    %v6993 = vmul.f32 %v6980, %v6958
    %v6994 = vmul.f32 %v6982, %v6958
    %v6995 = vmul.f32 %v6984, %v6958
    %v6996 = vmul.f32 %v6986, %v6958
    %v6997 = vmul.f32 %v6988, %v6958
    %v6998 = vmul.f32 %v6990, %v6958
    %v6999 = vmul.f32 %v6959, %v6959
    %v7000 = vmul.f32 %v6960, %v6960
    %v7001 = vmul.f32 %v6961, %v6961
    %v7002 = vmul.f32 %v6962, %v6962
    %v7003 = vmul.f32 %v6963, %v6963
    %v7004 = vmul.f32 %v6964, %v6964
    %v7005 = vmul.f32 %v6965, %v6965
    %v7006 = vmul.f32 %v6966, %v6966
    %v7007 = vsub.f32 %v6991, %v6999
    %v7008 = vsub.f32 %v6992, %v7000
    %v7009 = vsub.f32 %v6993, %v7001
    %v7010 = vsub.f32 %v6994, %v7002
    %v7011 = vsub.f32 %v6995, %v7003
    %v7012 = vsub.f32 %v6996, %v7004
    %v7013 = vsub.f32 %v6997, %v7005
    %v7014 = vsub.f32 %v6998, %v7006
    %v7015 = vsub.f32 %v6912, %v6959
    %v7016 = vsub.f32 %v6915, %v6960
    %v7017 = vsub.f32 %v6920, %v6961
    %v7018 = vsub.f32 %v6923, %v6962
    %v7019 = vsub.f32 %v6928, %v6963
    %v7020 = vsub.f32 %v6931, %v6964
    %v7021 = vsub.f32 %v6936, %v6965
    %v7022 = vsub.f32 %v6939, %v6966
    %v7023 = vadd.f32 %v7007, 1e-05
    %v7024 = vadd.f32 %v7008, 1e-05
    %v7025 = vadd.f32 %v7009, 1e-05
    %v7026 = vadd.f32 %v7010, 1e-05
    %v7027 = vadd.f32 %v7011, 1e-05
    %v7028 = vadd.f32 %v7012, 1e-05
    %v7029 = vadd.f32 %v7013, 1e-05
    %v7030 = vadd.f32 %v7014, 1e-05
    %v7031 = vrsqrt.pop %v7023
    %v7032 = vrsqrt.pop %v7024
    %v7033 = vrsqrt.pop %v7025
    %v7034 = vrsqrt.pop %v7026
    %v7035 = vrsqrt.pop %v7027
    %v7036 = vrsqrt.pop %v7028
    %v7037 = vrsqrt.pop %v7029
    %v7038 = vrsqrt.pop %v7030
    %v7039 = vmul.f32 %v7015, %v7031
    %v7040 = vmul.f32 %v7016, %v7032
    %v7041 = vmul.f32 %v7017, %v7033
    %v7042 = vmul.f32 %v7018, %v7034
    %v7043 = vmul.f32 %v7019, %v7035
    %v7044 = vmul.f32 %v7020, %v7036
    %v7045 = vmul.f32 %v7021, %v7037
    %v7046 = vmul.f32 %v7022, %v7038
    %v7047 = vld [vmem:[#allocation12] sm:$0x1]
    %v7049 = vlaneseq
    %v7050 = vshrl.u32 %v7049, 7
    %v7051 = vsub.s32 0, %v7050
    %v7052 = vrot.slane %v7047, %v7051
    %v7054 = vmul.f32 %v7039, %v7052
    %v7055 = vmul.f32 %v7040, %v7052
    %v7056 = vmul.f32 %v7041, %v7052
    %v7057 = vmul.f32 %v7042, %v7052
    %v7058 = vmul.f32 %v7043, %v7052
    %v7059 = vmul.f32 %v7044, %v7052
    %v7060 = vmul.f32 %v7045, %v7052
    %v7061 = vmul.f32 %v7046, %v7052
    %v7062 = vld [vmem:[#allocation14] sm:$0x1]
    %v7064 = vlaneseq
    %v7065 = vshrl.u32 %v7064, 7
    %v7066 = vsub.s32 0, %v7065
    %v7067 = vrot.slane %v7062, %v7066
    %v7069 = vadd.f32 %v7054, %v7067
    %v7070 = vadd.f32 %v7055, %v7067
    %v7071 = vadd.f32 %v7056, %v7067
    %v7072 = vadd.f32 %v7057, %v7067
    %v7073 = vadd.f32 %v7058, %v7067
    %v7074 = vadd.f32 %v7059, %v7067
    %v7075 = vadd.f32 %v7060, %v7067
    %v7076 = vadd.f32 %v7061, %v7067
    %vm7077 = vcmp.ge.f32.partialorder %v7069, 0.0
    %vm7078 = vcmp.ge.f32.partialorder %v7070, 0.0
    %vm7079 = vcmp.ge.f32.partialorder %v7071, 0.0
    %vm7080 = vcmp.ge.f32.partialorder %v7072, 0.0
    %vm7081 = vcmp.ge.f32.partialorder %v7073, 0.0
    %vm7082 = vcmp.ge.f32.partialorder %v7074, 0.0
    %vm7083 = vcmp.ge.f32.partialorder %v7075, 0.0
    %vm7084 = vcmp.ge.f32.partialorder %v7076, 0.0
    %v7085 = vmul.f32 %v7069, 0.01
    %v7086 = vmul.f32 %v7070, 0.01
    %v7087 = vmul.f32 %v7071, 0.01
    %v7088 = vmul.f32 %v7072, 0.01
    %v7089 = vmul.f32 %v7073, 0.01
    %v7090 = vmul.f32 %v7074, 0.01
    %v7091 = vmul.f32 %v7075, 0.01
    %v7092 = vmul.f32 %v7076, 0.01
    %v7093 = vsel %vm7077, %v7069, %v7085
    %v7094 = vsel %vm7078, %v7070, %v7086
    %v7095 = vsel %vm7079, %v7071, %v7087
    %v7096 = vsel %vm7080, %v7072, %v7088
    %v7097 = vsel %vm7081, %v7073, %v7089
    %v7098 = vsel %vm7082, %v7074, %v7090
    %v7099 = vsel %vm7083, %v7075, %v7091
    %v7100 = vsel %vm7084, %v7076, %v7092
    %v7101 = vpack.c.bf16 %v7094, %v7093
    %v7102 = vpack.c.bf16 %v7096, %v7095
    %v7103 = vpack.c.bf16 %v7098, %v7097
    %v7104 = vpack.c.bf16 %v7100, %v7099
    %v7105 = vld [vmem:[%s10] sm:$0xf]
    %v7106 = vld [vmem:[%s10 + $0x4] sm:$0xf]
    %v7107 = vld [vmem:[%s10 + $0x8] sm:$0xf]
    %v7108 = vld [vmem:[%s10 + $0xc] sm:$0xf]
    %v7109 = vld [vmem:[%s10 + $0x10] sm:$0xf]
    %v7110 = vld [vmem:[%s10 + $0x14] sm:$0xf]
    %v7111 = vld [vmem:[%s10 + $0x18] sm:$0xf]
    %v7112 = vld [vmem:[%s10 + $0x1c] sm:$0xf]
    %v7113 = vld [vmem:[%s10 + $0x20] sm:$0xf]
    %v7114 = vld [vmem:[%s10 + $0x24] sm:$0xf]
    %v7115 = vld [vmem:[%s10 + $0x28] sm:$0xf]
    %v7116 = vld [vmem:[%s10 + $0x2c] sm:$0xf]
    %v7117 = vld [vmem:[%s10 + $0x30] sm:$0xf]
    %v7118 = vld [vmem:[%s10 + $0x34] sm:$0xf]
    %v7119 = vld [vmem:[%s10 + $0x38] sm:$0xf]
    %v7120 = vld [vmem:[%s10 + $0x3c] sm:$0xf]
    %v7121 = vld [vmem:[#allocation15] sm:$0x1]
    %v7123 = vlaneseq
    %v7124 = vshrl.u32 %v7123, 7
    %v7125 = vsub.s32 0, %v7124
    %v7126 = vrot.slane %v7121, %v7125
    %v7144 = vunpack.c.l.b16 %v7105
    %v7145 = vunpack.c.l.b16 %v7106
    %v7146 = vunpack.c.l.b16 %v7107
    %v7147 = vunpack.c.l.b16 %v7108
    %v7148 = vunpack.c.l.b16 %v7109
    %v7149 = vunpack.c.l.b16 %v7110
    %v7150 = vunpack.c.l.b16 %v7111
    %v7151 = vunpack.c.l.b16 %v7112
    %v7152 = vunpack.c.l.b16 %v7113
    %v7153 = vunpack.c.l.b16 %v7114
    %v7154 = vunpack.c.l.b16 %v7115
    %v7155 = vunpack.c.l.b16 %v7116
    %v7156 = vunpack.c.l.b16 %v7117
    %v7157 = vunpack.c.l.b16 %v7118
    %v7158 = vunpack.c.l.b16 %v7119
    %v7159 = vunpack.c.l.b16 %v7120
    %v7160 = vpack.c.b16 %v7145, %v7144
    %v7161 = vpack.c.b16 %v7147, %v7146
    %v7162 = vpack.c.b16 %v7149, %v7148
    %v7163 = vpack.c.b16 %v7151, %v7150
    %v7164 = vpack.c.b16 %v7153, %v7152
    %v7165 = vpack.c.b16 %v7155, %v7154
    %v7166 = vpack.c.b16 %v7157, %v7156
    %v7167 = vpack.c.b16 %v7159, %v7158
    %7176 = vmatprep.subr.bf16.mxu0 0
    %7177 = vmatpush1.bf16.msra.mxu0 %v7160
    %7178 = vmatprep.subr.bf16.mxu0 0
    %7179 = vmatpush1.bf16.msra.mxu0 %v7161
    %7180 = vmatprep.subr.bf16.mxu0 0
    %7181 = vmatpush1.bf16.msra.mxu0 %v7162
    %7182 = vmatprep.subr.bf16.mxu0 0
    %7183 = vmatpush1.bf16.msra.mxu0 %v7163
    %7184 = vmatprep.subr.bf16.mxu0 0
    %7185 = vmatpush1.bf16.msra.mxu0 %v7164
    %7186 = vmatprep.subr.bf16.mxu0 0
    %7187 = vmatpush1.bf16.msra.mxu0 %v7165
    %7188 = vmatprep.subr.bf16.mxu0 0
    %7189 = vmatpush1.bf16.msra.mxu0 %v7166
    %7190 = vmatprep.subr.bf16.mxu0 0
    %7191 = vmatpush1.bf16.msra.mxu0 %v7167
    %7192 = vmatprep.subr.bf16.mxu0 0
    %7193 = vmatpush1.bf16.msra.mxu0 0
    %7194 = vmatprep.subr.bf16.mxu0 0
    %7195 = vmatpush1.bf16.msra.mxu0 0
    %7196 = vmatprep.subr.bf16.mxu0 0
    %7197 = vmatpush1.bf16.msra.mxu0 0
    %7198 = vmatprep.subr.bf16.mxu0 0
    %7199 = vmatpush1.bf16.msra.mxu0 0
    %7200 = vmatprep.subr.bf16.mxu0 0
    %7201 = vmatpush1.bf16.msra.mxu0 0
    %7202 = vmatprep.subr.bf16.mxu0 0
    %7203 = vmatpush1.bf16.msra.mxu0 0
    %7204 = vmatprep.subr.bf16.mxu0 0
    %7205 = vmatpush1.bf16.msra.mxu0 0
    %7206 = vmatprep.subr.bf16.mxu0 0
    %7207 = vmatpush1.bf16.msra.mxu0 0
    %7208 = vmatprep.mubr.bf16.mxu0 0
    %7209 = vmatmul.mubr.bf16.gmra.mrb[0].mxu0 %v7101
    %v7210 = vpop.f32.mrb[0].mxu0
    %v7211 = vadd.f32 %v7126, %v7210
    %v7212 = vpop.f32.mrb[0].mxu0
    %v7213 = vpop.f32.mrb[0].mxu0
    %v7214 = vadd.f32 %v7126, %v7213
    %v7215 = vpop.f32.mrb[0].mxu0
    %7216 = vmatprep.mubr.bf16.mxu0 0
    %7217 = vmatmul.mubr.bf16.gmra.mrb[0].mxu0 %v7102
    %v7218 = vpop.f32.mrb[0].mxu0
    %v7219 = vadd.f32 %v7126, %v7218
    %v7220 = vpop.f32.mrb[0].mxu0
    %v7221 = vpop.f32.mrb[0].mxu0
    %v7222 = vadd.f32 %v7126, %v7221
    %v7223 = vpop.f32.mrb[0].mxu0
    %7224 = vmatprep.mubr.bf16.mxu0 0
    %7225 = vmatmul.mubr.bf16.gmra.mrb[0].mxu0 %v7103
    %v7226 = vpop.f32.mrb[0].mxu0
    %v7227 = vadd.f32 %v7126, %v7226
    %v7228 = vpop.f32.mrb[0].mxu0
    %v7229 = vpop.f32.mrb[0].mxu0
    %v7230 = vadd.f32 %v7126, %v7229
    %v7231 = vpop.f32.mrb[0].mxu0
    %7232 = vmatprep.mubr.bf16.mxu0 0
    %7233 = vmatmul.mubr.bf16.gmra.mrb[0].mxu0 %v7104
    %v7234 = vpop.f32.mrb[0].mxu0
    %v7235 = vadd.f32 %v7126, %v7234
    %v7236 = vpop.f32.mrb[0].mxu0
    %v7237 = vpop.f32.mrb[0].mxu0
    %v7238 = vadd.f32 %v7126, %v7237
    %v7239 = vpop.f32.mrb[0].mxu0
    %7240 = vdwg.mxu0
    %7241 = vst [vmem:[%s12] sm:$0xff] %v7211
    %7242 = vst [vmem:[%s12 + $0x8] sm:$0xff] %v7214
    %7243 = vst [vmem:[%s12 + $0x10] sm:$0xff] %v7219
    %7244 = vst [vmem:[%s12 + $0x18] sm:$0xff] %v7222
    %7245 = vst [vmem:[%s12 + $0x20] sm:$0xff] %v7227
    %7246 = vst [vmem:[%s12 + $0x28] sm:$0xff] %v7230
    %7247 = vst [vmem:[%s12 + $0x30] sm:$0xff] %v7235
    %7248 = vst [vmem:[%s12 + $0x38] sm:$0xff] %v7238
    // Predicated region
    $region82: #{rnnlm_forward.1} parent=1 // pred_check
      _
    $region83: #{rnnlm_forward.1} parent=1 // pred_check_branch
      %7250 = sbr.rel (0) target = $region85
    $region84: #{rnnlm_forward.1} parent=1 // pred_region
      _
    $region85: #{rnnlm_forward.1} parent=1 // pred_fallthru
      _
    // Predicated region
    $region86: #{rnnlm_forward.1} parent=1 // pred_check
      _
    $region87: #{rnnlm_forward.1} parent=1 // pred_check_branch
      %7252 = sbr.rel (0) target = $region89
    $region88: #{rnnlm_forward.1} parent=1 // pred_region
      _
    $region89: #{rnnlm_forward.1} parent=1 // pred_fallthru
      _
    %7253 = vsyncpa [#allocation5], 1
    %7254 = vsyncpa [#allocation7], 1
    %7255 = vsyncpa [#allocation10], 1
    %7256 = vsyncpa [#allocation13], 1
    %7257 = vsyncpa [#allocation16], 1

</llo_original>
